<compile_context>
chip_gen: v5e
topology: v5e:2x2
jax: 0.10.0
libtpu: 0.0.40
codegen_flags: <defaults>
</compile_context>

<pallas_src>
import functools

import jax
import jax.numpy as jnp
from jax.experimental import pallas as pl
from jax.experimental.pallas import tpu as pltpu


# ---------------------------------------------------------------------------
# Kernel 1: conv1 (matmul) + bias + ReLU + 8x8 max-pool, fused
# ---------------------------------------------------------------------------
def _conv1_pool_kernel(p_ref, w_ref, b_ref, o_ref, *, n_win, win):
    # p_ref: (1, n_win*win, K*K) im2col patches, rows in pool-window-major order.
    p = p_ref[0]                                                        # (R, 16)
    s = jnp.dot(p, w_ref[...], preferred_element_type=jnp.float32)      # (R, 32) on the MXU
    # 8x8 max-pool: rows grouped 64-per-window (inner factor 64 is 8-aligned -> cheap reshape).
    s = jnp.max(s.reshape(n_win, win, s.shape[-1]), axis=1)             # (n_win, 32)
    # bias + ReLU commute with the max, so apply them after pooling (less VPU work).
    s = jnp.maximum(s + b_ref[...], 0.0)
    o_ref[0] = s.astype(o_ref.dtype)


def conv1_pool_pallas(patches, w, b, *, n_win, win):
    N, R, KK = patches.shape
    C = w.shape[1]
    return pl.pallas_call(
        functools.partial(_conv1_pool_kernel, n_win=n_win, win=win),
        out_shape=jax.ShapeDtypeStruct((N, n_win, C), jnp.float32),
        grid=(N,),
        in_specs=[
            pl.BlockSpec((1, R, KK), lambda i: (i, 0, 0)),
            pl.BlockSpec((KK, C), lambda i: (0, 0)),
            pl.BlockSpec((1, C), lambda i: (0, 0)),
        ],
        out_specs=pl.BlockSpec((1, n_win, C), lambda i: (i, 0, 0)),
        compiler_params=pltpu.CompilerParams(dimension_semantics=("parallel",)),
    )(patches, w, b)


# ---------------------------------------------------------------------------
# Kernel 2: fused tail — conv2 matmul + ReLU + adaptive pool + flatten + fc1 + ReLU + fc2
# ---------------------------------------------------------------------------
def _tail_kernel(q_ref, w2_ref, b2_ref, w3_ref, b3_ref, w4_ref, b4_ref,
                 o_ref, flat_ref, *, n_batch, n_spatial, win):
    # conv2 as a single (rows, 512) x (512, 128) MXU matmul; rows are ordered
    # (pool-window-offset major, then (n, hy, hx)) so pooling reduces a MAJOR dim (VPU only).
    s = jnp.dot(q_ref[...], w2_ref[...], preferred_element_type=jnp.float32)
    s = jnp.max(s.reshape(win, n_batch * n_spatial, s.shape[-1]), axis=0)   # adaptive 4x4 pool
    s = jnp.maximum(s + b2_ref[...], 0.0)                                   # bias + ReLU
    c = s.shape[-1]                                                         # 128 channels
    # Flatten into (N, 2048) VMEM scratch; together with the pre-permuted fc1 weight this
    # reproduces PyTorch's NCHW flatten order exactly.  32 lane-aligned (1,128) stores.
    for n in range(n_batch):
        for r in range(n_spatial):
            flat_ref[n:n + 1, r * c:(r + 1) * c] = \
                s[n * n_spatial + r:n * n_spatial + r + 1, :]
    h = jnp.dot(flat_ref[...], w3_ref[...], preferred_element_type=jnp.float32) + b3_ref[...]
    h = jnp.maximum(h, 0.0)                                                 # fc1 + ReLU
    o = jnp.dot(h, w4_ref[...], preferred_element_type=jnp.float32) + b4_ref[...]  # fc2 (lane-dense)
    o_ref[...] = o.astype(o_ref.dtype)


def tail_pallas(q, w2, b2, w3, b3, w4, b4, *, n_batch, n_spatial, win):
    Fp = w4.shape[1]
    C = w2.shape[1]
    return pl.pallas_call(
        functools.partial(_tail_kernel, n_batch=n_batch, n_spatial=n_spatial, win=win),
        out_shape=jax.ShapeDtypeStruct((n_batch, Fp), jnp.float32),
        in_specs=[pl.BlockSpec(memory_space=pltpu.MemorySpace.VMEM)] * 7,
        out_specs=pl.BlockSpec(memory_space=pltpu.MemorySpace.VMEM),
        scratch_shapes=[pltpu.VMEM((n_batch, n_spatial * C), jnp.float32)],
        # Explicit VMEM budget (total use ~5 MB; 32 MiB is safe on v5e/v6e/v7x).
        compiler_params=pltpu.CompilerParams(vmem_limit_bytes=32 * 1024 * 1024),
    )(q, w2, b2, w3, b3, w4, b4)


# ---------------------------------------------------------------------------
# Parameter preparation (runs ONCE, outside jit): transposes / permutations / padding
# ---------------------------------------------------------------------------
def _cdiv(a, b):
    return (a + b - 1) // b


def init_params(key, n_labels):
    ks = jax.random.split(key, 8)

    def n(k, shape, scale=0.05):
        return jax.random.normal(k, shape, jnp.float32) * scale

    return {
        "conv1_w": n(ks[0], (32, 1, 4, 4)),
        "conv1_b": n(ks[1], (32,)),
        "conv2_w": n(ks[2], (128, 32, 4, 4)),
        "conv2_b": n(ks[3], (128,)),
        "fc1_w": n(ks[4], (512, 128 * 4 * 4)),
        "fc1_b": n(ks[5], (512,)),
        "fc2_w": n(ks[6], (n_labels, 512)),
        "fc2_b": n(ks[7], (n_labels,)),
    }


def prepare_params(params, n_labels):
    """Convert PyTorch-layout params to kernel-ready matrices (hoisted out of the jit)."""
    c1, c2 = params["conv1_w"], params["conv2_w"]
    f1, f2 = params["fc1_w"], params["fc2_w"]
    co1, co2 = c1.shape[0], c2.shape[0]
    hidden = f1.shape[0]
    Fp = max(128, _cdiv(n_labels, 128) * 128)          # lane-dense fc2 output width

    # Conv weights -> (kh*kw*cin, cout), matching the im2col patch feature order.
    conv1_wm = jnp.transpose(c1, (2, 3, 1, 0)).reshape(-1, co1)          # (16, 32)
    conv2_wm = jnp.transpose(c2, (2, 3, 1, 0)).reshape(-1, co2)          # (512, 128)
    # fc1 consumes the kernel's (hy, hx, c) activation order; permute its columns so the
    # result equals PyTorch's NCHW flatten followed by fc1.
    fc1_wm = jnp.transpose(f1.reshape(hidden, co2, 4, 4), (2, 3, 1, 0)).reshape(-1, hidden)
    # fc2 padded to a lane-dense width; padded columns are exact zeros (sliced off outside).
    fc2_wm = jnp.zeros((hidden, Fp), jnp.float32).at[:, :n_labels].set(jnp.transpose(f2))
    fc2_bp = jnp.zeros((Fp,), jnp.float32).at[:n_labels].set(params["fc2_b"])

    return {
        "conv1_wm": conv1_wm, "conv1_b": params["conv1_b"].reshape(1, co1),
        "conv2_wm": conv2_wm, "conv2_b": params["conv2_b"].reshape(1, co2),
        "fc1_wm": fc1_wm, "fc1_b": params["fc1_b"].reshape(1, hidden),
        "fc2_wm": fc2_wm, "fc2_b": fc2_bp.reshape(1, Fp),
    }


# ---------------------------------------------------------------------------
# Forward pass
# ---------------------------------------------------------------------------
@functools.partial(jax.jit, static_argnames=("n_labels",))
def conv_model_forward(x, packed, *, n_labels):
    N, H, W = x.shape
    K = 4

    # ---- conv1 patches (pool-window-major row order); floor-mode 8x8 pool region only ----
    H1, W1 = H - K + 1, W - K + 1
    Ph, Pw = H1 // 8, W1 // 8                          # pooled spatial (11, 11)
    Hc, Wc = Ph * 8, Pw * 8                            # conv rows actually needed (floor mode)
    cols = [x[:, kh:kh + Hc, kw:kw + Wc] for kh in range(K) for kw in range(K)]
    p = jnp.stack(cols, axis=-1)                       # (N, Hc, Wc, 16)
    p = p.reshape(N, Ph, 8, Pw, 8, K * K).transpose(0, 1, 3, 2, 4, 5)
    p = p.reshape(N, Ph * Pw * 64, K * K)              # 64 consecutive rows = one pool window
    h1 = conv1_pool_pallas(p, packed["conv1_wm"], packed["conv1_b"], n_win=Ph * Pw, win=64)
    h1 = h1.reshape(N, Ph, Pw, 32)                     # (N, 11, 11, 32) — only ~15 KB in HBM

    # ---- conv2 patches; rows ordered (pool-offset major, then n, hy, hx) ----
    H2, W2 = Ph - K + 1, Pw - K + 1                    # (8, 8)
    # TODO(synk): general PyTorch adaptive (non-uniform) pooling windows when H2/W2 % 4 != 0;
    # for this input shape the windows are uniform 2x2.
    assert H2 % 4 == 0 and W2 % 4 == 0
    sy, sx = H2 // 4, W2 // 4                          # adaptive window (2, 2)
    cols2 = [h1[:, kh:kh + H2, kw:kw + W2, :] for kh in range(K) for kw in range(K)]
    q = jnp.stack(cols2, axis=3).reshape(N, H2, W2, K * K * 32)
    q = q.reshape(N, 4, sy, 4, sx, K * K * 32).transpose(2, 4, 0, 1, 3, 5)
    q = q.reshape(sy * sx * N * 16, K * K * 32)        # (128, 512)

    out = tail_pallas(q, packed["conv2_wm"], packed["conv2_b"],
                      packed["fc1_wm"], packed["fc1_b"],
                      packed["fc2_wm"], packed["fc2_b"],
                      n_batch=N, n_spatial=16, win=sy * sx)
    return out[:, :n_labels]


if __name__ == "__main__":
    n_labels = 10
    key = jax.random.PRNGKey(0)
    kx, kp = jax.random.split(key)
    # input: (batch, H, W) = (2, 91, 91)
    #   conv1 -> 88x88, maxpool8 -> 11x11, conv2 -> 8x8, adaptive pool -> 4x4, flatten -> 2048
    x = jax.random.normal(kx, (2, 91, 91), jnp.float32)
    params = init_params(kp, n_labels)
    packed = prepare_params(params, n_labels)          # weight transposes hoisted out of jit

    out = conv_model_forward(x, packed, n_labels=n_labels)
    out = jax.block_until_ready(out)
    assert out.shape == (2, n_labels)
    print("KERNEL_OK")
</pallas_src>

<mosaic_0001>
module attributes {stable_mosaic.version = 11 : i64} {
  func.func @_conv1_pool_kernel(%arg0: i32, %arg1: memref<1x7744x16xf32, #tpu.memory_space<vmem>>, %arg2: memref<16x32xf32, #tpu.memory_space<vmem>>, %arg3: memref<1x32xf32, #tpu.memory_space<vmem>>, %arg4: memref<1x121x32xf32, #tpu.memory_space<vmem>>) attributes {dimension_semantics = [#tpu.dimension_semantics<parallel>], iteration_bounds = array<i64: 2>, scalar_prefetch = 0 : i64, scratch_operands = 0 : i64, tpu.core_type = #tpu.core_type<tc>, window_params = [{transform_indices = @transform_0, window_bounds = array<i64: 1, 7744, 16>}, {pipeline_mode = #tpu.pipeline_mode<synchronous>, transform_indices = @transform_1, window_bounds = array<i64: 16, 32>}, {pipeline_mode = #tpu.pipeline_mode<synchronous>, transform_indices = @transform_2, window_bounds = array<i64: 1, 32>}, {transform_indices = @transform_3, window_bounds = array<i64: 1, 121, 32>}]} {
    %c0 = arith.constant 0 : index
    %c0_0 = arith.constant 0 : index
    %c0_1 = arith.constant 0 : index
    %0 = vector.load %arg1[%c0, %c0_0, %c0_1] : memref<1x7744x16xf32, #tpu.memory_space<vmem>>, vector<1x7744x16xf32>
    %1 = vector.shape_cast %0 : vector<1x7744x16xf32> to vector<7744x16xf32>
    %c0_2 = arith.constant 0 : index
    %c0_3 = arith.constant 0 : index
    %2 = vector.load %arg2[%c0_2, %c0_3] : memref<16x32xf32, #tpu.memory_space<vmem>>, vector<16x32xf32>
    %cst = arith.constant dense<0.000000e+00> : vector<7744x32xf32>
    %3 = tpu.matmul %1, %2, %cst {dimension_numbers = #tpu.dot_dimension_numbers<[1], [0], [0], [1], [0, 0, 1, 1], [], []>} : vector<7744x16xf32>, vector<16x32xf32>, vector<7744x32xf32> -> vector<7744x32xf32>
    %4 = vector.shape_cast %3 : vector<7744x32xf32> to vector<121x64x32xf32>
    %cst_4 = arith.constant dense<0xFF800000> : vector<121x32xf32>
    %5 = vector.multi_reduction <maximumf>, %4, %cst_4 [1] : vector<121x64x32xf32> to vector<121x32xf32>
    %c0_5 = arith.constant 0 : index
    %c0_6 = arith.constant 0 : index
    %6 = vector.load %arg3[%c0_5, %c0_6] : memref<1x32xf32, #tpu.memory_space<vmem>>, vector<1x32xf32>
    %7 = vector.broadcast %6 : vector<1x32xf32> to vector<121x32xf32>
    %8 = arith.addf %5, %7 : vector<121x32xf32>
    %cst_7 = arith.constant 0.000000e+00 : f32
    %9 = vector.broadcast %cst_7 : f32 to vector<121x32xf32>
    %10 = arith.maximumf %8, %9 : vector<121x32xf32>
    %c0_8 = arith.constant 0 : index
    %c0_9 = arith.constant 0 : index
    %c0_10 = arith.constant 0 : index
    %11 = vector.load %arg4[%c0_8, %c0_9, %c0_10] : memref<1x121x32xf32, #tpu.memory_space<vmem>>, vector<1x121x32xf32>
    %12 = vector.shape_cast %11 : vector<1x121x32xf32> to vector<121x32xf32>
    %13 = vector.shape_cast %10 : vector<121x32xf32> to vector<1x121x32xf32>
    tpu.vector_store %arg4[%c0_8, %c0_9, %c0_10], %13 {strides = array<i32>} : memref<1x121x32xf32, #tpu.memory_space<vmem>>, vector<1x121x32xf32>,
    return
  }
  func.func @transform_0(%arg0: i32) -> (i32, i32, i32) {
    %c0_i32 = arith.constant 0 : i32
    %c0_i32_0 = arith.constant 0 : i32
    %c0_i32_1 = arith.constant 0 : i32
    return %arg0, %c0_i32, %c0_i32_0 : i32, i32, i32
  }
  func.func @transform_1(%arg0: i32) -> (i32, i32) {
    %c0_i32 = arith.constant 0 : i32
    %c0_i32_0 = arith.constant 0 : i32
    %c0_i32_1 = arith.constant 0 : i32
    return %c0_i32, %c0_i32_0 : i32, i32
  }
  func.func @transform_2(%arg0: i32) -> (i32, i32) {
    %c0_i32 = arith.constant 0 : i32
    %c0_i32_0 = arith.constant 0 : i32
    %c0_i32_1 = arith.constant 0 : i32
    return %c0_i32, %c0_i32_0 : i32, i32
  }
  func.func @transform_3(%arg0: i32) -> (i32, i32, i32) {
    %c0_i32 = arith.constant 0 : i32
    %c0_i32_0 = arith.constant 0 : i32
    %c0_i32_1 = arith.constant 0 : i32
    return %arg0, %c0_i32, %c0_i32_0 : i32, i32, i32
  }
}

module attributes {stable_mosaic.version = 11 : i64} {
  func.func @_tail_kernel(%arg0: memref<128x512xf32, #tpu.memory_space<vmem>>, %arg1: memref<512x128xf32, #tpu.memory_space<vmem>>, %arg2: memref<1x128xf32, #tpu.memory_space<vmem>>, %arg3: memref<2048x512xf32, #tpu.memory_space<vmem>>, %arg4: memref<1x512xf32, #tpu.memory_space<vmem>>, %arg5: memref<512x128xf32, #tpu.memory_space<vmem>>, %arg6: memref<1x128xf32, #tpu.memory_space<vmem>>, %arg7: memref<2x128xf32, #tpu.memory_space<vmem>>, %arg8: memref<2x2048xf32, #tpu.memory_space<vmem>>) attributes {dimension_semantics = [], scalar_prefetch = 0 : i64, scratch_operands = 1 : i64, tpu.core_type = #tpu.core_type<tc>} {
    %c0 = arith.constant 0 : index
    %c0_0 = arith.constant 0 : index
    %0 = vector.load %arg0[%c0, %c0_0] : memref<128x512xf32, #tpu.memory_space<vmem>>, vector<128x512xf32>
    %c0_1 = arith.constant 0 : index
    %c0_2 = arith.constant 0 : index
    %1 = vector.load %arg1[%c0_1, %c0_2] : memref<512x128xf32, #tpu.memory_space<vmem>>, vector<512x128xf32>
    %cst = arith.constant dense<0.000000e+00> : vector<128x128xf32>
    %2 = tpu.matmul %0, %1, %cst {dimension_numbers = #tpu.dot_dimension_numbers<[1], [0], [0], [1], [0, 0, 1, 1], [], []>} : vector<128x512xf32>, vector<512x128xf32>, vector<128x128xf32> -> vector<128x128xf32>
    %3 = vector.shape_cast %2 : vector<128x128xf32> to vector<4x32x128xf32>
    %cst_3 = arith.constant dense<0xFF800000> : vector<32x128xf32>
    %4 = vector.multi_reduction <maximumf>, %3, %cst_3 [0] : vector<4x32x128xf32> to vector<32x128xf32>
    %c0_4 = arith.constant 0 : index
    %c0_5 = arith.constant 0 : index
    %5 = vector.load %arg2[%c0_4, %c0_5] : memref<1x128xf32, #tpu.memory_space<vmem>>, vector<1x128xf32>
    %6 = vector.broadcast %5 : vector<1x128xf32> to vector<32x128xf32>
    %7 = arith.addf %4, %6 : vector<32x128xf32>
    %cst_6 = arith.constant 0.000000e+00 : f32
    %8 = vector.broadcast %cst_6 : f32 to vector<32x128xf32>
    %9 = arith.maximumf %7, %8 : vector<32x128xf32>
    %10 = vector.extract_strided_slice %9 {offsets = [0, 0], sizes = [1, 128], strides = [1, 1]} : vector<32x128xf32> to vector<1x128xf32>
    %c0_7 = arith.constant 0 : index
    %c0_8 = arith.constant 0 : index
    %11 = vector.load %arg8[%c0_7, %c0_8] : memref<2x2048xf32, #tpu.memory_space<vmem>>, vector<1x128xf32>
    tpu.vector_store %arg8[%c0_7, %c0_8], %10 {strides = array<i32>} : memref<2x2048xf32, #tpu.memory_space<vmem>>, vector<1x128xf32>,
    %12 = vector.extract_strided_slice %9 {offsets = [1, 0], sizes = [1, 128], strides = [1, 1]} : vector<32x128xf32> to vector<1x128xf32>
    %c0_9 = arith.constant 0 : index
    %c128 = arith.constant 128 : index
    %13 = vector.load %arg8[%c0_9, %c128] : memref<2x2048xf32, #tpu.memory_space<vmem>>, vector<1x128xf32>
    tpu.vector_store %arg8[%c0_9, %c128], %12 {strides = array<i32>} : memref<2x2048xf32, #tpu.memory_space<vmem>>, vector<1x128xf32>,
    %14 = vector.extract_strided_slice %9 {offsets = [2, 0], sizes = [1, 128], strides = [1, 1]} : vector<32x128xf32> to vector<1x128xf32>
    %c0_10 = arith.constant 0 : index
    %c256 = arith.constant 256 : index
    %15 = vector.load %arg8[%c0_10, %c256] : memref<2x2048xf32, #tpu.memory_space<vmem>>, vector<1x128xf32>
    tpu.vector_store %arg8[%c0_10, %c256], %14 {strides = array<i32>} : memref<2x2048xf32, #tpu.memory_space<vmem>>, vector<1x128xf32>,
    %16 = vector.extract_strided_slice %9 {offsets = [3, 0], sizes = [1, 128], strides = [1, 1]} : vector<32x128xf32> to vector<1x128xf32>
    %c0_11 = arith.constant 0 : index
    %c384 = arith.constant 384 : index
    %17 = vector.load %arg8[%c0_11, %c384] : memref<2x2048xf32, #tpu.memory_space<vmem>>, vector<1x128xf32>
    tpu.vector_store %arg8[%c0_11, %c384], %16 {strides = array<i32>} : memref<2x2048xf32, #tpu.memory_space<vmem>>, vector<1x128xf32>,
    %18 = vector.extract_strided_slice %9 {offsets = [4, 0], sizes = [1, 128], strides = [1, 1]} : vector<32x128xf32> to vector<1x128xf32>
    %c0_12 = arith.constant 0 : index
    %c512 = arith.constant 512 : index
    %19 = vector.load %arg8[%c0_12, %c512] : memref<2x2048xf32, #tpu.memory_space<vmem>>, vector<1x128xf32>
    tpu.vector_store %arg8[%c0_12, %c512], %18 {strides = array<i32>} : memref<2x2048xf32, #tpu.memory_space<vmem>>, vector<1x128xf32>,
    %20 = vector.extract_strided_slice %9 {offsets = [5, 0], sizes = [1, 128], strides = [1, 1]} : vector<32x128xf32> to vector<1x128xf32>
    %c0_13 = arith.constant 0 : index
    %c640 = arith.constant 640 : index
    %21 = vector.load %arg8[%c0_13, %c640] : memref<2x2048xf32, #tpu.memory_space<vmem>>, vector<1x128xf32>
    tpu.vector_store %arg8[%c0_13, %c640], %20 {strides = array<i32>} : memref<2x2048xf32, #tpu.memory_space<vmem>>, vector<1x128xf32>,
    %22 = vector.extract_strided_slice %9 {offsets = [6, 0], sizes = [1, 128], strides = [1, 1]} : vector<32x128xf32> to vector<1x128xf32>
    %c0_14 = arith.constant 0 : index
    %c768 = arith.constant 768 : index
    %23 = vector.load %arg8[%c0_14, %c768] : memref<2x2048xf32, #tpu.memory_space<vmem>>, vector<1x128xf32>
    tpu.vector_store %arg8[%c0_14, %c768], %22 {strides = array<i32>} : memref<2x2048xf32, #tpu.memory_space<vmem>>, vector<1x128xf32>,
    %24 = vector.extract_strided_slice %9 {offsets = [7, 0], sizes = [1, 128], strides = [1, 1]} : vector<32x128xf32> to vector<1x128xf32>
    %c0_15 = arith.constant 0 : index
    %c896 = arith.constant 896 : index
    %25 = vector.load %arg8[%c0_15, %c896] : memref<2x2048xf32, #tpu.memory_space<vmem>>, vector<1x128xf32>
    tpu.vector_store %arg8[%c0_15, %c896], %24 {strides = array<i32>} : memref<2x2048xf32, #tpu.memory_space<vmem>>, vector<1x128xf32>,
    %26 = vector.extract_strided_slice %9 {offsets = [8, 0], sizes = [1, 128], strides = [1, 1]} : vector<32x128xf32> to vector<1x128xf32>
    %c0_16 = arith.constant 0 : index
    %c1024 = arith.constant 1024 : index
    %27 = vector.load %arg8[%c0_16, %c1024] : memref<2x2048xf32, #tpu.memory_space<vmem>>, vector<1x128xf32>
    tpu.vector_store %arg8[%c0_16, %c1024], %26 {strides = array<i32>} : memref<2x2048xf32, #tpu.memory_space<vmem>>, vector<1x128xf32>,
    %28 = vector.extract_strided_slice %9 {offsets = [9, 0], sizes = [1, 128], strides = [1, 1]} : vector<32x128xf32> to vector<1x128xf32>
    %c0_17 = arith.constant 0 : index
    %c1152 = arith.constant 1152 : index
    %29 = vector.load %arg8[%c0_17, %c1152] : memref<2x2048xf32, #tpu.memory_space<vmem>>, vector<1x128xf32>
    tpu.vector_store %arg8[%c0_17, %c1152], %28 {strides = array<i32>} : memref<2x2048xf32, #tpu.memory_space<vmem>>, vector<1x128xf32>,
    %30 = vector.extract_strided_slice %9 {offsets = [10, 0], sizes = [1, 128], strides = [1, 1]} : vector<32x128xf32> to vector<1x128xf32>
    %c0_18 = arith.constant 0 : index
    %c1280 = arith.constant 1280 : index
    %31 = vector.load %arg8[%c0_18, %c1280] : memref<2x2048xf32, #tpu.memory_space<vmem>>, vector<1x128xf32>
    tpu.vector_store %arg8[%c0_18, %c1280], %30 {strides = array<i32>} : memref<2x2048xf32, #tpu.memory_space<vmem>>, vector<1x128xf32>,
    %32 = vector.extract_strided_slice %9 {offsets = [11, 0], sizes = [1, 128], strides = [1, 1]} : vector<32x128xf32> to vector<1x128xf32>
    %c0_19 = arith.constant 0 : index
    %c1408 = arith.constant 1408 : index
    %33 = vector.load %arg8[%c0_19, %c1408] : memref<2x2048xf32, #tpu.memory_space<vmem>>, vector<1x128xf32>
    tpu.vector_store %arg8[%c0_19, %c1408], %32 {strides = array<i32>} : memref<2x2048xf32, #tpu.memory_space<vmem>>, vector<1x128xf32>,
    %34 = vector.extract_strided_slice %9 {offsets = [12, 0], sizes = [1, 128], strides = [1, 1]} : vector<32x128xf32> to vector<1x128xf32>
    %c0_20 = arith.constant 0 : index
    %c1536 = arith.constant 1536 : index
    %35 = vector.load %arg8[%c0_20, %c1536] : memref<2x2048xf32, #tpu.memory_space<vmem>>, vector<1x128xf32>
    tpu.vector_store %arg8[%c0_20, %c1536], %34 {strides = array<i32>} : memref<2x2048xf32, #tpu.memory_space<vmem>>, vector<1x128xf32>,
    %36 = vector.extract_strided_slice %9 {offsets = [13, 0], sizes = [1, 128], strides = [1, 1]} : vector<32x128xf32> to vector<1x128xf32>
    %c0_21 = arith.constant 0 : index
    %c1664 = arith.constant 1664 : index
    %37 = vector.load %arg8[%c0_21, %c1664] : memref<2x2048xf32, #tpu.memory_space<vmem>>, vector<1x128xf32>
    tpu.vector_store %arg8[%c0_21, %c1664], %36 {strides = array<i32>} : memref<2x2048xf32, #tpu.memory_space<vmem>>, vector<1x128xf32>,
    %38 = vector.extract_strided_slice %9 {offsets = [14, 0], sizes = [1, 128], strides = [1, 1]} : vector<32x128xf32> to vector<1x128xf32>
    %c0_22 = arith.constant 0 : index
    %c1792 = arith.constant 1792 : index
    %39 = vector.load %arg8[%c0_22, %c1792] : memref<2x2048xf32, #tpu.memory_space<vmem>>, vector<1x128xf32>
    tpu.vector_store %arg8[%c0_22, %c1792], %38 {strides = array<i32>} : memref<2x2048xf32, #tpu.memory_space<vmem>>, vector<1x128xf32>,
    %40 = vector.extract_strided_slice %9 {offsets = [15, 0], sizes = [1, 128], strides = [1, 1]} : vector<32x128xf32> to vector<1x128xf32>
    %c0_23 = arith.constant 0 : index
    %c1920 = arith.constant 1920 : index
    %41 = vector.load %arg8[%c0_23, %c1920] : memref<2x2048xf32, #tpu.memory_space<vmem>>, vector<1x128xf32>
    tpu.vector_store %arg8[%c0_23, %c1920], %40 {strides = array<i32>} : memref<2x2048xf32, #tpu.memory_space<vmem>>, vector<1x128xf32>,
    %42 = vector.extract_strided_slice %9 {offsets = [16, 0], sizes = [1, 128], strides = [1, 1]} : vector<32x128xf32> to vector<1x128xf32>
    %c1 = arith.constant 1 : index
    %c0_24 = arith.constant 0 : index
    %43 = vector.load %arg8[%c1, %c0_24] : memref<2x2048xf32, #tpu.memory_space<vmem>>, vector<1x128xf32>
    tpu.vector_store %arg8[%c1, %c0_24], %42 {strides = array<i32>} : memref<2x2048xf32, #tpu.memory_space<vmem>>, vector<1x128xf32>,
    %44 = vector.extract_strided_slice %9 {offsets = [17, 0], sizes = [1, 128], strides = [1, 1]} : vector<32x128xf32> to vector<1x128xf32>
    %c1_25 = arith.constant 1 : index
    %c128_26 = arith.constant 128 : index
    %45 = vector.load %arg8[%c1_25, %c128_26] : memref<2x2048xf32, #tpu.memory_space<vmem>>, vector<1x128xf32>
    tpu.vector_store %arg8[%c1_25, %c128_26], %44 {strides = array<i32>} : memref<2x2048xf32, #tpu.memory_space<vmem>>, vector<1x128xf32>,
    %46 = vector.extract_strided_slice %9 {offsets = [18, 0], sizes = [1, 128], strides = [1, 1]} : vector<32x128xf32> to vector<1x128xf32>
    %c1_27 = arith.constant 1 : index
    %c256_28 = arith.constant 256 : index
    %47 = vector.load %arg8[%c1_27, %c256_28] : memref<2x2048xf32, #tpu.memory_space<vmem>>, vector<1x128xf32>
    tpu.vector_store %arg8[%c1_27, %c256_28], %46 {strides = array<i32>} : memref<2x2048xf32, #tpu.memory_space<vmem>>, vector<1x128xf32>,
    %48 = vector.extract_strided_slice %9 {offsets = [19, 0], sizes = [1, 128], strides = [1, 1]} : vector<32x128xf32> to vector<1x128xf32>
    %c1_29 = arith.constant 1 : index
    %c384_30 = arith.constant 384 : index
    %49 = vector.load %arg8[%c1_29, %c384_30] : memref<2x2048xf32, #tpu.memory_space<vmem>>, vector<1x128xf32>
    tpu.vector_store %arg8[%c1_29, %c384_30], %48 {strides = array<i32>} : memref<2x2048xf32, #tpu.memory_space<vmem>>, vector<1x128xf32>,
    %50 = vector.extract_strided_slice %9 {offsets = [20, 0], sizes = [1, 128], strides = [1, 1]} : vector<32x128xf32> to vector<1x128xf32>
    %c1_31 = arith.constant 1 : index
    %c512_32 = arith.constant 512 : index
    %51 = vector.load %arg8[%c1_31, %c512_32] : memref<2x2048xf32, #tpu.memory_space<vmem>>, vector<1x128xf32>
    tpu.vector_store %arg8[%c1_31, %c512_32], %50 {strides = array<i32>} : memref<2x2048xf32, #tpu.memory_space<vmem>>, vector<1x128xf32>,
    %52 = vector.extract_strided_slice %9 {offsets = [21, 0], sizes = [1, 128], strides = [1, 1]} : vector<32x128xf32> to vector<1x128xf32>
    %c1_33 = arith.constant 1 : index
    %c640_34 = arith.constant 640 : index
    %53 = vector.load %arg8[%c1_33, %c640_34] : memref<2x2048xf32, #tpu.memory_space<vmem>>, vector<1x128xf32>
    tpu.vector_store %arg8[%c1_33, %c640_34], %52 {strides = array<i32>} : memref<2x2048xf32, #tpu.memory_space<vmem>>, vector<1x128xf32>,
    %54 = vector.extract_strided_slice %9 {offsets = [22, 0], sizes = [1, 128], strides = [1, 1]} : vector<32x128xf32> to vector<1x128xf32>
    %c1_35 = arith.constant 1 : index
    %c768_36 = arith.constant 768 : index
    %55 = vector.load %arg8[%c1_35, %c768_36] : memref<2x2048xf32, #tpu.memory_space<vmem>>, vector<1x128xf32>
    tpu.vector_store %arg8[%c1_35, %c768_36], %54 {strides = array<i32>} : memref<2x2048xf32, #tpu.memory_space<vmem>>, vector<1x128xf32>,
    %56 = vector.extract_strided_slice %9 {offsets = [23, 0], sizes = [1, 128], strides = [1, 1]} : vector<32x128xf32> to vector<1x128xf32>
    %c1_37 = arith.constant 1 : index
    %c896_38 = arith.constant 896 : index
    %57 = vector.load %arg8[%c1_37, %c896_38] : memref<2x2048xf32, #tpu.memory_space<vmem>>, vector<1x128xf32>
    tpu.vector_store %arg8[%c1_37, %c896_38], %56 {strides = array<i32>} : memref<2x2048xf32, #tpu.memory_space<vmem>>, vector<1x128xf32>,
    %58 = vector.extract_strided_slice %9 {offsets = [24, 0], sizes = [1, 128], strides = [1, 1]} : vector<32x128xf32> to vector<1x128xf32>
    %c1_39 = arith.constant 1 : index
    %c1024_40 = arith.constant 1024 : index
    %59 = vector.load %arg8[%c1_39, %c1024_40] : memref<2x2048xf32, #tpu.memory_space<vmem>>, vector<1x128xf32>
    tpu.vector_store %arg8[%c1_39, %c1024_40], %58 {strides = array<i32>} : memref<2x2048xf32, #tpu.memory_space<vmem>>, vector<1x128xf32>,
    %60 = vector.extract_strided_slice %9 {offsets = [25, 0], sizes = [1, 128], strides = [1, 1]} : vector<32x128xf32> to vector<1x128xf32>
    %c1_41 = arith.constant 1 : index
    %c1152_42 = arith.constant 1152 : index
    %61 = vector.load %arg8[%c1_41, %c1152_42] : memref<2x2048xf32, #tpu.memory_space<vmem>>, vector<1x128xf32>
    tpu.vector_store %arg8[%c1_41, %c1152_42], %60 {strides = array<i32>} : memref<2x2048xf32, #tpu.memory_space<vmem>>, vector<1x128xf32>,
    %62 = vector.extract_strided_slice %9 {offsets = [26, 0], sizes = [1, 128], strides = [1, 1]} : vector<32x128xf32> to vector<1x128xf32>
    %c1_43 = arith.constant 1 : index
    %c1280_44 = arith.constant 1280 : index
    %63 = vector.load %arg8[%c1_43, %c1280_44] : memref<2x2048xf32, #tpu.memory_space<vmem>>, vector<1x128xf32>
    tpu.vector_store %arg8[%c1_43, %c1280_44], %62 {strides = array<i32>} : memref<2x2048xf32, #tpu.memory_space<vmem>>, vector<1x128xf32>,
    %64 = vector.extract_strided_slice %9 {offsets = [27, 0], sizes = [1, 128], strides = [1, 1]} : vector<32x128xf32> to vector<1x128xf32>
    %c1_45 = arith.constant 1 : index
    %c1408_46 = arith.constant 1408 : index
    %65 = vector.load %arg8[%c1_45, %c1408_46] : memref<2x2048xf32, #tpu.memory_space<vmem>>, vector<1x128xf32>
    tpu.vector_store %arg8[%c1_45, %c1408_46], %64 {strides = array<i32>} : memref<2x2048xf32, #tpu.memory_space<vmem>>, vector<1x128xf32>,
    %66 = vector.extract_strided_slice %9 {offsets = [28, 0], sizes = [1, 128], strides = [1, 1]} : vector<32x128xf32> to vector<1x128xf32>
    %c1_47 = arith.constant 1 : index
    %c1536_48 = arith.constant 1536 : index
    %67 = vector.load %arg8[%c1_47, %c1536_48] : memref<2x2048xf32, #tpu.memory_space<vmem>>, vector<1x128xf32>
    tpu.vector_store %arg8[%c1_47, %c1536_48], %66 {strides = array<i32>} : memref<2x2048xf32, #tpu.memory_space<vmem>>, vector<1x128xf32>,
    %68 = vector.extract_strided_slice %9 {offsets = [29, 0], sizes = [1, 128], strides = [1, 1]} : vector<32x128xf32> to vector<1x128xf32>
    %c1_49 = arith.constant 1 : index
    %c1664_50 = arith.constant 1664 : index
    %69 = vector.load %arg8[%c1_49, %c1664_50] : memref<2x2048xf32, #tpu.memory_space<vmem>>, vector<1x128xf32>
    tpu.vector_store %arg8[%c1_49, %c1664_50], %68 {strides = array<i32>} : memref<2x2048xf32, #tpu.memory_space<vmem>>, vector<1x128xf32>,
    %70 = vector.extract_strided_slice %9 {offsets = [30, 0], sizes = [1, 128], strides = [1, 1]} : vector<32x128xf32> to vector<1x128xf32>
    %c1_51 = arith.constant 1 : index
    %c1792_52 = arith.constant 1792 : index
    %71 = vector.load %arg8[%c1_51, %c1792_52] : memref<2x2048xf32, #tpu.memory_space<vmem>>, vector<1x128xf32>
    tpu.vector_store %arg8[%c1_51, %c1792_52], %70 {strides = array<i32>} : memref<2x2048xf32, #tpu.memory_space<vmem>>, vector<1x128xf32>,
    %72 = vector.extract_strided_slice %9 {offsets = [31, 0], sizes = [1, 128], strides = [1, 1]} : vector<32x128xf32> to vector<1x128xf32>
    %c1_53 = arith.constant 1 : index
    %c1920_54 = arith.constant 1920 : index
    %73 = vector.load %arg8[%c1_53, %c1920_54] : memref<2x2048xf32, #tpu.memory_space<vmem>>, vector<1x128xf32>
    tpu.vector_store %arg8[%c1_53, %c1920_54], %72 {strides = array<i32>} : memref<2x2048xf32, #tpu.memory_space<vmem>>, vector<1x128xf32>,
    %c0_55 = arith.constant 0 : index
    %c0_56 = arith.constant 0 : index
    %74 = vector.load %arg8[%c0_55, %c0_56] : memref<2x2048xf32, #tpu.memory_space<vmem>>, vector<2x2048xf32>
    %c0_57 = arith.constant 0 : index
    %c0_58 = arith.constant 0 : index
    %75 = vector.load %arg3[%c0_57, %c0_58] : memref<2048x512xf32, #tpu.memory_space<vmem>>, vector<2048x512xf32>
    %cst_59 = arith.constant dense<0.000000e+00> : vector<2x512xf32>
    %76 = tpu.matmul %74, %75, %cst_59 {dimension_numbers = #tpu.dot_dimension_numbers<[1], [0], [0], [1], [0, 0, 1, 1], [], []>} : vector<2x2048xf32>, vector<2048x512xf32>, vector<2x512xf32> -> vector<2x512xf32>
    %c0_60 = arith.constant 0 : index
    %c0_61 = arith.constant 0 : index
    %77 = vector.load %arg4[%c0_60, %c0_61] : memref<1x512xf32, #tpu.memory_space<vmem>>, vector<1x512xf32>
    %78 = vector.broadcast %77 : vector<1x512xf32> to vector<2x512xf32>
    %79 = arith.addf %76, %78 : vector<2x512xf32>
    %cst_62 = arith.constant 0.000000e+00 : f32
    %80 = vector.broadcast %cst_62 : f32 to vector<2x512xf32>
    %81 = arith.maximumf %79, %80 : vector<2x512xf32>
    %c0_63 = arith.constant 0 : index
    %c0_64 = arith.constant 0 : index
    %82 = vector.load %arg5[%c0_63, %c0_64] : memref<512x128xf32, #tpu.memory_space<vmem>>, vector<512x128xf32>
    %cst_65 = arith.constant dense<0.000000e+00> : vector<2x128xf32>
    %83 = tpu.matmul %81, %82, %cst_65 {dimension_numbers = #tpu.dot_dimension_numbers<[1], [0], [0], [1], [0, 0, 1, 1], [], []>} : vector<2x512xf32>, vector<512x128xf32>, vector<2x128xf32> -> vector<2x128xf32>
    %c0_66 = arith.constant 0 : index
    %c0_67 = arith.constant 0 : index
    %84 = vector.load %arg6[%c0_66, %c0_67] : memref<1x128xf32, #tpu.memory_space<vmem>>, vector<1x128xf32>
    %85 = vector.broadcast %84 : vector<1x128xf32> to vector<2x128xf32>
    %86 = arith.addf %83, %85 : vector<2x128xf32>
    %c0_68 = arith.constant 0 : index
    %c0_69 = arith.constant 0 : index
    %87 = vector.load %arg7[%c0_68, %c0_69] : memref<2x128xf32, #tpu.memory_space<vmem>>, vector<2x128xf32>
    tpu.vector_store %arg7[%c0_68, %c0_69], %86 {strides = array<i32>} : memref<2x128xf32, #tpu.memory_space<vmem>>, vector<2x128xf32>,
    return
  }
}

</mosaic_0001>

<llo_original>
// kernel: conv_model_forward.2
$region0: #{conv_model_forward.2}
  #allocation0 [shape = 'u32[]', space=smem, size = 0x4, offset = 0x4, fixed_abs, tag = 'smem constant byte address 0x4 - core index']
  #allocation1 [shape = 'u32[72,128]{1,0:T(1,128)}', space=vmem, size = 0x9000, scoped, tag = 'internal scratch']
  %s0 = inlined_call_operand.vmem [shape: f32[2,7744,16], index: 0, kind: input, shape index: {}]
  %s1 = inlined_call_operand.vmem [shape: f32[16,32], index: 1, kind: input, shape index: {}]
  %s2 = inlined_call_operand.vmem [shape: f32[1,32], index: 2, kind: input, shape index: {}]
  %s3 = inlined_call_operand.vmem [shape: f32[2,121,32], index: 3, kind: output, shape index: {}]
  %s4 = sld [smem:[#allocation0]]
  $region45: #{conv_model_forward.2} parent=0
    _
  %s6 = ssub.s32 1, %s4
  %s7 = scalar_select 0, %s6, %s4
  loop: start=0, step=1, limit=4
  $region2: #{conv_model_forward.2} parent=0 // loop_pre_header
    _
  $region3: #{conv_model_forward.2} parent=0 // loop_header
    %s9 = sphi 0, %s13
    %p10 = scmp.ge.s32.totalorder %s9, 4
    %s19 = sphi 0, %s21
    %s22 = sphi 0, %s19
    %s23 = sphi 0, %s22
    %s39 = sphi 0, %s23
    %s43 = sphi 0, %s43
    %s45 = sphi 0, %s43
    %s46 = sphi 0, %s45
    %s60 = sphi 0, %s46
    %s64 = sphi 0, %s64
    %s66 = sphi 0, %s64
    %s67 = sphi 0, %s66
    %s81 = sphi 0, %s67
    %s87 = sphi 0, %s89
    %s90 = sphi 0, %s87
    %s91 = sphi 0, %s90
    %s107 = sphi 0, %s91
  $region4: #{conv_model_forward.2} parent=0 // loop_header_branch
    %12 = sbr.rel (%p10) target = $region8
  $region5: #{conv_model_forward.2} parent=0 // loop_body
    %s14 = ssub.s32 %s9, 1
    %s15 = ssub.s32 %s9, 2
    %s16 = sadd.s32 %s9, 1
    %s17 = ssub.s32 %s9, %s16
    %p18 = scmp.eq.s32.totalorder %s17, 0
    %s20 = sadd.s32 %s19, 1
    %s21 = scalar_select %p18, %s19, %s20
    %p24 = pneg %p18
    %p25 = scmp.eq.s32.totalorder %s9, 1
    %p26 = por %p24, %p25
    %p27 = scmp.ne.s32.totalorder %s19, %s22
    %p28 = scmp.eq.s32.totalorder %s9, 0
    %p29 = por %p27, %p28
    %p30 = scmp.ne.s32.totalorder %s19, %s22
    %p31 = scmp.eq.s32.totalorder %s14, 1
    %p32 = por %p30, %p31
    %p33 = scmp.ne.s32.totalorder %s22, %s23
    %p34 = scmp.eq.s32.totalorder %s14, 0
    %p35 = por %p33, %p34
    %p36 = scmp.ne.s32.totalorder %s22, %s23
    %p37 = scmp.eq.s32.totalorder %s15, 1
    %p38 = por %p36, %p37
    %p40 = scmp.ne.s32.totalorder %s23, %s39
    %p41 = scmp.eq.s32.totalorder %s15, 0
    %p42 = por %p40, %p41
    %s44 = sadd.s32 %s43, 1
    %p47 = scmp.eq.s32.totalorder %s9, 1
    %p48 = scmp.ne.s32.totalorder %s43, %s45
    %p49 = scmp.eq.s32.totalorder %s9, 0
    %p50 = por %p48, %p49
    %p51 = scmp.ne.s32.totalorder %s43, %s45
    %p52 = scmp.eq.s32.totalorder %s14, 1
    %p53 = por %p51, %p52
    %p54 = scmp.ne.s32.totalorder %s45, %s46
    %p55 = scmp.eq.s32.totalorder %s14, 0
    %p56 = por %p54, %p55
    %p57 = scmp.ne.s32.totalorder %s45, %s46
    %p58 = scmp.eq.s32.totalorder %s15, 1
    %p59 = por %p57, %p58
    %p61 = scmp.ne.s32.totalorder %s46, %s60
    %p62 = scmp.eq.s32.totalorder %s15, 0
    %p63 = por %p61, %p62
    %s65 = sadd.s32 %s64, 1
    %p68 = scmp.eq.s32.totalorder %s9, 1
    %p69 = scmp.ne.s32.totalorder %s64, %s66
    %p70 = scmp.eq.s32.totalorder %s9, 0
    %p71 = por %p69, %p70
    %p72 = scmp.ne.s32.totalorder %s64, %s66
    %p73 = scmp.eq.s32.totalorder %s14, 1
    %p74 = por %p72, %p73
    %p75 = scmp.ne.s32.totalorder %s66, %s67
    %p76 = scmp.eq.s32.totalorder %s14, 0
    %p77 = por %p75, %p76
    %p78 = scmp.ne.s32.totalorder %s66, %s67
    %p79 = scmp.eq.s32.totalorder %s15, 1
    %p80 = por %p78, %p79
    %p82 = scmp.ne.s32.totalorder %s67, %s81
    %p83 = scmp.eq.s32.totalorder %s15, 0
    %p84 = por %p82, %p83
    %s85 = ssub.s32 %s9, %s16
    %p86 = scmp.eq.s32.totalorder %s85, 0
    %s88 = sadd.s32 %s87, 1
    %s89 = scalar_select %p86, %s87, %s88
    %p92 = pneg %p86
    %p93 = scmp.eq.s32.totalorder %s9, 1
    %p94 = por %p92, %p93
    %p95 = scmp.ne.s32.totalorder %s87, %s90
    %p96 = scmp.eq.s32.totalorder %s9, 0
    %p97 = por %p95, %p96
    %p98 = scmp.ne.s32.totalorder %s87, %s90
    %p99 = scmp.eq.s32.totalorder %s14, 1
    %p100 = por %p98, %p99
    %p101 = scmp.ne.s32.totalorder %s90, %s91
    %p102 = scmp.eq.s32.totalorder %s14, 0
    %p103 = por %p101, %p102
    %p104 = scmp.ne.s32.totalorder %s90, %s91
    %p105 = scmp.eq.s32.totalorder %s15, 1
    %p106 = por %p104, %p105
    %p108 = scmp.ne.s32.totalorder %s91, %s107
    %p109 = scmp.eq.s32.totalorder %s15, 0
    %p110 = por %p108, %p109
    %p111 = scmp.le.s32.totalorder 1, %s9
    %p112 = scmp.lt.s32.totalorder %s9, 3
    %p113 = pnand %p111, %p112
    %p114 = pneg %p113
    // Predicated region
    $region9: #{conv_model_forward.2} parent=5 // pred_check
      _
    $region10: #{conv_model_forward.2} parent=5 // pred_check_branch
      %116 = sbr.rel (%p113) target = $region12
    $region11: #{conv_model_forward.2} parent=5 // pred_region
      %s117 = ssub.s32 %s9, 1
      // Predicated region
      $region13: #{conv_model_forward.2} parent=11 // pred_check
        %p118 = pneg %p56
      $region14: #{conv_model_forward.2} parent=11 // pred_check_branch
        %120 = sbr.rel (%p118) target = $region16
      $region15: #{conv_model_forward.2} parent=11 // pred_region
        _
      $region16: #{conv_model_forward.2} parent=11 // pred_fallthru
        _
      // Predicated region
      $region17: #{conv_model_forward.2} parent=11 // pred_check
        %p121 = pneg %p77
      $region18: #{conv_model_forward.2} parent=11 // pred_check_branch
        %123 = sbr.rel (%p121) target = $region20
      $region19: #{conv_model_forward.2} parent=11 // pred_region
        _
      $region20: #{conv_model_forward.2} parent=11 // pred_fallthru
        _
    $region12: #{conv_model_forward.2} parent=5 // pred_fallthru
      _
    %p124 = scmp.lt.s32.totalorder %s9, 2
    // Predicated region
    $region21: #{conv_model_forward.2} parent=5 // pred_check
      %p125 = pneg %p124
    $region22: #{conv_model_forward.2} parent=5 // pred_check_branch
      %127 = sbr.rel (%p125) target = $region24
    $region23: #{conv_model_forward.2} parent=5 // pred_region
      // Predicated region
      $region25: #{conv_model_forward.2} parent=23 // pred_check
        %p128 = pneg %p29
      $region26: #{conv_model_forward.2} parent=23 // pred_check_branch
        %130 = sbr.rel (%p128) target = $region28
      $region27: #{conv_model_forward.2} parent=23 // pred_region
        %p131 = scmp.lt.s32.totalorder %s9, 1
        %s132 = scalar_select %p131, %s9, 1
        %s133 = smul.addr %s132, 968
        %s134 = smul.addr %s133, 8
        %s135 = scalar_lea.vmem %s0, %s134
      $region28: #{conv_model_forward.2} parent=23 // pred_fallthru
        _
    $region24: #{conv_model_forward.2} parent=5 // pred_fallthru
      _
    %p136 = scmp.le.s32.totalorder 1, %s9
    %p137 = scmp.lt.s32.totalorder %s9, 3
    %p138 = pnand %p136, %p137
    %p139 = pneg %p138
    // Predicated region
    $region29: #{conv_model_forward.2} parent=5 // pred_check
      _
    $region30: #{conv_model_forward.2} parent=5 // pred_check_branch
      %141 = sbr.rel (%p138) target = $region32
    $region31: #{conv_model_forward.2} parent=5 // pred_region
      %s142 = ssub.s32 %s9, 1
      %p143 = scmp.lt.s32.totalorder %s14, 1
      %s144 = scalar_select %p143, %s14, 1
      %s145 = smul.addr %s144, 968
      %s146 = smul.addr %s145, 8
      %s147 = scalar_lea.vmem %s0, %s146
      %p148 = pneg %p35
      %p149 = pneg %p32
      %p150 = pneg %p56
      %p151 = pneg %p53
      %p152 = pneg %p77
      %p153 = pneg %p74
      %p154 = pneg %p103
      %p155 = pneg %p100
      %p156 = scmp.lt.s32.totalorder %s14, 1
      %s157 = scalar_select %p156, %s14, 1
      %s158 = smul.addr %s157, 16
      %s159 = smul.addr %s158, 8
      %s160 = scalar_lea.vmem %s3, %s159
      %p161 = scmp.lt.s32.totalorder %s14, 1
      %s162 = scalar_select %p161, %s14, 1
      %s163 = smul.addr %s162, 968
      %s164 = smul.addr %s163, 8
      %s165 = scalar_lea.vmem %s0, %s164
      %p166 = scmp.lt.s32.totalorder %s14, 1
      %s167 = scalar_select %p166, %s14, 1
      %s168 = smul.addr %s167, 16
      %s169 = smul.addr %s168, 8
      %s170 = scalar_lea.vmem %s3, %s169
      %v171 = vld [vmem:[%s165] sm:$0xff]
      %v172 = vld [vmem:[%s165 + $0x8] sm:$0xff]
      %v173 = vld [vmem:[%s165 + $0x10] sm:$0xff]
      %v174 = vld [vmem:[%s165 + $0x18] sm:$0xff]
      %v175 = vld [vmem:[%s165 + $0x20] sm:$0xff]
      %v176 = vld [vmem:[%s165 + $0x28] sm:$0xff]
      %v177 = vld [vmem:[%s165 + $0x30] sm:$0xff]
      %v178 = vld [vmem:[%s165 + $0x38] sm:$0xff]
      %v179 = vld [vmem:[%s165 + $0x40] sm:$0xff]
      %v180 = vld [vmem:[%s165 + $0x48] sm:$0xff]
      %v181 = vld [vmem:[%s165 + $0x50] sm:$0xff]
      %v182 = vld [vmem:[%s165 + $0x58] sm:$0xff]
      %v183 = vld [vmem:[%s165 + $0x60] sm:$0xff]
      %v184 = vld [vmem:[%s165 + $0x68] sm:$0xff]
      %v185 = vld [vmem:[%s165 + $0x70] sm:$0xff]
      %v186 = vld [vmem:[%s165 + $0x78] sm:$0xff]
      %v187 = vld [vmem:[%s165 + $0x80] sm:$0xff]
      %v188 = vld [vmem:[%s165 + $0x88] sm:$0xff]
      %v189 = vld [vmem:[%s165 + $0x90] sm:$0xff]
      %v190 = vld [vmem:[%s165 + $0x98] sm:$0xff]
      %v191 = vld [vmem:[%s165 + $0xa0] sm:$0xff]
      %v192 = vld [vmem:[%s165 + $0xa8] sm:$0xff]
      %v193 = vld [vmem:[%s165 + $0xb0] sm:$0xff]
      %v194 = vld [vmem:[%s165 + $0xb8] sm:$0xff]
      %v195 = vld [vmem:[%s165 + $0xc0] sm:$0xff]
      %v196 = vld [vmem:[%s165 + $0xc8] sm:$0xff]
      %v197 = vld [vmem:[%s165 + $0xd0] sm:$0xff]
      %v198 = vld [vmem:[%s165 + $0xd8] sm:$0xff]
      %v199 = vld [vmem:[%s165 + $0xe0] sm:$0xff]
      %v200 = vld [vmem:[%s165 + $0xe8] sm:$0xff]
      %v201 = vld [vmem:[%s165 + $0xf0] sm:$0xff]
      %v202 = vld [vmem:[%s165 + $0xf8] sm:$0xff]
      %v203 = vld [vmem:[%s165 + $0x100] sm:$0xff]
      %v204 = vld [vmem:[%s165 + $0x108] sm:$0xff]
      %v205 = vld [vmem:[%s165 + $0x110] sm:$0xff]
      %v206 = vld [vmem:[%s165 + $0x118] sm:$0xff]
      %v207 = vld [vmem:[%s165 + $0x120] sm:$0xff]
      %v208 = vld [vmem:[%s165 + $0x128] sm:$0xff]
      %v209 = vld [vmem:[%s165 + $0x130] sm:$0xff]
      %v210 = vld [vmem:[%s165 + $0x138] sm:$0xff]
      %v211 = vld [vmem:[%s165 + $0x140] sm:$0xff]
      %v212 = vld [vmem:[%s165 + $0x148] sm:$0xff]
      %v213 = vld [vmem:[%s165 + $0x150] sm:$0xff]
      %v214 = vld [vmem:[%s165 + $0x158] sm:$0xff]
      %v215 = vld [vmem:[%s165 + $0x160] sm:$0xff]
      %v216 = vld [vmem:[%s165 + $0x168] sm:$0xff]
      %v217 = vld [vmem:[%s165 + $0x170] sm:$0xff]
      %v218 = vld [vmem:[%s165 + $0x178] sm:$0xff]
      %v219 = vld [vmem:[%s165 + $0x180] sm:$0xff]
      %v220 = vld [vmem:[%s165 + $0x188] sm:$0xff]
      %v221 = vld [vmem:[%s165 + $0x190] sm:$0xff]
      %v222 = vld [vmem:[%s165 + $0x198] sm:$0xff]
      %v223 = vld [vmem:[%s165 + $0x1a0] sm:$0xff]
      %v224 = vld [vmem:[%s165 + $0x1a8] sm:$0xff]
      %v225 = vld [vmem:[%s165 + $0x1b0] sm:$0xff]
      %v226 = vld [vmem:[%s165 + $0x1b8] sm:$0xff]
      %v227 = vld [vmem:[%s165 + $0x1c0] sm:$0xff]
      %v228 = vld [vmem:[%s165 + $0x1c8] sm:$0xff]
      %v229 = vld [vmem:[%s165 + $0x1d0] sm:$0xff]
      %v230 = vld [vmem:[%s165 + $0x1d8] sm:$0xff]
      %v231 = vld [vmem:[%s165 + $0x1e0] sm:$0xff]
      %v232 = vld [vmem:[%s165 + $0x1e8] sm:$0xff]
      %v233 = vld [vmem:[%s165 + $0x1f0] sm:$0xff]
      %v234 = vld [vmem:[%s165 + $0x1f8] sm:$0xff]
      %v235 = vld [vmem:[%s165 + $0x200] sm:$0xff]
      %v236 = vld [vmem:[%s165 + $0x208] sm:$0xff]
      %v237 = vld [vmem:[%s165 + $0x210] sm:$0xff]
      %v238 = vld [vmem:[%s165 + $0x218] sm:$0xff]
      %v239 = vld [vmem:[%s165 + $0x220] sm:$0xff]
      %v240 = vld [vmem:[%s165 + $0x228] sm:$0xff]
      %v241 = vld [vmem:[%s165 + $0x230] sm:$0xff]
      %v242 = vld [vmem:[%s165 + $0x238] sm:$0xff]
      %v243 = vld [vmem:[%s165 + $0x240] sm:$0xff]
      %v244 = vld [vmem:[%s165 + $0x248] sm:$0xff]
      %v245 = vld [vmem:[%s165 + $0x250] sm:$0xff]
      %v246 = vld [vmem:[%s165 + $0x258] sm:$0xff]
      %v247 = vld [vmem:[%s165 + $0x260] sm:$0xff]
      %v248 = vld [vmem:[%s165 + $0x268] sm:$0xff]
      %v249 = vld [vmem:[%s165 + $0x270] sm:$0xff]
      %v250 = vld [vmem:[%s165 + $0x278] sm:$0xff]
      %v251 = vld [vmem:[%s165 + $0x280] sm:$0xff]
      %v252 = vld [vmem:[%s165 + $0x288] sm:$0xff]
      %v253 = vld [vmem:[%s165 + $0x290] sm:$0xff]
      %v254 = vld [vmem:[%s165 + $0x298] sm:$0xff]
      %v255 = vld [vmem:[%s165 + $0x2a0] sm:$0xff]
      %v256 = vld [vmem:[%s165 + $0x2a8] sm:$0xff]
      %v257 = vld [vmem:[%s165 + $0x2b0] sm:$0xff]
      %v258 = vld [vmem:[%s165 + $0x2b8] sm:$0xff]
      %v259 = vld [vmem:[%s165 + $0x2c0] sm:$0xff]
      %v260 = vld [vmem:[%s165 + $0x2c8] sm:$0xff]
      %v261 = vld [vmem:[%s165 + $0x2d0] sm:$0xff]
      %v262 = vld [vmem:[%s165 + $0x2d8] sm:$0xff]
      %v263 = vld [vmem:[%s165 + $0x2e0] sm:$0xff]
      %v264 = vld [vmem:[%s165 + $0x2e8] sm:$0xff]
      %v265 = vld [vmem:[%s165 + $0x2f0] sm:$0xff]
      %v266 = vld [vmem:[%s165 + $0x2f8] sm:$0xff]
      %v267 = vld [vmem:[%s165 + $0x300] sm:$0xff]
      %v268 = vld [vmem:[%s165 + $0x308] sm:$0xff]
      %v269 = vld [vmem:[%s165 + $0x310] sm:$0xff]
      %v270 = vld [vmem:[%s165 + $0x318] sm:$0xff]
      %v271 = vld [vmem:[%s165 + $0x320] sm:$0xff]
      %v272 = vld [vmem:[%s165 + $0x328] sm:$0xff]
      %v273 = vld [vmem:[%s165 + $0x330] sm:$0xff]
      %v274 = vld [vmem:[%s165 + $0x338] sm:$0xff]
      %v275 = vld [vmem:[%s165 + $0x340] sm:$0xff]
      %v276 = vld [vmem:[%s165 + $0x348] sm:$0xff]
      %v277 = vld [vmem:[%s165 + $0x350] sm:$0xff]
      %v278 = vld [vmem:[%s165 + $0x358] sm:$0xff]
      %v279 = vld [vmem:[%s165 + $0x360] sm:$0xff]
      %v280 = vld [vmem:[%s165 + $0x368] sm:$0xff]
      %v281 = vld [vmem:[%s165 + $0x370] sm:$0xff]
      %v282 = vld [vmem:[%s165 + $0x378] sm:$0xff]
      %v283 = vld [vmem:[%s165 + $0x380] sm:$0xff]
      %v284 = vld [vmem:[%s165 + $0x388] sm:$0xff]
      %v285 = vld [vmem:[%s165 + $0x390] sm:$0xff]
      %v286 = vld [vmem:[%s165 + $0x398] sm:$0xff]
      %v287 = vld [vmem:[%s165 + $0x3a0] sm:$0xff]
      %v288 = vld [vmem:[%s165 + $0x3a8] sm:$0xff]
      %v289 = vld [vmem:[%s165 + $0x3b0] sm:$0xff]
      %v290 = vld [vmem:[%s165 + $0x3b8] sm:$0xff]
      %v291 = vld [vmem:[%s165 + $0x3c0] sm:$0xff]
      %v292 = vld [vmem:[%s165 + $0x3c8] sm:$0xff]
      %v293 = vld [vmem:[%s165 + $0x3d0] sm:$0xff]
      %v294 = vld [vmem:[%s165 + $0x3d8] sm:$0xff]
      %v295 = vld [vmem:[%s165 + $0x3e0] sm:$0xff]
      %v296 = vld [vmem:[%s165 + $0x3e8] sm:$0xff]
      %v297 = vld [vmem:[%s165 + $0x3f0] sm:$0xff]
      %v298 = vld [vmem:[%s165 + $0x3f8] sm:$0xff]
      %v299 = vld [vmem:[%s165 + $0x400] sm:$0xff]
      %v300 = vld [vmem:[%s165 + $0x408] sm:$0xff]
      %v301 = vld [vmem:[%s165 + $0x410] sm:$0xff]
      %v302 = vld [vmem:[%s165 + $0x418] sm:$0xff]
      %v303 = vld [vmem:[%s165 + $0x420] sm:$0xff]
      %v304 = vld [vmem:[%s165 + $0x428] sm:$0xff]
      %v305 = vld [vmem:[%s165 + $0x430] sm:$0xff]
      %v306 = vld [vmem:[%s165 + $0x438] sm:$0xff]
      %v307 = vld [vmem:[%s165 + $0x440] sm:$0xff]
      %v308 = vld [vmem:[%s165 + $0x448] sm:$0xff]
      %v309 = vld [vmem:[%s165 + $0x450] sm:$0xff]
      %v310 = vld [vmem:[%s165 + $0x458] sm:$0xff]
      %v311 = vld [vmem:[%s165 + $0x460] sm:$0xff]
      %v312 = vld [vmem:[%s165 + $0x468] sm:$0xff]
      %v313 = vld [vmem:[%s165 + $0x470] sm:$0xff]
      %v314 = vld [vmem:[%s165 + $0x478] sm:$0xff]
      %v315 = vld [vmem:[%s165 + $0x480] sm:$0xff]
      %v316 = vld [vmem:[%s165 + $0x488] sm:$0xff]
      %v317 = vld [vmem:[%s165 + $0x490] sm:$0xff]
      %v318 = vld [vmem:[%s165 + $0x498] sm:$0xff]
      %v319 = vld [vmem:[%s165 + $0x4a0] sm:$0xff]
      %v320 = vld [vmem:[%s165 + $0x4a8] sm:$0xff]
      %v321 = vld [vmem:[%s165 + $0x4b0] sm:$0xff]
      %v322 = vld [vmem:[%s165 + $0x4b8] sm:$0xff]
      %v323 = vld [vmem:[%s165 + $0x4c0] sm:$0xff]
      %v324 = vld [vmem:[%s165 + $0x4c8] sm:$0xff]
      %v325 = vld [vmem:[%s165 + $0x4d0] sm:$0xff]
      %v326 = vld [vmem:[%s165 + $0x4d8] sm:$0xff]
      %v327 = vld [vmem:[%s165 + $0x4e0] sm:$0xff]
      %v328 = vld [vmem:[%s165 + $0x4e8] sm:$0xff]
      %v329 = vld [vmem:[%s165 + $0x4f0] sm:$0xff]
      %v330 = vld [vmem:[%s165 + $0x4f8] sm:$0xff]
      %v331 = vld [vmem:[%s165 + $0x500] sm:$0xff]
      %v332 = vld [vmem:[%s165 + $0x508] sm:$0xff]
      %v333 = vld [vmem:[%s165 + $0x510] sm:$0xff]
      %v334 = vld [vmem:[%s165 + $0x518] sm:$0xff]
      %v335 = vld [vmem:[%s165 + $0x520] sm:$0xff]
      %v336 = vld [vmem:[%s165 + $0x528] sm:$0xff]
      %v337 = vld [vmem:[%s165 + $0x530] sm:$0xff]
      %v338 = vld [vmem:[%s165 + $0x538] sm:$0xff]
      %v339 = vld [vmem:[%s165 + $0x540] sm:$0xff]
      %v340 = vld [vmem:[%s165 + $0x548] sm:$0xff]
      %v341 = vld [vmem:[%s165 + $0x550] sm:$0xff]
      %v342 = vld [vmem:[%s165 + $0x558] sm:$0xff]
      %v343 = vld [vmem:[%s165 + $0x560] sm:$0xff]
      %v344 = vld [vmem:[%s165 + $0x568] sm:$0xff]
      %v345 = vld [vmem:[%s165 + $0x570] sm:$0xff]
      %v346 = vld [vmem:[%s165 + $0x578] sm:$0xff]
      %v347 = vld [vmem:[%s165 + $0x580] sm:$0xff]
      %v348 = vld [vmem:[%s165 + $0x588] sm:$0xff]
      %v349 = vld [vmem:[%s165 + $0x590] sm:$0xff]
      %v350 = vld [vmem:[%s165 + $0x598] sm:$0xff]
      %v351 = vld [vmem:[%s165 + $0x5a0] sm:$0xff]
      %v352 = vld [vmem:[%s165 + $0x5a8] sm:$0xff]
      %v353 = vld [vmem:[%s165 + $0x5b0] sm:$0xff]
      %v354 = vld [vmem:[%s165 + $0x5b8] sm:$0xff]
      %v355 = vld [vmem:[%s165 + $0x5c0] sm:$0xff]
      %v356 = vld [vmem:[%s165 + $0x5c8] sm:$0xff]
      %v357 = vld [vmem:[%s165 + $0x5d0] sm:$0xff]
      %v358 = vld [vmem:[%s165 + $0x5d8] sm:$0xff]
      %v359 = vld [vmem:[%s165 + $0x5e0] sm:$0xff]
      %v360 = vld [vmem:[%s165 + $0x5e8] sm:$0xff]
      %v361 = vld [vmem:[%s165 + $0x5f0] sm:$0xff]
      %v362 = vld [vmem:[%s165 + $0x5f8] sm:$0xff]
      %v363 = vld [vmem:[%s165 + $0x600] sm:$0xff]
      %v364 = vld [vmem:[%s165 + $0x608] sm:$0xff]
      %v365 = vld [vmem:[%s165 + $0x610] sm:$0xff]
      %v366 = vld [vmem:[%s165 + $0x618] sm:$0xff]
      %v367 = vld [vmem:[%s165 + $0x620] sm:$0xff]
      %v368 = vld [vmem:[%s165 + $0x628] sm:$0xff]
      %v369 = vld [vmem:[%s165 + $0x630] sm:$0xff]
      %v370 = vld [vmem:[%s165 + $0x638] sm:$0xff]
      %v371 = vld [vmem:[%s165 + $0x640] sm:$0xff]
      %v372 = vld [vmem:[%s165 + $0x648] sm:$0xff]
      %v373 = vld [vmem:[%s165 + $0x650] sm:$0xff]
      %v374 = vld [vmem:[%s165 + $0x658] sm:$0xff]
      %v375 = vld [vmem:[%s165 + $0x660] sm:$0xff]
      %v376 = vld [vmem:[%s165 + $0x668] sm:$0xff]
      %v377 = vld [vmem:[%s165 + $0x670] sm:$0xff]
      %v378 = vld [vmem:[%s165 + $0x678] sm:$0xff]
      %v379 = vld [vmem:[%s165 + $0x680] sm:$0xff]
      %v380 = vld [vmem:[%s165 + $0x688] sm:$0xff]
      %v381 = vld [vmem:[%s165 + $0x690] sm:$0xff]
      %v382 = vld [vmem:[%s165 + $0x698] sm:$0xff]
      %v383 = vld [vmem:[%s165 + $0x6a0] sm:$0xff]
      %v384 = vld [vmem:[%s165 + $0x6a8] sm:$0xff]
      %v385 = vld [vmem:[%s165 + $0x6b0] sm:$0xff]
      %v386 = vld [vmem:[%s165 + $0x6b8] sm:$0xff]
      %v387 = vld [vmem:[%s165 + $0x6c0] sm:$0xff]
      %v388 = vld [vmem:[%s165 + $0x6c8] sm:$0xff]
      %v389 = vld [vmem:[%s165 + $0x6d0] sm:$0xff]
      %v390 = vld [vmem:[%s165 + $0x6d8] sm:$0xff]
      %v391 = vld [vmem:[%s165 + $0x6e0] sm:$0xff]
      %v392 = vld [vmem:[%s165 + $0x6e8] sm:$0xff]
      %v393 = vld [vmem:[%s165 + $0x6f0] sm:$0xff]
      %v394 = vld [vmem:[%s165 + $0x6f8] sm:$0xff]
      %v395 = vld [vmem:[%s165 + $0x700] sm:$0xff]
      %v396 = vld [vmem:[%s165 + $0x708] sm:$0xff]
      %v397 = vld [vmem:[%s165 + $0x710] sm:$0xff]
      %v398 = vld [vmem:[%s165 + $0x718] sm:$0xff]
      %v399 = vld [vmem:[%s165 + $0x720] sm:$0xff]
      %v400 = vld [vmem:[%s165 + $0x728] sm:$0xff]
      %v401 = vld [vmem:[%s165 + $0x730] sm:$0xff]
      %v402 = vld [vmem:[%s165 + $0x738] sm:$0xff]
      %v403 = vld [vmem:[%s165 + $0x740] sm:$0xff]
      %v404 = vld [vmem:[%s165 + $0x748] sm:$0xff]
      %v405 = vld [vmem:[%s165 + $0x750] sm:$0xff]
      %v406 = vld [vmem:[%s165 + $0x758] sm:$0xff]
      %v407 = vld [vmem:[%s165 + $0x760] sm:$0xff]
      %v408 = vld [vmem:[%s165 + $0x768] sm:$0xff]
      %v409 = vld [vmem:[%s165 + $0x770] sm:$0xff]
      %v410 = vld [vmem:[%s165 + $0x778] sm:$0xff]
      %v411 = vld [vmem:[%s165 + $0x780] sm:$0xff]
      %v412 = vld [vmem:[%s165 + $0x788] sm:$0xff]
      %v413 = vld [vmem:[%s165 + $0x790] sm:$0xff]
      %v414 = vld [vmem:[%s165 + $0x798] sm:$0xff]
      %v415 = vld [vmem:[%s165 + $0x7a0] sm:$0xff]
      %v416 = vld [vmem:[%s165 + $0x7a8] sm:$0xff]
      %v417 = vld [vmem:[%s165 + $0x7b0] sm:$0xff]
      %v418 = vld [vmem:[%s165 + $0x7b8] sm:$0xff]
      %v419 = vld [vmem:[%s165 + $0x7c0] sm:$0xff]
      %v420 = vld [vmem:[%s165 + $0x7c8] sm:$0xff]
      %v421 = vld [vmem:[%s165 + $0x7d0] sm:$0xff]
      %v422 = vld [vmem:[%s165 + $0x7d8] sm:$0xff]
      %v423 = vld [vmem:[%s165 + $0x7e0] sm:$0xff]
      %v424 = vld [vmem:[%s165 + $0x7e8] sm:$0xff]
      %v425 = vld [vmem:[%s165 + $0x7f0] sm:$0xff]
      %v426 = vld [vmem:[%s165 + $0x7f8] sm:$0xff]
      %v427 = vld [vmem:[%s165 + $0x800] sm:$0xff]
      %v428 = vld [vmem:[%s165 + $0x808] sm:$0xff]
      %v429 = vld [vmem:[%s165 + $0x810] sm:$0xff]
      %v430 = vld [vmem:[%s165 + $0x818] sm:$0xff]
      %v431 = vld [vmem:[%s165 + $0x820] sm:$0xff]
      %v432 = vld [vmem:[%s165 + $0x828] sm:$0xff]
      %v433 = vld [vmem:[%s165 + $0x830] sm:$0xff]
      %v434 = vld [vmem:[%s165 + $0x838] sm:$0xff]
      %v435 = vld [vmem:[%s165 + $0x840] sm:$0xff]
      %v436 = vld [vmem:[%s165 + $0x848] sm:$0xff]
      %v437 = vld [vmem:[%s165 + $0x850] sm:$0xff]
      %v438 = vld [vmem:[%s165 + $0x858] sm:$0xff]
      %v439 = vld [vmem:[%s165 + $0x860] sm:$0xff]
      %v440 = vld [vmem:[%s165 + $0x868] sm:$0xff]
      %v441 = vld [vmem:[%s165 + $0x870] sm:$0xff]
      %v442 = vld [vmem:[%s165 + $0x878] sm:$0xff]
      %v443 = vld [vmem:[%s165 + $0x880] sm:$0xff]
      %v444 = vld [vmem:[%s165 + $0x888] sm:$0xff]
      %v445 = vld [vmem:[%s165 + $0x890] sm:$0xff]
      %v446 = vld [vmem:[%s165 + $0x898] sm:$0xff]
      %v447 = vld [vmem:[%s165 + $0x8a0] sm:$0xff]
      %v448 = vld [vmem:[%s165 + $0x8a8] sm:$0xff]
      %v449 = vld [vmem:[%s165 + $0x8b0] sm:$0xff]
      %v450 = vld [vmem:[%s165 + $0x8b8] sm:$0xff]
      %v451 = vld [vmem:[%s165 + $0x8c0] sm:$0xff]
      %v452 = vld [vmem:[%s165 + $0x8c8] sm:$0xff]
      %v453 = vld [vmem:[%s165 + $0x8d0] sm:$0xff]
      %v454 = vld [vmem:[%s165 + $0x8d8] sm:$0xff]
      %v455 = vld [vmem:[%s165 + $0x8e0] sm:$0xff]
      %v456 = vld [vmem:[%s165 + $0x8e8] sm:$0xff]
      %v457 = vld [vmem:[%s165 + $0x8f0] sm:$0xff]
      %v458 = vld [vmem:[%s165 + $0x8f8] sm:$0xff]
      %v459 = vld [vmem:[%s165 + $0x900] sm:$0xff]
      %v460 = vld [vmem:[%s165 + $0x908] sm:$0xff]
      %v461 = vld [vmem:[%s165 + $0x910] sm:$0xff]
      %v462 = vld [vmem:[%s165 + $0x918] sm:$0xff]
      %v463 = vld [vmem:[%s165 + $0x920] sm:$0xff]
      %v464 = vld [vmem:[%s165 + $0x928] sm:$0xff]
      %v465 = vld [vmem:[%s165 + $0x930] sm:$0xff]
      %v466 = vld [vmem:[%s165 + $0x938] sm:$0xff]
      %v467 = vld [vmem:[%s165 + $0x940] sm:$0xff]
      %v468 = vld [vmem:[%s165 + $0x948] sm:$0xff]
      %v469 = vld [vmem:[%s165 + $0x950] sm:$0xff]
      %v470 = vld [vmem:[%s165 + $0x958] sm:$0xff]
      %v471 = vld [vmem:[%s165 + $0x960] sm:$0xff]
      %v472 = vld [vmem:[%s165 + $0x968] sm:$0xff]
      %v473 = vld [vmem:[%s165 + $0x970] sm:$0xff]
      %v474 = vld [vmem:[%s165 + $0x978] sm:$0xff]
      %v475 = vld [vmem:[%s165 + $0x980] sm:$0xff]
      %v476 = vld [vmem:[%s165 + $0x988] sm:$0xff]
      %v477 = vld [vmem:[%s165 + $0x990] sm:$0xff]
      %v478 = vld [vmem:[%s165 + $0x998] sm:$0xff]
      %v479 = vld [vmem:[%s165 + $0x9a0] sm:$0xff]
      %v480 = vld [vmem:[%s165 + $0x9a8] sm:$0xff]
      %v481 = vld [vmem:[%s165 + $0x9b0] sm:$0xff]
      %v482 = vld [vmem:[%s165 + $0x9b8] sm:$0xff]
      %v483 = vld [vmem:[%s165 + $0x9c0] sm:$0xff]
      %v484 = vld [vmem:[%s165 + $0x9c8] sm:$0xff]
      %v485 = vld [vmem:[%s165 + $0x9d0] sm:$0xff]
      %v486 = vld [vmem:[%s165 + $0x9d8] sm:$0xff]
      %v487 = vld [vmem:[%s165 + $0x9e0] sm:$0xff]
      %v488 = vld [vmem:[%s165 + $0x9e8] sm:$0xff]
      %v489 = vld [vmem:[%s165 + $0x9f0] sm:$0xff]
      %v490 = vld [vmem:[%s165 + $0x9f8] sm:$0xff]
      %v491 = vld [vmem:[%s165 + $0xa00] sm:$0xff]
      %v492 = vld [vmem:[%s165 + $0xa08] sm:$0xff]
      %v493 = vld [vmem:[%s165 + $0xa10] sm:$0xff]
      %v494 = vld [vmem:[%s165 + $0xa18] sm:$0xff]
      %v495 = vld [vmem:[%s165 + $0xa20] sm:$0xff]
      %v496 = vld [vmem:[%s165 + $0xa28] sm:$0xff]
      %v497 = vld [vmem:[%s165 + $0xa30] sm:$0xff]
      %v498 = vld [vmem:[%s165 + $0xa38] sm:$0xff]
      %v499 = vld [vmem:[%s165 + $0xa40] sm:$0xff]
      %v500 = vld [vmem:[%s165 + $0xa48] sm:$0xff]
      %v501 = vld [vmem:[%s165 + $0xa50] sm:$0xff]
      %v502 = vld [vmem:[%s165 + $0xa58] sm:$0xff]
      %v503 = vld [vmem:[%s165 + $0xa60] sm:$0xff]
      %v504 = vld [vmem:[%s165 + $0xa68] sm:$0xff]
      %v505 = vld [vmem:[%s165 + $0xa70] sm:$0xff]
      %v506 = vld [vmem:[%s165 + $0xa78] sm:$0xff]
      %v507 = vld [vmem:[%s165 + $0xa80] sm:$0xff]
      %v508 = vld [vmem:[%s165 + $0xa88] sm:$0xff]
      %v509 = vld [vmem:[%s165 + $0xa90] sm:$0xff]
      %v510 = vld [vmem:[%s165 + $0xa98] sm:$0xff]
      %v511 = vld [vmem:[%s165 + $0xaa0] sm:$0xff]
      %v512 = vld [vmem:[%s165 + $0xaa8] sm:$0xff]
      %v513 = vld [vmem:[%s165 + $0xab0] sm:$0xff]
      %v514 = vld [vmem:[%s165 + $0xab8] sm:$0xff]
      %v515 = vld [vmem:[%s165 + $0xac0] sm:$0xff]
      %v516 = vld [vmem:[%s165 + $0xac8] sm:$0xff]
      %v517 = vld [vmem:[%s165 + $0xad0] sm:$0xff]
      %v518 = vld [vmem:[%s165 + $0xad8] sm:$0xff]
      %v519 = vld [vmem:[%s165 + $0xae0] sm:$0xff]
      %v520 = vld [vmem:[%s165 + $0xae8] sm:$0xff]
      %v521 = vld [vmem:[%s165 + $0xaf0] sm:$0xff]
      %v522 = vld [vmem:[%s165 + $0xaf8] sm:$0xff]
      %v523 = vld [vmem:[%s165 + $0xb00] sm:$0xff]
      %v524 = vld [vmem:[%s165 + $0xb08] sm:$0xff]
      %v525 = vld [vmem:[%s165 + $0xb10] sm:$0xff]
      %v526 = vld [vmem:[%s165 + $0xb18] sm:$0xff]
      %v527 = vld [vmem:[%s165 + $0xb20] sm:$0xff]
      %v528 = vld [vmem:[%s165 + $0xb28] sm:$0xff]
      %v529 = vld [vmem:[%s165 + $0xb30] sm:$0xff]
      %v530 = vld [vmem:[%s165 + $0xb38] sm:$0xff]
      %v531 = vld [vmem:[%s165 + $0xb40] sm:$0xff]
      %v532 = vld [vmem:[%s165 + $0xb48] sm:$0xff]
      %v533 = vld [vmem:[%s165 + $0xb50] sm:$0xff]
      %v534 = vld [vmem:[%s165 + $0xb58] sm:$0xff]
      %v535 = vld [vmem:[%s165 + $0xb60] sm:$0xff]
      %v536 = vld [vmem:[%s165 + $0xb68] sm:$0xff]
      %v537 = vld [vmem:[%s165 + $0xb70] sm:$0xff]
      %v538 = vld [vmem:[%s165 + $0xb78] sm:$0xff]
      %v539 = vld [vmem:[%s165 + $0xb80] sm:$0xff]
      %v540 = vld [vmem:[%s165 + $0xb88] sm:$0xff]
      %v541 = vld [vmem:[%s165 + $0xb90] sm:$0xff]
      %v542 = vld [vmem:[%s165 + $0xb98] sm:$0xff]
      %v543 = vld [vmem:[%s165 + $0xba0] sm:$0xff]
      %v544 = vld [vmem:[%s165 + $0xba8] sm:$0xff]
      %v545 = vld [vmem:[%s165 + $0xbb0] sm:$0xff]
      %v546 = vld [vmem:[%s165 + $0xbb8] sm:$0xff]
      %v547 = vld [vmem:[%s165 + $0xbc0] sm:$0xff]
      %v548 = vld [vmem:[%s165 + $0xbc8] sm:$0xff]
      %v549 = vld [vmem:[%s165 + $0xbd0] sm:$0xff]
      %v550 = vld [vmem:[%s165 + $0xbd8] sm:$0xff]
      %v551 = vld [vmem:[%s165 + $0xbe0] sm:$0xff]
      %v552 = vld [vmem:[%s165 + $0xbe8] sm:$0xff]
      %v553 = vld [vmem:[%s165 + $0xbf0] sm:$0xff]
      %v554 = vld [vmem:[%s165 + $0xbf8] sm:$0xff]
      %v555 = vld [vmem:[%s165 + $0xc00] sm:$0xff]
      %v556 = vld [vmem:[%s165 + $0xc08] sm:$0xff]
      %v557 = vld [vmem:[%s165 + $0xc10] sm:$0xff]
      %v558 = vld [vmem:[%s165 + $0xc18] sm:$0xff]
      %v559 = vld [vmem:[%s165 + $0xc20] sm:$0xff]
      %v560 = vld [vmem:[%s165 + $0xc28] sm:$0xff]
      %v561 = vld [vmem:[%s165 + $0xc30] sm:$0xff]
      %v562 = vld [vmem:[%s165 + $0xc38] sm:$0xff]
      %v563 = vld [vmem:[%s165 + $0xc40] sm:$0xff]
      %v564 = vld [vmem:[%s165 + $0xc48] sm:$0xff]
      %v565 = vld [vmem:[%s165 + $0xc50] sm:$0xff]
      %v566 = vld [vmem:[%s165 + $0xc58] sm:$0xff]
      %v567 = vld [vmem:[%s165 + $0xc60] sm:$0xff]
      %v568 = vld [vmem:[%s165 + $0xc68] sm:$0xff]
      %v569 = vld [vmem:[%s165 + $0xc70] sm:$0xff]
      %v570 = vld [vmem:[%s165 + $0xc78] sm:$0xff]
      %v571 = vld [vmem:[%s165 + $0xc80] sm:$0xff]
      %v572 = vld [vmem:[%s165 + $0xc88] sm:$0xff]
      %v573 = vld [vmem:[%s165 + $0xc90] sm:$0xff]
      %v574 = vld [vmem:[%s165 + $0xc98] sm:$0xff]
      %v575 = vld [vmem:[%s165 + $0xca0] sm:$0xff]
      %v576 = vld [vmem:[%s165 + $0xca8] sm:$0xff]
      %v577 = vld [vmem:[%s165 + $0xcb0] sm:$0xff]
      %v578 = vld [vmem:[%s165 + $0xcb8] sm:$0xff]
      %v579 = vld [vmem:[%s165 + $0xcc0] sm:$0xff]
      %v580 = vld [vmem:[%s165 + $0xcc8] sm:$0xff]
      %v581 = vld [vmem:[%s165 + $0xcd0] sm:$0xff]
      %v582 = vld [vmem:[%s165 + $0xcd8] sm:$0xff]
      %v583 = vld [vmem:[%s165 + $0xce0] sm:$0xff]
      %v584 = vld [vmem:[%s165 + $0xce8] sm:$0xff]
      %v585 = vld [vmem:[%s165 + $0xcf0] sm:$0xff]
      %v586 = vld [vmem:[%s165 + $0xcf8] sm:$0xff]
      %v587 = vld [vmem:[%s165 + $0xd00] sm:$0xff]
      %v588 = vld [vmem:[%s165 + $0xd08] sm:$0xff]
      %v589 = vld [vmem:[%s165 + $0xd10] sm:$0xff]
      %v590 = vld [vmem:[%s165 + $0xd18] sm:$0xff]
      %v591 = vld [vmem:[%s165 + $0xd20] sm:$0xff]
      %v592 = vld [vmem:[%s165 + $0xd28] sm:$0xff]
      %v593 = vld [vmem:[%s165 + $0xd30] sm:$0xff]
      %v594 = vld [vmem:[%s165 + $0xd38] sm:$0xff]
      %v595 = vld [vmem:[%s165 + $0xd40] sm:$0xff]
      %v596 = vld [vmem:[%s165 + $0xd48] sm:$0xff]
      %v597 = vld [vmem:[%s165 + $0xd50] sm:$0xff]
      %v598 = vld [vmem:[%s165 + $0xd58] sm:$0xff]
      %v599 = vld [vmem:[%s165 + $0xd60] sm:$0xff]
      %v600 = vld [vmem:[%s165 + $0xd68] sm:$0xff]
      %v601 = vld [vmem:[%s165 + $0xd70] sm:$0xff]
      %v602 = vld [vmem:[%s165 + $0xd78] sm:$0xff]
      %v603 = vld [vmem:[%s165 + $0xd80] sm:$0xff]
      %v604 = vld [vmem:[%s165 + $0xd88] sm:$0xff]
      %v605 = vld [vmem:[%s165 + $0xd90] sm:$0xff]
      %v606 = vld [vmem:[%s165 + $0xd98] sm:$0xff]
      %v607 = vld [vmem:[%s165 + $0xda0] sm:$0xff]
      %v608 = vld [vmem:[%s165 + $0xda8] sm:$0xff]
      %v609 = vld [vmem:[%s165 + $0xdb0] sm:$0xff]
      %v610 = vld [vmem:[%s165 + $0xdb8] sm:$0xff]
      %v611 = vld [vmem:[%s165 + $0xdc0] sm:$0xff]
      %v612 = vld [vmem:[%s165 + $0xdc8] sm:$0xff]
      %v613 = vld [vmem:[%s165 + $0xdd0] sm:$0xff]
      %v614 = vld [vmem:[%s165 + $0xdd8] sm:$0xff]
      %v615 = vld [vmem:[%s165 + $0xde0] sm:$0xff]
      %v616 = vld [vmem:[%s165 + $0xde8] sm:$0xff]
      %v617 = vld [vmem:[%s165 + $0xdf0] sm:$0xff]
      %v618 = vld [vmem:[%s165 + $0xdf8] sm:$0xff]
      %v619 = vld [vmem:[%s165 + $0xe00] sm:$0xff]
      %v620 = vld [vmem:[%s165 + $0xe08] sm:$0xff]
      %v621 = vld [vmem:[%s165 + $0xe10] sm:$0xff]
      %v622 = vld [vmem:[%s165 + $0xe18] sm:$0xff]
      %v623 = vld [vmem:[%s165 + $0xe20] sm:$0xff]
      %v624 = vld [vmem:[%s165 + $0xe28] sm:$0xff]
      %v625 = vld [vmem:[%s165 + $0xe30] sm:$0xff]
      %v626 = vld [vmem:[%s165 + $0xe38] sm:$0xff]
      %v627 = vld [vmem:[%s165 + $0xe40] sm:$0xff]
      %v628 = vld [vmem:[%s165 + $0xe48] sm:$0xff]
      %v629 = vld [vmem:[%s165 + $0xe50] sm:$0xff]
      %v630 = vld [vmem:[%s165 + $0xe58] sm:$0xff]
      %v631 = vld [vmem:[%s165 + $0xe60] sm:$0xff]
      %v632 = vld [vmem:[%s165 + $0xe68] sm:$0xff]
      %v633 = vld [vmem:[%s165 + $0xe70] sm:$0xff]
      %v634 = vld [vmem:[%s165 + $0xe78] sm:$0xff]
      %v635 = vld [vmem:[%s165 + $0xe80] sm:$0xff]
      %v636 = vld [vmem:[%s165 + $0xe88] sm:$0xff]
      %v637 = vld [vmem:[%s165 + $0xe90] sm:$0xff]
      %v638 = vld [vmem:[%s165 + $0xe98] sm:$0xff]
      %v639 = vld [vmem:[%s165 + $0xea0] sm:$0xff]
      %v640 = vld [vmem:[%s165 + $0xea8] sm:$0xff]
      %v641 = vld [vmem:[%s165 + $0xeb0] sm:$0xff]
      %v642 = vld [vmem:[%s165 + $0xeb8] sm:$0xff]
      %v643 = vld [vmem:[%s165 + $0xec0] sm:$0xff]
      %v644 = vld [vmem:[%s165 + $0xec8] sm:$0xff]
      %v645 = vld [vmem:[%s165 + $0xed0] sm:$0xff]
      %v646 = vld [vmem:[%s165 + $0xed8] sm:$0xff]
      %v647 = vld [vmem:[%s165 + $0xee0] sm:$0xff]
      %v648 = vld [vmem:[%s165 + $0xee8] sm:$0xff]
      %v649 = vld [vmem:[%s165 + $0xef0] sm:$0xff]
      %v650 = vld [vmem:[%s165 + $0xef8] sm:$0xff]
      %v651 = vld [vmem:[%s165 + $0xf00] sm:$0xff]
      %v652 = vld [vmem:[%s165 + $0xf08] sm:$0xff]
      %v653 = vld [vmem:[%s165 + $0xf10] sm:$0xff]
      %v654 = vld [vmem:[%s165 + $0xf18] sm:$0xff]
      %v655 = vld [vmem:[%s165 + $0xf20] sm:$0xff]
      %v656 = vld [vmem:[%s165 + $0xf28] sm:$0xff]
      %v657 = vld [vmem:[%s165 + $0xf30] sm:$0xff]
      %v658 = vld [vmem:[%s165 + $0xf38] sm:$0xff]
      %v659 = vld [vmem:[%s165 + $0xf40] sm:$0xff]
      %v660 = vld [vmem:[%s165 + $0xf48] sm:$0xff]
      %v661 = vld [vmem:[%s165 + $0xf50] sm:$0xff]
      %v662 = vld [vmem:[%s165 + $0xf58] sm:$0xff]
      %v663 = vld [vmem:[%s165 + $0xf60] sm:$0xff]
      %v664 = vld [vmem:[%s165 + $0xf68] sm:$0xff]
      %v665 = vld [vmem:[%s165 + $0xf70] sm:$0xff]
      %v666 = vld [vmem:[%s165 + $0xf78] sm:$0xff]
      %v667 = vld [vmem:[%s165 + $0xf80] sm:$0xff]
      %v668 = vld [vmem:[%s165 + $0xf88] sm:$0xff]
      %v669 = vld [vmem:[%s165 + $0xf90] sm:$0xff]
      %v670 = vld [vmem:[%s165 + $0xf98] sm:$0xff]
      %v671 = vld [vmem:[%s165 + $0xfa0] sm:$0xff]
      %v672 = vld [vmem:[%s165 + $0xfa8] sm:$0xff]
      %v673 = vld [vmem:[%s165 + $0xfb0] sm:$0xff]
      %v674 = vld [vmem:[%s165 + $0xfb8] sm:$0xff]
      %v675 = vld [vmem:[%s165 + $0xfc0] sm:$0xff]
      %v676 = vld [vmem:[%s165 + $0xfc8] sm:$0xff]
      %v677 = vld [vmem:[%s165 + $0xfd0] sm:$0xff]
      %v678 = vld [vmem:[%s165 + $0xfd8] sm:$0xff]
      %v679 = vld [vmem:[%s165 + $0xfe0] sm:$0xff]
      %v680 = vld [vmem:[%s165 + $0xfe8] sm:$0xff]
      %v681 = vld [vmem:[%s165 + $0xff0] sm:$0xff]
      %v682 = vld [vmem:[%s165 + $0xff8] sm:$0xff]
      %v683 = vld [vmem:[%s165 + $0x1000] sm:$0xff]
      %v684 = vld [vmem:[%s165 + $0x1008] sm:$0xff]
      %v685 = vld [vmem:[%s165 + $0x1010] sm:$0xff]
      %v686 = vld [vmem:[%s165 + $0x1018] sm:$0xff]
      %v687 = vld [vmem:[%s165 + $0x1020] sm:$0xff]
      %v688 = vld [vmem:[%s165 + $0x1028] sm:$0xff]
      %v689 = vld [vmem:[%s165 + $0x1030] sm:$0xff]
      %v690 = vld [vmem:[%s165 + $0x1038] sm:$0xff]
      %v691 = vld [vmem:[%s165 + $0x1040] sm:$0xff]
      %v692 = vld [vmem:[%s165 + $0x1048] sm:$0xff]
      %v693 = vld [vmem:[%s165 + $0x1050] sm:$0xff]
      %v694 = vld [vmem:[%s165 + $0x1058] sm:$0xff]
      %v695 = vld [vmem:[%s165 + $0x1060] sm:$0xff]
      %v696 = vld [vmem:[%s165 + $0x1068] sm:$0xff]
      %v697 = vld [vmem:[%s165 + $0x1070] sm:$0xff]
      %v698 = vld [vmem:[%s165 + $0x1078] sm:$0xff]
      %v699 = vld [vmem:[%s165 + $0x1080] sm:$0xff]
      %v700 = vld [vmem:[%s165 + $0x1088] sm:$0xff]
      %v701 = vld [vmem:[%s165 + $0x1090] sm:$0xff]
      %v702 = vld [vmem:[%s165 + $0x1098] sm:$0xff]
      %v703 = vld [vmem:[%s165 + $0x10a0] sm:$0xff]
      %v704 = vld [vmem:[%s165 + $0x10a8] sm:$0xff]
      %v705 = vld [vmem:[%s165 + $0x10b0] sm:$0xff]
      %v706 = vld [vmem:[%s165 + $0x10b8] sm:$0xff]
      %v707 = vld [vmem:[%s165 + $0x10c0] sm:$0xff]
      %v708 = vld [vmem:[%s165 + $0x10c8] sm:$0xff]
      %v709 = vld [vmem:[%s165 + $0x10d0] sm:$0xff]
      %v710 = vld [vmem:[%s165 + $0x10d8] sm:$0xff]
      %v711 = vld [vmem:[%s165 + $0x10e0] sm:$0xff]
      %v712 = vld [vmem:[%s165 + $0x10e8] sm:$0xff]
      %v713 = vld [vmem:[%s165 + $0x10f0] sm:$0xff]
      %v714 = vld [vmem:[%s165 + $0x10f8] sm:$0xff]
      %v715 = vld [vmem:[%s165 + $0x1100] sm:$0xff]
      %v716 = vld [vmem:[%s165 + $0x1108] sm:$0xff]
      %v717 = vld [vmem:[%s165 + $0x1110] sm:$0xff]
      %v718 = vld [vmem:[%s165 + $0x1118] sm:$0xff]
      %v719 = vld [vmem:[%s165 + $0x1120] sm:$0xff]
      %v720 = vld [vmem:[%s165 + $0x1128] sm:$0xff]
      %v721 = vld [vmem:[%s165 + $0x1130] sm:$0xff]
      %v722 = vld [vmem:[%s165 + $0x1138] sm:$0xff]
      %v723 = vld [vmem:[%s165 + $0x1140] sm:$0xff]
      %v724 = vld [vmem:[%s165 + $0x1148] sm:$0xff]
      %v725 = vld [vmem:[%s165 + $0x1150] sm:$0xff]
      %v726 = vld [vmem:[%s165 + $0x1158] sm:$0xff]
      %v727 = vld [vmem:[%s165 + $0x1160] sm:$0xff]
      %v728 = vld [vmem:[%s165 + $0x1168] sm:$0xff]
      %v729 = vld [vmem:[%s165 + $0x1170] sm:$0xff]
      %v730 = vld [vmem:[%s165 + $0x1178] sm:$0xff]
      %v731 = vld [vmem:[%s165 + $0x1180] sm:$0xff]
      %v732 = vld [vmem:[%s165 + $0x1188] sm:$0xff]
      %v733 = vld [vmem:[%s165 + $0x1190] sm:$0xff]
      %v734 = vld [vmem:[%s165 + $0x1198] sm:$0xff]
      %v735 = vld [vmem:[%s165 + $0x11a0] sm:$0xff]
      %v736 = vld [vmem:[%s165 + $0x11a8] sm:$0xff]
      %v737 = vld [vmem:[%s165 + $0x11b0] sm:$0xff]
      %v738 = vld [vmem:[%s165 + $0x11b8] sm:$0xff]
      %v739 = vld [vmem:[%s165 + $0x11c0] sm:$0xff]
      %v740 = vld [vmem:[%s165 + $0x11c8] sm:$0xff]
      %v741 = vld [vmem:[%s165 + $0x11d0] sm:$0xff]
      %v742 = vld [vmem:[%s165 + $0x11d8] sm:$0xff]
      %v743 = vld [vmem:[%s165 + $0x11e0] sm:$0xff]
      %v744 = vld [vmem:[%s165 + $0x11e8] sm:$0xff]
      %v745 = vld [vmem:[%s165 + $0x11f0] sm:$0xff]
      %v746 = vld [vmem:[%s165 + $0x11f8] sm:$0xff]
      %v747 = vld [vmem:[%s165 + $0x1200] sm:$0xff]
      %v748 = vld [vmem:[%s165 + $0x1208] sm:$0xff]
      %v749 = vld [vmem:[%s165 + $0x1210] sm:$0xff]
      %v750 = vld [vmem:[%s165 + $0x1218] sm:$0xff]
      %v751 = vld [vmem:[%s165 + $0x1220] sm:$0xff]
      %v752 = vld [vmem:[%s165 + $0x1228] sm:$0xff]
      %v753 = vld [vmem:[%s165 + $0x1230] sm:$0xff]
      %v754 = vld [vmem:[%s165 + $0x1238] sm:$0xff]
      %v755 = vld [vmem:[%s165 + $0x1240] sm:$0xff]
      %v756 = vld [vmem:[%s165 + $0x1248] sm:$0xff]
      %v757 = vld [vmem:[%s165 + $0x1250] sm:$0xff]
      %v758 = vld [vmem:[%s165 + $0x1258] sm:$0xff]
      %v759 = vld [vmem:[%s165 + $0x1260] sm:$0xff]
      %v760 = vld [vmem:[%s165 + $0x1268] sm:$0xff]
      %v761 = vld [vmem:[%s165 + $0x1270] sm:$0xff]
      %v762 = vld [vmem:[%s165 + $0x1278] sm:$0xff]
      %v763 = vld [vmem:[%s165 + $0x1280] sm:$0xff]
      %v764 = vld [vmem:[%s165 + $0x1288] sm:$0xff]
      %v765 = vld [vmem:[%s165 + $0x1290] sm:$0xff]
      %v766 = vld [vmem:[%s165 + $0x1298] sm:$0xff]
      %v767 = vld [vmem:[%s165 + $0x12a0] sm:$0xff]
      %v768 = vld [vmem:[%s165 + $0x12a8] sm:$0xff]
      %v769 = vld [vmem:[%s165 + $0x12b0] sm:$0xff]
      %v770 = vld [vmem:[%s165 + $0x12b8] sm:$0xff]
      %v771 = vld [vmem:[%s165 + $0x12c0] sm:$0xff]
      %v772 = vld [vmem:[%s165 + $0x12c8] sm:$0xff]
      %v773 = vld [vmem:[%s165 + $0x12d0] sm:$0xff]
      %v774 = vld [vmem:[%s165 + $0x12d8] sm:$0xff]
      %v775 = vld [vmem:[%s165 + $0x12e0] sm:$0xff]
      %v776 = vld [vmem:[%s165 + $0x12e8] sm:$0xff]
      %v777 = vld [vmem:[%s165 + $0x12f0] sm:$0xff]
      %v778 = vld [vmem:[%s165 + $0x12f8] sm:$0xff]
      %v779 = vld [vmem:[%s165 + $0x1300] sm:$0xff]
      %v780 = vld [vmem:[%s165 + $0x1308] sm:$0xff]
      %v781 = vld [vmem:[%s165 + $0x1310] sm:$0xff]
      %v782 = vld [vmem:[%s165 + $0x1318] sm:$0xff]
      %v783 = vld [vmem:[%s165 + $0x1320] sm:$0xff]
      %v784 = vld [vmem:[%s165 + $0x1328] sm:$0xff]
      %v785 = vld [vmem:[%s165 + $0x1330] sm:$0xff]
      %v786 = vld [vmem:[%s165 + $0x1338] sm:$0xff]
      %v787 = vld [vmem:[%s165 + $0x1340] sm:$0xff]
      %v788 = vld [vmem:[%s165 + $0x1348] sm:$0xff]
      %v789 = vld [vmem:[%s165 + $0x1350] sm:$0xff]
      %v790 = vld [vmem:[%s165 + $0x1358] sm:$0xff]
      %v791 = vld [vmem:[%s165 + $0x1360] sm:$0xff]
      %v792 = vld [vmem:[%s165 + $0x1368] sm:$0xff]
      %v793 = vld [vmem:[%s165 + $0x1370] sm:$0xff]
      %v794 = vld [vmem:[%s165 + $0x1378] sm:$0xff]
      %v795 = vld [vmem:[%s165 + $0x1380] sm:$0xff]
      %v796 = vld [vmem:[%s165 + $0x1388] sm:$0xff]
      %v797 = vld [vmem:[%s165 + $0x1390] sm:$0xff]
      %v798 = vld [vmem:[%s165 + $0x1398] sm:$0xff]
      %v799 = vld [vmem:[%s165 + $0x13a0] sm:$0xff]
      %v800 = vld [vmem:[%s165 + $0x13a8] sm:$0xff]
      %v801 = vld [vmem:[%s165 + $0x13b0] sm:$0xff]
      %v802 = vld [vmem:[%s165 + $0x13b8] sm:$0xff]
      %v803 = vld [vmem:[%s165 + $0x13c0] sm:$0xff]
      %v804 = vld [vmem:[%s165 + $0x13c8] sm:$0xff]
      %v805 = vld [vmem:[%s165 + $0x13d0] sm:$0xff]
      %v806 = vld [vmem:[%s165 + $0x13d8] sm:$0xff]
      %v807 = vld [vmem:[%s165 + $0x13e0] sm:$0xff]
      %v808 = vld [vmem:[%s165 + $0x13e8] sm:$0xff]
      %v809 = vld [vmem:[%s165 + $0x13f0] sm:$0xff]
      %v810 = vld [vmem:[%s165 + $0x13f8] sm:$0xff]
      %v811 = vld [vmem:[%s165 + $0x1400] sm:$0xff]
      %v812 = vld [vmem:[%s165 + $0x1408] sm:$0xff]
      %v813 = vld [vmem:[%s165 + $0x1410] sm:$0xff]
      %v814 = vld [vmem:[%s165 + $0x1418] sm:$0xff]
      %v815 = vld [vmem:[%s165 + $0x1420] sm:$0xff]
      %v816 = vld [vmem:[%s165 + $0x1428] sm:$0xff]
      %v817 = vld [vmem:[%s165 + $0x1430] sm:$0xff]
      %v818 = vld [vmem:[%s165 + $0x1438] sm:$0xff]
      %v819 = vld [vmem:[%s165 + $0x1440] sm:$0xff]
      %v820 = vld [vmem:[%s165 + $0x1448] sm:$0xff]
      %v821 = vld [vmem:[%s165 + $0x1450] sm:$0xff]
      %v822 = vld [vmem:[%s165 + $0x1458] sm:$0xff]
      %v823 = vld [vmem:[%s165 + $0x1460] sm:$0xff]
      %v824 = vld [vmem:[%s165 + $0x1468] sm:$0xff]
      %v825 = vld [vmem:[%s165 + $0x1470] sm:$0xff]
      %v826 = vld [vmem:[%s165 + $0x1478] sm:$0xff]
      %v827 = vld [vmem:[%s165 + $0x1480] sm:$0xff]
      %v828 = vld [vmem:[%s165 + $0x1488] sm:$0xff]
      %v829 = vld [vmem:[%s165 + $0x1490] sm:$0xff]
      %v830 = vld [vmem:[%s165 + $0x1498] sm:$0xff]
      %v831 = vld [vmem:[%s165 + $0x14a0] sm:$0xff]
      %v832 = vld [vmem:[%s165 + $0x14a8] sm:$0xff]
      %v833 = vld [vmem:[%s165 + $0x14b0] sm:$0xff]
      %v834 = vld [vmem:[%s165 + $0x14b8] sm:$0xff]
      %v835 = vld [vmem:[%s165 + $0x14c0] sm:$0xff]
      %v836 = vld [vmem:[%s165 + $0x14c8] sm:$0xff]
      %v837 = vld [vmem:[%s165 + $0x14d0] sm:$0xff]
      %v838 = vld [vmem:[%s165 + $0x14d8] sm:$0xff]
      %v839 = vld [vmem:[%s165 + $0x14e0] sm:$0xff]
      %v840 = vld [vmem:[%s165 + $0x14e8] sm:$0xff]
      %v841 = vld [vmem:[%s165 + $0x14f0] sm:$0xff]
      %v842 = vld [vmem:[%s165 + $0x14f8] sm:$0xff]
      %v843 = vld [vmem:[%s165 + $0x1500] sm:$0xff]
      %v844 = vld [vmem:[%s165 + $0x1508] sm:$0xff]
      %v845 = vld [vmem:[%s165 + $0x1510] sm:$0xff]
      %v846 = vld [vmem:[%s165 + $0x1518] sm:$0xff]
      %v847 = vld [vmem:[%s165 + $0x1520] sm:$0xff]
      %v848 = vld [vmem:[%s165 + $0x1528] sm:$0xff]
      %v849 = vld [vmem:[%s165 + $0x1530] sm:$0xff]
      %v850 = vld [vmem:[%s165 + $0x1538] sm:$0xff]
      %v851 = vld [vmem:[%s165 + $0x1540] sm:$0xff]
      %v852 = vld [vmem:[%s165 + $0x1548] sm:$0xff]
      %v853 = vld [vmem:[%s165 + $0x1550] sm:$0xff]
      %v854 = vld [vmem:[%s165 + $0x1558] sm:$0xff]
      %v855 = vld [vmem:[%s165 + $0x1560] sm:$0xff]
      %v856 = vld [vmem:[%s165 + $0x1568] sm:$0xff]
      %v857 = vld [vmem:[%s165 + $0x1570] sm:$0xff]
      %v858 = vld [vmem:[%s165 + $0x1578] sm:$0xff]
      %v859 = vld [vmem:[%s165 + $0x1580] sm:$0xff]
      %v860 = vld [vmem:[%s165 + $0x1588] sm:$0xff]
      %v861 = vld [vmem:[%s165 + $0x1590] sm:$0xff]
      %v862 = vld [vmem:[%s165 + $0x1598] sm:$0xff]
      %v863 = vld [vmem:[%s165 + $0x15a0] sm:$0xff]
      %v864 = vld [vmem:[%s165 + $0x15a8] sm:$0xff]
      %v865 = vld [vmem:[%s165 + $0x15b0] sm:$0xff]
      %v866 = vld [vmem:[%s165 + $0x15b8] sm:$0xff]
      %v867 = vld [vmem:[%s165 + $0x15c0] sm:$0xff]
      %v868 = vld [vmem:[%s165 + $0x15c8] sm:$0xff]
      %v869 = vld [vmem:[%s165 + $0x15d0] sm:$0xff]
      %v870 = vld [vmem:[%s165 + $0x15d8] sm:$0xff]
      %v871 = vld [vmem:[%s165 + $0x15e0] sm:$0xff]
      %v872 = vld [vmem:[%s165 + $0x15e8] sm:$0xff]
      %v873 = vld [vmem:[%s165 + $0x15f0] sm:$0xff]
      %v874 = vld [vmem:[%s165 + $0x15f8] sm:$0xff]
      %v875 = vld [vmem:[%s165 + $0x1600] sm:$0xff]
      %v876 = vld [vmem:[%s165 + $0x1608] sm:$0xff]
      %v877 = vld [vmem:[%s165 + $0x1610] sm:$0xff]
      %v878 = vld [vmem:[%s165 + $0x1618] sm:$0xff]
      %v879 = vld [vmem:[%s165 + $0x1620] sm:$0xff]
      %v880 = vld [vmem:[%s165 + $0x1628] sm:$0xff]
      %v881 = vld [vmem:[%s165 + $0x1630] sm:$0xff]
      %v882 = vld [vmem:[%s165 + $0x1638] sm:$0xff]
      %v883 = vld [vmem:[%s165 + $0x1640] sm:$0xff]
      %v884 = vld [vmem:[%s165 + $0x1648] sm:$0xff]
      %v885 = vld [vmem:[%s165 + $0x1650] sm:$0xff]
      %v886 = vld [vmem:[%s165 + $0x1658] sm:$0xff]
      %v887 = vld [vmem:[%s165 + $0x1660] sm:$0xff]
      %v888 = vld [vmem:[%s165 + $0x1668] sm:$0xff]
      %v889 = vld [vmem:[%s165 + $0x1670] sm:$0xff]
      %v890 = vld [vmem:[%s165 + $0x1678] sm:$0xff]
      %v891 = vld [vmem:[%s165 + $0x1680] sm:$0xff]
      %v892 = vld [vmem:[%s165 + $0x1688] sm:$0xff]
      %v893 = vld [vmem:[%s165 + $0x1690] sm:$0xff]
      %v894 = vld [vmem:[%s165 + $0x1698] sm:$0xff]
      %v895 = vld [vmem:[%s165 + $0x16a0] sm:$0xff]
      %v896 = vld [vmem:[%s165 + $0x16a8] sm:$0xff]
      %v897 = vld [vmem:[%s165 + $0x16b0] sm:$0xff]
      %v898 = vld [vmem:[%s165 + $0x16b8] sm:$0xff]
      %v899 = vld [vmem:[%s165 + $0x16c0] sm:$0xff]
      %v900 = vld [vmem:[%s165 + $0x16c8] sm:$0xff]
      %v901 = vld [vmem:[%s165 + $0x16d0] sm:$0xff]
      %v902 = vld [vmem:[%s165 + $0x16d8] sm:$0xff]
      %v903 = vld [vmem:[%s165 + $0x16e0] sm:$0xff]
      %v904 = vld [vmem:[%s165 + $0x16e8] sm:$0xff]
      %v905 = vld [vmem:[%s165 + $0x16f0] sm:$0xff]
      %v906 = vld [vmem:[%s165 + $0x16f8] sm:$0xff]
      %v907 = vld [vmem:[%s165 + $0x1700] sm:$0xff]
      %v908 = vld [vmem:[%s165 + $0x1708] sm:$0xff]
      %v909 = vld [vmem:[%s165 + $0x1710] sm:$0xff]
      %v910 = vld [vmem:[%s165 + $0x1718] sm:$0xff]
      %v911 = vld [vmem:[%s165 + $0x1720] sm:$0xff]
      %v912 = vld [vmem:[%s165 + $0x1728] sm:$0xff]
      %v913 = vld [vmem:[%s165 + $0x1730] sm:$0xff]
      %v914 = vld [vmem:[%s165 + $0x1738] sm:$0xff]
      %v915 = vld [vmem:[%s165 + $0x1740] sm:$0xff]
      %v916 = vld [vmem:[%s165 + $0x1748] sm:$0xff]
      %v917 = vld [vmem:[%s165 + $0x1750] sm:$0xff]
      %v918 = vld [vmem:[%s165 + $0x1758] sm:$0xff]
      %v919 = vld [vmem:[%s165 + $0x1760] sm:$0xff]
      %v920 = vld [vmem:[%s165 + $0x1768] sm:$0xff]
      %v921 = vld [vmem:[%s165 + $0x1770] sm:$0xff]
      %v922 = vld [vmem:[%s165 + $0x1778] sm:$0xff]
      %v923 = vld [vmem:[%s165 + $0x1780] sm:$0xff]
      %v924 = vld [vmem:[%s165 + $0x1788] sm:$0xff]
      %v925 = vld [vmem:[%s165 + $0x1790] sm:$0xff]
      %v926 = vld [vmem:[%s165 + $0x1798] sm:$0xff]
      %v927 = vld [vmem:[%s165 + $0x17a0] sm:$0xff]
      %v928 = vld [vmem:[%s165 + $0x17a8] sm:$0xff]
      %v929 = vld [vmem:[%s165 + $0x17b0] sm:$0xff]
      %v930 = vld [vmem:[%s165 + $0x17b8] sm:$0xff]
      %v931 = vld [vmem:[%s165 + $0x17c0] sm:$0xff]
      %v932 = vld [vmem:[%s165 + $0x17c8] sm:$0xff]
      %v933 = vld [vmem:[%s165 + $0x17d0] sm:$0xff]
      %v934 = vld [vmem:[%s165 + $0x17d8] sm:$0xff]
      %v935 = vld [vmem:[%s165 + $0x17e0] sm:$0xff]
      %v936 = vld [vmem:[%s165 + $0x17e8] sm:$0xff]
      %v937 = vld [vmem:[%s165 + $0x17f0] sm:$0xff]
      %v938 = vld [vmem:[%s165 + $0x17f8] sm:$0xff]
      %v939 = vld [vmem:[%s165 + $0x1800] sm:$0xff]
      %v940 = vld [vmem:[%s165 + $0x1808] sm:$0xff]
      %v941 = vld [vmem:[%s165 + $0x1810] sm:$0xff]
      %v942 = vld [vmem:[%s165 + $0x1818] sm:$0xff]
      %v943 = vld [vmem:[%s165 + $0x1820] sm:$0xff]
      %v944 = vld [vmem:[%s165 + $0x1828] sm:$0xff]
      %v945 = vld [vmem:[%s165 + $0x1830] sm:$0xff]
      %v946 = vld [vmem:[%s165 + $0x1838] sm:$0xff]
      %v947 = vld [vmem:[%s165 + $0x1840] sm:$0xff]
      %v948 = vld [vmem:[%s165 + $0x1848] sm:$0xff]
      %v949 = vld [vmem:[%s165 + $0x1850] sm:$0xff]
      %v950 = vld [vmem:[%s165 + $0x1858] sm:$0xff]
      %v951 = vld [vmem:[%s165 + $0x1860] sm:$0xff]
      %v952 = vld [vmem:[%s165 + $0x1868] sm:$0xff]
      %v953 = vld [vmem:[%s165 + $0x1870] sm:$0xff]
      %v954 = vld [vmem:[%s165 + $0x1878] sm:$0xff]
      %v955 = vld [vmem:[%s165 + $0x1880] sm:$0xff]
      %v956 = vld [vmem:[%s165 + $0x1888] sm:$0xff]
      %v957 = vld [vmem:[%s165 + $0x1890] sm:$0xff]
      %v958 = vld [vmem:[%s165 + $0x1898] sm:$0xff]
      %v959 = vld [vmem:[%s165 + $0x18a0] sm:$0xff]
      %v960 = vld [vmem:[%s165 + $0x18a8] sm:$0xff]
      %v961 = vld [vmem:[%s165 + $0x18b0] sm:$0xff]
      %v962 = vld [vmem:[%s165 + $0x18b8] sm:$0xff]
      %v963 = vld [vmem:[%s165 + $0x18c0] sm:$0xff]
      %v964 = vld [vmem:[%s165 + $0x18c8] sm:$0xff]
      %v965 = vld [vmem:[%s165 + $0x18d0] sm:$0xff]
      %v966 = vld [vmem:[%s165 + $0x18d8] sm:$0xff]
      %v967 = vld [vmem:[%s165 + $0x18e0] sm:$0xff]
      %v968 = vld [vmem:[%s165 + $0x18e8] sm:$0xff]
      %v969 = vld [vmem:[%s165 + $0x18f0] sm:$0xff]
      %v970 = vld [vmem:[%s165 + $0x18f8] sm:$0xff]
      %v971 = vld [vmem:[%s165 + $0x1900] sm:$0xff]
      %v972 = vld [vmem:[%s165 + $0x1908] sm:$0xff]
      %v973 = vld [vmem:[%s165 + $0x1910] sm:$0xff]
      %v974 = vld [vmem:[%s165 + $0x1918] sm:$0xff]
      %v975 = vld [vmem:[%s165 + $0x1920] sm:$0xff]
      %v976 = vld [vmem:[%s165 + $0x1928] sm:$0xff]
      %v977 = vld [vmem:[%s165 + $0x1930] sm:$0xff]
      %v978 = vld [vmem:[%s165 + $0x1938] sm:$0xff]
      %v979 = vld [vmem:[%s165 + $0x1940] sm:$0xff]
      %v980 = vld [vmem:[%s165 + $0x1948] sm:$0xff]
      %v981 = vld [vmem:[%s165 + $0x1950] sm:$0xff]
      %v982 = vld [vmem:[%s165 + $0x1958] sm:$0xff]
      %v983 = vld [vmem:[%s165 + $0x1960] sm:$0xff]
      %v984 = vld [vmem:[%s165 + $0x1968] sm:$0xff]
      %v985 = vld [vmem:[%s165 + $0x1970] sm:$0xff]
      %v986 = vld [vmem:[%s165 + $0x1978] sm:$0xff]
      %v987 = vld [vmem:[%s165 + $0x1980] sm:$0xff]
      %v988 = vld [vmem:[%s165 + $0x1988] sm:$0xff]
      %v989 = vld [vmem:[%s165 + $0x1990] sm:$0xff]
      %v990 = vld [vmem:[%s165 + $0x1998] sm:$0xff]
      %v991 = vld [vmem:[%s165 + $0x19a0] sm:$0xff]
      %v992 = vld [vmem:[%s165 + $0x19a8] sm:$0xff]
      %v993 = vld [vmem:[%s165 + $0x19b0] sm:$0xff]
      %v994 = vld [vmem:[%s165 + $0x19b8] sm:$0xff]
      %v995 = vld [vmem:[%s165 + $0x19c0] sm:$0xff]
      %v996 = vld [vmem:[%s165 + $0x19c8] sm:$0xff]
      %v997 = vld [vmem:[%s165 + $0x19d0] sm:$0xff]
      %v998 = vld [vmem:[%s165 + $0x19d8] sm:$0xff]
      %v999 = vld [vmem:[%s165 + $0x19e0] sm:$0xff]
      %v1000 = vld [vmem:[%s165 + $0x19e8] sm:$0xff]
      %v1001 = vld [vmem:[%s165 + $0x19f0] sm:$0xff]
      %v1002 = vld [vmem:[%s165 + $0x19f8] sm:$0xff]
      %v1003 = vld [vmem:[%s165 + $0x1a00] sm:$0xff]
      %v1004 = vld [vmem:[%s165 + $0x1a08] sm:$0xff]
      %v1005 = vld [vmem:[%s165 + $0x1a10] sm:$0xff]
      %v1006 = vld [vmem:[%s165 + $0x1a18] sm:$0xff]
      %v1007 = vld [vmem:[%s165 + $0x1a20] sm:$0xff]
      %v1008 = vld [vmem:[%s165 + $0x1a28] sm:$0xff]
      %v1009 = vld [vmem:[%s165 + $0x1a30] sm:$0xff]
      %v1010 = vld [vmem:[%s165 + $0x1a38] sm:$0xff]
      %v1011 = vld [vmem:[%s165 + $0x1a40] sm:$0xff]
      %v1012 = vld [vmem:[%s165 + $0x1a48] sm:$0xff]
      %v1013 = vld [vmem:[%s165 + $0x1a50] sm:$0xff]
      %v1014 = vld [vmem:[%s165 + $0x1a58] sm:$0xff]
      %v1015 = vld [vmem:[%s165 + $0x1a60] sm:$0xff]
      %v1016 = vld [vmem:[%s165 + $0x1a68] sm:$0xff]
      %v1017 = vld [vmem:[%s165 + $0x1a70] sm:$0xff]
      %v1018 = vld [vmem:[%s165 + $0x1a78] sm:$0xff]
      %v1019 = vld [vmem:[%s165 + $0x1a80] sm:$0xff]
      %v1020 = vld [vmem:[%s165 + $0x1a88] sm:$0xff]
      %v1021 = vld [vmem:[%s165 + $0x1a90] sm:$0xff]
      %v1022 = vld [vmem:[%s165 + $0x1a98] sm:$0xff]
      %v1023 = vld [vmem:[%s165 + $0x1aa0] sm:$0xff]
      %v1024 = vld [vmem:[%s165 + $0x1aa8] sm:$0xff]
      %v1025 = vld [vmem:[%s165 + $0x1ab0] sm:$0xff]
      %v1026 = vld [vmem:[%s165 + $0x1ab8] sm:$0xff]
      %v1027 = vld [vmem:[%s165 + $0x1ac0] sm:$0xff]
      %v1028 = vld [vmem:[%s165 + $0x1ac8] sm:$0xff]
      %v1029 = vld [vmem:[%s165 + $0x1ad0] sm:$0xff]
      %v1030 = vld [vmem:[%s165 + $0x1ad8] sm:$0xff]
      %v1031 = vld [vmem:[%s165 + $0x1ae0] sm:$0xff]
      %v1032 = vld [vmem:[%s165 + $0x1ae8] sm:$0xff]
      %v1033 = vld [vmem:[%s165 + $0x1af0] sm:$0xff]
      %v1034 = vld [vmem:[%s165 + $0x1af8] sm:$0xff]
      %v1035 = vld [vmem:[%s165 + $0x1b00] sm:$0xff]
      %v1036 = vld [vmem:[%s165 + $0x1b08] sm:$0xff]
      %v1037 = vld [vmem:[%s165 + $0x1b10] sm:$0xff]
      %v1038 = vld [vmem:[%s165 + $0x1b18] sm:$0xff]
      %v1039 = vld [vmem:[%s165 + $0x1b20] sm:$0xff]
      %v1040 = vld [vmem:[%s165 + $0x1b28] sm:$0xff]
      %v1041 = vld [vmem:[%s165 + $0x1b30] sm:$0xff]
      %v1042 = vld [vmem:[%s165 + $0x1b38] sm:$0xff]
      %v1043 = vld [vmem:[%s165 + $0x1b40] sm:$0xff]
      %v1044 = vld [vmem:[%s165 + $0x1b48] sm:$0xff]
      %v1045 = vld [vmem:[%s165 + $0x1b50] sm:$0xff]
      %v1046 = vld [vmem:[%s165 + $0x1b58] sm:$0xff]
      %v1047 = vld [vmem:[%s165 + $0x1b60] sm:$0xff]
      %v1048 = vld [vmem:[%s165 + $0x1b68] sm:$0xff]
      %v1049 = vld [vmem:[%s165 + $0x1b70] sm:$0xff]
      %v1050 = vld [vmem:[%s165 + $0x1b78] sm:$0xff]
      %v1051 = vld [vmem:[%s165 + $0x1b80] sm:$0xff]
      %v1052 = vld [vmem:[%s165 + $0x1b88] sm:$0xff]
      %v1053 = vld [vmem:[%s165 + $0x1b90] sm:$0xff]
      %v1054 = vld [vmem:[%s165 + $0x1b98] sm:$0xff]
      %v1055 = vld [vmem:[%s165 + $0x1ba0] sm:$0xff]
      %v1056 = vld [vmem:[%s165 + $0x1ba8] sm:$0xff]
      %v1057 = vld [vmem:[%s165 + $0x1bb0] sm:$0xff]
      %v1058 = vld [vmem:[%s165 + $0x1bb8] sm:$0xff]
      %v1059 = vld [vmem:[%s165 + $0x1bc0] sm:$0xff]
      %v1060 = vld [vmem:[%s165 + $0x1bc8] sm:$0xff]
      %v1061 = vld [vmem:[%s165 + $0x1bd0] sm:$0xff]
      %v1062 = vld [vmem:[%s165 + $0x1bd8] sm:$0xff]
      %v1063 = vld [vmem:[%s165 + $0x1be0] sm:$0xff]
      %v1064 = vld [vmem:[%s165 + $0x1be8] sm:$0xff]
      %v1065 = vld [vmem:[%s165 + $0x1bf0] sm:$0xff]
      %v1066 = vld [vmem:[%s165 + $0x1bf8] sm:$0xff]
      %v1067 = vld [vmem:[%s165 + $0x1c00] sm:$0xff]
      %v1068 = vld [vmem:[%s165 + $0x1c08] sm:$0xff]
      %v1069 = vld [vmem:[%s165 + $0x1c10] sm:$0xff]
      %v1070 = vld [vmem:[%s165 + $0x1c18] sm:$0xff]
      %v1071 = vld [vmem:[%s165 + $0x1c20] sm:$0xff]
      %v1072 = vld [vmem:[%s165 + $0x1c28] sm:$0xff]
      %v1073 = vld [vmem:[%s165 + $0x1c30] sm:$0xff]
      %v1074 = vld [vmem:[%s165 + $0x1c38] sm:$0xff]
      %v1075 = vld [vmem:[%s165 + $0x1c40] sm:$0xff]
      %v1076 = vld [vmem:[%s165 + $0x1c48] sm:$0xff]
      %v1077 = vld [vmem:[%s165 + $0x1c50] sm:$0xff]
      %v1078 = vld [vmem:[%s165 + $0x1c58] sm:$0xff]
      %v1079 = vld [vmem:[%s165 + $0x1c60] sm:$0xff]
      %v1080 = vld [vmem:[%s165 + $0x1c68] sm:$0xff]
      %v1081 = vld [vmem:[%s165 + $0x1c70] sm:$0xff]
      %v1082 = vld [vmem:[%s165 + $0x1c78] sm:$0xff]
      %v1083 = vld [vmem:[%s165 + $0x1c80] sm:$0xff]
      %v1084 = vld [vmem:[%s165 + $0x1c88] sm:$0xff]
      %v1085 = vld [vmem:[%s165 + $0x1c90] sm:$0xff]
      %v1086 = vld [vmem:[%s165 + $0x1c98] sm:$0xff]
      %v1087 = vld [vmem:[%s165 + $0x1ca0] sm:$0xff]
      %v1088 = vld [vmem:[%s165 + $0x1ca8] sm:$0xff]
      %v1089 = vld [vmem:[%s165 + $0x1cb0] sm:$0xff]
      %v1090 = vld [vmem:[%s165 + $0x1cb8] sm:$0xff]
      %v1091 = vld [vmem:[%s165 + $0x1cc0] sm:$0xff]
      %v1092 = vld [vmem:[%s165 + $0x1cc8] sm:$0xff]
      %v1093 = vld [vmem:[%s165 + $0x1cd0] sm:$0xff]
      %v1094 = vld [vmem:[%s165 + $0x1cd8] sm:$0xff]
      %v1095 = vld [vmem:[%s165 + $0x1ce0] sm:$0xff]
      %v1096 = vld [vmem:[%s165 + $0x1ce8] sm:$0xff]
      %v1097 = vld [vmem:[%s165 + $0x1cf0] sm:$0xff]
      %v1098 = vld [vmem:[%s165 + $0x1cf8] sm:$0xff]
      %v1099 = vld [vmem:[%s165 + $0x1d00] sm:$0xff]
      %v1100 = vld [vmem:[%s165 + $0x1d08] sm:$0xff]
      %v1101 = vld [vmem:[%s165 + $0x1d10] sm:$0xff]
      %v1102 = vld [vmem:[%s165 + $0x1d18] sm:$0xff]
      %v1103 = vld [vmem:[%s165 + $0x1d20] sm:$0xff]
      %v1104 = vld [vmem:[%s165 + $0x1d28] sm:$0xff]
      %v1105 = vld [vmem:[%s165 + $0x1d30] sm:$0xff]
      %v1106 = vld [vmem:[%s165 + $0x1d38] sm:$0xff]
      %v1107 = vld [vmem:[%s165 + $0x1d40] sm:$0xff]
      %v1108 = vld [vmem:[%s165 + $0x1d48] sm:$0xff]
      %v1109 = vld [vmem:[%s165 + $0x1d50] sm:$0xff]
      %v1110 = vld [vmem:[%s165 + $0x1d58] sm:$0xff]
      %v1111 = vld [vmem:[%s165 + $0x1d60] sm:$0xff]
      %v1112 = vld [vmem:[%s165 + $0x1d68] sm:$0xff]
      %v1113 = vld [vmem:[%s165 + $0x1d70] sm:$0xff]
      %v1114 = vld [vmem:[%s165 + $0x1d78] sm:$0xff]
      %v1115 = vld [vmem:[%s165 + $0x1d80] sm:$0xff]
      %v1116 = vld [vmem:[%s165 + $0x1d88] sm:$0xff]
      %v1117 = vld [vmem:[%s165 + $0x1d90] sm:$0xff]
      %v1118 = vld [vmem:[%s165 + $0x1d98] sm:$0xff]
      %v1119 = vld [vmem:[%s165 + $0x1da0] sm:$0xff]
      %v1120 = vld [vmem:[%s165 + $0x1da8] sm:$0xff]
      %v1121 = vld [vmem:[%s165 + $0x1db0] sm:$0xff]
      %v1122 = vld [vmem:[%s165 + $0x1db8] sm:$0xff]
      %v1123 = vld [vmem:[%s165 + $0x1dc0] sm:$0xff]
      %v1124 = vld [vmem:[%s165 + $0x1dc8] sm:$0xff]
      %v1125 = vld [vmem:[%s165 + $0x1dd0] sm:$0xff]
      %v1126 = vld [vmem:[%s165 + $0x1dd8] sm:$0xff]
      %v1127 = vld [vmem:[%s165 + $0x1de0] sm:$0xff]
      %v1128 = vld [vmem:[%s165 + $0x1de8] sm:$0xff]
      %v1129 = vld [vmem:[%s165 + $0x1df0] sm:$0xff]
      %v1130 = vld [vmem:[%s165 + $0x1df8] sm:$0xff]
      %v1131 = vld [vmem:[%s165 + $0x1e00] sm:$0xff]
      %v1132 = vld [vmem:[%s165 + $0x1e08] sm:$0xff]
      %v1133 = vld [vmem:[%s165 + $0x1e10] sm:$0xff]
      %v1134 = vld [vmem:[%s165 + $0x1e18] sm:$0xff]
      %v1135 = vld [vmem:[%s165 + $0x1e20] sm:$0xff]
      %v1136 = vld [vmem:[%s165 + $0x1e28] sm:$0xff]
      %v1137 = vld [vmem:[%s165 + $0x1e30] sm:$0xff]
      %v1138 = vld [vmem:[%s165 + $0x1e38] sm:$0xff]
      %v1139 = vld [vmem:[%s1] sm:$0xff]
      %v1140 = vld [vmem:[%s1 + $0x8] sm:$0xff]
      %vm1141 = vcmask 130048
      %v1143 = vsel %vm1141, %v171, 0
      %v1146 = vsel %vm1141, %v172, 0
      %v1149 = vsel %vm1141, %v173, 0
      %v1152 = vsel %vm1141, %v174, 0
      %v1155 = vsel %vm1141, %v175, 0
      %v1158 = vsel %vm1141, %v176, 0
      %v1161 = vsel %vm1141, %v177, 0
      %v1164 = vsel %vm1141, %v178, 0
      %v1167 = vsel %vm1141, %v179, 0
      %v1170 = vsel %vm1141, %v180, 0
      %v1173 = vsel %vm1141, %v181, 0
      %v1176 = vsel %vm1141, %v182, 0
      %v1179 = vsel %vm1141, %v183, 0
      %v1182 = vsel %vm1141, %v184, 0
      %v1185 = vsel %vm1141, %v185, 0
      %v1188 = vsel %vm1141, %v186, 0
      %v1191 = vsel %vm1141, %v187, 0
      %v1194 = vsel %vm1141, %v188, 0
      %v1197 = vsel %vm1141, %v189, 0
      %v1200 = vsel %vm1141, %v190, 0
      %v1203 = vsel %vm1141, %v191, 0
      %v1206 = vsel %vm1141, %v192, 0
      %v1209 = vsel %vm1141, %v193, 0
      %v1212 = vsel %vm1141, %v194, 0
      %v1215 = vsel %vm1141, %v195, 0
      %v1218 = vsel %vm1141, %v196, 0
      %v1221 = vsel %vm1141, %v197, 0
      %v1224 = vsel %vm1141, %v198, 0
      %v1227 = vsel %vm1141, %v199, 0
      %v1230 = vsel %vm1141, %v200, 0
      %v1233 = vsel %vm1141, %v201, 0
      %v1236 = vsel %vm1141, %v202, 0
      %v1239 = vsel %vm1141, %v203, 0
      %v1242 = vsel %vm1141, %v204, 0
      %v1245 = vsel %vm1141, %v205, 0
      %v1248 = vsel %vm1141, %v206, 0
      %v1251 = vsel %vm1141, %v207, 0
      %v1254 = vsel %vm1141, %v208, 0
      %v1257 = vsel %vm1141, %v209, 0
      %v1260 = vsel %vm1141, %v210, 0
      %v1263 = vsel %vm1141, %v211, 0
      %v1266 = vsel %vm1141, %v212, 0
      %v1269 = vsel %vm1141, %v213, 0
      %v1272 = vsel %vm1141, %v214, 0
      %v1275 = vsel %vm1141, %v215, 0
      %v1278 = vsel %vm1141, %v216, 0
      %v1281 = vsel %vm1141, %v217, 0
      %v1284 = vsel %vm1141, %v218, 0
      %v1287 = vsel %vm1141, %v219, 0
      %v1290 = vsel %vm1141, %v220, 0
      %v1293 = vsel %vm1141, %v221, 0
      %v1296 = vsel %vm1141, %v222, 0
      %v1299 = vsel %vm1141, %v223, 0
      %v1302 = vsel %vm1141, %v224, 0
      %v1305 = vsel %vm1141, %v225, 0
      %v1308 = vsel %vm1141, %v226, 0
      %v1311 = vsel %vm1141, %v227, 0
      %v1314 = vsel %vm1141, %v228, 0
      %v1317 = vsel %vm1141, %v229, 0
      %v1320 = vsel %vm1141, %v230, 0
      %v1323 = vsel %vm1141, %v231, 0
      %v1326 = vsel %vm1141, %v232, 0
      %v1329 = vsel %vm1141, %v233, 0
      %v1332 = vsel %vm1141, %v234, 0
      %v1335 = vsel %vm1141, %v235, 0
      %v1338 = vsel %vm1141, %v236, 0
      %v1341 = vsel %vm1141, %v237, 0
      %v1344 = vsel %vm1141, %v238, 0
      %v1347 = vsel %vm1141, %v239, 0
      %v1350 = vsel %vm1141, %v240, 0
      %v1353 = vsel %vm1141, %v241, 0
      %v1356 = vsel %vm1141, %v242, 0
      %v1359 = vsel %vm1141, %v243, 0
      %v1362 = vsel %vm1141, %v244, 0
      %v1365 = vsel %vm1141, %v245, 0
      %v1368 = vsel %vm1141, %v246, 0
      %v1371 = vsel %vm1141, %v247, 0
      %v1374 = vsel %vm1141, %v248, 0
      %v1377 = vsel %vm1141, %v249, 0
      %v1380 = vsel %vm1141, %v250, 0
      %v1383 = vsel %vm1141, %v251, 0
      %v1386 = vsel %vm1141, %v252, 0
      %v1389 = vsel %vm1141, %v253, 0
      %v1392 = vsel %vm1141, %v254, 0
      %v1395 = vsel %vm1141, %v255, 0
      %v1398 = vsel %vm1141, %v256, 0
      %v1401 = vsel %vm1141, %v257, 0
      %v1404 = vsel %vm1141, %v258, 0
      %v1407 = vsel %vm1141, %v259, 0
      %v1410 = vsel %vm1141, %v260, 0
      %v1413 = vsel %vm1141, %v261, 0
      %v1416 = vsel %vm1141, %v262, 0
      %v1419 = vsel %vm1141, %v263, 0
      %v1422 = vsel %vm1141, %v264, 0
      %v1425 = vsel %vm1141, %v265, 0
      %v1428 = vsel %vm1141, %v266, 0
      %v1431 = vsel %vm1141, %v267, 0
      %v1434 = vsel %vm1141, %v268, 0
      %v1437 = vsel %vm1141, %v269, 0
      %v1440 = vsel %vm1141, %v270, 0
      %v1443 = vsel %vm1141, %v271, 0
      %v1446 = vsel %vm1141, %v272, 0
      %v1449 = vsel %vm1141, %v273, 0
      %v1452 = vsel %vm1141, %v274, 0
      %v1455 = vsel %vm1141, %v275, 0
      %v1458 = vsel %vm1141, %v276, 0
      %v1461 = vsel %vm1141, %v277, 0
      %v1464 = vsel %vm1141, %v278, 0
      %v1467 = vsel %vm1141, %v279, 0
      %v1470 = vsel %vm1141, %v280, 0
      %v1473 = vsel %vm1141, %v281, 0
      %v1476 = vsel %vm1141, %v282, 0
      %v1479 = vsel %vm1141, %v283, 0
      %v1482 = vsel %vm1141, %v284, 0
      %v1485 = vsel %vm1141, %v285, 0
      %v1488 = vsel %vm1141, %v286, 0
      %v1491 = vsel %vm1141, %v287, 0
      %v1494 = vsel %vm1141, %v288, 0
      %v1497 = vsel %vm1141, %v289, 0
      %v1500 = vsel %vm1141, %v290, 0
      %v1503 = vsel %vm1141, %v291, 0
      %v1506 = vsel %vm1141, %v292, 0
      %v1509 = vsel %vm1141, %v293, 0
      %v1512 = vsel %vm1141, %v294, 0
      %v1515 = vsel %vm1141, %v295, 0
      %v1518 = vsel %vm1141, %v296, 0
      %v1521 = vsel %vm1141, %v297, 0
      %v1524 = vsel %vm1141, %v298, 0
      %v1527 = vsel %vm1141, %v299, 0
      %v1530 = vsel %vm1141, %v300, 0
      %v1533 = vsel %vm1141, %v301, 0
      %v1536 = vsel %vm1141, %v302, 0
      %v1539 = vsel %vm1141, %v303, 0
      %v1542 = vsel %vm1141, %v304, 0
      %v1545 = vsel %vm1141, %v305, 0
      %v1548 = vsel %vm1141, %v306, 0
      %v1551 = vsel %vm1141, %v307, 0
      %v1554 = vsel %vm1141, %v308, 0
      %v1557 = vsel %vm1141, %v309, 0
      %v1560 = vsel %vm1141, %v310, 0
      %v1563 = vsel %vm1141, %v311, 0
      %v1566 = vsel %vm1141, %v312, 0
      %v1569 = vsel %vm1141, %v313, 0
      %v1572 = vsel %vm1141, %v314, 0
      %v1575 = vsel %vm1141, %v315, 0
      %v1578 = vsel %vm1141, %v316, 0
      %v1581 = vsel %vm1141, %v317, 0
      %v1584 = vsel %vm1141, %v318, 0
      %v1587 = vsel %vm1141, %v319, 0
      %v1590 = vsel %vm1141, %v320, 0
      %v1593 = vsel %vm1141, %v321, 0
      %v1596 = vsel %vm1141, %v322, 0
      %v1599 = vsel %vm1141, %v323, 0
      %v1602 = vsel %vm1141, %v324, 0
      %v1605 = vsel %vm1141, %v325, 0
      %v1608 = vsel %vm1141, %v326, 0
      %v1611 = vsel %vm1141, %v327, 0
      %v1614 = vsel %vm1141, %v328, 0
      %v1617 = vsel %vm1141, %v329, 0
      %v1620 = vsel %vm1141, %v330, 0
      %v1623 = vsel %vm1141, %v331, 0
      %v1626 = vsel %vm1141, %v332, 0
      %v1629 = vsel %vm1141, %v333, 0
      %v1632 = vsel %vm1141, %v334, 0
      %v1635 = vsel %vm1141, %v335, 0
      %v1638 = vsel %vm1141, %v336, 0
      %v1641 = vsel %vm1141, %v337, 0
      %v1644 = vsel %vm1141, %v338, 0
      %v1647 = vsel %vm1141, %v339, 0
      %v1650 = vsel %vm1141, %v340, 0
      %v1653 = vsel %vm1141, %v341, 0
      %v1656 = vsel %vm1141, %v342, 0
      %v1659 = vsel %vm1141, %v343, 0
      %v1662 = vsel %vm1141, %v344, 0
      %v1665 = vsel %vm1141, %v345, 0
      %v1668 = vsel %vm1141, %v346, 0
      %v1671 = vsel %vm1141, %v347, 0
      %v1674 = vsel %vm1141, %v348, 0
      %v1677 = vsel %vm1141, %v349, 0
      %v1680 = vsel %vm1141, %v350, 0
      %v1683 = vsel %vm1141, %v351, 0
      %v1686 = vsel %vm1141, %v352, 0
      %v1689 = vsel %vm1141, %v353, 0
      %v1692 = vsel %vm1141, %v354, 0
      %v1695 = vsel %vm1141, %v355, 0
      %v1698 = vsel %vm1141, %v356, 0
      %v1701 = vsel %vm1141, %v357, 0
      %v1704 = vsel %vm1141, %v358, 0
      %v1707 = vsel %vm1141, %v359, 0
      %v1710 = vsel %vm1141, %v360, 0
      %v1713 = vsel %vm1141, %v361, 0
      %v1716 = vsel %vm1141, %v362, 0
      %v1719 = vsel %vm1141, %v363, 0
      %v1722 = vsel %vm1141, %v364, 0
      %v1725 = vsel %vm1141, %v365, 0
      %v1728 = vsel %vm1141, %v366, 0
      %v1731 = vsel %vm1141, %v367, 0
      %v1734 = vsel %vm1141, %v368, 0
      %v1737 = vsel %vm1141, %v369, 0
      %v1740 = vsel %vm1141, %v370, 0
      %v1743 = vsel %vm1141, %v371, 0
      %v1746 = vsel %vm1141, %v372, 0
      %v1749 = vsel %vm1141, %v373, 0
      %v1752 = vsel %vm1141, %v374, 0
      %v1755 = vsel %vm1141, %v375, 0
      %v1758 = vsel %vm1141, %v376, 0
      %v1761 = vsel %vm1141, %v377, 0
      %v1764 = vsel %vm1141, %v378, 0
      %v1767 = vsel %vm1141, %v379, 0
      %v1770 = vsel %vm1141, %v380, 0
      %v1773 = vsel %vm1141, %v381, 0
      %v1776 = vsel %vm1141, %v382, 0
      %v1779 = vsel %vm1141, %v383, 0
      %v1782 = vsel %vm1141, %v384, 0
      %v1785 = vsel %vm1141, %v385, 0
      %v1788 = vsel %vm1141, %v386, 0
      %v1791 = vsel %vm1141, %v387, 0
      %v1794 = vsel %vm1141, %v388, 0
      %v1797 = vsel %vm1141, %v389, 0
      %v1800 = vsel %vm1141, %v390, 0
      %v1803 = vsel %vm1141, %v391, 0
      %v1806 = vsel %vm1141, %v392, 0
      %v1809 = vsel %vm1141, %v393, 0
      %v1812 = vsel %vm1141, %v394, 0
      %v1815 = vsel %vm1141, %v395, 0
      %v1818 = vsel %vm1141, %v396, 0
      %v1821 = vsel %vm1141, %v397, 0
      %v1824 = vsel %vm1141, %v398, 0
      %v1827 = vsel %vm1141, %v399, 0
      %v1830 = vsel %vm1141, %v400, 0
      %v1833 = vsel %vm1141, %v401, 0
      %v1836 = vsel %vm1141, %v402, 0
      %v1839 = vsel %vm1141, %v403, 0
      %v1842 = vsel %vm1141, %v404, 0
      %v1845 = vsel %vm1141, %v405, 0
      %v1848 = vsel %vm1141, %v406, 0
      %v1851 = vsel %vm1141, %v407, 0
      %v1854 = vsel %vm1141, %v408, 0
      %v1857 = vsel %vm1141, %v409, 0
      %v1860 = vsel %vm1141, %v410, 0
      %v1863 = vsel %vm1141, %v411, 0
      %v1866 = vsel %vm1141, %v412, 0
      %v1869 = vsel %vm1141, %v413, 0
      %v1872 = vsel %vm1141, %v414, 0
      %v1875 = vsel %vm1141, %v415, 0
      %v1878 = vsel %vm1141, %v416, 0
      %v1881 = vsel %vm1141, %v417, 0
      %v1884 = vsel %vm1141, %v418, 0
      %v1887 = vsel %vm1141, %v419, 0
      %v1890 = vsel %vm1141, %v420, 0
      %v1893 = vsel %vm1141, %v421, 0
      %v1896 = vsel %vm1141, %v422, 0
      %v1899 = vsel %vm1141, %v423, 0
      %v1902 = vsel %vm1141, %v424, 0
      %v1905 = vsel %vm1141, %v425, 0
      %v1908 = vsel %vm1141, %v426, 0
      %v1911 = vsel %vm1141, %v427, 0
      %v1914 = vsel %vm1141, %v428, 0
      %v1917 = vsel %vm1141, %v429, 0
      %v1920 = vsel %vm1141, %v430, 0
      %v1923 = vsel %vm1141, %v431, 0
      %v1926 = vsel %vm1141, %v432, 0
      %v1929 = vsel %vm1141, %v433, 0
      %v1932 = vsel %vm1141, %v434, 0
      %v1935 = vsel %vm1141, %v435, 0
      %v1938 = vsel %vm1141, %v436, 0
      %v1941 = vsel %vm1141, %v437, 0
      %v1944 = vsel %vm1141, %v438, 0
      %v1947 = vsel %vm1141, %v439, 0
      %v1950 = vsel %vm1141, %v440, 0
      %v1953 = vsel %vm1141, %v441, 0
      %v1956 = vsel %vm1141, %v442, 0
      %v1959 = vsel %vm1141, %v443, 0
      %v1962 = vsel %vm1141, %v444, 0
      %v1965 = vsel %vm1141, %v445, 0
      %v1968 = vsel %vm1141, %v446, 0
      %v1971 = vsel %vm1141, %v447, 0
      %v1974 = vsel %vm1141, %v448, 0
      %v1977 = vsel %vm1141, %v449, 0
      %v1980 = vsel %vm1141, %v450, 0
      %v1983 = vsel %vm1141, %v451, 0
      %v1986 = vsel %vm1141, %v452, 0
      %v1989 = vsel %vm1141, %v453, 0
      %v1992 = vsel %vm1141, %v454, 0
      %v1995 = vsel %vm1141, %v455, 0
      %v1998 = vsel %vm1141, %v456, 0
      %v2001 = vsel %vm1141, %v457, 0
      %v2004 = vsel %vm1141, %v458, 0
      %v2007 = vsel %vm1141, %v459, 0
      %v2010 = vsel %vm1141, %v460, 0
      %v2013 = vsel %vm1141, %v461, 0
      %v2016 = vsel %vm1141, %v462, 0
      %v2019 = vsel %vm1141, %v463, 0
      %v2022 = vsel %vm1141, %v464, 0
      %v2025 = vsel %vm1141, %v465, 0
      %v2028 = vsel %vm1141, %v466, 0
      %v2031 = vsel %vm1141, %v467, 0
      %v2034 = vsel %vm1141, %v468, 0
      %v2037 = vsel %vm1141, %v469, 0
      %v2040 = vsel %vm1141, %v470, 0
      %v2043 = vsel %vm1141, %v471, 0
      %v2046 = vsel %vm1141, %v472, 0
      %v2049 = vsel %vm1141, %v473, 0
      %v2052 = vsel %vm1141, %v474, 0
      %v2055 = vsel %vm1141, %v475, 0
      %v2058 = vsel %vm1141, %v476, 0
      %v2061 = vsel %vm1141, %v477, 0
      %v2064 = vsel %vm1141, %v478, 0
      %v2067 = vsel %vm1141, %v479, 0
      %v2070 = vsel %vm1141, %v480, 0
      %v2073 = vsel %vm1141, %v481, 0
      %v2076 = vsel %vm1141, %v482, 0
      %v2079 = vsel %vm1141, %v483, 0
      %v2082 = vsel %vm1141, %v484, 0
      %v2085 = vsel %vm1141, %v485, 0
      %v2088 = vsel %vm1141, %v486, 0
      %v2091 = vsel %vm1141, %v487, 0
      %v2094 = vsel %vm1141, %v488, 0
      %v2097 = vsel %vm1141, %v489, 0
      %v2100 = vsel %vm1141, %v490, 0
      %v2103 = vsel %vm1141, %v491, 0
      %v2106 = vsel %vm1141, %v492, 0
      %v2109 = vsel %vm1141, %v493, 0
      %v2112 = vsel %vm1141, %v494, 0
      %v2115 = vsel %vm1141, %v495, 0
      %v2118 = vsel %vm1141, %v496, 0
      %v2121 = vsel %vm1141, %v497, 0
      %v2124 = vsel %vm1141, %v498, 0
      %v2127 = vsel %vm1141, %v499, 0
      %v2130 = vsel %vm1141, %v500, 0
      %v2133 = vsel %vm1141, %v501, 0
      %v2136 = vsel %vm1141, %v502, 0
      %v2139 = vsel %vm1141, %v503, 0
      %v2142 = vsel %vm1141, %v504, 0
      %v2145 = vsel %vm1141, %v505, 0
      %v2148 = vsel %vm1141, %v506, 0
      %v2151 = vsel %vm1141, %v507, 0
      %v2154 = vsel %vm1141, %v508, 0
      %v2157 = vsel %vm1141, %v509, 0
      %v2160 = vsel %vm1141, %v510, 0
      %v2163 = vsel %vm1141, %v511, 0
      %v2166 = vsel %vm1141, %v512, 0
      %v2169 = vsel %vm1141, %v513, 0
      %v2172 = vsel %vm1141, %v514, 0
      %v2175 = vsel %vm1141, %v515, 0
      %v2178 = vsel %vm1141, %v516, 0
      %v2181 = vsel %vm1141, %v517, 0
      %v2184 = vsel %vm1141, %v518, 0
      %v2187 = vsel %vm1141, %v519, 0
      %v2190 = vsel %vm1141, %v520, 0
      %v2193 = vsel %vm1141, %v521, 0
      %v2196 = vsel %vm1141, %v522, 0
      %v2199 = vsel %vm1141, %v523, 0
      %v2202 = vsel %vm1141, %v524, 0
      %v2205 = vsel %vm1141, %v525, 0
      %v2208 = vsel %vm1141, %v526, 0
      %v2211 = vsel %vm1141, %v527, 0
      %v2214 = vsel %vm1141, %v528, 0
      %v2217 = vsel %vm1141, %v529, 0
      %v2220 = vsel %vm1141, %v530, 0
      %v2223 = vsel %vm1141, %v531, 0
      %v2226 = vsel %vm1141, %v532, 0
      %v2229 = vsel %vm1141, %v533, 0
      %v2232 = vsel %vm1141, %v534, 0
      %v2235 = vsel %vm1141, %v535, 0
      %v2238 = vsel %vm1141, %v536, 0
      %v2241 = vsel %vm1141, %v537, 0
      %v2244 = vsel %vm1141, %v538, 0
      %v2247 = vsel %vm1141, %v539, 0
      %v2250 = vsel %vm1141, %v540, 0
      %v2253 = vsel %vm1141, %v541, 0
      %v2256 = vsel %vm1141, %v542, 0
      %v2259 = vsel %vm1141, %v543, 0
      %v2262 = vsel %vm1141, %v544, 0
      %v2265 = vsel %vm1141, %v545, 0
      %v2268 = vsel %vm1141, %v546, 0
      %v2271 = vsel %vm1141, %v547, 0
      %v2274 = vsel %vm1141, %v548, 0
      %v2277 = vsel %vm1141, %v549, 0
      %v2280 = vsel %vm1141, %v550, 0
      %v2283 = vsel %vm1141, %v551, 0
      %v2286 = vsel %vm1141, %v552, 0
      %v2289 = vsel %vm1141, %v553, 0
      %v2292 = vsel %vm1141, %v554, 0
      %v2295 = vsel %vm1141, %v555, 0
      %v2298 = vsel %vm1141, %v556, 0
      %v2301 = vsel %vm1141, %v557, 0
      %v2304 = vsel %vm1141, %v558, 0
      %v2307 = vsel %vm1141, %v559, 0
      %v2310 = vsel %vm1141, %v560, 0
      %v2313 = vsel %vm1141, %v561, 0
      %v2316 = vsel %vm1141, %v562, 0
      %v2319 = vsel %vm1141, %v563, 0
      %v2322 = vsel %vm1141, %v564, 0
      %v2325 = vsel %vm1141, %v565, 0
      %v2328 = vsel %vm1141, %v566, 0
      %v2331 = vsel %vm1141, %v567, 0
      %v2334 = vsel %vm1141, %v568, 0
      %v2337 = vsel %vm1141, %v569, 0
      %v2340 = vsel %vm1141, %v570, 0
      %v2343 = vsel %vm1141, %v571, 0
      %v2346 = vsel %vm1141, %v572, 0
      %v2349 = vsel %vm1141, %v573, 0
      %v2352 = vsel %vm1141, %v574, 0
      %v2355 = vsel %vm1141, %v575, 0
      %v2358 = vsel %vm1141, %v576, 0
      %v2361 = vsel %vm1141, %v577, 0
      %v2364 = vsel %vm1141, %v578, 0
      %v2367 = vsel %vm1141, %v579, 0
      %v2370 = vsel %vm1141, %v580, 0
      %v2373 = vsel %vm1141, %v581, 0
      %v2376 = vsel %vm1141, %v582, 0
      %v2379 = vsel %vm1141, %v583, 0
      %v2382 = vsel %vm1141, %v584, 0
      %v2385 = vsel %vm1141, %v585, 0
      %v2388 = vsel %vm1141, %v586, 0
      %v2391 = vsel %vm1141, %v587, 0
      %v2394 = vsel %vm1141, %v588, 0
      %v2397 = vsel %vm1141, %v589, 0
      %v2400 = vsel %vm1141, %v590, 0
      %v2403 = vsel %vm1141, %v591, 0
      %v2406 = vsel %vm1141, %v592, 0
      %v2409 = vsel %vm1141, %v593, 0
      %v2412 = vsel %vm1141, %v594, 0
      %v2415 = vsel %vm1141, %v595, 0
      %v2418 = vsel %vm1141, %v596, 0
      %v2421 = vsel %vm1141, %v597, 0
      %v2424 = vsel %vm1141, %v598, 0
      %v2427 = vsel %vm1141, %v599, 0
      %v2430 = vsel %vm1141, %v600, 0
      %v2433 = vsel %vm1141, %v601, 0
      %v2436 = vsel %vm1141, %v602, 0
      %v2439 = vsel %vm1141, %v603, 0
      %v2442 = vsel %vm1141, %v604, 0
      %v2445 = vsel %vm1141, %v605, 0
      %v2448 = vsel %vm1141, %v606, 0
      %v2451 = vsel %vm1141, %v607, 0
      %v2454 = vsel %vm1141, %v608, 0
      %v2457 = vsel %vm1141, %v609, 0
      %v2460 = vsel %vm1141, %v610, 0
      %v2463 = vsel %vm1141, %v611, 0
      %v2466 = vsel %vm1141, %v612, 0
      %v2469 = vsel %vm1141, %v613, 0
      %v2472 = vsel %vm1141, %v614, 0
      %v2475 = vsel %vm1141, %v615, 0
      %v2478 = vsel %vm1141, %v616, 0
      %v2481 = vsel %vm1141, %v617, 0
      %v2484 = vsel %vm1141, %v618, 0
      %v2487 = vsel %vm1141, %v619, 0
      %v2490 = vsel %vm1141, %v620, 0
      %v2493 = vsel %vm1141, %v621, 0
      %v2496 = vsel %vm1141, %v622, 0
      %v2499 = vsel %vm1141, %v623, 0
      %v2502 = vsel %vm1141, %v624, 0
      %v2505 = vsel %vm1141, %v625, 0
      %v2508 = vsel %vm1141, %v626, 0
      %v2511 = vsel %vm1141, %v627, 0
      %v2514 = vsel %vm1141, %v628, 0
      %v2517 = vsel %vm1141, %v629, 0
      %v2520 = vsel %vm1141, %v630, 0
      %v2523 = vsel %vm1141, %v631, 0
      %v2526 = vsel %vm1141, %v632, 0
      %v2529 = vsel %vm1141, %v633, 0
      %v2532 = vsel %vm1141, %v634, 0
      %v2535 = vsel %vm1141, %v635, 0
      %v2538 = vsel %vm1141, %v636, 0
      %v2541 = vsel %vm1141, %v637, 0
      %v2544 = vsel %vm1141, %v638, 0
      %v2547 = vsel %vm1141, %v639, 0
      %v2550 = vsel %vm1141, %v640, 0
      %v2553 = vsel %vm1141, %v641, 0
      %v2556 = vsel %vm1141, %v642, 0
      %v2559 = vsel %vm1141, %v643, 0
      %v2562 = vsel %vm1141, %v644, 0
      %v2565 = vsel %vm1141, %v645, 0
      %v2568 = vsel %vm1141, %v646, 0
      %v2571 = vsel %vm1141, %v647, 0
      %v2574 = vsel %vm1141, %v648, 0
      %v2577 = vsel %vm1141, %v649, 0
      %v2580 = vsel %vm1141, %v650, 0
      %v2583 = vsel %vm1141, %v651, 0
      %v2586 = vsel %vm1141, %v652, 0
      %v2589 = vsel %vm1141, %v653, 0
      %v2592 = vsel %vm1141, %v654, 0
      %v2595 = vsel %vm1141, %v655, 0
      %v2598 = vsel %vm1141, %v656, 0
      %v2601 = vsel %vm1141, %v657, 0
      %v2604 = vsel %vm1141, %v658, 0
      %v2607 = vsel %vm1141, %v659, 0
      %v2610 = vsel %vm1141, %v660, 0
      %v2613 = vsel %vm1141, %v661, 0
      %v2616 = vsel %vm1141, %v662, 0
      %v2619 = vsel %vm1141, %v663, 0
      %v2622 = vsel %vm1141, %v664, 0
      %v2625 = vsel %vm1141, %v665, 0
      %v2628 = vsel %vm1141, %v666, 0
      %v2631 = vsel %vm1141, %v667, 0
      %v2634 = vsel %vm1141, %v668, 0
      %v2637 = vsel %vm1141, %v669, 0
      %v2640 = vsel %vm1141, %v670, 0
      %v2643 = vsel %vm1141, %v671, 0
      %v2646 = vsel %vm1141, %v672, 0
      %v2649 = vsel %vm1141, %v673, 0
      %v2652 = vsel %vm1141, %v674, 0
      %v2655 = vsel %vm1141, %v675, 0
      %v2658 = vsel %vm1141, %v676, 0
      %v2661 = vsel %vm1141, %v677, 0
      %v2664 = vsel %vm1141, %v678, 0
      %v2667 = vsel %vm1141, %v679, 0
      %v2670 = vsel %vm1141, %v680, 0
      %v2673 = vsel %vm1141, %v681, 0
      %v2676 = vsel %vm1141, %v682, 0
      %v2679 = vsel %vm1141, %v683, 0
      %v2682 = vsel %vm1141, %v684, 0
      %v2685 = vsel %vm1141, %v685, 0
      %v2688 = vsel %vm1141, %v686, 0
      %v2691 = vsel %vm1141, %v687, 0
      %v2694 = vsel %vm1141, %v688, 0
      %v2697 = vsel %vm1141, %v689, 0
      %v2700 = vsel %vm1141, %v690, 0
      %v2703 = vsel %vm1141, %v691, 0
      %v2706 = vsel %vm1141, %v692, 0
      %v2709 = vsel %vm1141, %v693, 0
      %v2712 = vsel %vm1141, %v694, 0
      %v2715 = vsel %vm1141, %v695, 0
      %v2718 = vsel %vm1141, %v696, 0
      %v2721 = vsel %vm1141, %v697, 0
      %v2724 = vsel %vm1141, %v698, 0
      %v2727 = vsel %vm1141, %v699, 0
      %v2730 = vsel %vm1141, %v700, 0
      %v2733 = vsel %vm1141, %v701, 0
      %v2736 = vsel %vm1141, %v702, 0
      %v2739 = vsel %vm1141, %v703, 0
      %v2742 = vsel %vm1141, %v704, 0
      %v2745 = vsel %vm1141, %v705, 0
      %v2748 = vsel %vm1141, %v706, 0
      %v2751 = vsel %vm1141, %v707, 0
      %v2754 = vsel %vm1141, %v708, 0
      %v2757 = vsel %vm1141, %v709, 0
      %v2760 = vsel %vm1141, %v710, 0
      %v2763 = vsel %vm1141, %v711, 0
      %v2766 = vsel %vm1141, %v712, 0
      %v2769 = vsel %vm1141, %v713, 0
      %v2772 = vsel %vm1141, %v714, 0
      %v2775 = vsel %vm1141, %v715, 0
      %v2778 = vsel %vm1141, %v716, 0
      %v2781 = vsel %vm1141, %v717, 0
      %v2784 = vsel %vm1141, %v718, 0
      %v2787 = vsel %vm1141, %v719, 0
      %v2790 = vsel %vm1141, %v720, 0
      %v2793 = vsel %vm1141, %v721, 0
      %v2796 = vsel %vm1141, %v722, 0
      %v2799 = vsel %vm1141, %v723, 0
      %v2802 = vsel %vm1141, %v724, 0
      %v2805 = vsel %vm1141, %v725, 0
      %v2808 = vsel %vm1141, %v726, 0
      %v2811 = vsel %vm1141, %v727, 0
      %v2814 = vsel %vm1141, %v728, 0
      %v2817 = vsel %vm1141, %v729, 0
      %v2820 = vsel %vm1141, %v730, 0
      %v2823 = vsel %vm1141, %v731, 0
      %v2826 = vsel %vm1141, %v732, 0
      %v2829 = vsel %vm1141, %v733, 0
      %v2832 = vsel %vm1141, %v734, 0
      %v2835 = vsel %vm1141, %v735, 0
      %v2838 = vsel %vm1141, %v736, 0
      %v2841 = vsel %vm1141, %v737, 0
      %v2844 = vsel %vm1141, %v738, 0
      %v2847 = vsel %vm1141, %v739, 0
      %v2850 = vsel %vm1141, %v740, 0
      %v2853 = vsel %vm1141, %v741, 0
      %v2856 = vsel %vm1141, %v742, 0
      %v2859 = vsel %vm1141, %v743, 0
      %v2862 = vsel %vm1141, %v744, 0
      %v2865 = vsel %vm1141, %v745, 0
      %v2868 = vsel %vm1141, %v746, 0
      %v2871 = vsel %vm1141, %v747, 0
      %v2874 = vsel %vm1141, %v748, 0
      %v2877 = vsel %vm1141, %v749, 0
      %v2880 = vsel %vm1141, %v750, 0
      %v2883 = vsel %vm1141, %v751, 0
      %v2886 = vsel %vm1141, %v752, 0
      %v2889 = vsel %vm1141, %v753, 0
      %v2892 = vsel %vm1141, %v754, 0
      %v2895 = vsel %vm1141, %v755, 0
      %v2898 = vsel %vm1141, %v756, 0
      %v2901 = vsel %vm1141, %v757, 0
      %v2904 = vsel %vm1141, %v758, 0
      %v2907 = vsel %vm1141, %v759, 0
      %v2910 = vsel %vm1141, %v760, 0
      %v2913 = vsel %vm1141, %v761, 0
      %v2916 = vsel %vm1141, %v762, 0
      %v2919 = vsel %vm1141, %v763, 0
      %v2922 = vsel %vm1141, %v764, 0
      %v2925 = vsel %vm1141, %v765, 0
      %v2928 = vsel %vm1141, %v766, 0
      %v2931 = vsel %vm1141, %v767, 0
      %v2934 = vsel %vm1141, %v768, 0
      %v2937 = vsel %vm1141, %v769, 0
      %v2940 = vsel %vm1141, %v770, 0
      %v2943 = vsel %vm1141, %v771, 0
      %v2946 = vsel %vm1141, %v772, 0
      %v2949 = vsel %vm1141, %v773, 0
      %v2952 = vsel %vm1141, %v774, 0
      %v2955 = vsel %vm1141, %v775, 0
      %v2958 = vsel %vm1141, %v776, 0
      %v2961 = vsel %vm1141, %v777, 0
      %v2964 = vsel %vm1141, %v778, 0
      %v2967 = vsel %vm1141, %v779, 0
      %v2970 = vsel %vm1141, %v780, 0
      %v2973 = vsel %vm1141, %v781, 0
      %v2976 = vsel %vm1141, %v782, 0
      %v2979 = vsel %vm1141, %v783, 0
      %v2982 = vsel %vm1141, %v784, 0
      %v2985 = vsel %vm1141, %v785, 0
      %v2988 = vsel %vm1141, %v786, 0
      %v2991 = vsel %vm1141, %v787, 0
      %v2994 = vsel %vm1141, %v788, 0
      %v2997 = vsel %vm1141, %v789, 0
      %v3000 = vsel %vm1141, %v790, 0
      %v3003 = vsel %vm1141, %v791, 0
      %v3006 = vsel %vm1141, %v792, 0
      %v3009 = vsel %vm1141, %v793, 0
      %v3012 = vsel %vm1141, %v794, 0
      %v3015 = vsel %vm1141, %v795, 0
      %v3018 = vsel %vm1141, %v796, 0
      %v3021 = vsel %vm1141, %v797, 0
      %v3024 = vsel %vm1141, %v798, 0
      %v3027 = vsel %vm1141, %v799, 0
      %v3030 = vsel %vm1141, %v800, 0
      %v3033 = vsel %vm1141, %v801, 0
      %v3036 = vsel %vm1141, %v802, 0
      %v3039 = vsel %vm1141, %v803, 0
      %v3042 = vsel %vm1141, %v804, 0
      %v3045 = vsel %vm1141, %v805, 0
      %v3048 = vsel %vm1141, %v806, 0
      %v3051 = vsel %vm1141, %v807, 0
      %v3054 = vsel %vm1141, %v808, 0
      %v3057 = vsel %vm1141, %v809, 0
      %v3060 = vsel %vm1141, %v810, 0
      %v3063 = vsel %vm1141, %v811, 0
      %v3066 = vsel %vm1141, %v812, 0
      %v3069 = vsel %vm1141, %v813, 0
      %v3072 = vsel %vm1141, %v814, 0
      %v3075 = vsel %vm1141, %v815, 0
      %v3078 = vsel %vm1141, %v816, 0
      %v3081 = vsel %vm1141, %v817, 0
      %v3084 = vsel %vm1141, %v818, 0
      %v3087 = vsel %vm1141, %v819, 0
      %v3090 = vsel %vm1141, %v820, 0
      %v3093 = vsel %vm1141, %v821, 0
      %v3096 = vsel %vm1141, %v822, 0
      %v3099 = vsel %vm1141, %v823, 0
      %v3102 = vsel %vm1141, %v824, 0
      %v3105 = vsel %vm1141, %v825, 0
      %v3108 = vsel %vm1141, %v826, 0
      %v3111 = vsel %vm1141, %v827, 0
      %v3114 = vsel %vm1141, %v828, 0
      %v3117 = vsel %vm1141, %v829, 0
      %v3120 = vsel %vm1141, %v830, 0
      %v3123 = vsel %vm1141, %v831, 0
      %v3126 = vsel %vm1141, %v832, 0
      %v3129 = vsel %vm1141, %v833, 0
      %v3132 = vsel %vm1141, %v834, 0
      %v3135 = vsel %vm1141, %v835, 0
      %v3138 = vsel %vm1141, %v836, 0
      %v3141 = vsel %vm1141, %v837, 0
      %v3144 = vsel %vm1141, %v838, 0
      %v3147 = vsel %vm1141, %v839, 0
      %v3150 = vsel %vm1141, %v840, 0
      %v3153 = vsel %vm1141, %v841, 0
      %v3156 = vsel %vm1141, %v842, 0
      %v3159 = vsel %vm1141, %v843, 0
      %v3162 = vsel %vm1141, %v844, 0
      %v3165 = vsel %vm1141, %v845, 0
      %v3168 = vsel %vm1141, %v846, 0
      %v3171 = vsel %vm1141, %v847, 0
      %v3174 = vsel %vm1141, %v848, 0
      %v3177 = vsel %vm1141, %v849, 0
      %v3180 = vsel %vm1141, %v850, 0
      %v3183 = vsel %vm1141, %v851, 0
      %v3186 = vsel %vm1141, %v852, 0
      %v3189 = vsel %vm1141, %v853, 0
      %v3192 = vsel %vm1141, %v854, 0
      %v3195 = vsel %vm1141, %v855, 0
      %v3198 = vsel %vm1141, %v856, 0
      %v3201 = vsel %vm1141, %v857, 0
      %v3204 = vsel %vm1141, %v858, 0
      %v3207 = vsel %vm1141, %v859, 0
      %v3210 = vsel %vm1141, %v860, 0
      %v3213 = vsel %vm1141, %v861, 0
      %v3216 = vsel %vm1141, %v862, 0
      %v3219 = vsel %vm1141, %v863, 0
      %v3222 = vsel %vm1141, %v864, 0
      %v3225 = vsel %vm1141, %v865, 0
      %v3228 = vsel %vm1141, %v866, 0
      %v3231 = vsel %vm1141, %v867, 0
      %v3234 = vsel %vm1141, %v868, 0
      %v3237 = vsel %vm1141, %v869, 0
      %v3240 = vsel %vm1141, %v870, 0
      %v3243 = vsel %vm1141, %v871, 0
      %v3246 = vsel %vm1141, %v872, 0
      %v3249 = vsel %vm1141, %v873, 0
      %v3252 = vsel %vm1141, %v874, 0
      %v3255 = vsel %vm1141, %v875, 0
      %v3258 = vsel %vm1141, %v876, 0
      %v3261 = vsel %vm1141, %v877, 0
      %v3264 = vsel %vm1141, %v878, 0
      %v3267 = vsel %vm1141, %v879, 0
      %v3270 = vsel %vm1141, %v880, 0
      %v3273 = vsel %vm1141, %v881, 0
      %v3276 = vsel %vm1141, %v882, 0
      %v3279 = vsel %vm1141, %v883, 0
      %v3282 = vsel %vm1141, %v884, 0
      %v3285 = vsel %vm1141, %v885, 0
      %v3288 = vsel %vm1141, %v886, 0
      %v3291 = vsel %vm1141, %v887, 0
      %v3294 = vsel %vm1141, %v888, 0
      %v3297 = vsel %vm1141, %v889, 0
      %v3300 = vsel %vm1141, %v890, 0
      %v3303 = vsel %vm1141, %v891, 0
      %v3306 = vsel %vm1141, %v892, 0
      %v3309 = vsel %vm1141, %v893, 0
      %v3312 = vsel %vm1141, %v894, 0
      %v3315 = vsel %vm1141, %v895, 0
      %v3318 = vsel %vm1141, %v896, 0
      %v3321 = vsel %vm1141, %v897, 0
      %v3324 = vsel %vm1141, %v898, 0
      %v3327 = vsel %vm1141, %v899, 0
      %v3330 = vsel %vm1141, %v900, 0
      %v3333 = vsel %vm1141, %v901, 0
      %v3336 = vsel %vm1141, %v902, 0
      %v3339 = vsel %vm1141, %v903, 0
      %v3342 = vsel %vm1141, %v904, 0
      %v3345 = vsel %vm1141, %v905, 0
      %v3348 = vsel %vm1141, %v906, 0
      %v3351 = vsel %vm1141, %v907, 0
      %v3354 = vsel %vm1141, %v908, 0
      %v3357 = vsel %vm1141, %v909, 0
      %v3360 = vsel %vm1141, %v910, 0
      %v3363 = vsel %vm1141, %v911, 0
      %v3366 = vsel %vm1141, %v912, 0
      %v3369 = vsel %vm1141, %v913, 0
      %v3372 = vsel %vm1141, %v914, 0
      %v3375 = vsel %vm1141, %v915, 0
      %v3378 = vsel %vm1141, %v916, 0
      %v3381 = vsel %vm1141, %v917, 0
      %v3384 = vsel %vm1141, %v918, 0
      %v3387 = vsel %vm1141, %v919, 0
      %v3390 = vsel %vm1141, %v920, 0
      %v3393 = vsel %vm1141, %v921, 0
      %v3396 = vsel %vm1141, %v922, 0
      %v3399 = vsel %vm1141, %v923, 0
      %v3402 = vsel %vm1141, %v924, 0
      %v3405 = vsel %vm1141, %v925, 0
      %v3408 = vsel %vm1141, %v926, 0
      %v3411 = vsel %vm1141, %v927, 0
      %v3414 = vsel %vm1141, %v928, 0
      %v3417 = vsel %vm1141, %v929, 0
      %v3420 = vsel %vm1141, %v930, 0
      %v3423 = vsel %vm1141, %v931, 0
      %v3426 = vsel %vm1141, %v932, 0
      %v3429 = vsel %vm1141, %v933, 0
      %v3432 = vsel %vm1141, %v934, 0
      %v3435 = vsel %vm1141, %v935, 0
      %v3438 = vsel %vm1141, %v936, 0
      %v3441 = vsel %vm1141, %v937, 0
      %v3444 = vsel %vm1141, %v938, 0
      %v3447 = vsel %vm1141, %v939, 0
      %v3450 = vsel %vm1141, %v940, 0
      %v3453 = vsel %vm1141, %v941, 0
      %v3456 = vsel %vm1141, %v942, 0
      %v3459 = vsel %vm1141, %v943, 0
      %v3462 = vsel %vm1141, %v944, 0
      %v3465 = vsel %vm1141, %v945, 0
      %v3468 = vsel %vm1141, %v946, 0
      %v3471 = vsel %vm1141, %v947, 0
      %v3474 = vsel %vm1141, %v948, 0
      %v3477 = vsel %vm1141, %v949, 0
      %v3480 = vsel %vm1141, %v950, 0
      %v3483 = vsel %vm1141, %v951, 0
      %v3486 = vsel %vm1141, %v952, 0
      %v3489 = vsel %vm1141, %v953, 0
      %v3492 = vsel %vm1141, %v954, 0
      %v3495 = vsel %vm1141, %v955, 0
      %v3498 = vsel %vm1141, %v956, 0
      %v3501 = vsel %vm1141, %v957, 0
      %v3504 = vsel %vm1141, %v958, 0
      %v3507 = vsel %vm1141, %v959, 0
      %v3510 = vsel %vm1141, %v960, 0
      %v3513 = vsel %vm1141, %v961, 0
      %v3516 = vsel %vm1141, %v962, 0
      %v3519 = vsel %vm1141, %v963, 0
      %v3522 = vsel %vm1141, %v964, 0
      %v3525 = vsel %vm1141, %v965, 0
      %v3528 = vsel %vm1141, %v966, 0
      %v3531 = vsel %vm1141, %v967, 0
      %v3534 = vsel %vm1141, %v968, 0
      %v3537 = vsel %vm1141, %v969, 0
      %v3540 = vsel %vm1141, %v970, 0
      %v3543 = vsel %vm1141, %v971, 0
      %v3546 = vsel %vm1141, %v972, 0
      %v3549 = vsel %vm1141, %v973, 0
      %v3552 = vsel %vm1141, %v974, 0
      %v3555 = vsel %vm1141, %v975, 0
      %v3558 = vsel %vm1141, %v976, 0
      %v3561 = vsel %vm1141, %v977, 0
      %v3564 = vsel %vm1141, %v978, 0
      %v3567 = vsel %vm1141, %v979, 0
      %v3570 = vsel %vm1141, %v980, 0
      %v3573 = vsel %vm1141, %v981, 0
      %v3576 = vsel %vm1141, %v982, 0
      %v3579 = vsel %vm1141, %v983, 0
      %v3582 = vsel %vm1141, %v984, 0
      %v3585 = vsel %vm1141, %v985, 0
      %v3588 = vsel %vm1141, %v986, 0
      %v3591 = vsel %vm1141, %v987, 0
      %v3594 = vsel %vm1141, %v988, 0
      %v3597 = vsel %vm1141, %v989, 0
      %v3600 = vsel %vm1141, %v990, 0
      %v3603 = vsel %vm1141, %v991, 0
      %v3606 = vsel %vm1141, %v992, 0
      %v3609 = vsel %vm1141, %v993, 0
      %v3612 = vsel %vm1141, %v994, 0
      %v3615 = vsel %vm1141, %v995, 0
      %v3618 = vsel %vm1141, %v996, 0
      %v3621 = vsel %vm1141, %v997, 0
      %v3624 = vsel %vm1141, %v998, 0
      %v3627 = vsel %vm1141, %v999, 0
      %v3630 = vsel %vm1141, %v1000, 0
      %v3633 = vsel %vm1141, %v1001, 0
      %v3636 = vsel %vm1141, %v1002, 0
      %v3639 = vsel %vm1141, %v1003, 0
      %v3642 = vsel %vm1141, %v1004, 0
      %v3645 = vsel %vm1141, %v1005, 0
      %v3648 = vsel %vm1141, %v1006, 0
      %v3651 = vsel %vm1141, %v1007, 0
      %v3654 = vsel %vm1141, %v1008, 0
      %v3657 = vsel %vm1141, %v1009, 0
      %v3660 = vsel %vm1141, %v1010, 0
      %v3663 = vsel %vm1141, %v1011, 0
      %v3666 = vsel %vm1141, %v1012, 0
      %v3669 = vsel %vm1141, %v1013, 0
      %v3672 = vsel %vm1141, %v1014, 0
      %v3675 = vsel %vm1141, %v1015, 0
      %v3678 = vsel %vm1141, %v1016, 0
      %v3681 = vsel %vm1141, %v1017, 0
      %v3684 = vsel %vm1141, %v1018, 0
      %v3687 = vsel %vm1141, %v1019, 0
      %v3690 = vsel %vm1141, %v1020, 0
      %v3693 = vsel %vm1141, %v1021, 0
      %v3696 = vsel %vm1141, %v1022, 0
      %v3699 = vsel %vm1141, %v1023, 0
      %v3702 = vsel %vm1141, %v1024, 0
      %v3705 = vsel %vm1141, %v1025, 0
      %v3708 = vsel %vm1141, %v1026, 0
      %v3711 = vsel %vm1141, %v1027, 0
      %v3714 = vsel %vm1141, %v1028, 0
      %v3717 = vsel %vm1141, %v1029, 0
      %v3720 = vsel %vm1141, %v1030, 0
      %v3723 = vsel %vm1141, %v1031, 0
      %v3726 = vsel %vm1141, %v1032, 0
      %v3729 = vsel %vm1141, %v1033, 0
      %v3732 = vsel %vm1141, %v1034, 0
      %v3735 = vsel %vm1141, %v1035, 0
      %v3738 = vsel %vm1141, %v1036, 0
      %v3741 = vsel %vm1141, %v1037, 0
      %v3744 = vsel %vm1141, %v1038, 0
      %v3747 = vsel %vm1141, %v1039, 0
      %v3750 = vsel %vm1141, %v1040, 0
      %v3753 = vsel %vm1141, %v1041, 0
      %v3756 = vsel %vm1141, %v1042, 0
      %v3759 = vsel %vm1141, %v1043, 0
      %v3762 = vsel %vm1141, %v1044, 0
      %v3765 = vsel %vm1141, %v1045, 0
      %v3768 = vsel %vm1141, %v1046, 0
      %v3771 = vsel %vm1141, %v1047, 0
      %v3774 = vsel %vm1141, %v1048, 0
      %v3777 = vsel %vm1141, %v1049, 0
      %v3780 = vsel %vm1141, %v1050, 0
      %v3783 = vsel %vm1141, %v1051, 0
      %v3786 = vsel %vm1141, %v1052, 0
      %v3789 = vsel %vm1141, %v1053, 0
      %v3792 = vsel %vm1141, %v1054, 0
      %v3795 = vsel %vm1141, %v1055, 0
      %v3798 = vsel %vm1141, %v1056, 0
      %v3801 = vsel %vm1141, %v1057, 0
      %v3804 = vsel %vm1141, %v1058, 0
      %v3807 = vsel %vm1141, %v1059, 0
      %v3810 = vsel %vm1141, %v1060, 0
      %v3813 = vsel %vm1141, %v1061, 0
      %v3816 = vsel %vm1141, %v1062, 0
      %v3819 = vsel %vm1141, %v1063, 0
      %v3822 = vsel %vm1141, %v1064, 0
      %v3825 = vsel %vm1141, %v1065, 0
      %v3828 = vsel %vm1141, %v1066, 0
      %v3831 = vsel %vm1141, %v1067, 0
      %v3834 = vsel %vm1141, %v1068, 0
      %v3837 = vsel %vm1141, %v1069, 0
      %v3840 = vsel %vm1141, %v1070, 0
      %v3843 = vsel %vm1141, %v1071, 0
      %v3846 = vsel %vm1141, %v1072, 0
      %v3849 = vsel %vm1141, %v1073, 0
      %v3852 = vsel %vm1141, %v1074, 0
      %v3855 = vsel %vm1141, %v1075, 0
      %v3858 = vsel %vm1141, %v1076, 0
      %v3861 = vsel %vm1141, %v1077, 0
      %v3864 = vsel %vm1141, %v1078, 0
      %v3867 = vsel %vm1141, %v1079, 0
      %v3870 = vsel %vm1141, %v1080, 0
      %v3873 = vsel %vm1141, %v1081, 0
      %v3876 = vsel %vm1141, %v1082, 0
      %v3879 = vsel %vm1141, %v1083, 0
      %v3882 = vsel %vm1141, %v1084, 0
      %v3885 = vsel %vm1141, %v1085, 0
      %v3888 = vsel %vm1141, %v1086, 0
      %v3891 = vsel %vm1141, %v1087, 0
      %v3894 = vsel %vm1141, %v1088, 0
      %v3897 = vsel %vm1141, %v1089, 0
      %v3900 = vsel %vm1141, %v1090, 0
      %v3903 = vsel %vm1141, %v1091, 0
      %v3906 = vsel %vm1141, %v1092, 0
      %v3909 = vsel %vm1141, %v1093, 0
      %v3912 = vsel %vm1141, %v1094, 0
      %v3915 = vsel %vm1141, %v1095, 0
      %v3918 = vsel %vm1141, %v1096, 0
      %v3921 = vsel %vm1141, %v1097, 0
      %v3924 = vsel %vm1141, %v1098, 0
      %v3927 = vsel %vm1141, %v1099, 0
      %v3930 = vsel %vm1141, %v1100, 0
      %v3933 = vsel %vm1141, %v1101, 0
      %v3936 = vsel %vm1141, %v1102, 0
      %v3939 = vsel %vm1141, %v1103, 0
      %v3942 = vsel %vm1141, %v1104, 0
      %v3945 = vsel %vm1141, %v1105, 0
      %v3948 = vsel %vm1141, %v1106, 0
      %v3951 = vsel %vm1141, %v1107, 0
      %v3954 = vsel %vm1141, %v1108, 0
      %v3957 = vsel %vm1141, %v1109, 0
      %v3960 = vsel %vm1141, %v1110, 0
      %v3963 = vsel %vm1141, %v1111, 0
      %v3966 = vsel %vm1141, %v1112, 0
      %v3969 = vsel %vm1141, %v1113, 0
      %v3972 = vsel %vm1141, %v1114, 0
      %v3975 = vsel %vm1141, %v1115, 0
      %v3978 = vsel %vm1141, %v1116, 0
      %v3981 = vsel %vm1141, %v1117, 0
      %v3984 = vsel %vm1141, %v1118, 0
      %v3987 = vsel %vm1141, %v1119, 0
      %v3990 = vsel %vm1141, %v1120, 0
      %v3993 = vsel %vm1141, %v1121, 0
      %v3996 = vsel %vm1141, %v1122, 0
      %v3999 = vsel %vm1141, %v1123, 0
      %v4002 = vsel %vm1141, %v1124, 0
      %v4005 = vsel %vm1141, %v1125, 0
      %v4008 = vsel %vm1141, %v1126, 0
      %v4011 = vsel %vm1141, %v1127, 0
      %v4014 = vsel %vm1141, %v1128, 0
      %v4017 = vsel %vm1141, %v1129, 0
      %v4020 = vsel %vm1141, %v1130, 0
      %v4023 = vsel %vm1141, %v1131, 0
      %v4026 = vsel %vm1141, %v1132, 0
      %v4029 = vsel %vm1141, %v1133, 0
      %v4032 = vsel %vm1141, %v1134, 0
      %v4035 = vsel %vm1141, %v1135, 0
      %v4038 = vsel %vm1141, %v1136, 0
      %v4041 = vsel %vm1141, %v1137, 0
      %v4044 = vsel %vm1141, %v1138, 0
      %4046 = vmatpush.msra.mxu0 0.0
      %4047 = vmatpush.msra.mxu0 0.0
      %4048 = vmatpush.msra.mxu0 0.0
      %4049 = vmatpush.msra.mxu0 0.0
      %4050 = vmatpush.msra.mxu0 0.0
      %4051 = vmatpush.msra.mxu0 0.0
      %4052 = vmatpush.msra.mxu0 0.0
      %4053 = vmatpush.msra.mxu0 0.0
      %4054 = vmatpush.msra.mxu0 0.0
      %4055 = vmatpush.msra.mxu0 0.0
      %4056 = vmatpush.msra.mxu0 0.0
      %4057 = vmatpush.msra.mxu0 0.0
      %4058 = vmatpush.msra.mxu0 0.0
      %4059 = vmatpush.msra.mxu0 0.0
      %4060 = vmatpush.msra.mxu0 %v1140
      %4061 = vmatpush.msra.mxu0 %v1139
      %4062 = vmatmul.f32.gmra.mxu0 %v1143
      %v4063 = vpop.f32.mrf.mxu0
      %v4064 = vadd.f32 0.0, %v4063
      %4065 = vmatmul.f32.gmra.mxu0 %v1146
      %v4066 = vpop.f32.mrf.mxu0
      %v4067 = vadd.f32 0.0, %v4066
      %4068 = vmatmul.f32.gmra.mxu0 %v1149
      %v4069 = vpop.f32.mrf.mxu0
      %v4070 = vadd.f32 0.0, %v4069
      %4071 = vmatmul.f32.gmra.mxu0 %v1152
      %v4072 = vpop.f32.mrf.mxu0
      %v4073 = vadd.f32 0.0, %v4072
      %4074 = vmatmul.f32.gmra.mxu0 %v1155
      %v4075 = vpop.f32.mrf.mxu0
      %v4076 = vadd.f32 0.0, %v4075
      %4077 = vmatmul.f32.gmra.mxu0 %v1158
      %v4078 = vpop.f32.mrf.mxu0
      %v4079 = vadd.f32 0.0, %v4078
      %4080 = vmatmul.f32.gmra.mxu0 %v1161
      %v4081 = vpop.f32.mrf.mxu0
      %v4082 = vadd.f32 0.0, %v4081
      %4083 = vmatmul.f32.gmra.mxu0 %v1164
      %v4084 = vpop.f32.mrf.mxu0
      %v4085 = vadd.f32 0.0, %v4084
      %4086 = vmatmul.f32.gmra.mxu0 %v1167
      %v4087 = vpop.f32.mrf.mxu0
      %v4088 = vadd.f32 0.0, %v4087
      %4089 = vmatmul.f32.gmra.mxu0 %v1170
      %v4090 = vpop.f32.mrf.mxu0
      %v4091 = vadd.f32 0.0, %v4090
      %4092 = vmatmul.f32.gmra.mxu0 %v1173
      %v4093 = vpop.f32.mrf.mxu0
      %v4094 = vadd.f32 0.0, %v4093
      %4095 = vmatmul.f32.gmra.mxu0 %v1176
      %v4096 = vpop.f32.mrf.mxu0
      %v4097 = vadd.f32 0.0, %v4096
      %4098 = vmatmul.f32.gmra.mxu0 %v1179
      %v4099 = vpop.f32.mrf.mxu0
      %v4100 = vadd.f32 0.0, %v4099
      %4101 = vmatmul.f32.gmra.mxu0 %v1182
      %v4102 = vpop.f32.mrf.mxu0
      %v4103 = vadd.f32 0.0, %v4102
      %4104 = vmatmul.f32.gmra.mxu0 %v1185
      %v4105 = vpop.f32.mrf.mxu0
      %v4106 = vadd.f32 0.0, %v4105
      %4107 = vmatmul.f32.gmra.mxu0 %v1188
      %v4108 = vpop.f32.mrf.mxu0
      %v4109 = vadd.f32 0.0, %v4108
      %4110 = vmatmul.f32.gmra.mxu0 %v1191
      %v4111 = vpop.f32.mrf.mxu0
      %v4112 = vadd.f32 0.0, %v4111
      %4113 = vmatmul.f32.gmra.mxu0 %v1194
      %v4114 = vpop.f32.mrf.mxu0
      %v4115 = vadd.f32 0.0, %v4114
      %4116 = vmatmul.f32.gmra.mxu0 %v1197
      %v4117 = vpop.f32.mrf.mxu0
      %v4118 = vadd.f32 0.0, %v4117
      %4119 = vmatmul.f32.gmra.mxu0 %v1200
      %v4120 = vpop.f32.mrf.mxu0
      %v4121 = vadd.f32 0.0, %v4120
      %4122 = vmatmul.f32.gmra.mxu0 %v1203
      %v4123 = vpop.f32.mrf.mxu0
      %v4124 = vadd.f32 0.0, %v4123
      %4125 = vmatmul.f32.gmra.mxu0 %v1206
      %v4126 = vpop.f32.mrf.mxu0
      %v4127 = vadd.f32 0.0, %v4126
      %4128 = vmatmul.f32.gmra.mxu0 %v1209
      %v4129 = vpop.f32.mrf.mxu0
      %v4130 = vadd.f32 0.0, %v4129
      %4131 = vmatmul.f32.gmra.mxu0 %v1212
      %v4132 = vpop.f32.mrf.mxu0
      %v4133 = vadd.f32 0.0, %v4132
      %4134 = vmatmul.f32.gmra.mxu0 %v1215
      %v4135 = vpop.f32.mrf.mxu0
      %v4136 = vadd.f32 0.0, %v4135
      %4137 = vmatmul.f32.gmra.mxu0 %v1218
      %v4138 = vpop.f32.mrf.mxu0
      %v4139 = vadd.f32 0.0, %v4138
      %4140 = vmatmul.f32.gmra.mxu0 %v1221
      %v4141 = vpop.f32.mrf.mxu0
      %v4142 = vadd.f32 0.0, %v4141
      %4143 = vmatmul.f32.gmra.mxu0 %v1224
      %v4144 = vpop.f32.mrf.mxu0
      %v4145 = vadd.f32 0.0, %v4144
      %4146 = vmatmul.f32.gmra.mxu0 %v1227
      %v4147 = vpop.f32.mrf.mxu0
      %v4148 = vadd.f32 0.0, %v4147
      %4149 = vmatmul.f32.gmra.mxu0 %v1230
      %v4150 = vpop.f32.mrf.mxu0
      %v4151 = vadd.f32 0.0, %v4150
      %4152 = vmatmul.f32.gmra.mxu0 %v1233
      %v4153 = vpop.f32.mrf.mxu0
      %v4154 = vadd.f32 0.0, %v4153
      %4155 = vmatmul.f32.gmra.mxu0 %v1236
      %v4156 = vpop.f32.mrf.mxu0
      %v4157 = vadd.f32 0.0, %v4156
      %4158 = vmatmul.f32.gmra.mxu0 %v1239
      %v4159 = vpop.f32.mrf.mxu0
      %v4160 = vadd.f32 0.0, %v4159
      %4161 = vmatmul.f32.gmra.mxu0 %v1242
      %v4162 = vpop.f32.mrf.mxu0
      %v4163 = vadd.f32 0.0, %v4162
      %4164 = vmatmul.f32.gmra.mxu0 %v1245
      %v4165 = vpop.f32.mrf.mxu0
      %v4166 = vadd.f32 0.0, %v4165
      %4167 = vmatmul.f32.gmra.mxu0 %v1248
      %v4168 = vpop.f32.mrf.mxu0
      %v4169 = vadd.f32 0.0, %v4168
      %4170 = vmatmul.f32.gmra.mxu0 %v1251
      %v4171 = vpop.f32.mrf.mxu0
      %v4172 = vadd.f32 0.0, %v4171
      %4173 = vmatmul.f32.gmra.mxu0 %v1254
      %v4174 = vpop.f32.mrf.mxu0
      %v4175 = vadd.f32 0.0, %v4174
      %4176 = vmatmul.f32.gmra.mxu0 %v1257
      %v4177 = vpop.f32.mrf.mxu0
      %v4178 = vadd.f32 0.0, %v4177
      %4179 = vmatmul.f32.gmra.mxu0 %v1260
      %v4180 = vpop.f32.mrf.mxu0
      %v4181 = vadd.f32 0.0, %v4180
      %4182 = vmatmul.f32.gmra.mxu0 %v1263
      %v4183 = vpop.f32.mrf.mxu0
      %v4184 = vadd.f32 0.0, %v4183
      %4185 = vmatmul.f32.gmra.mxu0 %v1266
      %v4186 = vpop.f32.mrf.mxu0
      %v4187 = vadd.f32 0.0, %v4186
      %4188 = vmatmul.f32.gmra.mxu0 %v1269
      %v4189 = vpop.f32.mrf.mxu0
      %v4190 = vadd.f32 0.0, %v4189
      %4191 = vmatmul.f32.gmra.mxu0 %v1272
      %v4192 = vpop.f32.mrf.mxu0
      %v4193 = vadd.f32 0.0, %v4192
      %4194 = vmatmul.f32.gmra.mxu0 %v1275
      %v4195 = vpop.f32.mrf.mxu0
      %v4196 = vadd.f32 0.0, %v4195
      %4197 = vmatmul.f32.gmra.mxu0 %v1278
      %v4198 = vpop.f32.mrf.mxu0
      %v4199 = vadd.f32 0.0, %v4198
      %4200 = vmatmul.f32.gmra.mxu0 %v1281
      %v4201 = vpop.f32.mrf.mxu0
      %v4202 = vadd.f32 0.0, %v4201
      %4203 = vmatmul.f32.gmra.mxu0 %v1284
      %v4204 = vpop.f32.mrf.mxu0
      %v4205 = vadd.f32 0.0, %v4204
      %4206 = vmatmul.f32.gmra.mxu0 %v1287
      %v4207 = vpop.f32.mrf.mxu0
      %v4208 = vadd.f32 0.0, %v4207
      %4209 = vmatmul.f32.gmra.mxu0 %v1290
      %v4210 = vpop.f32.mrf.mxu0
      %v4211 = vadd.f32 0.0, %v4210
      %4212 = vmatmul.f32.gmra.mxu0 %v1293
      %v4213 = vpop.f32.mrf.mxu0
      %v4214 = vadd.f32 0.0, %v4213
      %4215 = vmatmul.f32.gmra.mxu0 %v1296
      %v4216 = vpop.f32.mrf.mxu0
      %v4217 = vadd.f32 0.0, %v4216
      %4218 = vmatmul.f32.gmra.mxu0 %v1299
      %v4219 = vpop.f32.mrf.mxu0
      %v4220 = vadd.f32 0.0, %v4219
      %4221 = vmatmul.f32.gmra.mxu0 %v1302
      %v4222 = vpop.f32.mrf.mxu0
      %v4223 = vadd.f32 0.0, %v4222
      %4224 = vmatmul.f32.gmra.mxu0 %v1305
      %v4225 = vpop.f32.mrf.mxu0
      %v4226 = vadd.f32 0.0, %v4225
      %4227 = vmatmul.f32.gmra.mxu0 %v1308
      %v4228 = vpop.f32.mrf.mxu0
      %v4229 = vadd.f32 0.0, %v4228
      %4230 = vmatmul.f32.gmra.mxu0 %v1311
      %v4231 = vpop.f32.mrf.mxu0
      %v4232 = vadd.f32 0.0, %v4231
      %4233 = vmatmul.f32.gmra.mxu0 %v1314
      %v4234 = vpop.f32.mrf.mxu0
      %v4235 = vadd.f32 0.0, %v4234
      %4236 = vmatmul.f32.gmra.mxu0 %v1317
      %v4237 = vpop.f32.mrf.mxu0
      %v4238 = vadd.f32 0.0, %v4237
      %4239 = vmatmul.f32.gmra.mxu0 %v1320
      %v4240 = vpop.f32.mrf.mxu0
      %v4241 = vadd.f32 0.0, %v4240
      %4242 = vmatmul.f32.gmra.mxu0 %v1323
      %v4243 = vpop.f32.mrf.mxu0
      %v4244 = vadd.f32 0.0, %v4243
      %4245 = vmatmul.f32.gmra.mxu0 %v1326
      %v4246 = vpop.f32.mrf.mxu0
      %v4247 = vadd.f32 0.0, %v4246
      %4248 = vmatmul.f32.gmra.mxu0 %v1329
      %v4249 = vpop.f32.mrf.mxu0
      %v4250 = vadd.f32 0.0, %v4249
      %4251 = vmatmul.f32.gmra.mxu0 %v1332
      %v4252 = vpop.f32.mrf.mxu0
      %v4253 = vadd.f32 0.0, %v4252
      %4254 = vmatmul.f32.gmra.mxu0 %v1335
      %v4255 = vpop.f32.mrf.mxu0
      %v4256 = vadd.f32 0.0, %v4255
      %4257 = vmatmul.f32.gmra.mxu0 %v1338
      %v4258 = vpop.f32.mrf.mxu0
      %v4259 = vadd.f32 0.0, %v4258
      %4260 = vmatmul.f32.gmra.mxu0 %v1341
      %v4261 = vpop.f32.mrf.mxu0
      %v4262 = vadd.f32 0.0, %v4261
      %4263 = vmatmul.f32.gmra.mxu0 %v1344
      %v4264 = vpop.f32.mrf.mxu0
      %v4265 = vadd.f32 0.0, %v4264
      %4266 = vmatmul.f32.gmra.mxu0 %v1347
      %v4267 = vpop.f32.mrf.mxu0
      %v4268 = vadd.f32 0.0, %v4267
      %4269 = vmatmul.f32.gmra.mxu0 %v1350
      %v4270 = vpop.f32.mrf.mxu0
      %v4271 = vadd.f32 0.0, %v4270
      %4272 = vmatmul.f32.gmra.mxu0 %v1353
      %v4273 = vpop.f32.mrf.mxu0
      %v4274 = vadd.f32 0.0, %v4273
      %4275 = vmatmul.f32.gmra.mxu0 %v1356
      %v4276 = vpop.f32.mrf.mxu0
      %v4277 = vadd.f32 0.0, %v4276
      %4278 = vmatmul.f32.gmra.mxu0 %v1359
      %v4279 = vpop.f32.mrf.mxu0
      %v4280 = vadd.f32 0.0, %v4279
      %4281 = vmatmul.f32.gmra.mxu0 %v1362
      %v4282 = vpop.f32.mrf.mxu0
      %v4283 = vadd.f32 0.0, %v4282
      %4284 = vmatmul.f32.gmra.mxu0 %v1365
      %v4285 = vpop.f32.mrf.mxu0
      %v4286 = vadd.f32 0.0, %v4285
      %4287 = vmatmul.f32.gmra.mxu0 %v1368
      %v4288 = vpop.f32.mrf.mxu0
      %v4289 = vadd.f32 0.0, %v4288
      %4290 = vmatmul.f32.gmra.mxu0 %v1371
      %v4291 = vpop.f32.mrf.mxu0
      %v4292 = vadd.f32 0.0, %v4291
      %4293 = vmatmul.f32.gmra.mxu0 %v1374
      %v4294 = vpop.f32.mrf.mxu0
      %v4295 = vadd.f32 0.0, %v4294
      %4296 = vmatmul.f32.gmra.mxu0 %v1377
      %v4297 = vpop.f32.mrf.mxu0
      %v4298 = vadd.f32 0.0, %v4297
      %4299 = vmatmul.f32.gmra.mxu0 %v1380
      %v4300 = vpop.f32.mrf.mxu0
      %v4301 = vadd.f32 0.0, %v4300
      %4302 = vmatmul.f32.gmra.mxu0 %v1383
      %v4303 = vpop.f32.mrf.mxu0
      %v4304 = vadd.f32 0.0, %v4303
      %4305 = vmatmul.f32.gmra.mxu0 %v1386
      %v4306 = vpop.f32.mrf.mxu0
      %v4307 = vadd.f32 0.0, %v4306
      %4308 = vmatmul.f32.gmra.mxu0 %v1389
      %v4309 = vpop.f32.mrf.mxu0
      %v4310 = vadd.f32 0.0, %v4309
      %4311 = vmatmul.f32.gmra.mxu0 %v1392
      %v4312 = vpop.f32.mrf.mxu0
      %v4313 = vadd.f32 0.0, %v4312
      %4314 = vmatmul.f32.gmra.mxu0 %v1395
      %v4315 = vpop.f32.mrf.mxu0
      %v4316 = vadd.f32 0.0, %v4315
      %4317 = vmatmul.f32.gmra.mxu0 %v1398
      %v4318 = vpop.f32.mrf.mxu0
      %v4319 = vadd.f32 0.0, %v4318
      %4320 = vmatmul.f32.gmra.mxu0 %v1401
      %v4321 = vpop.f32.mrf.mxu0
      %v4322 = vadd.f32 0.0, %v4321
      %4323 = vmatmul.f32.gmra.mxu0 %v1404
      %v4324 = vpop.f32.mrf.mxu0
      %v4325 = vadd.f32 0.0, %v4324
      %4326 = vmatmul.f32.gmra.mxu0 %v1407
      %v4327 = vpop.f32.mrf.mxu0
      %v4328 = vadd.f32 0.0, %v4327
      %4329 = vmatmul.f32.gmra.mxu0 %v1410
      %v4330 = vpop.f32.mrf.mxu0
      %v4331 = vadd.f32 0.0, %v4330
      %4332 = vmatmul.f32.gmra.mxu0 %v1413
      %v4333 = vpop.f32.mrf.mxu0
      %v4334 = vadd.f32 0.0, %v4333
      %4335 = vmatmul.f32.gmra.mxu0 %v1416
      %v4336 = vpop.f32.mrf.mxu0
      %v4337 = vadd.f32 0.0, %v4336
      %4338 = vmatmul.f32.gmra.mxu0 %v1419
      %v4339 = vpop.f32.mrf.mxu0
      %v4340 = vadd.f32 0.0, %v4339
      %4341 = vmatmul.f32.gmra.mxu0 %v1422
      %v4342 = vpop.f32.mrf.mxu0
      %v4343 = vadd.f32 0.0, %v4342
      %4344 = vmatmul.f32.gmra.mxu0 %v1425
      %v4345 = vpop.f32.mrf.mxu0
      %v4346 = vadd.f32 0.0, %v4345
      %4347 = vmatmul.f32.gmra.mxu0 %v1428
      %v4348 = vpop.f32.mrf.mxu0
      %v4349 = vadd.f32 0.0, %v4348
      %4350 = vmatmul.f32.gmra.mxu0 %v1431
      %v4351 = vpop.f32.mrf.mxu0
      %v4352 = vadd.f32 0.0, %v4351
      %4353 = vmatmul.f32.gmra.mxu0 %v1434
      %v4354 = vpop.f32.mrf.mxu0
      %v4355 = vadd.f32 0.0, %v4354
      %4356 = vmatmul.f32.gmra.mxu0 %v1437
      %v4357 = vpop.f32.mrf.mxu0
      %v4358 = vadd.f32 0.0, %v4357
      %4359 = vmatmul.f32.gmra.mxu0 %v1440
      %v4360 = vpop.f32.mrf.mxu0
      %v4361 = vadd.f32 0.0, %v4360
      %4362 = vmatmul.f32.gmra.mxu0 %v1443
      %v4363 = vpop.f32.mrf.mxu0
      %v4364 = vadd.f32 0.0, %v4363
      %4365 = vmatmul.f32.gmra.mxu0 %v1446
      %v4366 = vpop.f32.mrf.mxu0
      %v4367 = vadd.f32 0.0, %v4366
      %4368 = vmatmul.f32.gmra.mxu0 %v1449
      %v4369 = vpop.f32.mrf.mxu0
      %v4370 = vadd.f32 0.0, %v4369
      %4371 = vmatmul.f32.gmra.mxu0 %v1452
      %v4372 = vpop.f32.mrf.mxu0
      %v4373 = vadd.f32 0.0, %v4372
      %4374 = vmatmul.f32.gmra.mxu0 %v1455
      %v4375 = vpop.f32.mrf.mxu0
      %v4376 = vadd.f32 0.0, %v4375
      %4377 = vmatmul.f32.gmra.mxu0 %v1458
      %v4378 = vpop.f32.mrf.mxu0
      %v4379 = vadd.f32 0.0, %v4378
      %4380 = vmatmul.f32.gmra.mxu0 %v1461
      %v4381 = vpop.f32.mrf.mxu0
      %v4382 = vadd.f32 0.0, %v4381
      %4383 = vmatmul.f32.gmra.mxu0 %v1464
      %v4384 = vpop.f32.mrf.mxu0
      %v4385 = vadd.f32 0.0, %v4384
      %4386 = vmatmul.f32.gmra.mxu0 %v1467
      %v4387 = vpop.f32.mrf.mxu0
      %v4388 = vadd.f32 0.0, %v4387
      %4389 = vmatmul.f32.gmra.mxu0 %v1470
      %v4390 = vpop.f32.mrf.mxu0
      %v4391 = vadd.f32 0.0, %v4390
      %4392 = vmatmul.f32.gmra.mxu0 %v1473
      %v4393 = vpop.f32.mrf.mxu0
      %v4394 = vadd.f32 0.0, %v4393
      %4395 = vmatmul.f32.gmra.mxu0 %v1476
      %v4396 = vpop.f32.mrf.mxu0
      %v4397 = vadd.f32 0.0, %v4396
      %4398 = vmatmul.f32.gmra.mxu0 %v1479
      %v4399 = vpop.f32.mrf.mxu0
      %v4400 = vadd.f32 0.0, %v4399
      %4401 = vmatmul.f32.gmra.mxu0 %v1482
      %v4402 = vpop.f32.mrf.mxu0
      %v4403 = vadd.f32 0.0, %v4402
      %4404 = vmatmul.f32.gmra.mxu0 %v1485
      %v4405 = vpop.f32.mrf.mxu0
      %v4406 = vadd.f32 0.0, %v4405
      %4407 = vmatmul.f32.gmra.mxu0 %v1488
      %v4408 = vpop.f32.mrf.mxu0
      %v4409 = vadd.f32 0.0, %v4408
      %4410 = vmatmul.f32.gmra.mxu0 %v1491
      %v4411 = vpop.f32.mrf.mxu0
      %v4412 = vadd.f32 0.0, %v4411
      %4413 = vmatmul.f32.gmra.mxu0 %v1494
      %v4414 = vpop.f32.mrf.mxu0
      %v4415 = vadd.f32 0.0, %v4414
      %4416 = vmatmul.f32.gmra.mxu0 %v1497
      %v4417 = vpop.f32.mrf.mxu0
      %v4418 = vadd.f32 0.0, %v4417
      %4419 = vmatmul.f32.gmra.mxu0 %v1500
      %v4420 = vpop.f32.mrf.mxu0
      %v4421 = vadd.f32 0.0, %v4420
      %4422 = vmatmul.f32.gmra.mxu0 %v1503
      %v4423 = vpop.f32.mrf.mxu0
      %v4424 = vadd.f32 0.0, %v4423
      %4425 = vmatmul.f32.gmra.mxu0 %v1506
      %v4426 = vpop.f32.mrf.mxu0
      %v4427 = vadd.f32 0.0, %v4426
      %4428 = vmatmul.f32.gmra.mxu0 %v1509
      %v4429 = vpop.f32.mrf.mxu0
      %v4430 = vadd.f32 0.0, %v4429
      %4431 = vmatmul.f32.gmra.mxu0 %v1512
      %v4432 = vpop.f32.mrf.mxu0
      %v4433 = vadd.f32 0.0, %v4432
      %4434 = vmatmul.f32.gmra.mxu0 %v1515
      %v4435 = vpop.f32.mrf.mxu0
      %v4436 = vadd.f32 0.0, %v4435
      %4437 = vmatmul.f32.gmra.mxu0 %v1518
      %v4438 = vpop.f32.mrf.mxu0
      %v4439 = vadd.f32 0.0, %v4438
      %4440 = vmatmul.f32.gmra.mxu0 %v1521
      %v4441 = vpop.f32.mrf.mxu0
      %v4442 = vadd.f32 0.0, %v4441
      %4443 = vmatmul.f32.gmra.mxu0 %v1524
      %v4444 = vpop.f32.mrf.mxu0
      %v4445 = vadd.f32 0.0, %v4444
      %4446 = vmatmul.f32.gmra.mxu0 %v1527
      %v4447 = vpop.f32.mrf.mxu0
      %v4448 = vadd.f32 0.0, %v4447
      %4449 = vmatmul.f32.gmra.mxu0 %v1530
      %v4450 = vpop.f32.mrf.mxu0
      %v4451 = vadd.f32 0.0, %v4450
      %4452 = vmatmul.f32.gmra.mxu0 %v1533
      %v4453 = vpop.f32.mrf.mxu0
      %v4454 = vadd.f32 0.0, %v4453
      %4455 = vmatmul.f32.gmra.mxu0 %v1536
      %v4456 = vpop.f32.mrf.mxu0
      %v4457 = vadd.f32 0.0, %v4456
      %4458 = vmatmul.f32.gmra.mxu0 %v1539
      %v4459 = vpop.f32.mrf.mxu0
      %v4460 = vadd.f32 0.0, %v4459
      %4461 = vmatmul.f32.gmra.mxu0 %v1542
      %v4462 = vpop.f32.mrf.mxu0
      %v4463 = vadd.f32 0.0, %v4462
      %4464 = vmatmul.f32.gmra.mxu0 %v1545
      %v4465 = vpop.f32.mrf.mxu0
      %v4466 = vadd.f32 0.0, %v4465
      %4467 = vmatmul.f32.gmra.mxu0 %v1548
      %v4468 = vpop.f32.mrf.mxu0
      %v4469 = vadd.f32 0.0, %v4468
      %4470 = vmatmul.f32.gmra.mxu0 %v1551
      %v4471 = vpop.f32.mrf.mxu0
      %v4472 = vadd.f32 0.0, %v4471
      %4473 = vmatmul.f32.gmra.mxu0 %v1554
      %v4474 = vpop.f32.mrf.mxu0
      %v4475 = vadd.f32 0.0, %v4474
      %4476 = vmatmul.f32.gmra.mxu0 %v1557
      %v4477 = vpop.f32.mrf.mxu0
      %v4478 = vadd.f32 0.0, %v4477
      %4479 = vmatmul.f32.gmra.mxu0 %v1560
      %v4480 = vpop.f32.mrf.mxu0
      %v4481 = vadd.f32 0.0, %v4480
      %4482 = vmatmul.f32.gmra.mxu0 %v1563
      %v4483 = vpop.f32.mrf.mxu0
      %v4484 = vadd.f32 0.0, %v4483
      %4485 = vmatmul.f32.gmra.mxu0 %v1566
      %v4486 = vpop.f32.mrf.mxu0
      %v4487 = vadd.f32 0.0, %v4486
      %4488 = vmatmul.f32.gmra.mxu0 %v1569
      %v4489 = vpop.f32.mrf.mxu0
      %v4490 = vadd.f32 0.0, %v4489
      %4491 = vmatmul.f32.gmra.mxu0 %v1572
      %v4492 = vpop.f32.mrf.mxu0
      %v4493 = vadd.f32 0.0, %v4492
      %4494 = vmatmul.f32.gmra.mxu0 %v1575
      %v4495 = vpop.f32.mrf.mxu0
      %v4496 = vadd.f32 0.0, %v4495
      %4497 = vmatmul.f32.gmra.mxu0 %v1578
      %v4498 = vpop.f32.mrf.mxu0
      %v4499 = vadd.f32 0.0, %v4498
      %4500 = vmatmul.f32.gmra.mxu0 %v1581
      %v4501 = vpop.f32.mrf.mxu0
      %v4502 = vadd.f32 0.0, %v4501
      %4503 = vmatmul.f32.gmra.mxu0 %v1584
      %v4504 = vpop.f32.mrf.mxu0
      %v4505 = vadd.f32 0.0, %v4504
      %4506 = vmatmul.f32.gmra.mxu0 %v1587
      %v4507 = vpop.f32.mrf.mxu0
      %v4508 = vadd.f32 0.0, %v4507
      %4509 = vmatmul.f32.gmra.mxu0 %v1590
      %v4510 = vpop.f32.mrf.mxu0
      %v4511 = vadd.f32 0.0, %v4510
      %4512 = vmatmul.f32.gmra.mxu0 %v1593
      %v4513 = vpop.f32.mrf.mxu0
      %v4514 = vadd.f32 0.0, %v4513
      %4515 = vmatmul.f32.gmra.mxu0 %v1596
      %v4516 = vpop.f32.mrf.mxu0
      %v4517 = vadd.f32 0.0, %v4516
      %4518 = vmatmul.f32.gmra.mxu0 %v1599
      %v4519 = vpop.f32.mrf.mxu0
      %v4520 = vadd.f32 0.0, %v4519
      %4521 = vmatmul.f32.gmra.mxu0 %v1602
      %v4522 = vpop.f32.mrf.mxu0
      %v4523 = vadd.f32 0.0, %v4522
      %4524 = vmatmul.f32.gmra.mxu0 %v1605
      %v4525 = vpop.f32.mrf.mxu0
      %v4526 = vadd.f32 0.0, %v4525
      %4527 = vmatmul.f32.gmra.mxu0 %v1608
      %v4528 = vpop.f32.mrf.mxu0
      %v4529 = vadd.f32 0.0, %v4528
      %4530 = vmatmul.f32.gmra.mxu0 %v1611
      %v4531 = vpop.f32.mrf.mxu0
      %v4532 = vadd.f32 0.0, %v4531
      %4533 = vmatmul.f32.gmra.mxu0 %v1614
      %v4534 = vpop.f32.mrf.mxu0
      %v4535 = vadd.f32 0.0, %v4534
      %4536 = vmatmul.f32.gmra.mxu0 %v1617
      %v4537 = vpop.f32.mrf.mxu0
      %v4538 = vadd.f32 0.0, %v4537
      %4539 = vmatmul.f32.gmra.mxu0 %v1620
      %v4540 = vpop.f32.mrf.mxu0
      %v4541 = vadd.f32 0.0, %v4540
      %4542 = vmatmul.f32.gmra.mxu0 %v1623
      %v4543 = vpop.f32.mrf.mxu0
      %v4544 = vadd.f32 0.0, %v4543
      %4545 = vmatmul.f32.gmra.mxu0 %v1626
      %v4546 = vpop.f32.mrf.mxu0
      %v4547 = vadd.f32 0.0, %v4546
      %4548 = vmatmul.f32.gmra.mxu0 %v1629
      %v4549 = vpop.f32.mrf.mxu0
      %v4550 = vadd.f32 0.0, %v4549
      %4551 = vmatmul.f32.gmra.mxu0 %v1632
      %v4552 = vpop.f32.mrf.mxu0
      %v4553 = vadd.f32 0.0, %v4552
      %4554 = vmatmul.f32.gmra.mxu0 %v1635
      %v4555 = vpop.f32.mrf.mxu0
      %v4556 = vadd.f32 0.0, %v4555
      %4557 = vmatmul.f32.gmra.mxu0 %v1638
      %v4558 = vpop.f32.mrf.mxu0
      %v4559 = vadd.f32 0.0, %v4558
      %4560 = vmatmul.f32.gmra.mxu0 %v1641
      %v4561 = vpop.f32.mrf.mxu0
      %v4562 = vadd.f32 0.0, %v4561
      %4563 = vmatmul.f32.gmra.mxu0 %v1644
      %v4564 = vpop.f32.mrf.mxu0
      %v4565 = vadd.f32 0.0, %v4564
      %4566 = vmatmul.f32.gmra.mxu0 %v1647
      %v4567 = vpop.f32.mrf.mxu0
      %v4568 = vadd.f32 0.0, %v4567
      %4569 = vmatmul.f32.gmra.mxu0 %v1650
      %v4570 = vpop.f32.mrf.mxu0
      %v4571 = vadd.f32 0.0, %v4570
      %4572 = vmatmul.f32.gmra.mxu0 %v1653
      %v4573 = vpop.f32.mrf.mxu0
      %v4574 = vadd.f32 0.0, %v4573
      %4575 = vmatmul.f32.gmra.mxu0 %v1656
      %v4576 = vpop.f32.mrf.mxu0
      %v4577 = vadd.f32 0.0, %v4576
      %4578 = vmatmul.f32.gmra.mxu0 %v1659
      %v4579 = vpop.f32.mrf.mxu0
      %v4580 = vadd.f32 0.0, %v4579
      %4581 = vmatmul.f32.gmra.mxu0 %v1662
      %v4582 = vpop.f32.mrf.mxu0
      %v4583 = vadd.f32 0.0, %v4582
      %4584 = vmatmul.f32.gmra.mxu0 %v1665
      %v4585 = vpop.f32.mrf.mxu0
      %v4586 = vadd.f32 0.0, %v4585
      %4587 = vmatmul.f32.gmra.mxu0 %v1668
      %v4588 = vpop.f32.mrf.mxu0
      %v4589 = vadd.f32 0.0, %v4588
      %4590 = vmatmul.f32.gmra.mxu0 %v1671
      %v4591 = vpop.f32.mrf.mxu0
      %v4592 = vadd.f32 0.0, %v4591
      %4593 = vmatmul.f32.gmra.mxu0 %v1674
      %v4594 = vpop.f32.mrf.mxu0
      %v4595 = vadd.f32 0.0, %v4594
      %4596 = vmatmul.f32.gmra.mxu0 %v1677
      %v4597 = vpop.f32.mrf.mxu0
      %v4598 = vadd.f32 0.0, %v4597
      %4599 = vmatmul.f32.gmra.mxu0 %v1680
      %v4600 = vpop.f32.mrf.mxu0
      %v4601 = vadd.f32 0.0, %v4600
      %4602 = vmatmul.f32.gmra.mxu0 %v1683
      %v4603 = vpop.f32.mrf.mxu0
      %v4604 = vadd.f32 0.0, %v4603
      %4605 = vmatmul.f32.gmra.mxu0 %v1686
      %v4606 = vpop.f32.mrf.mxu0
      %v4607 = vadd.f32 0.0, %v4606
      %4608 = vmatmul.f32.gmra.mxu0 %v1689
      %v4609 = vpop.f32.mrf.mxu0
      %v4610 = vadd.f32 0.0, %v4609
      %4611 = vmatmul.f32.gmra.mxu0 %v1692
      %v4612 = vpop.f32.mrf.mxu0
      %v4613 = vadd.f32 0.0, %v4612
      %4614 = vmatmul.f32.gmra.mxu0 %v1695
      %v4615 = vpop.f32.mrf.mxu0
      %v4616 = vadd.f32 0.0, %v4615
      %4617 = vmatmul.f32.gmra.mxu0 %v1698
      %v4618 = vpop.f32.mrf.mxu0
      %v4619 = vadd.f32 0.0, %v4618
      %4620 = vmatmul.f32.gmra.mxu0 %v1701
      %v4621 = vpop.f32.mrf.mxu0
      %v4622 = vadd.f32 0.0, %v4621
      %4623 = vmatmul.f32.gmra.mxu0 %v1704
      %v4624 = vpop.f32.mrf.mxu0
      %v4625 = vadd.f32 0.0, %v4624
      %4626 = vmatmul.f32.gmra.mxu0 %v1707
      %v4627 = vpop.f32.mrf.mxu0
      %v4628 = vadd.f32 0.0, %v4627
      %4629 = vmatmul.f32.gmra.mxu0 %v1710
      %v4630 = vpop.f32.mrf.mxu0
      %v4631 = vadd.f32 0.0, %v4630
      %4632 = vmatmul.f32.gmra.mxu0 %v1713
      %v4633 = vpop.f32.mrf.mxu0
      %v4634 = vadd.f32 0.0, %v4633
      %4635 = vmatmul.f32.gmra.mxu0 %v1716
      %v4636 = vpop.f32.mrf.mxu0
      %v4637 = vadd.f32 0.0, %v4636
      %4638 = vmatmul.f32.gmra.mxu0 %v1719
      %v4639 = vpop.f32.mrf.mxu0
      %v4640 = vadd.f32 0.0, %v4639
      %4641 = vmatmul.f32.gmra.mxu0 %v1722
      %v4642 = vpop.f32.mrf.mxu0
      %v4643 = vadd.f32 0.0, %v4642
      %4644 = vmatmul.f32.gmra.mxu0 %v1725
      %v4645 = vpop.f32.mrf.mxu0
      %v4646 = vadd.f32 0.0, %v4645
      %4647 = vmatmul.f32.gmra.mxu0 %v1728
      %v4648 = vpop.f32.mrf.mxu0
      %v4649 = vadd.f32 0.0, %v4648
      %4650 = vmatmul.f32.gmra.mxu0 %v1731
      %v4651 = vpop.f32.mrf.mxu0
      %v4652 = vadd.f32 0.0, %v4651
      %4653 = vmatmul.f32.gmra.mxu0 %v1734
      %v4654 = vpop.f32.mrf.mxu0
      %v4655 = vadd.f32 0.0, %v4654
      %4656 = vmatmul.f32.gmra.mxu0 %v1737
      %v4657 = vpop.f32.mrf.mxu0
      %v4658 = vadd.f32 0.0, %v4657
      %4659 = vmatmul.f32.gmra.mxu0 %v1740
      %v4660 = vpop.f32.mrf.mxu0
      %v4661 = vadd.f32 0.0, %v4660
      %4662 = vmatmul.f32.gmra.mxu0 %v1743
      %v4663 = vpop.f32.mrf.mxu0
      %v4664 = vadd.f32 0.0, %v4663
      %4665 = vmatmul.f32.gmra.mxu0 %v1746
      %v4666 = vpop.f32.mrf.mxu0
      %v4667 = vadd.f32 0.0, %v4666
      %4668 = vmatmul.f32.gmra.mxu0 %v1749
      %v4669 = vpop.f32.mrf.mxu0
      %v4670 = vadd.f32 0.0, %v4669
      %4671 = vmatmul.f32.gmra.mxu0 %v1752
      %v4672 = vpop.f32.mrf.mxu0
      %v4673 = vadd.f32 0.0, %v4672
      %4674 = vmatmul.f32.gmra.mxu0 %v1755
      %v4675 = vpop.f32.mrf.mxu0
      %v4676 = vadd.f32 0.0, %v4675
      %4677 = vmatmul.f32.gmra.mxu0 %v1758
      %v4678 = vpop.f32.mrf.mxu0
      %v4679 = vadd.f32 0.0, %v4678
      %4680 = vmatmul.f32.gmra.mxu0 %v1761
      %v4681 = vpop.f32.mrf.mxu0
      %v4682 = vadd.f32 0.0, %v4681
      %4683 = vmatmul.f32.gmra.mxu0 %v1764
      %v4684 = vpop.f32.mrf.mxu0
      %v4685 = vadd.f32 0.0, %v4684
      %4686 = vmatmul.f32.gmra.mxu0 %v1767
      %v4687 = vpop.f32.mrf.mxu0
      %v4688 = vadd.f32 0.0, %v4687
      %4689 = vmatmul.f32.gmra.mxu0 %v1770
      %v4690 = vpop.f32.mrf.mxu0
      %v4691 = vadd.f32 0.0, %v4690
      %4692 = vmatmul.f32.gmra.mxu0 %v1773
      %v4693 = vpop.f32.mrf.mxu0
      %v4694 = vadd.f32 0.0, %v4693
      %4695 = vmatmul.f32.gmra.mxu0 %v1776
      %v4696 = vpop.f32.mrf.mxu0
      %v4697 = vadd.f32 0.0, %v4696
      %4698 = vmatmul.f32.gmra.mxu0 %v1779
      %v4699 = vpop.f32.mrf.mxu0
      %v4700 = vadd.f32 0.0, %v4699
      %4701 = vmatmul.f32.gmra.mxu0 %v1782
      %v4702 = vpop.f32.mrf.mxu0
      %v4703 = vadd.f32 0.0, %v4702
      %4704 = vmatmul.f32.gmra.mxu0 %v1785
      %v4705 = vpop.f32.mrf.mxu0
      %v4706 = vadd.f32 0.0, %v4705
      %4707 = vmatmul.f32.gmra.mxu0 %v1788
      %v4708 = vpop.f32.mrf.mxu0
      %v4709 = vadd.f32 0.0, %v4708
      %4710 = vmatmul.f32.gmra.mxu0 %v1791
      %v4711 = vpop.f32.mrf.mxu0
      %v4712 = vadd.f32 0.0, %v4711
      %4713 = vmatmul.f32.gmra.mxu0 %v1794
      %v4714 = vpop.f32.mrf.mxu0
      %v4715 = vadd.f32 0.0, %v4714
      %4716 = vmatmul.f32.gmra.mxu0 %v1797
      %v4717 = vpop.f32.mrf.mxu0
      %v4718 = vadd.f32 0.0, %v4717
      %4719 = vmatmul.f32.gmra.mxu0 %v1800
      %v4720 = vpop.f32.mrf.mxu0
      %v4721 = vadd.f32 0.0, %v4720
      %4722 = vmatmul.f32.gmra.mxu0 %v1803
      %v4723 = vpop.f32.mrf.mxu0
      %v4724 = vadd.f32 0.0, %v4723
      %4725 = vmatmul.f32.gmra.mxu0 %v1806
      %v4726 = vpop.f32.mrf.mxu0
      %v4727 = vadd.f32 0.0, %v4726
      %4728 = vmatmul.f32.gmra.mxu0 %v1809
      %v4729 = vpop.f32.mrf.mxu0
      %v4730 = vadd.f32 0.0, %v4729
      %4731 = vmatmul.f32.gmra.mxu0 %v1812
      %v4732 = vpop.f32.mrf.mxu0
      %v4733 = vadd.f32 0.0, %v4732
      %4734 = vmatmul.f32.gmra.mxu0 %v1815
      %v4735 = vpop.f32.mrf.mxu0
      %v4736 = vadd.f32 0.0, %v4735
      %4737 = vmatmul.f32.gmra.mxu0 %v1818
      %v4738 = vpop.f32.mrf.mxu0
      %v4739 = vadd.f32 0.0, %v4738
      %4740 = vmatmul.f32.gmra.mxu0 %v1821
      %v4741 = vpop.f32.mrf.mxu0
      %v4742 = vadd.f32 0.0, %v4741
      %4743 = vmatmul.f32.gmra.mxu0 %v1824
      %v4744 = vpop.f32.mrf.mxu0
      %v4745 = vadd.f32 0.0, %v4744
      %4746 = vmatmul.f32.gmra.mxu0 %v1827
      %v4747 = vpop.f32.mrf.mxu0
      %v4748 = vadd.f32 0.0, %v4747
      %4749 = vmatmul.f32.gmra.mxu0 %v1830
      %v4750 = vpop.f32.mrf.mxu0
      %v4751 = vadd.f32 0.0, %v4750
      %4752 = vmatmul.f32.gmra.mxu0 %v1833
      %v4753 = vpop.f32.mrf.mxu0
      %v4754 = vadd.f32 0.0, %v4753
      %4755 = vmatmul.f32.gmra.mxu0 %v1836
      %v4756 = vpop.f32.mrf.mxu0
      %v4757 = vadd.f32 0.0, %v4756
      %4758 = vmatmul.f32.gmra.mxu0 %v1839
      %v4759 = vpop.f32.mrf.mxu0
      %v4760 = vadd.f32 0.0, %v4759
      %4761 = vmatmul.f32.gmra.mxu0 %v1842
      %v4762 = vpop.f32.mrf.mxu0
      %v4763 = vadd.f32 0.0, %v4762
      %4764 = vmatmul.f32.gmra.mxu0 %v1845
      %v4765 = vpop.f32.mrf.mxu0
      %v4766 = vadd.f32 0.0, %v4765
      %4767 = vmatmul.f32.gmra.mxu0 %v1848
      %v4768 = vpop.f32.mrf.mxu0
      %v4769 = vadd.f32 0.0, %v4768
      %4770 = vmatmul.f32.gmra.mxu0 %v1851
      %v4771 = vpop.f32.mrf.mxu0
      %v4772 = vadd.f32 0.0, %v4771
      %4773 = vmatmul.f32.gmra.mxu0 %v1854
      %v4774 = vpop.f32.mrf.mxu0
      %v4775 = vadd.f32 0.0, %v4774
      %4776 = vmatmul.f32.gmra.mxu0 %v1857
      %v4777 = vpop.f32.mrf.mxu0
      %v4778 = vadd.f32 0.0, %v4777
      %4779 = vmatmul.f32.gmra.mxu0 %v1860
      %v4780 = vpop.f32.mrf.mxu0
      %v4781 = vadd.f32 0.0, %v4780
      %4782 = vmatmul.f32.gmra.mxu0 %v1863
      %v4783 = vpop.f32.mrf.mxu0
      %v4784 = vadd.f32 0.0, %v4783
      %4785 = vmatmul.f32.gmra.mxu0 %v1866
      %v4786 = vpop.f32.mrf.mxu0
      %v4787 = vadd.f32 0.0, %v4786
      %4788 = vmatmul.f32.gmra.mxu0 %v1869
      %v4789 = vpop.f32.mrf.mxu0
      %v4790 = vadd.f32 0.0, %v4789
      %4791 = vmatmul.f32.gmra.mxu0 %v1872
      %v4792 = vpop.f32.mrf.mxu0
      %v4793 = vadd.f32 0.0, %v4792
      %4794 = vmatmul.f32.gmra.mxu0 %v1875
      %v4795 = vpop.f32.mrf.mxu0
      %v4796 = vadd.f32 0.0, %v4795
      %4797 = vmatmul.f32.gmra.mxu0 %v1878
      %v4798 = vpop.f32.mrf.mxu0
      %v4799 = vadd.f32 0.0, %v4798
      %4800 = vmatmul.f32.gmra.mxu0 %v1881
      %v4801 = vpop.f32.mrf.mxu0
      %v4802 = vadd.f32 0.0, %v4801
      %4803 = vmatmul.f32.gmra.mxu0 %v1884
      %v4804 = vpop.f32.mrf.mxu0
      %v4805 = vadd.f32 0.0, %v4804
      %4806 = vmatmul.f32.gmra.mxu0 %v1887
      %v4807 = vpop.f32.mrf.mxu0
      %v4808 = vadd.f32 0.0, %v4807
      %4809 = vmatmul.f32.gmra.mxu0 %v1890
      %v4810 = vpop.f32.mrf.mxu0
      %v4811 = vadd.f32 0.0, %v4810
      %4812 = vmatmul.f32.gmra.mxu0 %v1893
      %v4813 = vpop.f32.mrf.mxu0
      %v4814 = vadd.f32 0.0, %v4813
      %4815 = vmatmul.f32.gmra.mxu0 %v1896
      %v4816 = vpop.f32.mrf.mxu0
      %v4817 = vadd.f32 0.0, %v4816
      %4818 = vmatmul.f32.gmra.mxu0 %v1899
      %v4819 = vpop.f32.mrf.mxu0
      %v4820 = vadd.f32 0.0, %v4819
      %4821 = vmatmul.f32.gmra.mxu0 %v1902
      %v4822 = vpop.f32.mrf.mxu0
      %v4823 = vadd.f32 0.0, %v4822
      %4824 = vmatmul.f32.gmra.mxu0 %v1905
      %v4825 = vpop.f32.mrf.mxu0
      %v4826 = vadd.f32 0.0, %v4825
      %4827 = vmatmul.f32.gmra.mxu0 %v1908
      %v4828 = vpop.f32.mrf.mxu0
      %v4829 = vadd.f32 0.0, %v4828
      %4830 = vmatmul.f32.gmra.mxu0 %v1911
      %v4831 = vpop.f32.mrf.mxu0
      %v4832 = vadd.f32 0.0, %v4831
      %4833 = vmatmul.f32.gmra.mxu0 %v1914
      %v4834 = vpop.f32.mrf.mxu0
      %v4835 = vadd.f32 0.0, %v4834
      %4836 = vmatmul.f32.gmra.mxu0 %v1917
      %v4837 = vpop.f32.mrf.mxu0
      %v4838 = vadd.f32 0.0, %v4837
      %4839 = vmatmul.f32.gmra.mxu0 %v1920
      %v4840 = vpop.f32.mrf.mxu0
      %v4841 = vadd.f32 0.0, %v4840
      %4842 = vmatmul.f32.gmra.mxu0 %v1923
      %v4843 = vpop.f32.mrf.mxu0
      %v4844 = vadd.f32 0.0, %v4843
      %4845 = vmatmul.f32.gmra.mxu0 %v1926
      %v4846 = vpop.f32.mrf.mxu0
      %v4847 = vadd.f32 0.0, %v4846
      %4848 = vmatmul.f32.gmra.mxu0 %v1929
      %v4849 = vpop.f32.mrf.mxu0
      %v4850 = vadd.f32 0.0, %v4849
      %4851 = vmatmul.f32.gmra.mxu0 %v1932
      %v4852 = vpop.f32.mrf.mxu0
      %v4853 = vadd.f32 0.0, %v4852
      %4854 = vmatmul.f32.gmra.mxu0 %v1935
      %v4855 = vpop.f32.mrf.mxu0
      %v4856 = vadd.f32 0.0, %v4855
      %4857 = vmatmul.f32.gmra.mxu0 %v1938
      %v4858 = vpop.f32.mrf.mxu0
      %v4859 = vadd.f32 0.0, %v4858
      %4860 = vmatmul.f32.gmra.mxu0 %v1941
      %v4861 = vpop.f32.mrf.mxu0
      %v4862 = vadd.f32 0.0, %v4861
      %4863 = vmatmul.f32.gmra.mxu0 %v1944
      %v4864 = vpop.f32.mrf.mxu0
      %v4865 = vadd.f32 0.0, %v4864
      %4866 = vmatmul.f32.gmra.mxu0 %v1947
      %v4867 = vpop.f32.mrf.mxu0
      %v4868 = vadd.f32 0.0, %v4867
      %4869 = vmatmul.f32.gmra.mxu0 %v1950
      %v4870 = vpop.f32.mrf.mxu0
      %v4871 = vadd.f32 0.0, %v4870
      %4872 = vmatmul.f32.gmra.mxu0 %v1953
      %v4873 = vpop.f32.mrf.mxu0
      %v4874 = vadd.f32 0.0, %v4873
      %4875 = vmatmul.f32.gmra.mxu0 %v1956
      %v4876 = vpop.f32.mrf.mxu0
      %v4877 = vadd.f32 0.0, %v4876
      %4878 = vmatmul.f32.gmra.mxu0 %v1959
      %v4879 = vpop.f32.mrf.mxu0
      %v4880 = vadd.f32 0.0, %v4879
      %4881 = vmatmul.f32.gmra.mxu0 %v1962
      %v4882 = vpop.f32.mrf.mxu0
      %v4883 = vadd.f32 0.0, %v4882
      %4884 = vmatmul.f32.gmra.mxu0 %v1965
      %v4885 = vpop.f32.mrf.mxu0
      %v4886 = vadd.f32 0.0, %v4885
      %4887 = vmatmul.f32.gmra.mxu0 %v1968
      %v4888 = vpop.f32.mrf.mxu0
      %v4889 = vadd.f32 0.0, %v4888
      %4890 = vmatmul.f32.gmra.mxu0 %v1971
      %v4891 = vpop.f32.mrf.mxu0
      %v4892 = vadd.f32 0.0, %v4891
      %4893 = vmatmul.f32.gmra.mxu0 %v1974
      %v4894 = vpop.f32.mrf.mxu0
      %v4895 = vadd.f32 0.0, %v4894
      %4896 = vmatmul.f32.gmra.mxu0 %v1977
      %v4897 = vpop.f32.mrf.mxu0
      %v4898 = vadd.f32 0.0, %v4897
      %4899 = vmatmul.f32.gmra.mxu0 %v1980
      %v4900 = vpop.f32.mrf.mxu0
      %v4901 = vadd.f32 0.0, %v4900
      %4902 = vmatmul.f32.gmra.mxu0 %v1983
      %v4903 = vpop.f32.mrf.mxu0
      %v4904 = vadd.f32 0.0, %v4903
      %4905 = vmatmul.f32.gmra.mxu0 %v1986
      %v4906 = vpop.f32.mrf.mxu0
      %v4907 = vadd.f32 0.0, %v4906
      %4908 = vmatmul.f32.gmra.mxu0 %v1989
      %v4909 = vpop.f32.mrf.mxu0
      %v4910 = vadd.f32 0.0, %v4909
      %4911 = vmatmul.f32.gmra.mxu0 %v1992
      %v4912 = vpop.f32.mrf.mxu0
      %v4913 = vadd.f32 0.0, %v4912
      %4914 = vmatmul.f32.gmra.mxu0 %v1995
      %v4915 = vpop.f32.mrf.mxu0
      %v4916 = vadd.f32 0.0, %v4915
      %4917 = vmatmul.f32.gmra.mxu0 %v1998
      %v4918 = vpop.f32.mrf.mxu0
      %v4919 = vadd.f32 0.0, %v4918
      %4920 = vmatmul.f32.gmra.mxu0 %v2001
      %v4921 = vpop.f32.mrf.mxu0
      %v4922 = vadd.f32 0.0, %v4921
      %4923 = vmatmul.f32.gmra.mxu0 %v2004
      %v4924 = vpop.f32.mrf.mxu0
      %v4925 = vadd.f32 0.0, %v4924
      %4926 = vmatmul.f32.gmra.mxu0 %v2007
      %v4927 = vpop.f32.mrf.mxu0
      %v4928 = vadd.f32 0.0, %v4927
      %4929 = vmatmul.f32.gmra.mxu0 %v2010
      %v4930 = vpop.f32.mrf.mxu0
      %v4931 = vadd.f32 0.0, %v4930
      %4932 = vmatmul.f32.gmra.mxu0 %v2013
      %v4933 = vpop.f32.mrf.mxu0
      %v4934 = vadd.f32 0.0, %v4933
      %4935 = vmatmul.f32.gmra.mxu0 %v2016
      %v4936 = vpop.f32.mrf.mxu0
      %v4937 = vadd.f32 0.0, %v4936
      %4938 = vmatmul.f32.gmra.mxu0 %v2019
      %v4939 = vpop.f32.mrf.mxu0
      %v4940 = vadd.f32 0.0, %v4939
      %4941 = vmatmul.f32.gmra.mxu0 %v2022
      %v4942 = vpop.f32.mrf.mxu0
      %v4943 = vadd.f32 0.0, %v4942
      %4944 = vmatmul.f32.gmra.mxu0 %v2025
      %v4945 = vpop.f32.mrf.mxu0
      %v4946 = vadd.f32 0.0, %v4945
      %4947 = vmatmul.f32.gmra.mxu0 %v2028
      %v4948 = vpop.f32.mrf.mxu0
      %v4949 = vadd.f32 0.0, %v4948
      %4950 = vmatmul.f32.gmra.mxu0 %v2031
      %v4951 = vpop.f32.mrf.mxu0
      %v4952 = vadd.f32 0.0, %v4951
      %4953 = vmatmul.f32.gmra.mxu0 %v2034
      %v4954 = vpop.f32.mrf.mxu0
      %v4955 = vadd.f32 0.0, %v4954
      %4956 = vmatmul.f32.gmra.mxu0 %v2037
      %v4957 = vpop.f32.mrf.mxu0
      %v4958 = vadd.f32 0.0, %v4957
      %4959 = vmatmul.f32.gmra.mxu0 %v2040
      %v4960 = vpop.f32.mrf.mxu0
      %v4961 = vadd.f32 0.0, %v4960
      %4962 = vmatmul.f32.gmra.mxu0 %v2043
      %v4963 = vpop.f32.mrf.mxu0
      %v4964 = vadd.f32 0.0, %v4963
      %4965 = vmatmul.f32.gmra.mxu0 %v2046
      %v4966 = vpop.f32.mrf.mxu0
      %v4967 = vadd.f32 0.0, %v4966
      %4968 = vmatmul.f32.gmra.mxu0 %v2049
      %v4969 = vpop.f32.mrf.mxu0
      %v4970 = vadd.f32 0.0, %v4969
      %4971 = vmatmul.f32.gmra.mxu0 %v2052
      %v4972 = vpop.f32.mrf.mxu0
      %v4973 = vadd.f32 0.0, %v4972
      %4974 = vmatmul.f32.gmra.mxu0 %v2055
      %v4975 = vpop.f32.mrf.mxu0
      %v4976 = vadd.f32 0.0, %v4975
      %4977 = vmatmul.f32.gmra.mxu0 %v2058
      %v4978 = vpop.f32.mrf.mxu0
      %v4979 = vadd.f32 0.0, %v4978
      %4980 = vmatmul.f32.gmra.mxu0 %v2061
      %v4981 = vpop.f32.mrf.mxu0
      %v4982 = vadd.f32 0.0, %v4981
      %4983 = vmatmul.f32.gmra.mxu0 %v2064
      %v4984 = vpop.f32.mrf.mxu0
      %v4985 = vadd.f32 0.0, %v4984
      %4986 = vmatmul.f32.gmra.mxu0 %v2067
      %v4987 = vpop.f32.mrf.mxu0
      %v4988 = vadd.f32 0.0, %v4987
      %4989 = vmatmul.f32.gmra.mxu0 %v2070
      %v4990 = vpop.f32.mrf.mxu0
      %v4991 = vadd.f32 0.0, %v4990
      %4992 = vmatmul.f32.gmra.mxu0 %v2073
      %v4993 = vpop.f32.mrf.mxu0
      %v4994 = vadd.f32 0.0, %v4993
      %4995 = vmatmul.f32.gmra.mxu0 %v2076
      %v4996 = vpop.f32.mrf.mxu0
      %v4997 = vadd.f32 0.0, %v4996
      %4998 = vmatmul.f32.gmra.mxu0 %v2079
      %v4999 = vpop.f32.mrf.mxu0
      %v5000 = vadd.f32 0.0, %v4999
      %5001 = vmatmul.f32.gmra.mxu0 %v2082
      %v5002 = vpop.f32.mrf.mxu0
      %v5003 = vadd.f32 0.0, %v5002
      %5004 = vmatmul.f32.gmra.mxu0 %v2085
      %v5005 = vpop.f32.mrf.mxu0
      %v5006 = vadd.f32 0.0, %v5005
      %5007 = vmatmul.f32.gmra.mxu0 %v2088
      %v5008 = vpop.f32.mrf.mxu0
      %v5009 = vadd.f32 0.0, %v5008
      %5010 = vmatmul.f32.gmra.mxu0 %v2091
      %v5011 = vpop.f32.mrf.mxu0
      %v5012 = vadd.f32 0.0, %v5011
      %5013 = vmatmul.f32.gmra.mxu0 %v2094
      %v5014 = vpop.f32.mrf.mxu0
      %v5015 = vadd.f32 0.0, %v5014
      %5016 = vmatmul.f32.gmra.mxu0 %v2097
      %v5017 = vpop.f32.mrf.mxu0
      %v5018 = vadd.f32 0.0, %v5017
      %5019 = vmatmul.f32.gmra.mxu0 %v2100
      %v5020 = vpop.f32.mrf.mxu0
      %v5021 = vadd.f32 0.0, %v5020
      %5022 = vmatmul.f32.gmra.mxu0 %v2103
      %v5023 = vpop.f32.mrf.mxu0
      %v5024 = vadd.f32 0.0, %v5023
      %5025 = vmatmul.f32.gmra.mxu0 %v2106
      %v5026 = vpop.f32.mrf.mxu0
      %v5027 = vadd.f32 0.0, %v5026
      %5028 = vmatmul.f32.gmra.mxu0 %v2109
      %v5029 = vpop.f32.mrf.mxu0
      %v5030 = vadd.f32 0.0, %v5029
      %5031 = vmatmul.f32.gmra.mxu0 %v2112
      %v5032 = vpop.f32.mrf.mxu0
      %v5033 = vadd.f32 0.0, %v5032
      %5034 = vmatmul.f32.gmra.mxu0 %v2115
      %v5035 = vpop.f32.mrf.mxu0
      %v5036 = vadd.f32 0.0, %v5035
      %5037 = vmatmul.f32.gmra.mxu0 %v2118
      %v5038 = vpop.f32.mrf.mxu0
      %v5039 = vadd.f32 0.0, %v5038
      %5040 = vmatmul.f32.gmra.mxu0 %v2121
      %v5041 = vpop.f32.mrf.mxu0
      %v5042 = vadd.f32 0.0, %v5041
      %5043 = vmatmul.f32.gmra.mxu0 %v2124
      %v5044 = vpop.f32.mrf.mxu0
      %v5045 = vadd.f32 0.0, %v5044
      %5046 = vmatmul.f32.gmra.mxu0 %v2127
      %v5047 = vpop.f32.mrf.mxu0
      %v5048 = vadd.f32 0.0, %v5047
      %5049 = vmatmul.f32.gmra.mxu0 %v2130
      %v5050 = vpop.f32.mrf.mxu0
      %v5051 = vadd.f32 0.0, %v5050
      %5052 = vmatmul.f32.gmra.mxu0 %v2133
      %v5053 = vpop.f32.mrf.mxu0
      %v5054 = vadd.f32 0.0, %v5053
      %5055 = vmatmul.f32.gmra.mxu0 %v2136
      %v5056 = vpop.f32.mrf.mxu0
      %v5057 = vadd.f32 0.0, %v5056
      %5058 = vmatmul.f32.gmra.mxu0 %v2139
      %v5059 = vpop.f32.mrf.mxu0
      %v5060 = vadd.f32 0.0, %v5059
      %5061 = vmatmul.f32.gmra.mxu0 %v2142
      %v5062 = vpop.f32.mrf.mxu0
      %v5063 = vadd.f32 0.0, %v5062
      %5064 = vmatmul.f32.gmra.mxu0 %v2145
      %v5065 = vpop.f32.mrf.mxu0
      %v5066 = vadd.f32 0.0, %v5065
      %5067 = vmatmul.f32.gmra.mxu0 %v2148
      %v5068 = vpop.f32.mrf.mxu0
      %v5069 = vadd.f32 0.0, %v5068
      %5070 = vmatmul.f32.gmra.mxu0 %v2151
      %v5071 = vpop.f32.mrf.mxu0
      %v5072 = vadd.f32 0.0, %v5071
      %5073 = vmatmul.f32.gmra.mxu0 %v2154
      %v5074 = vpop.f32.mrf.mxu0
      %v5075 = vadd.f32 0.0, %v5074
      %5076 = vmatmul.f32.gmra.mxu0 %v2157
      %v5077 = vpop.f32.mrf.mxu0
      %v5078 = vadd.f32 0.0, %v5077
      %5079 = vmatmul.f32.gmra.mxu0 %v2160
      %v5080 = vpop.f32.mrf.mxu0
      %v5081 = vadd.f32 0.0, %v5080
      %5082 = vmatmul.f32.gmra.mxu0 %v2163
      %v5083 = vpop.f32.mrf.mxu0
      %v5084 = vadd.f32 0.0, %v5083
      %5085 = vmatmul.f32.gmra.mxu0 %v2166
      %v5086 = vpop.f32.mrf.mxu0
      %v5087 = vadd.f32 0.0, %v5086
      %5088 = vmatmul.f32.gmra.mxu0 %v2169
      %v5089 = vpop.f32.mrf.mxu0
      %v5090 = vadd.f32 0.0, %v5089
      %5091 = vmatmul.f32.gmra.mxu0 %v2172
      %v5092 = vpop.f32.mrf.mxu0
      %v5093 = vadd.f32 0.0, %v5092
      %5094 = vmatmul.f32.gmra.mxu0 %v2175
      %v5095 = vpop.f32.mrf.mxu0
      %v5096 = vadd.f32 0.0, %v5095
      %5097 = vmatmul.f32.gmra.mxu0 %v2178
      %v5098 = vpop.f32.mrf.mxu0
      %v5099 = vadd.f32 0.0, %v5098
      %5100 = vmatmul.f32.gmra.mxu0 %v2181
      %v5101 = vpop.f32.mrf.mxu0
      %v5102 = vadd.f32 0.0, %v5101
      %5103 = vmatmul.f32.gmra.mxu0 %v2184
      %v5104 = vpop.f32.mrf.mxu0
      %v5105 = vadd.f32 0.0, %v5104
      %5106 = vmatmul.f32.gmra.mxu0 %v2187
      %v5107 = vpop.f32.mrf.mxu0
      %v5108 = vadd.f32 0.0, %v5107
      %5109 = vmatmul.f32.gmra.mxu0 %v2190
      %v5110 = vpop.f32.mrf.mxu0
      %v5111 = vadd.f32 0.0, %v5110
      %5112 = vmatmul.f32.gmra.mxu0 %v2193
      %v5113 = vpop.f32.mrf.mxu0
      %v5114 = vadd.f32 0.0, %v5113
      %5115 = vmatmul.f32.gmra.mxu0 %v2196
      %v5116 = vpop.f32.mrf.mxu0
      %v5117 = vadd.f32 0.0, %v5116
      %5118 = vmatmul.f32.gmra.mxu0 %v2199
      %v5119 = vpop.f32.mrf.mxu0
      %v5120 = vadd.f32 0.0, %v5119
      %5121 = vmatmul.f32.gmra.mxu0 %v2202
      %v5122 = vpop.f32.mrf.mxu0
      %v5123 = vadd.f32 0.0, %v5122
      %5124 = vmatmul.f32.gmra.mxu0 %v2205
      %v5125 = vpop.f32.mrf.mxu0
      %v5126 = vadd.f32 0.0, %v5125
      %5127 = vmatmul.f32.gmra.mxu0 %v2208
      %v5128 = vpop.f32.mrf.mxu0
      %v5129 = vadd.f32 0.0, %v5128
      %5130 = vmatmul.f32.gmra.mxu0 %v2211
      %v5131 = vpop.f32.mrf.mxu0
      %v5132 = vadd.f32 0.0, %v5131
      %5133 = vmatmul.f32.gmra.mxu0 %v2214
      %v5134 = vpop.f32.mrf.mxu0
      %v5135 = vadd.f32 0.0, %v5134
      %5136 = vmatmul.f32.gmra.mxu0 %v2217
      %v5137 = vpop.f32.mrf.mxu0
      %v5138 = vadd.f32 0.0, %v5137
      %5139 = vmatmul.f32.gmra.mxu0 %v2220
      %v5140 = vpop.f32.mrf.mxu0
      %v5141 = vadd.f32 0.0, %v5140
      %5142 = vmatmul.f32.gmra.mxu0 %v2223
      %v5143 = vpop.f32.mrf.mxu0
      %v5144 = vadd.f32 0.0, %v5143
      %5145 = vmatmul.f32.gmra.mxu0 %v2226
      %v5146 = vpop.f32.mrf.mxu0
      %v5147 = vadd.f32 0.0, %v5146
      %5148 = vmatmul.f32.gmra.mxu0 %v2229
      %v5149 = vpop.f32.mrf.mxu0
      %v5150 = vadd.f32 0.0, %v5149
      %5151 = vmatmul.f32.gmra.mxu0 %v2232
      %v5152 = vpop.f32.mrf.mxu0
      %v5153 = vadd.f32 0.0, %v5152
      %5154 = vmatmul.f32.gmra.mxu0 %v2235
      %v5155 = vpop.f32.mrf.mxu0
      %v5156 = vadd.f32 0.0, %v5155
      %5157 = vmatmul.f32.gmra.mxu0 %v2238
      %v5158 = vpop.f32.mrf.mxu0
      %v5159 = vadd.f32 0.0, %v5158
      %5160 = vmatmul.f32.gmra.mxu0 %v2241
      %v5161 = vpop.f32.mrf.mxu0
      %v5162 = vadd.f32 0.0, %v5161
      %5163 = vmatmul.f32.gmra.mxu0 %v2244
      %v5164 = vpop.f32.mrf.mxu0
      %v5165 = vadd.f32 0.0, %v5164
      %5166 = vmatmul.f32.gmra.mxu0 %v2247
      %v5167 = vpop.f32.mrf.mxu0
      %v5168 = vadd.f32 0.0, %v5167
      %5169 = vmatmul.f32.gmra.mxu0 %v2250
      %v5170 = vpop.f32.mrf.mxu0
      %v5171 = vadd.f32 0.0, %v5170
      %5172 = vmatmul.f32.gmra.mxu0 %v2253
      %v5173 = vpop.f32.mrf.mxu0
      %v5174 = vadd.f32 0.0, %v5173
      %5175 = vmatmul.f32.gmra.mxu0 %v2256
      %v5176 = vpop.f32.mrf.mxu0
      %v5177 = vadd.f32 0.0, %v5176
      %5178 = vmatmul.f32.gmra.mxu0 %v2259
      %v5179 = vpop.f32.mrf.mxu0
      %v5180 = vadd.f32 0.0, %v5179
      %5181 = vmatmul.f32.gmra.mxu0 %v2262
      %v5182 = vpop.f32.mrf.mxu0
      %v5183 = vadd.f32 0.0, %v5182
      %5184 = vmatmul.f32.gmra.mxu0 %v2265
      %v5185 = vpop.f32.mrf.mxu0
      %v5186 = vadd.f32 0.0, %v5185
      %5187 = vmatmul.f32.gmra.mxu0 %v2268
      %v5188 = vpop.f32.mrf.mxu0
      %v5189 = vadd.f32 0.0, %v5188
      %5190 = vmatmul.f32.gmra.mxu0 %v2271
      %v5191 = vpop.f32.mrf.mxu0
      %v5192 = vadd.f32 0.0, %v5191
      %5193 = vmatmul.f32.gmra.mxu0 %v2274
      %v5194 = vpop.f32.mrf.mxu0
      %v5195 = vadd.f32 0.0, %v5194
      %5196 = vmatmul.f32.gmra.mxu0 %v2277
      %v5197 = vpop.f32.mrf.mxu0
      %v5198 = vadd.f32 0.0, %v5197
      %5199 = vmatmul.f32.gmra.mxu0 %v2280
      %v5200 = vpop.f32.mrf.mxu0
      %v5201 = vadd.f32 0.0, %v5200
      %5202 = vmatmul.f32.gmra.mxu0 %v2283
      %v5203 = vpop.f32.mrf.mxu0
      %v5204 = vadd.f32 0.0, %v5203
      %5205 = vmatmul.f32.gmra.mxu0 %v2286
      %v5206 = vpop.f32.mrf.mxu0
      %v5207 = vadd.f32 0.0, %v5206
      %5208 = vmatmul.f32.gmra.mxu0 %v2289
      %v5209 = vpop.f32.mrf.mxu0
      %v5210 = vadd.f32 0.0, %v5209
      %5211 = vmatmul.f32.gmra.mxu0 %v2292
      %v5212 = vpop.f32.mrf.mxu0
      %v5213 = vadd.f32 0.0, %v5212
      %5214 = vmatmul.f32.gmra.mxu0 %v2295
      %v5215 = vpop.f32.mrf.mxu0
      %v5216 = vadd.f32 0.0, %v5215
      %5217 = vmatmul.f32.gmra.mxu0 %v2298
      %v5218 = vpop.f32.mrf.mxu0
      %v5219 = vadd.f32 0.0, %v5218
      %5220 = vmatmul.f32.gmra.mxu0 %v2301
      %v5221 = vpop.f32.mrf.mxu0
      %v5222 = vadd.f32 0.0, %v5221
      %5223 = vmatmul.f32.gmra.mxu0 %v2304
      %v5224 = vpop.f32.mrf.mxu0
      %v5225 = vadd.f32 0.0, %v5224
      %5226 = vmatmul.f32.gmra.mxu0 %v2307
      %v5227 = vpop.f32.mrf.mxu0
      %v5228 = vadd.f32 0.0, %v5227
      %5229 = vmatmul.f32.gmra.mxu0 %v2310
      %v5230 = vpop.f32.mrf.mxu0
      %v5231 = vadd.f32 0.0, %v5230
      %5232 = vmatmul.f32.gmra.mxu0 %v2313
      %v5233 = vpop.f32.mrf.mxu0
      %v5234 = vadd.f32 0.0, %v5233
      %5235 = vmatmul.f32.gmra.mxu0 %v2316
      %v5236 = vpop.f32.mrf.mxu0
      %v5237 = vadd.f32 0.0, %v5236
      %5238 = vmatmul.f32.gmra.mxu0 %v2319
      %v5239 = vpop.f32.mrf.mxu0
      %v5240 = vadd.f32 0.0, %v5239
      %5241 = vmatmul.f32.gmra.mxu0 %v2322
      %v5242 = vpop.f32.mrf.mxu0
      %v5243 = vadd.f32 0.0, %v5242
      %5244 = vmatmul.f32.gmra.mxu0 %v2325
      %v5245 = vpop.f32.mrf.mxu0
      %v5246 = vadd.f32 0.0, %v5245
      %5247 = vmatmul.f32.gmra.mxu0 %v2328
      %v5248 = vpop.f32.mrf.mxu0
      %v5249 = vadd.f32 0.0, %v5248
      %5250 = vmatmul.f32.gmra.mxu0 %v2331
      %v5251 = vpop.f32.mrf.mxu0
      %v5252 = vadd.f32 0.0, %v5251
      %5253 = vmatmul.f32.gmra.mxu0 %v2334
      %v5254 = vpop.f32.mrf.mxu0
      %v5255 = vadd.f32 0.0, %v5254
      %5256 = vmatmul.f32.gmra.mxu0 %v2337
      %v5257 = vpop.f32.mrf.mxu0
      %v5258 = vadd.f32 0.0, %v5257
      %5259 = vmatmul.f32.gmra.mxu0 %v2340
      %v5260 = vpop.f32.mrf.mxu0
      %v5261 = vadd.f32 0.0, %v5260
      %5262 = vmatmul.f32.gmra.mxu0 %v2343
      %v5263 = vpop.f32.mrf.mxu0
      %v5264 = vadd.f32 0.0, %v5263
      %5265 = vmatmul.f32.gmra.mxu0 %v2346
      %v5266 = vpop.f32.mrf.mxu0
      %v5267 = vadd.f32 0.0, %v5266
      %5268 = vmatmul.f32.gmra.mxu0 %v2349
      %v5269 = vpop.f32.mrf.mxu0
      %v5270 = vadd.f32 0.0, %v5269
      %5271 = vmatmul.f32.gmra.mxu0 %v2352
      %v5272 = vpop.f32.mrf.mxu0
      %v5273 = vadd.f32 0.0, %v5272
      %5274 = vmatmul.f32.gmra.mxu0 %v2355
      %v5275 = vpop.f32.mrf.mxu0
      %v5276 = vadd.f32 0.0, %v5275
      %5277 = vmatmul.f32.gmra.mxu0 %v2358
      %v5278 = vpop.f32.mrf.mxu0
      %v5279 = vadd.f32 0.0, %v5278
      %5280 = vmatmul.f32.gmra.mxu0 %v2361
      %v5281 = vpop.f32.mrf.mxu0
      %v5282 = vadd.f32 0.0, %v5281
      %5283 = vmatmul.f32.gmra.mxu0 %v2364
      %v5284 = vpop.f32.mrf.mxu0
      %v5285 = vadd.f32 0.0, %v5284
      %5286 = vmatmul.f32.gmra.mxu0 %v2367
      %v5287 = vpop.f32.mrf.mxu0
      %v5288 = vadd.f32 0.0, %v5287
      %5289 = vmatmul.f32.gmra.mxu0 %v2370
      %v5290 = vpop.f32.mrf.mxu0
      %v5291 = vadd.f32 0.0, %v5290
      %5292 = vmatmul.f32.gmra.mxu0 %v2373
      %v5293 = vpop.f32.mrf.mxu0
      %v5294 = vadd.f32 0.0, %v5293
      %5295 = vmatmul.f32.gmra.mxu0 %v2376
      %v5296 = vpop.f32.mrf.mxu0
      %v5297 = vadd.f32 0.0, %v5296
      %5298 = vmatmul.f32.gmra.mxu0 %v2379
      %v5299 = vpop.f32.mrf.mxu0
      %v5300 = vadd.f32 0.0, %v5299
      %5301 = vmatmul.f32.gmra.mxu0 %v2382
      %v5302 = vpop.f32.mrf.mxu0
      %v5303 = vadd.f32 0.0, %v5302
      %5304 = vmatmul.f32.gmra.mxu0 %v2385
      %v5305 = vpop.f32.mrf.mxu0
      %v5306 = vadd.f32 0.0, %v5305
      %5307 = vmatmul.f32.gmra.mxu0 %v2388
      %v5308 = vpop.f32.mrf.mxu0
      %v5309 = vadd.f32 0.0, %v5308
      %5310 = vmatmul.f32.gmra.mxu0 %v2391
      %v5311 = vpop.f32.mrf.mxu0
      %v5312 = vadd.f32 0.0, %v5311
      %5313 = vmatmul.f32.gmra.mxu0 %v2394
      %v5314 = vpop.f32.mrf.mxu0
      %v5315 = vadd.f32 0.0, %v5314
      %5316 = vmatmul.f32.gmra.mxu0 %v2397
      %v5317 = vpop.f32.mrf.mxu0
      %v5318 = vadd.f32 0.0, %v5317
      %5319 = vmatmul.f32.gmra.mxu0 %v2400
      %v5320 = vpop.f32.mrf.mxu0
      %v5321 = vadd.f32 0.0, %v5320
      %5322 = vmatmul.f32.gmra.mxu0 %v2403
      %v5323 = vpop.f32.mrf.mxu0
      %v5324 = vadd.f32 0.0, %v5323
      %5325 = vmatmul.f32.gmra.mxu0 %v2406
      %v5326 = vpop.f32.mrf.mxu0
      %v5327 = vadd.f32 0.0, %v5326
      %5328 = vmatmul.f32.gmra.mxu0 %v2409
      %v5329 = vpop.f32.mrf.mxu0
      %v5330 = vadd.f32 0.0, %v5329
      %5331 = vmatmul.f32.gmra.mxu0 %v2412
      %v5332 = vpop.f32.mrf.mxu0
      %v5333 = vadd.f32 0.0, %v5332
      %5334 = vmatmul.f32.gmra.mxu0 %v2415
      %v5335 = vpop.f32.mrf.mxu0
      %v5336 = vadd.f32 0.0, %v5335
      %5337 = vmatmul.f32.gmra.mxu0 %v2418
      %v5338 = vpop.f32.mrf.mxu0
      %v5339 = vadd.f32 0.0, %v5338
      %5340 = vmatmul.f32.gmra.mxu0 %v2421
      %v5341 = vpop.f32.mrf.mxu0
      %v5342 = vadd.f32 0.0, %v5341
      %5343 = vmatmul.f32.gmra.mxu0 %v2424
      %v5344 = vpop.f32.mrf.mxu0
      %v5345 = vadd.f32 0.0, %v5344
      %5346 = vmatmul.f32.gmra.mxu0 %v2427
      %v5347 = vpop.f32.mrf.mxu0
      %v5348 = vadd.f32 0.0, %v5347
      %5349 = vmatmul.f32.gmra.mxu0 %v2430
      %v5350 = vpop.f32.mrf.mxu0
      %v5351 = vadd.f32 0.0, %v5350
      %5352 = vmatmul.f32.gmra.mxu0 %v2433
      %v5353 = vpop.f32.mrf.mxu0
      %v5354 = vadd.f32 0.0, %v5353
      %5355 = vmatmul.f32.gmra.mxu0 %v2436
      %v5356 = vpop.f32.mrf.mxu0
      %v5357 = vadd.f32 0.0, %v5356
      %5358 = vmatmul.f32.gmra.mxu0 %v2439
      %v5359 = vpop.f32.mrf.mxu0
      %v5360 = vadd.f32 0.0, %v5359
      %5361 = vmatmul.f32.gmra.mxu0 %v2442
      %v5362 = vpop.f32.mrf.mxu0
      %v5363 = vadd.f32 0.0, %v5362
      %5364 = vmatmul.f32.gmra.mxu0 %v2445
      %v5365 = vpop.f32.mrf.mxu0
      %v5366 = vadd.f32 0.0, %v5365
      %5367 = vmatmul.f32.gmra.mxu0 %v2448
      %v5368 = vpop.f32.mrf.mxu0
      %v5369 = vadd.f32 0.0, %v5368
      %5370 = vmatmul.f32.gmra.mxu0 %v2451
      %v5371 = vpop.f32.mrf.mxu0
      %v5372 = vadd.f32 0.0, %v5371
      %5373 = vmatmul.f32.gmra.mxu0 %v2454
      %v5374 = vpop.f32.mrf.mxu0
      %v5375 = vadd.f32 0.0, %v5374
      %5376 = vmatmul.f32.gmra.mxu0 %v2457
      %v5377 = vpop.f32.mrf.mxu0
      %v5378 = vadd.f32 0.0, %v5377
      %5379 = vmatmul.f32.gmra.mxu0 %v2460
      %v5380 = vpop.f32.mrf.mxu0
      %v5381 = vadd.f32 0.0, %v5380
      %5382 = vmatmul.f32.gmra.mxu0 %v2463
      %v5383 = vpop.f32.mrf.mxu0
      %v5384 = vadd.f32 0.0, %v5383
      %5385 = vmatmul.f32.gmra.mxu0 %v2466
      %v5386 = vpop.f32.mrf.mxu0
      %v5387 = vadd.f32 0.0, %v5386
      %5388 = vmatmul.f32.gmra.mxu0 %v2469
      %v5389 = vpop.f32.mrf.mxu0
      %v5390 = vadd.f32 0.0, %v5389
      %5391 = vmatmul.f32.gmra.mxu0 %v2472
      %v5392 = vpop.f32.mrf.mxu0
      %v5393 = vadd.f32 0.0, %v5392
      %5394 = vmatmul.f32.gmra.mxu0 %v2475
      %v5395 = vpop.f32.mrf.mxu0
      %v5396 = vadd.f32 0.0, %v5395
      %5397 = vmatmul.f32.gmra.mxu0 %v2478
      %v5398 = vpop.f32.mrf.mxu0
      %v5399 = vadd.f32 0.0, %v5398
      %5400 = vmatmul.f32.gmra.mxu0 %v2481
      %v5401 = vpop.f32.mrf.mxu0
      %v5402 = vadd.f32 0.0, %v5401
      %5403 = vmatmul.f32.gmra.mxu0 %v2484
      %v5404 = vpop.f32.mrf.mxu0
      %v5405 = vadd.f32 0.0, %v5404
      %5406 = vmatmul.f32.gmra.mxu0 %v2487
      %v5407 = vpop.f32.mrf.mxu0
      %v5408 = vadd.f32 0.0, %v5407
      %5409 = vmatmul.f32.gmra.mxu0 %v2490
      %v5410 = vpop.f32.mrf.mxu0
      %v5411 = vadd.f32 0.0, %v5410
      %5412 = vmatmul.f32.gmra.mxu0 %v2493
      %v5413 = vpop.f32.mrf.mxu0
      %v5414 = vadd.f32 0.0, %v5413
      %5415 = vmatmul.f32.gmra.mxu0 %v2496
      %v5416 = vpop.f32.mrf.mxu0
      %v5417 = vadd.f32 0.0, %v5416
      %5418 = vmatmul.f32.gmra.mxu0 %v2499
      %v5419 = vpop.f32.mrf.mxu0
      %v5420 = vadd.f32 0.0, %v5419
      %5421 = vmatmul.f32.gmra.mxu0 %v2502
      %v5422 = vpop.f32.mrf.mxu0
      %v5423 = vadd.f32 0.0, %v5422
      %5424 = vmatmul.f32.gmra.mxu0 %v2505
      %v5425 = vpop.f32.mrf.mxu0
      %v5426 = vadd.f32 0.0, %v5425
      %5427 = vmatmul.f32.gmra.mxu0 %v2508
      %v5428 = vpop.f32.mrf.mxu0
      %v5429 = vadd.f32 0.0, %v5428
      %5430 = vmatmul.f32.gmra.mxu0 %v2511
      %v5431 = vpop.f32.mrf.mxu0
      %v5432 = vadd.f32 0.0, %v5431
      %5433 = vmatmul.f32.gmra.mxu0 %v2514
      %v5434 = vpop.f32.mrf.mxu0
      %v5435 = vadd.f32 0.0, %v5434
      %5436 = vmatmul.f32.gmra.mxu0 %v2517
      %v5437 = vpop.f32.mrf.mxu0
      %v5438 = vadd.f32 0.0, %v5437
      %5439 = vmatmul.f32.gmra.mxu0 %v2520
      %v5440 = vpop.f32.mrf.mxu0
      %v5441 = vadd.f32 0.0, %v5440
      %5442 = vmatmul.f32.gmra.mxu0 %v2523
      %v5443 = vpop.f32.mrf.mxu0
      %v5444 = vadd.f32 0.0, %v5443
      %5445 = vmatmul.f32.gmra.mxu0 %v2526
      %v5446 = vpop.f32.mrf.mxu0
      %v5447 = vadd.f32 0.0, %v5446
      %5448 = vmatmul.f32.gmra.mxu0 %v2529
      %v5449 = vpop.f32.mrf.mxu0
      %v5450 = vadd.f32 0.0, %v5449
      %5451 = vmatmul.f32.gmra.mxu0 %v2532
      %v5452 = vpop.f32.mrf.mxu0
      %v5453 = vadd.f32 0.0, %v5452
      %5454 = vmatmul.f32.gmra.mxu0 %v2535
      %v5455 = vpop.f32.mrf.mxu0
      %v5456 = vadd.f32 0.0, %v5455
      %5457 = vmatmul.f32.gmra.mxu0 %v2538
      %v5458 = vpop.f32.mrf.mxu0
      %v5459 = vadd.f32 0.0, %v5458
      %5460 = vmatmul.f32.gmra.mxu0 %v2541
      %v5461 = vpop.f32.mrf.mxu0
      %v5462 = vadd.f32 0.0, %v5461
      %5463 = vmatmul.f32.gmra.mxu0 %v2544
      %v5464 = vpop.f32.mrf.mxu0
      %v5465 = vadd.f32 0.0, %v5464
      %5466 = vmatmul.f32.gmra.mxu0 %v2547
      %v5467 = vpop.f32.mrf.mxu0
      %v5468 = vadd.f32 0.0, %v5467
      %5469 = vmatmul.f32.gmra.mxu0 %v2550
      %v5470 = vpop.f32.mrf.mxu0
      %v5471 = vadd.f32 0.0, %v5470
      %5472 = vmatmul.f32.gmra.mxu0 %v2553
      %v5473 = vpop.f32.mrf.mxu0
      %v5474 = vadd.f32 0.0, %v5473
      %5475 = vmatmul.f32.gmra.mxu0 %v2556
      %v5476 = vpop.f32.mrf.mxu0
      %v5477 = vadd.f32 0.0, %v5476
      %5478 = vmatmul.f32.gmra.mxu0 %v2559
      %v5479 = vpop.f32.mrf.mxu0
      %v5480 = vadd.f32 0.0, %v5479
      %5481 = vmatmul.f32.gmra.mxu0 %v2562
      %v5482 = vpop.f32.mrf.mxu0
      %v5483 = vadd.f32 0.0, %v5482
      %5484 = vmatmul.f32.gmra.mxu0 %v2565
      %v5485 = vpop.f32.mrf.mxu0
      %v5486 = vadd.f32 0.0, %v5485
      %5487 = vmatmul.f32.gmra.mxu0 %v2568
      %v5488 = vpop.f32.mrf.mxu0
      %v5489 = vadd.f32 0.0, %v5488
      %5490 = vmatmul.f32.gmra.mxu0 %v2571
      %v5491 = vpop.f32.mrf.mxu0
      %v5492 = vadd.f32 0.0, %v5491
      %5493 = vmatmul.f32.gmra.mxu0 %v2574
      %v5494 = vpop.f32.mrf.mxu0
      %v5495 = vadd.f32 0.0, %v5494
      %5496 = vmatmul.f32.gmra.mxu0 %v2577
      %v5497 = vpop.f32.mrf.mxu0
      %v5498 = vadd.f32 0.0, %v5497
      %5499 = vmatmul.f32.gmra.mxu0 %v2580
      %v5500 = vpop.f32.mrf.mxu0
      %v5501 = vadd.f32 0.0, %v5500
      %5502 = vmatmul.f32.gmra.mxu0 %v2583
      %v5503 = vpop.f32.mrf.mxu0
      %v5504 = vadd.f32 0.0, %v5503
      %5505 = vmatmul.f32.gmra.mxu0 %v2586
      %v5506 = vpop.f32.mrf.mxu0
      %v5507 = vadd.f32 0.0, %v5506
      %5508 = vmatmul.f32.gmra.mxu0 %v2589
      %v5509 = vpop.f32.mrf.mxu0
      %v5510 = vadd.f32 0.0, %v5509
      %5511 = vmatmul.f32.gmra.mxu0 %v2592
      %v5512 = vpop.f32.mrf.mxu0
      %v5513 = vadd.f32 0.0, %v5512
      %5514 = vmatmul.f32.gmra.mxu0 %v2595
      %v5515 = vpop.f32.mrf.mxu0
      %v5516 = vadd.f32 0.0, %v5515
      %5517 = vmatmul.f32.gmra.mxu0 %v2598
      %v5518 = vpop.f32.mrf.mxu0
      %v5519 = vadd.f32 0.0, %v5518
      %5520 = vmatmul.f32.gmra.mxu0 %v2601
      %v5521 = vpop.f32.mrf.mxu0
      %v5522 = vadd.f32 0.0, %v5521
      %5523 = vmatmul.f32.gmra.mxu0 %v2604
      %v5524 = vpop.f32.mrf.mxu0
      %v5525 = vadd.f32 0.0, %v5524
      %5526 = vmatmul.f32.gmra.mxu0 %v2607
      %v5527 = vpop.f32.mrf.mxu0
      %v5528 = vadd.f32 0.0, %v5527
      %5529 = vmatmul.f32.gmra.mxu0 %v2610
      %v5530 = vpop.f32.mrf.mxu0
      %v5531 = vadd.f32 0.0, %v5530
      %5532 = vmatmul.f32.gmra.mxu0 %v2613
      %v5533 = vpop.f32.mrf.mxu0
      %v5534 = vadd.f32 0.0, %v5533
      %5535 = vmatmul.f32.gmra.mxu0 %v2616
      %v5536 = vpop.f32.mrf.mxu0
      %v5537 = vadd.f32 0.0, %v5536
      %5538 = vmatmul.f32.gmra.mxu0 %v2619
      %v5539 = vpop.f32.mrf.mxu0
      %v5540 = vadd.f32 0.0, %v5539
      %5541 = vmatmul.f32.gmra.mxu0 %v2622
      %v5542 = vpop.f32.mrf.mxu0
      %v5543 = vadd.f32 0.0, %v5542
      %5544 = vmatmul.f32.gmra.mxu0 %v2625
      %v5545 = vpop.f32.mrf.mxu0
      %v5546 = vadd.f32 0.0, %v5545
      %5547 = vmatmul.f32.gmra.mxu0 %v2628
      %v5548 = vpop.f32.mrf.mxu0
      %v5549 = vadd.f32 0.0, %v5548
      %5550 = vmatmul.f32.gmra.mxu0 %v2631
      %v5551 = vpop.f32.mrf.mxu0
      %v5552 = vadd.f32 0.0, %v5551
      %5553 = vmatmul.f32.gmra.mxu0 %v2634
      %v5554 = vpop.f32.mrf.mxu0
      %v5555 = vadd.f32 0.0, %v5554
      %5556 = vmatmul.f32.gmra.mxu0 %v2637
      %v5557 = vpop.f32.mrf.mxu0
      %v5558 = vadd.f32 0.0, %v5557
      %5559 = vmatmul.f32.gmra.mxu0 %v2640
      %v5560 = vpop.f32.mrf.mxu0
      %v5561 = vadd.f32 0.0, %v5560
      %5562 = vmatmul.f32.gmra.mxu0 %v2643
      %v5563 = vpop.f32.mrf.mxu0
      %v5564 = vadd.f32 0.0, %v5563
      %5565 = vmatmul.f32.gmra.mxu0 %v2646
      %v5566 = vpop.f32.mrf.mxu0
      %v5567 = vadd.f32 0.0, %v5566
      %5568 = vmatmul.f32.gmra.mxu0 %v2649
      %v5569 = vpop.f32.mrf.mxu0
      %v5570 = vadd.f32 0.0, %v5569
      %5571 = vmatmul.f32.gmra.mxu0 %v2652
      %v5572 = vpop.f32.mrf.mxu0
      %v5573 = vadd.f32 0.0, %v5572
      %5574 = vmatmul.f32.gmra.mxu0 %v2655
      %v5575 = vpop.f32.mrf.mxu0
      %v5576 = vadd.f32 0.0, %v5575
      %5577 = vmatmul.f32.gmra.mxu0 %v2658
      %v5578 = vpop.f32.mrf.mxu0
      %v5579 = vadd.f32 0.0, %v5578
      %5580 = vmatmul.f32.gmra.mxu0 %v2661
      %v5581 = vpop.f32.mrf.mxu0
      %v5582 = vadd.f32 0.0, %v5581
      %5583 = vmatmul.f32.gmra.mxu0 %v2664
      %v5584 = vpop.f32.mrf.mxu0
      %v5585 = vadd.f32 0.0, %v5584
      %5586 = vmatmul.f32.gmra.mxu0 %v2667
      %v5587 = vpop.f32.mrf.mxu0
      %v5588 = vadd.f32 0.0, %v5587
      %5589 = vmatmul.f32.gmra.mxu0 %v2670
      %v5590 = vpop.f32.mrf.mxu0
      %v5591 = vadd.f32 0.0, %v5590
      %5592 = vmatmul.f32.gmra.mxu0 %v2673
      %v5593 = vpop.f32.mrf.mxu0
      %v5594 = vadd.f32 0.0, %v5593
      %5595 = vmatmul.f32.gmra.mxu0 %v2676
      %v5596 = vpop.f32.mrf.mxu0
      %v5597 = vadd.f32 0.0, %v5596
      %5598 = vmatmul.f32.gmra.mxu0 %v2679
      %v5599 = vpop.f32.mrf.mxu0
      %v5600 = vadd.f32 0.0, %v5599
      %5601 = vmatmul.f32.gmra.mxu0 %v2682
      %v5602 = vpop.f32.mrf.mxu0
      %v5603 = vadd.f32 0.0, %v5602
      %5604 = vmatmul.f32.gmra.mxu0 %v2685
      %v5605 = vpop.f32.mrf.mxu0
      %v5606 = vadd.f32 0.0, %v5605
      %5607 = vmatmul.f32.gmra.mxu0 %v2688
      %v5608 = vpop.f32.mrf.mxu0
      %v5609 = vadd.f32 0.0, %v5608
      %5610 = vmatmul.f32.gmra.mxu0 %v2691
      %v5611 = vpop.f32.mrf.mxu0
      %v5612 = vadd.f32 0.0, %v5611
      %5613 = vmatmul.f32.gmra.mxu0 %v2694
      %v5614 = vpop.f32.mrf.mxu0
      %v5615 = vadd.f32 0.0, %v5614
      %5616 = vmatmul.f32.gmra.mxu0 %v2697
      %v5617 = vpop.f32.mrf.mxu0
      %v5618 = vadd.f32 0.0, %v5617
      %5619 = vmatmul.f32.gmra.mxu0 %v2700
      %v5620 = vpop.f32.mrf.mxu0
      %v5621 = vadd.f32 0.0, %v5620
      %5622 = vmatmul.f32.gmra.mxu0 %v2703
      %v5623 = vpop.f32.mrf.mxu0
      %v5624 = vadd.f32 0.0, %v5623
      %5625 = vmatmul.f32.gmra.mxu0 %v2706
      %v5626 = vpop.f32.mrf.mxu0
      %v5627 = vadd.f32 0.0, %v5626
      %5628 = vmatmul.f32.gmra.mxu0 %v2709
      %v5629 = vpop.f32.mrf.mxu0
      %v5630 = vadd.f32 0.0, %v5629
      %5631 = vmatmul.f32.gmra.mxu0 %v2712
      %v5632 = vpop.f32.mrf.mxu0
      %v5633 = vadd.f32 0.0, %v5632
      %5634 = vmatmul.f32.gmra.mxu0 %v2715
      %v5635 = vpop.f32.mrf.mxu0
      %v5636 = vadd.f32 0.0, %v5635
      %5637 = vmatmul.f32.gmra.mxu0 %v2718
      %v5638 = vpop.f32.mrf.mxu0
      %v5639 = vadd.f32 0.0, %v5638
      %5640 = vmatmul.f32.gmra.mxu0 %v2721
      %v5641 = vpop.f32.mrf.mxu0
      %v5642 = vadd.f32 0.0, %v5641
      %5643 = vmatmul.f32.gmra.mxu0 %v2724
      %v5644 = vpop.f32.mrf.mxu0
      %v5645 = vadd.f32 0.0, %v5644
      %5646 = vmatmul.f32.gmra.mxu0 %v2727
      %v5647 = vpop.f32.mrf.mxu0
      %v5648 = vadd.f32 0.0, %v5647
      %5649 = vmatmul.f32.gmra.mxu0 %v2730
      %v5650 = vpop.f32.mrf.mxu0
      %v5651 = vadd.f32 0.0, %v5650
      %5652 = vmatmul.f32.gmra.mxu0 %v2733
      %v5653 = vpop.f32.mrf.mxu0
      %v5654 = vadd.f32 0.0, %v5653
      %5655 = vmatmul.f32.gmra.mxu0 %v2736
      %v5656 = vpop.f32.mrf.mxu0
      %v5657 = vadd.f32 0.0, %v5656
      %5658 = vmatmul.f32.gmra.mxu0 %v2739
      %v5659 = vpop.f32.mrf.mxu0
      %v5660 = vadd.f32 0.0, %v5659
      %5661 = vmatmul.f32.gmra.mxu0 %v2742
      %v5662 = vpop.f32.mrf.mxu0
      %v5663 = vadd.f32 0.0, %v5662
      %5664 = vmatmul.f32.gmra.mxu0 %v2745
      %v5665 = vpop.f32.mrf.mxu0
      %v5666 = vadd.f32 0.0, %v5665
      %5667 = vmatmul.f32.gmra.mxu0 %v2748
      %v5668 = vpop.f32.mrf.mxu0
      %v5669 = vadd.f32 0.0, %v5668
      %5670 = vmatmul.f32.gmra.mxu0 %v2751
      %v5671 = vpop.f32.mrf.mxu0
      %v5672 = vadd.f32 0.0, %v5671
      %5673 = vmatmul.f32.gmra.mxu0 %v2754
      %v5674 = vpop.f32.mrf.mxu0
      %v5675 = vadd.f32 0.0, %v5674
      %5676 = vmatmul.f32.gmra.mxu0 %v2757
      %v5677 = vpop.f32.mrf.mxu0
      %v5678 = vadd.f32 0.0, %v5677
      %5679 = vmatmul.f32.gmra.mxu0 %v2760
      %v5680 = vpop.f32.mrf.mxu0
      %v5681 = vadd.f32 0.0, %v5680
      %5682 = vmatmul.f32.gmra.mxu0 %v2763
      %v5683 = vpop.f32.mrf.mxu0
      %v5684 = vadd.f32 0.0, %v5683
      %5685 = vmatmul.f32.gmra.mxu0 %v2766
      %v5686 = vpop.f32.mrf.mxu0
      %v5687 = vadd.f32 0.0, %v5686
      %5688 = vmatmul.f32.gmra.mxu0 %v2769
      %v5689 = vpop.f32.mrf.mxu0
      %v5690 = vadd.f32 0.0, %v5689
      %5691 = vmatmul.f32.gmra.mxu0 %v2772
      %v5692 = vpop.f32.mrf.mxu0
      %v5693 = vadd.f32 0.0, %v5692
      %5694 = vmatmul.f32.gmra.mxu0 %v2775
      %v5695 = vpop.f32.mrf.mxu0
      %v5696 = vadd.f32 0.0, %v5695
      %5697 = vmatmul.f32.gmra.mxu0 %v2778
      %v5698 = vpop.f32.mrf.mxu0
      %v5699 = vadd.f32 0.0, %v5698
      %5700 = vmatmul.f32.gmra.mxu0 %v2781
      %v5701 = vpop.f32.mrf.mxu0
      %v5702 = vadd.f32 0.0, %v5701
      %5703 = vmatmul.f32.gmra.mxu0 %v2784
      %v5704 = vpop.f32.mrf.mxu0
      %v5705 = vadd.f32 0.0, %v5704
      %5706 = vmatmul.f32.gmra.mxu0 %v2787
      %v5707 = vpop.f32.mrf.mxu0
      %v5708 = vadd.f32 0.0, %v5707
      %5709 = vmatmul.f32.gmra.mxu0 %v2790
      %v5710 = vpop.f32.mrf.mxu0
      %v5711 = vadd.f32 0.0, %v5710
      %5712 = vmatmul.f32.gmra.mxu0 %v2793
      %v5713 = vpop.f32.mrf.mxu0
      %v5714 = vadd.f32 0.0, %v5713
      %5715 = vmatmul.f32.gmra.mxu0 %v2796
      %v5716 = vpop.f32.mrf.mxu0
      %v5717 = vadd.f32 0.0, %v5716
      %5718 = vmatmul.f32.gmra.mxu0 %v2799
      %v5719 = vpop.f32.mrf.mxu0
      %v5720 = vadd.f32 0.0, %v5719
      %5721 = vmatmul.f32.gmra.mxu0 %v2802
      %v5722 = vpop.f32.mrf.mxu0
      %v5723 = vadd.f32 0.0, %v5722
      %5724 = vmatmul.f32.gmra.mxu0 %v2805
      %v5725 = vpop.f32.mrf.mxu0
      %v5726 = vadd.f32 0.0, %v5725
      %5727 = vmatmul.f32.gmra.mxu0 %v2808
      %v5728 = vpop.f32.mrf.mxu0
      %v5729 = vadd.f32 0.0, %v5728
      %5730 = vmatmul.f32.gmra.mxu0 %v2811
      %v5731 = vpop.f32.mrf.mxu0
      %v5732 = vadd.f32 0.0, %v5731
      %5733 = vmatmul.f32.gmra.mxu0 %v2814
      %v5734 = vpop.f32.mrf.mxu0
      %v5735 = vadd.f32 0.0, %v5734
      %5736 = vmatmul.f32.gmra.mxu0 %v2817
      %v5737 = vpop.f32.mrf.mxu0
      %v5738 = vadd.f32 0.0, %v5737
      %5739 = vmatmul.f32.gmra.mxu0 %v2820
      %v5740 = vpop.f32.mrf.mxu0
      %v5741 = vadd.f32 0.0, %v5740
      %5742 = vmatmul.f32.gmra.mxu0 %v2823
      %v5743 = vpop.f32.mrf.mxu0
      %v5744 = vadd.f32 0.0, %v5743
      %5745 = vmatmul.f32.gmra.mxu0 %v2826
      %v5746 = vpop.f32.mrf.mxu0
      %v5747 = vadd.f32 0.0, %v5746
      %5748 = vmatmul.f32.gmra.mxu0 %v2829
      %v5749 = vpop.f32.mrf.mxu0
      %v5750 = vadd.f32 0.0, %v5749
      %5751 = vmatmul.f32.gmra.mxu0 %v2832
      %v5752 = vpop.f32.mrf.mxu0
      %v5753 = vadd.f32 0.0, %v5752
      %5754 = vmatmul.f32.gmra.mxu0 %v2835
      %v5755 = vpop.f32.mrf.mxu0
      %v5756 = vadd.f32 0.0, %v5755
      %5757 = vmatmul.f32.gmra.mxu0 %v2838
      %v5758 = vpop.f32.mrf.mxu0
      %v5759 = vadd.f32 0.0, %v5758
      %5760 = vmatmul.f32.gmra.mxu0 %v2841
      %v5761 = vpop.f32.mrf.mxu0
      %v5762 = vadd.f32 0.0, %v5761
      %5763 = vmatmul.f32.gmra.mxu0 %v2844
      %v5764 = vpop.f32.mrf.mxu0
      %v5765 = vadd.f32 0.0, %v5764
      %5766 = vmatmul.f32.gmra.mxu0 %v2847
      %v5767 = vpop.f32.mrf.mxu0
      %v5768 = vadd.f32 0.0, %v5767
      %5769 = vmatmul.f32.gmra.mxu0 %v2850
      %v5770 = vpop.f32.mrf.mxu0
      %v5771 = vadd.f32 0.0, %v5770
      %5772 = vmatmul.f32.gmra.mxu0 %v2853
      %v5773 = vpop.f32.mrf.mxu0
      %v5774 = vadd.f32 0.0, %v5773
      %5775 = vmatmul.f32.gmra.mxu0 %v2856
      %v5776 = vpop.f32.mrf.mxu0
      %v5777 = vadd.f32 0.0, %v5776
      %5778 = vmatmul.f32.gmra.mxu0 %v2859
      %v5779 = vpop.f32.mrf.mxu0
      %v5780 = vadd.f32 0.0, %v5779
      %5781 = vmatmul.f32.gmra.mxu0 %v2862
      %v5782 = vpop.f32.mrf.mxu0
      %v5783 = vadd.f32 0.0, %v5782
      %5784 = vmatmul.f32.gmra.mxu0 %v2865
      %v5785 = vpop.f32.mrf.mxu0
      %v5786 = vadd.f32 0.0, %v5785
      %5787 = vmatmul.f32.gmra.mxu0 %v2868
      %v5788 = vpop.f32.mrf.mxu0
      %v5789 = vadd.f32 0.0, %v5788
      %5790 = vmatmul.f32.gmra.mxu0 %v2871
      %v5791 = vpop.f32.mrf.mxu0
      %v5792 = vadd.f32 0.0, %v5791
      %5793 = vmatmul.f32.gmra.mxu0 %v2874
      %v5794 = vpop.f32.mrf.mxu0
      %v5795 = vadd.f32 0.0, %v5794
      %5796 = vmatmul.f32.gmra.mxu0 %v2877
      %v5797 = vpop.f32.mrf.mxu0
      %v5798 = vadd.f32 0.0, %v5797
      %5799 = vmatmul.f32.gmra.mxu0 %v2880
      %v5800 = vpop.f32.mrf.mxu0
      %v5801 = vadd.f32 0.0, %v5800
      %5802 = vmatmul.f32.gmra.mxu0 %v2883
      %v5803 = vpop.f32.mrf.mxu0
      %v5804 = vadd.f32 0.0, %v5803
      %5805 = vmatmul.f32.gmra.mxu0 %v2886
      %v5806 = vpop.f32.mrf.mxu0
      %v5807 = vadd.f32 0.0, %v5806
      %5808 = vmatmul.f32.gmra.mxu0 %v2889
      %v5809 = vpop.f32.mrf.mxu0
      %v5810 = vadd.f32 0.0, %v5809
      %5811 = vmatmul.f32.gmra.mxu0 %v2892
      %v5812 = vpop.f32.mrf.mxu0
      %v5813 = vadd.f32 0.0, %v5812
      %5814 = vmatmul.f32.gmra.mxu0 %v2895
      %v5815 = vpop.f32.mrf.mxu0
      %v5816 = vadd.f32 0.0, %v5815
      %5817 = vmatmul.f32.gmra.mxu0 %v2898
      %v5818 = vpop.f32.mrf.mxu0
      %v5819 = vadd.f32 0.0, %v5818
      %5820 = vmatmul.f32.gmra.mxu0 %v2901
      %v5821 = vpop.f32.mrf.mxu0
      %v5822 = vadd.f32 0.0, %v5821
      %5823 = vmatmul.f32.gmra.mxu0 %v2904
      %v5824 = vpop.f32.mrf.mxu0
      %v5825 = vadd.f32 0.0, %v5824
      %5826 = vmatmul.f32.gmra.mxu0 %v2907
      %v5827 = vpop.f32.mrf.mxu0
      %v5828 = vadd.f32 0.0, %v5827
      %5829 = vmatmul.f32.gmra.mxu0 %v2910
      %v5830 = vpop.f32.mrf.mxu0
      %v5831 = vadd.f32 0.0, %v5830
      %5832 = vmatmul.f32.gmra.mxu0 %v2913
      %v5833 = vpop.f32.mrf.mxu0
      %v5834 = vadd.f32 0.0, %v5833
      %5835 = vmatmul.f32.gmra.mxu0 %v2916
      %v5836 = vpop.f32.mrf.mxu0
      %v5837 = vadd.f32 0.0, %v5836
      %5838 = vmatmul.f32.gmra.mxu0 %v2919
      %v5839 = vpop.f32.mrf.mxu0
      %v5840 = vadd.f32 0.0, %v5839
      %5841 = vmatmul.f32.gmra.mxu0 %v2922
      %v5842 = vpop.f32.mrf.mxu0
      %v5843 = vadd.f32 0.0, %v5842
      %5844 = vmatmul.f32.gmra.mxu0 %v2925
      %v5845 = vpop.f32.mrf.mxu0
      %v5846 = vadd.f32 0.0, %v5845
      %5847 = vmatmul.f32.gmra.mxu0 %v2928
      %v5848 = vpop.f32.mrf.mxu0
      %v5849 = vadd.f32 0.0, %v5848
      %5850 = vmatmul.f32.gmra.mxu0 %v2931
      %v5851 = vpop.f32.mrf.mxu0
      %v5852 = vadd.f32 0.0, %v5851
      %5853 = vmatmul.f32.gmra.mxu0 %v2934
      %v5854 = vpop.f32.mrf.mxu0
      %v5855 = vadd.f32 0.0, %v5854
      %5856 = vmatmul.f32.gmra.mxu0 %v2937
      %v5857 = vpop.f32.mrf.mxu0
      %v5858 = vadd.f32 0.0, %v5857
      %5859 = vmatmul.f32.gmra.mxu0 %v2940
      %v5860 = vpop.f32.mrf.mxu0
      %v5861 = vadd.f32 0.0, %v5860
      %5862 = vmatmul.f32.gmra.mxu0 %v2943
      %v5863 = vpop.f32.mrf.mxu0
      %v5864 = vadd.f32 0.0, %v5863
      %5865 = vmatmul.f32.gmra.mxu0 %v2946
      %v5866 = vpop.f32.mrf.mxu0
      %v5867 = vadd.f32 0.0, %v5866
      %5868 = vmatmul.f32.gmra.mxu0 %v2949
      %v5869 = vpop.f32.mrf.mxu0
      %v5870 = vadd.f32 0.0, %v5869
      %5871 = vmatmul.f32.gmra.mxu0 %v2952
      %v5872 = vpop.f32.mrf.mxu0
      %v5873 = vadd.f32 0.0, %v5872
      %5874 = vmatmul.f32.gmra.mxu0 %v2955
      %v5875 = vpop.f32.mrf.mxu0
      %v5876 = vadd.f32 0.0, %v5875
      %5877 = vmatmul.f32.gmra.mxu0 %v2958
      %v5878 = vpop.f32.mrf.mxu0
      %v5879 = vadd.f32 0.0, %v5878
      %5880 = vmatmul.f32.gmra.mxu0 %v2961
      %v5881 = vpop.f32.mrf.mxu0
      %v5882 = vadd.f32 0.0, %v5881
      %5883 = vmatmul.f32.gmra.mxu0 %v2964
      %v5884 = vpop.f32.mrf.mxu0
      %v5885 = vadd.f32 0.0, %v5884
      %5886 = vmatmul.f32.gmra.mxu0 %v2967
      %v5887 = vpop.f32.mrf.mxu0
      %v5888 = vadd.f32 0.0, %v5887
      %5889 = vmatmul.f32.gmra.mxu0 %v2970
      %v5890 = vpop.f32.mrf.mxu0
      %v5891 = vadd.f32 0.0, %v5890
      %5892 = vmatmul.f32.gmra.mxu0 %v2973
      %v5893 = vpop.f32.mrf.mxu0
      %v5894 = vadd.f32 0.0, %v5893
      %5895 = vmatmul.f32.gmra.mxu0 %v2976
      %v5896 = vpop.f32.mrf.mxu0
      %v5897 = vadd.f32 0.0, %v5896
      %5898 = vmatmul.f32.gmra.mxu0 %v2979
      %v5899 = vpop.f32.mrf.mxu0
      %v5900 = vadd.f32 0.0, %v5899
      %5901 = vmatmul.f32.gmra.mxu0 %v2982
      %v5902 = vpop.f32.mrf.mxu0
      %v5903 = vadd.f32 0.0, %v5902
      %5904 = vmatmul.f32.gmra.mxu0 %v2985
      %v5905 = vpop.f32.mrf.mxu0
      %v5906 = vadd.f32 0.0, %v5905
      %5907 = vmatmul.f32.gmra.mxu0 %v2988
      %v5908 = vpop.f32.mrf.mxu0
      %v5909 = vadd.f32 0.0, %v5908
      %5910 = vmatmul.f32.gmra.mxu0 %v2991
      %v5911 = vpop.f32.mrf.mxu0
      %v5912 = vadd.f32 0.0, %v5911
      %5913 = vmatmul.f32.gmra.mxu0 %v2994
      %v5914 = vpop.f32.mrf.mxu0
      %v5915 = vadd.f32 0.0, %v5914
      %5916 = vmatmul.f32.gmra.mxu0 %v2997
      %v5917 = vpop.f32.mrf.mxu0
      %v5918 = vadd.f32 0.0, %v5917
      %5919 = vmatmul.f32.gmra.mxu0 %v3000
      %v5920 = vpop.f32.mrf.mxu0
      %v5921 = vadd.f32 0.0, %v5920
      %5922 = vmatmul.f32.gmra.mxu0 %v3003
      %v5923 = vpop.f32.mrf.mxu0
      %v5924 = vadd.f32 0.0, %v5923
      %5925 = vmatmul.f32.gmra.mxu0 %v3006
      %v5926 = vpop.f32.mrf.mxu0
      %v5927 = vadd.f32 0.0, %v5926
      %5928 = vmatmul.f32.gmra.mxu0 %v3009
      %v5929 = vpop.f32.mrf.mxu0
      %v5930 = vadd.f32 0.0, %v5929
      %5931 = vmatmul.f32.gmra.mxu0 %v3012
      %v5932 = vpop.f32.mrf.mxu0
      %v5933 = vadd.f32 0.0, %v5932
      %5934 = vmatmul.f32.gmra.mxu0 %v3015
      %v5935 = vpop.f32.mrf.mxu0
      %v5936 = vadd.f32 0.0, %v5935
      %5937 = vmatmul.f32.gmra.mxu0 %v3018
      %v5938 = vpop.f32.mrf.mxu0
      %v5939 = vadd.f32 0.0, %v5938
      %5940 = vmatmul.f32.gmra.mxu0 %v3021
      %v5941 = vpop.f32.mrf.mxu0
      %v5942 = vadd.f32 0.0, %v5941
      %5943 = vmatmul.f32.gmra.mxu0 %v3024
      %v5944 = vpop.f32.mrf.mxu0
      %v5945 = vadd.f32 0.0, %v5944
      %5946 = vmatmul.f32.gmra.mxu0 %v3027
      %v5947 = vpop.f32.mrf.mxu0
      %v5948 = vadd.f32 0.0, %v5947
      %5949 = vmatmul.f32.gmra.mxu0 %v3030
      %v5950 = vpop.f32.mrf.mxu0
      %v5951 = vadd.f32 0.0, %v5950
      %5952 = vmatmul.f32.gmra.mxu0 %v3033
      %v5953 = vpop.f32.mrf.mxu0
      %v5954 = vadd.f32 0.0, %v5953
      %5955 = vmatmul.f32.gmra.mxu0 %v3036
      %v5956 = vpop.f32.mrf.mxu0
      %v5957 = vadd.f32 0.0, %v5956
      %5958 = vmatmul.f32.gmra.mxu0 %v3039
      %v5959 = vpop.f32.mrf.mxu0
      %v5960 = vadd.f32 0.0, %v5959
      %5961 = vmatmul.f32.gmra.mxu0 %v3042
      %v5962 = vpop.f32.mrf.mxu0
      %v5963 = vadd.f32 0.0, %v5962
      %5964 = vmatmul.f32.gmra.mxu0 %v3045
      %v5965 = vpop.f32.mrf.mxu0
      %v5966 = vadd.f32 0.0, %v5965
      %5967 = vmatmul.f32.gmra.mxu0 %v3048
      %v5968 = vpop.f32.mrf.mxu0
      %v5969 = vadd.f32 0.0, %v5968
      %5970 = vmatmul.f32.gmra.mxu0 %v3051
      %v5971 = vpop.f32.mrf.mxu0
      %v5972 = vadd.f32 0.0, %v5971
      %5973 = vmatmul.f32.gmra.mxu0 %v3054
      %v5974 = vpop.f32.mrf.mxu0
      %v5975 = vadd.f32 0.0, %v5974
      %5976 = vmatmul.f32.gmra.mxu0 %v3057
      %v5977 = vpop.f32.mrf.mxu0
      %v5978 = vadd.f32 0.0, %v5977
      %5979 = vmatmul.f32.gmra.mxu0 %v3060
      %v5980 = vpop.f32.mrf.mxu0
      %v5981 = vadd.f32 0.0, %v5980
      %5982 = vmatmul.f32.gmra.mxu0 %v3063
      %v5983 = vpop.f32.mrf.mxu0
      %v5984 = vadd.f32 0.0, %v5983
      %5985 = vmatmul.f32.gmra.mxu0 %v3066
      %v5986 = vpop.f32.mrf.mxu0
      %v5987 = vadd.f32 0.0, %v5986
      %5988 = vmatmul.f32.gmra.mxu0 %v3069
      %v5989 = vpop.f32.mrf.mxu0
      %v5990 = vadd.f32 0.0, %v5989
      %5991 = vmatmul.f32.gmra.mxu0 %v3072
      %v5992 = vpop.f32.mrf.mxu0
      %v5993 = vadd.f32 0.0, %v5992
      %5994 = vmatmul.f32.gmra.mxu0 %v3075
      %v5995 = vpop.f32.mrf.mxu0
      %v5996 = vadd.f32 0.0, %v5995
      %5997 = vmatmul.f32.gmra.mxu0 %v3078
      %v5998 = vpop.f32.mrf.mxu0
      %v5999 = vadd.f32 0.0, %v5998
      %6000 = vmatmul.f32.gmra.mxu0 %v3081
      %v6001 = vpop.f32.mrf.mxu0
      %v6002 = vadd.f32 0.0, %v6001
      %6003 = vmatmul.f32.gmra.mxu0 %v3084
      %v6004 = vpop.f32.mrf.mxu0
      %v6005 = vadd.f32 0.0, %v6004
      %6006 = vmatmul.f32.gmra.mxu0 %v3087
      %v6007 = vpop.f32.mrf.mxu0
      %v6008 = vadd.f32 0.0, %v6007
      %6009 = vmatmul.f32.gmra.mxu0 %v3090
      %v6010 = vpop.f32.mrf.mxu0
      %v6011 = vadd.f32 0.0, %v6010
      %6012 = vmatmul.f32.gmra.mxu0 %v3093
      %v6013 = vpop.f32.mrf.mxu0
      %v6014 = vadd.f32 0.0, %v6013
      %6015 = vmatmul.f32.gmra.mxu0 %v3096
      %v6016 = vpop.f32.mrf.mxu0
      %v6017 = vadd.f32 0.0, %v6016
      %6018 = vmatmul.f32.gmra.mxu0 %v3099
      %v6019 = vpop.f32.mrf.mxu0
      %v6020 = vadd.f32 0.0, %v6019
      %6021 = vmatmul.f32.gmra.mxu0 %v3102
      %v6022 = vpop.f32.mrf.mxu0
      %v6023 = vadd.f32 0.0, %v6022
      %6024 = vmatmul.f32.gmra.mxu0 %v3105
      %v6025 = vpop.f32.mrf.mxu0
      %v6026 = vadd.f32 0.0, %v6025
      %6027 = vmatmul.f32.gmra.mxu0 %v3108
      %v6028 = vpop.f32.mrf.mxu0
      %v6029 = vadd.f32 0.0, %v6028
      %6030 = vmatmul.f32.gmra.mxu0 %v3111
      %v6031 = vpop.f32.mrf.mxu0
      %v6032 = vadd.f32 0.0, %v6031
      %6033 = vmatmul.f32.gmra.mxu0 %v3114
      %v6034 = vpop.f32.mrf.mxu0
      %v6035 = vadd.f32 0.0, %v6034
      %6036 = vmatmul.f32.gmra.mxu0 %v3117
      %v6037 = vpop.f32.mrf.mxu0
      %v6038 = vadd.f32 0.0, %v6037
      %6039 = vmatmul.f32.gmra.mxu0 %v3120
      %v6040 = vpop.f32.mrf.mxu0
      %v6041 = vadd.f32 0.0, %v6040
      %6042 = vmatmul.f32.gmra.mxu0 %v3123
      %v6043 = vpop.f32.mrf.mxu0
      %v6044 = vadd.f32 0.0, %v6043
      %6045 = vmatmul.f32.gmra.mxu0 %v3126
      %v6046 = vpop.f32.mrf.mxu0
      %v6047 = vadd.f32 0.0, %v6046
      %6048 = vmatmul.f32.gmra.mxu0 %v3129
      %v6049 = vpop.f32.mrf.mxu0
      %v6050 = vadd.f32 0.0, %v6049
      %6051 = vmatmul.f32.gmra.mxu0 %v3132
      %v6052 = vpop.f32.mrf.mxu0
      %v6053 = vadd.f32 0.0, %v6052
      %6054 = vmatmul.f32.gmra.mxu0 %v3135
      %v6055 = vpop.f32.mrf.mxu0
      %v6056 = vadd.f32 0.0, %v6055
      %6057 = vmatmul.f32.gmra.mxu0 %v3138
      %v6058 = vpop.f32.mrf.mxu0
      %v6059 = vadd.f32 0.0, %v6058
      %6060 = vmatmul.f32.gmra.mxu0 %v3141
      %v6061 = vpop.f32.mrf.mxu0
      %v6062 = vadd.f32 0.0, %v6061
      %6063 = vmatmul.f32.gmra.mxu0 %v3144
      %v6064 = vpop.f32.mrf.mxu0
      %v6065 = vadd.f32 0.0, %v6064
      %6066 = vmatmul.f32.gmra.mxu0 %v3147
      %v6067 = vpop.f32.mrf.mxu0
      %v6068 = vadd.f32 0.0, %v6067
      %6069 = vmatmul.f32.gmra.mxu0 %v3150
      %v6070 = vpop.f32.mrf.mxu0
      %v6071 = vadd.f32 0.0, %v6070
      %6072 = vmatmul.f32.gmra.mxu0 %v3153
      %v6073 = vpop.f32.mrf.mxu0
      %v6074 = vadd.f32 0.0, %v6073
      %6075 = vmatmul.f32.gmra.mxu0 %v3156
      %v6076 = vpop.f32.mrf.mxu0
      %v6077 = vadd.f32 0.0, %v6076
      %6078 = vmatmul.f32.gmra.mxu0 %v3159
      %v6079 = vpop.f32.mrf.mxu0
      %v6080 = vadd.f32 0.0, %v6079
      %6081 = vmatmul.f32.gmra.mxu0 %v3162
      %v6082 = vpop.f32.mrf.mxu0
      %v6083 = vadd.f32 0.0, %v6082
      %6084 = vmatmul.f32.gmra.mxu0 %v3165
      %v6085 = vpop.f32.mrf.mxu0
      %v6086 = vadd.f32 0.0, %v6085
      %6087 = vmatmul.f32.gmra.mxu0 %v3168
      %v6088 = vpop.f32.mrf.mxu0
      %v6089 = vadd.f32 0.0, %v6088
      %6090 = vmatmul.f32.gmra.mxu0 %v3171
      %v6091 = vpop.f32.mrf.mxu0
      %v6092 = vadd.f32 0.0, %v6091
      %6093 = vmatmul.f32.gmra.mxu0 %v3174
      %v6094 = vpop.f32.mrf.mxu0
      %v6095 = vadd.f32 0.0, %v6094
      %6096 = vmatmul.f32.gmra.mxu0 %v3177
      %v6097 = vpop.f32.mrf.mxu0
      %v6098 = vadd.f32 0.0, %v6097
      %6099 = vmatmul.f32.gmra.mxu0 %v3180
      %v6100 = vpop.f32.mrf.mxu0
      %v6101 = vadd.f32 0.0, %v6100
      %6102 = vmatmul.f32.gmra.mxu0 %v3183
      %v6103 = vpop.f32.mrf.mxu0
      %v6104 = vadd.f32 0.0, %v6103
      %6105 = vmatmul.f32.gmra.mxu0 %v3186
      %v6106 = vpop.f32.mrf.mxu0
      %v6107 = vadd.f32 0.0, %v6106
      %6108 = vmatmul.f32.gmra.mxu0 %v3189
      %v6109 = vpop.f32.mrf.mxu0
      %v6110 = vadd.f32 0.0, %v6109
      %6111 = vmatmul.f32.gmra.mxu0 %v3192
      %v6112 = vpop.f32.mrf.mxu0
      %v6113 = vadd.f32 0.0, %v6112
      %6114 = vmatmul.f32.gmra.mxu0 %v3195
      %v6115 = vpop.f32.mrf.mxu0
      %v6116 = vadd.f32 0.0, %v6115
      %6117 = vmatmul.f32.gmra.mxu0 %v3198
      %v6118 = vpop.f32.mrf.mxu0
      %v6119 = vadd.f32 0.0, %v6118
      %6120 = vmatmul.f32.gmra.mxu0 %v3201
      %v6121 = vpop.f32.mrf.mxu0
      %v6122 = vadd.f32 0.0, %v6121
      %6123 = vmatmul.f32.gmra.mxu0 %v3204
      %v6124 = vpop.f32.mrf.mxu0
      %v6125 = vadd.f32 0.0, %v6124
      %6126 = vmatmul.f32.gmra.mxu0 %v3207
      %v6127 = vpop.f32.mrf.mxu0
      %v6128 = vadd.f32 0.0, %v6127
      %6129 = vmatmul.f32.gmra.mxu0 %v3210
      %v6130 = vpop.f32.mrf.mxu0
      %v6131 = vadd.f32 0.0, %v6130
      %6132 = vmatmul.f32.gmra.mxu0 %v3213
      %v6133 = vpop.f32.mrf.mxu0
      %v6134 = vadd.f32 0.0, %v6133
      %6135 = vmatmul.f32.gmra.mxu0 %v3216
      %v6136 = vpop.f32.mrf.mxu0
      %v6137 = vadd.f32 0.0, %v6136
      %6138 = vmatmul.f32.gmra.mxu0 %v3219
      %v6139 = vpop.f32.mrf.mxu0
      %v6140 = vadd.f32 0.0, %v6139
      %6141 = vmatmul.f32.gmra.mxu0 %v3222
      %v6142 = vpop.f32.mrf.mxu0
      %v6143 = vadd.f32 0.0, %v6142
      %6144 = vmatmul.f32.gmra.mxu0 %v3225
      %v6145 = vpop.f32.mrf.mxu0
      %v6146 = vadd.f32 0.0, %v6145
      %6147 = vmatmul.f32.gmra.mxu0 %v3228
      %v6148 = vpop.f32.mrf.mxu0
      %v6149 = vadd.f32 0.0, %v6148
      %6150 = vmatmul.f32.gmra.mxu0 %v3231
      %v6151 = vpop.f32.mrf.mxu0
      %v6152 = vadd.f32 0.0, %v6151
      %6153 = vmatmul.f32.gmra.mxu0 %v3234
      %v6154 = vpop.f32.mrf.mxu0
      %v6155 = vadd.f32 0.0, %v6154
      %6156 = vmatmul.f32.gmra.mxu0 %v3237
      %v6157 = vpop.f32.mrf.mxu0
      %v6158 = vadd.f32 0.0, %v6157
      %6159 = vmatmul.f32.gmra.mxu0 %v3240
      %v6160 = vpop.f32.mrf.mxu0
      %v6161 = vadd.f32 0.0, %v6160
      %6162 = vmatmul.f32.gmra.mxu0 %v3243
      %v6163 = vpop.f32.mrf.mxu0
      %v6164 = vadd.f32 0.0, %v6163
      %6165 = vmatmul.f32.gmra.mxu0 %v3246
      %v6166 = vpop.f32.mrf.mxu0
      %v6167 = vadd.f32 0.0, %v6166
      %6168 = vmatmul.f32.gmra.mxu0 %v3249
      %v6169 = vpop.f32.mrf.mxu0
      %v6170 = vadd.f32 0.0, %v6169
      %6171 = vmatmul.f32.gmra.mxu0 %v3252
      %v6172 = vpop.f32.mrf.mxu0
      %v6173 = vadd.f32 0.0, %v6172
      %6174 = vmatmul.f32.gmra.mxu0 %v3255
      %v6175 = vpop.f32.mrf.mxu0
      %v6176 = vadd.f32 0.0, %v6175
      %6177 = vmatmul.f32.gmra.mxu0 %v3258
      %v6178 = vpop.f32.mrf.mxu0
      %v6179 = vadd.f32 0.0, %v6178
      %6180 = vmatmul.f32.gmra.mxu0 %v3261
      %v6181 = vpop.f32.mrf.mxu0
      %v6182 = vadd.f32 0.0, %v6181
      %6183 = vmatmul.f32.gmra.mxu0 %v3264
      %v6184 = vpop.f32.mrf.mxu0
      %v6185 = vadd.f32 0.0, %v6184
      %6186 = vmatmul.f32.gmra.mxu0 %v3267
      %v6187 = vpop.f32.mrf.mxu0
      %v6188 = vadd.f32 0.0, %v6187
      %6189 = vmatmul.f32.gmra.mxu0 %v3270
      %v6190 = vpop.f32.mrf.mxu0
      %v6191 = vadd.f32 0.0, %v6190
      %6192 = vmatmul.f32.gmra.mxu0 %v3273
      %v6193 = vpop.f32.mrf.mxu0
      %v6194 = vadd.f32 0.0, %v6193
      %6195 = vmatmul.f32.gmra.mxu0 %v3276
      %v6196 = vpop.f32.mrf.mxu0
      %v6197 = vadd.f32 0.0, %v6196
      %6198 = vmatmul.f32.gmra.mxu0 %v3279
      %v6199 = vpop.f32.mrf.mxu0
      %v6200 = vadd.f32 0.0, %v6199
      %6201 = vmatmul.f32.gmra.mxu0 %v3282
      %v6202 = vpop.f32.mrf.mxu0
      %v6203 = vadd.f32 0.0, %v6202
      %6204 = vmatmul.f32.gmra.mxu0 %v3285
      %v6205 = vpop.f32.mrf.mxu0
      %v6206 = vadd.f32 0.0, %v6205
      %6207 = vmatmul.f32.gmra.mxu0 %v3288
      %v6208 = vpop.f32.mrf.mxu0
      %v6209 = vadd.f32 0.0, %v6208
      %6210 = vmatmul.f32.gmra.mxu0 %v3291
      %v6211 = vpop.f32.mrf.mxu0
      %v6212 = vadd.f32 0.0, %v6211
      %6213 = vmatmul.f32.gmra.mxu0 %v3294
      %v6214 = vpop.f32.mrf.mxu0
      %v6215 = vadd.f32 0.0, %v6214
      %6216 = vmatmul.f32.gmra.mxu0 %v3297
      %v6217 = vpop.f32.mrf.mxu0
      %v6218 = vadd.f32 0.0, %v6217
      %6219 = vmatmul.f32.gmra.mxu0 %v3300
      %v6220 = vpop.f32.mrf.mxu0
      %v6221 = vadd.f32 0.0, %v6220
      %6222 = vmatmul.f32.gmra.mxu0 %v3303
      %v6223 = vpop.f32.mrf.mxu0
      %v6224 = vadd.f32 0.0, %v6223
      %6225 = vmatmul.f32.gmra.mxu0 %v3306
      %v6226 = vpop.f32.mrf.mxu0
      %v6227 = vadd.f32 0.0, %v6226
      %6228 = vmatmul.f32.gmra.mxu0 %v3309
      %v6229 = vpop.f32.mrf.mxu0
      %v6230 = vadd.f32 0.0, %v6229
      %6231 = vmatmul.f32.gmra.mxu0 %v3312
      %v6232 = vpop.f32.mrf.mxu0
      %v6233 = vadd.f32 0.0, %v6232
      %6234 = vmatmul.f32.gmra.mxu0 %v3315
      %v6235 = vpop.f32.mrf.mxu0
      %v6236 = vadd.f32 0.0, %v6235
      %6237 = vmatmul.f32.gmra.mxu0 %v3318
      %v6238 = vpop.f32.mrf.mxu0
      %v6239 = vadd.f32 0.0, %v6238
      %6240 = vmatmul.f32.gmra.mxu0 %v3321
      %v6241 = vpop.f32.mrf.mxu0
      %v6242 = vadd.f32 0.0, %v6241
      %6243 = vmatmul.f32.gmra.mxu0 %v3324
      %v6244 = vpop.f32.mrf.mxu0
      %v6245 = vadd.f32 0.0, %v6244
      %6246 = vmatmul.f32.gmra.mxu0 %v3327
      %v6247 = vpop.f32.mrf.mxu0
      %v6248 = vadd.f32 0.0, %v6247
      %6249 = vmatmul.f32.gmra.mxu0 %v3330
      %v6250 = vpop.f32.mrf.mxu0
      %v6251 = vadd.f32 0.0, %v6250
      %6252 = vmatmul.f32.gmra.mxu0 %v3333
      %v6253 = vpop.f32.mrf.mxu0
      %v6254 = vadd.f32 0.0, %v6253
      %6255 = vmatmul.f32.gmra.mxu0 %v3336
      %v6256 = vpop.f32.mrf.mxu0
      %v6257 = vadd.f32 0.0, %v6256
      %6258 = vmatmul.f32.gmra.mxu0 %v3339
      %v6259 = vpop.f32.mrf.mxu0
      %v6260 = vadd.f32 0.0, %v6259
      %6261 = vmatmul.f32.gmra.mxu0 %v3342
      %v6262 = vpop.f32.mrf.mxu0
      %v6263 = vadd.f32 0.0, %v6262
      %6264 = vmatmul.f32.gmra.mxu0 %v3345
      %v6265 = vpop.f32.mrf.mxu0
      %v6266 = vadd.f32 0.0, %v6265
      %6267 = vmatmul.f32.gmra.mxu0 %v3348
      %v6268 = vpop.f32.mrf.mxu0
      %v6269 = vadd.f32 0.0, %v6268
      %6270 = vmatmul.f32.gmra.mxu0 %v3351
      %v6271 = vpop.f32.mrf.mxu0
      %v6272 = vadd.f32 0.0, %v6271
      %6273 = vmatmul.f32.gmra.mxu0 %v3354
      %v6274 = vpop.f32.mrf.mxu0
      %v6275 = vadd.f32 0.0, %v6274
      %6276 = vmatmul.f32.gmra.mxu0 %v3357
      %v6277 = vpop.f32.mrf.mxu0
      %v6278 = vadd.f32 0.0, %v6277
      %6279 = vmatmul.f32.gmra.mxu0 %v3360
      %v6280 = vpop.f32.mrf.mxu0
      %v6281 = vadd.f32 0.0, %v6280
      %6282 = vmatmul.f32.gmra.mxu0 %v3363
      %v6283 = vpop.f32.mrf.mxu0
      %v6284 = vadd.f32 0.0, %v6283
      %6285 = vmatmul.f32.gmra.mxu0 %v3366
      %v6286 = vpop.f32.mrf.mxu0
      %v6287 = vadd.f32 0.0, %v6286
      %6288 = vmatmul.f32.gmra.mxu0 %v3369
      %v6289 = vpop.f32.mrf.mxu0
      %v6290 = vadd.f32 0.0, %v6289
      %6291 = vmatmul.f32.gmra.mxu0 %v3372
      %v6292 = vpop.f32.mrf.mxu0
      %v6293 = vadd.f32 0.0, %v6292
      %6294 = vmatmul.f32.gmra.mxu0 %v3375
      %v6295 = vpop.f32.mrf.mxu0
      %v6296 = vadd.f32 0.0, %v6295
      %6297 = vmatmul.f32.gmra.mxu0 %v3378
      %v6298 = vpop.f32.mrf.mxu0
      %v6299 = vadd.f32 0.0, %v6298
      %6300 = vmatmul.f32.gmra.mxu0 %v3381
      %v6301 = vpop.f32.mrf.mxu0
      %v6302 = vadd.f32 0.0, %v6301
      %6303 = vmatmul.f32.gmra.mxu0 %v3384
      %v6304 = vpop.f32.mrf.mxu0
      %v6305 = vadd.f32 0.0, %v6304
      %6306 = vmatmul.f32.gmra.mxu0 %v3387
      %v6307 = vpop.f32.mrf.mxu0
      %v6308 = vadd.f32 0.0, %v6307
      %6309 = vmatmul.f32.gmra.mxu0 %v3390
      %v6310 = vpop.f32.mrf.mxu0
      %v6311 = vadd.f32 0.0, %v6310
      %6312 = vmatmul.f32.gmra.mxu0 %v3393
      %v6313 = vpop.f32.mrf.mxu0
      %v6314 = vadd.f32 0.0, %v6313
      %6315 = vmatmul.f32.gmra.mxu0 %v3396
      %v6316 = vpop.f32.mrf.mxu0
      %v6317 = vadd.f32 0.0, %v6316
      %6318 = vmatmul.f32.gmra.mxu0 %v3399
      %v6319 = vpop.f32.mrf.mxu0
      %v6320 = vadd.f32 0.0, %v6319
      %6321 = vmatmul.f32.gmra.mxu0 %v3402
      %v6322 = vpop.f32.mrf.mxu0
      %v6323 = vadd.f32 0.0, %v6322
      %6324 = vmatmul.f32.gmra.mxu0 %v3405
      %v6325 = vpop.f32.mrf.mxu0
      %v6326 = vadd.f32 0.0, %v6325
      %6327 = vmatmul.f32.gmra.mxu0 %v3408
      %v6328 = vpop.f32.mrf.mxu0
      %v6329 = vadd.f32 0.0, %v6328
      %6330 = vmatmul.f32.gmra.mxu0 %v3411
      %v6331 = vpop.f32.mrf.mxu0
      %v6332 = vadd.f32 0.0, %v6331
      %6333 = vmatmul.f32.gmra.mxu0 %v3414
      %v6334 = vpop.f32.mrf.mxu0
      %v6335 = vadd.f32 0.0, %v6334
      %6336 = vmatmul.f32.gmra.mxu0 %v3417
      %v6337 = vpop.f32.mrf.mxu0
      %v6338 = vadd.f32 0.0, %v6337
      %6339 = vmatmul.f32.gmra.mxu0 %v3420
      %v6340 = vpop.f32.mrf.mxu0
      %v6341 = vadd.f32 0.0, %v6340
      %6342 = vmatmul.f32.gmra.mxu0 %v3423
      %v6343 = vpop.f32.mrf.mxu0
      %v6344 = vadd.f32 0.0, %v6343
      %6345 = vmatmul.f32.gmra.mxu0 %v3426
      %v6346 = vpop.f32.mrf.mxu0
      %v6347 = vadd.f32 0.0, %v6346
      %6348 = vmatmul.f32.gmra.mxu0 %v3429
      %v6349 = vpop.f32.mrf.mxu0
      %v6350 = vadd.f32 0.0, %v6349
      %6351 = vmatmul.f32.gmra.mxu0 %v3432
      %v6352 = vpop.f32.mrf.mxu0
      %v6353 = vadd.f32 0.0, %v6352
      %6354 = vmatmul.f32.gmra.mxu0 %v3435
      %v6355 = vpop.f32.mrf.mxu0
      %v6356 = vadd.f32 0.0, %v6355
      %6357 = vmatmul.f32.gmra.mxu0 %v3438
      %v6358 = vpop.f32.mrf.mxu0
      %v6359 = vadd.f32 0.0, %v6358
      %6360 = vmatmul.f32.gmra.mxu0 %v3441
      %v6361 = vpop.f32.mrf.mxu0
      %v6362 = vadd.f32 0.0, %v6361
      %6363 = vmatmul.f32.gmra.mxu0 %v3444
      %v6364 = vpop.f32.mrf.mxu0
      %v6365 = vadd.f32 0.0, %v6364
      %6366 = vmatmul.f32.gmra.mxu0 %v3447
      %v6367 = vpop.f32.mrf.mxu0
      %v6368 = vadd.f32 0.0, %v6367
      %6369 = vmatmul.f32.gmra.mxu0 %v3450
      %v6370 = vpop.f32.mrf.mxu0
      %v6371 = vadd.f32 0.0, %v6370
      %6372 = vmatmul.f32.gmra.mxu0 %v3453
      %v6373 = vpop.f32.mrf.mxu0
      %v6374 = vadd.f32 0.0, %v6373
      %6375 = vmatmul.f32.gmra.mxu0 %v3456
      %v6376 = vpop.f32.mrf.mxu0
      %v6377 = vadd.f32 0.0, %v6376
      %6378 = vmatmul.f32.gmra.mxu0 %v3459
      %v6379 = vpop.f32.mrf.mxu0
      %v6380 = vadd.f32 0.0, %v6379
      %6381 = vmatmul.f32.gmra.mxu0 %v3462
      %v6382 = vpop.f32.mrf.mxu0
      %v6383 = vadd.f32 0.0, %v6382
      %6384 = vmatmul.f32.gmra.mxu0 %v3465
      %v6385 = vpop.f32.mrf.mxu0
      %v6386 = vadd.f32 0.0, %v6385
      %6387 = vmatmul.f32.gmra.mxu0 %v3468
      %v6388 = vpop.f32.mrf.mxu0
      %v6389 = vadd.f32 0.0, %v6388
      %6390 = vmatmul.f32.gmra.mxu0 %v3471
      %v6391 = vpop.f32.mrf.mxu0
      %v6392 = vadd.f32 0.0, %v6391
      %6393 = vmatmul.f32.gmra.mxu0 %v3474
      %v6394 = vpop.f32.mrf.mxu0
      %v6395 = vadd.f32 0.0, %v6394
      %6396 = vmatmul.f32.gmra.mxu0 %v3477
      %v6397 = vpop.f32.mrf.mxu0
      %v6398 = vadd.f32 0.0, %v6397
      %6399 = vmatmul.f32.gmra.mxu0 %v3480
      %v6400 = vpop.f32.mrf.mxu0
      %v6401 = vadd.f32 0.0, %v6400
      %6402 = vmatmul.f32.gmra.mxu0 %v3483
      %v6403 = vpop.f32.mrf.mxu0
      %v6404 = vadd.f32 0.0, %v6403
      %6405 = vmatmul.f32.gmra.mxu0 %v3486
      %v6406 = vpop.f32.mrf.mxu0
      %v6407 = vadd.f32 0.0, %v6406
      %6408 = vmatmul.f32.gmra.mxu0 %v3489
      %v6409 = vpop.f32.mrf.mxu0
      %v6410 = vadd.f32 0.0, %v6409
      %6411 = vmatmul.f32.gmra.mxu0 %v3492
      %v6412 = vpop.f32.mrf.mxu0
      %v6413 = vadd.f32 0.0, %v6412
      %6414 = vmatmul.f32.gmra.mxu0 %v3495
      %v6415 = vpop.f32.mrf.mxu0
      %v6416 = vadd.f32 0.0, %v6415
      %6417 = vmatmul.f32.gmra.mxu0 %v3498
      %v6418 = vpop.f32.mrf.mxu0
      %v6419 = vadd.f32 0.0, %v6418
      %6420 = vmatmul.f32.gmra.mxu0 %v3501
      %v6421 = vpop.f32.mrf.mxu0
      %v6422 = vadd.f32 0.0, %v6421
      %6423 = vmatmul.f32.gmra.mxu0 %v3504
      %v6424 = vpop.f32.mrf.mxu0
      %v6425 = vadd.f32 0.0, %v6424
      %6426 = vmatmul.f32.gmra.mxu0 %v3507
      %v6427 = vpop.f32.mrf.mxu0
      %v6428 = vadd.f32 0.0, %v6427
      %6429 = vmatmul.f32.gmra.mxu0 %v3510
      %v6430 = vpop.f32.mrf.mxu0
      %v6431 = vadd.f32 0.0, %v6430
      %6432 = vmatmul.f32.gmra.mxu0 %v3513
      %v6433 = vpop.f32.mrf.mxu0
      %v6434 = vadd.f32 0.0, %v6433
      %6435 = vmatmul.f32.gmra.mxu0 %v3516
      %v6436 = vpop.f32.mrf.mxu0
      %v6437 = vadd.f32 0.0, %v6436
      %6438 = vmatmul.f32.gmra.mxu0 %v3519
      %v6439 = vpop.f32.mrf.mxu0
      %v6440 = vadd.f32 0.0, %v6439
      %6441 = vmatmul.f32.gmra.mxu0 %v3522
      %v6442 = vpop.f32.mrf.mxu0
      %v6443 = vadd.f32 0.0, %v6442
      %6444 = vmatmul.f32.gmra.mxu0 %v3525
      %v6445 = vpop.f32.mrf.mxu0
      %v6446 = vadd.f32 0.0, %v6445
      %6447 = vmatmul.f32.gmra.mxu0 %v3528
      %v6448 = vpop.f32.mrf.mxu0
      %v6449 = vadd.f32 0.0, %v6448
      %6450 = vmatmul.f32.gmra.mxu0 %v3531
      %v6451 = vpop.f32.mrf.mxu0
      %v6452 = vadd.f32 0.0, %v6451
      %6453 = vmatmul.f32.gmra.mxu0 %v3534
      %v6454 = vpop.f32.mrf.mxu0
      %v6455 = vadd.f32 0.0, %v6454
      %6456 = vmatmul.f32.gmra.mxu0 %v3537
      %v6457 = vpop.f32.mrf.mxu0
      %v6458 = vadd.f32 0.0, %v6457
      %6459 = vmatmul.f32.gmra.mxu0 %v3540
      %v6460 = vpop.f32.mrf.mxu0
      %v6461 = vadd.f32 0.0, %v6460
      %6462 = vmatmul.f32.gmra.mxu0 %v3543
      %v6463 = vpop.f32.mrf.mxu0
      %v6464 = vadd.f32 0.0, %v6463
      %6465 = vmatmul.f32.gmra.mxu0 %v3546
      %v6466 = vpop.f32.mrf.mxu0
      %v6467 = vadd.f32 0.0, %v6466
      %6468 = vmatmul.f32.gmra.mxu0 %v3549
      %v6469 = vpop.f32.mrf.mxu0
      %v6470 = vadd.f32 0.0, %v6469
      %6471 = vmatmul.f32.gmra.mxu0 %v3552
      %v6472 = vpop.f32.mrf.mxu0
      %v6473 = vadd.f32 0.0, %v6472
      %6474 = vmatmul.f32.gmra.mxu0 %v3555
      %v6475 = vpop.f32.mrf.mxu0
      %v6476 = vadd.f32 0.0, %v6475
      %6477 = vmatmul.f32.gmra.mxu0 %v3558
      %v6478 = vpop.f32.mrf.mxu0
      %v6479 = vadd.f32 0.0, %v6478
      %6480 = vmatmul.f32.gmra.mxu0 %v3561
      %v6481 = vpop.f32.mrf.mxu0
      %v6482 = vadd.f32 0.0, %v6481
      %6483 = vmatmul.f32.gmra.mxu0 %v3564
      %v6484 = vpop.f32.mrf.mxu0
      %v6485 = vadd.f32 0.0, %v6484
      %6486 = vmatmul.f32.gmra.mxu0 %v3567
      %v6487 = vpop.f32.mrf.mxu0
      %v6488 = vadd.f32 0.0, %v6487
      %6489 = vmatmul.f32.gmra.mxu0 %v3570
      %v6490 = vpop.f32.mrf.mxu0
      %v6491 = vadd.f32 0.0, %v6490
      %6492 = vmatmul.f32.gmra.mxu0 %v3573
      %v6493 = vpop.f32.mrf.mxu0
      %v6494 = vadd.f32 0.0, %v6493
      %6495 = vmatmul.f32.gmra.mxu0 %v3576
      %v6496 = vpop.f32.mrf.mxu0
      %v6497 = vadd.f32 0.0, %v6496
      %6498 = vmatmul.f32.gmra.mxu0 %v3579
      %v6499 = vpop.f32.mrf.mxu0
      %v6500 = vadd.f32 0.0, %v6499
      %6501 = vmatmul.f32.gmra.mxu0 %v3582
      %v6502 = vpop.f32.mrf.mxu0
      %v6503 = vadd.f32 0.0, %v6502
      %6504 = vmatmul.f32.gmra.mxu0 %v3585
      %v6505 = vpop.f32.mrf.mxu0
      %v6506 = vadd.f32 0.0, %v6505
      %6507 = vmatmul.f32.gmra.mxu0 %v3588
      %v6508 = vpop.f32.mrf.mxu0
      %v6509 = vadd.f32 0.0, %v6508
      %6510 = vmatmul.f32.gmra.mxu0 %v3591
      %v6511 = vpop.f32.mrf.mxu0
      %v6512 = vadd.f32 0.0, %v6511
      %6513 = vmatmul.f32.gmra.mxu0 %v3594
      %v6514 = vpop.f32.mrf.mxu0
      %v6515 = vadd.f32 0.0, %v6514
      %6516 = vmatmul.f32.gmra.mxu0 %v3597
      %v6517 = vpop.f32.mrf.mxu0
      %v6518 = vadd.f32 0.0, %v6517
      %6519 = vmatmul.f32.gmra.mxu0 %v3600
      %v6520 = vpop.f32.mrf.mxu0
      %v6521 = vadd.f32 0.0, %v6520
      %6522 = vmatmul.f32.gmra.mxu0 %v3603
      %v6523 = vpop.f32.mrf.mxu0
      %v6524 = vadd.f32 0.0, %v6523
      %6525 = vmatmul.f32.gmra.mxu0 %v3606
      %v6526 = vpop.f32.mrf.mxu0
      %v6527 = vadd.f32 0.0, %v6526
      %6528 = vmatmul.f32.gmra.mxu0 %v3609
      %v6529 = vpop.f32.mrf.mxu0
      %v6530 = vadd.f32 0.0, %v6529
      %6531 = vmatmul.f32.gmra.mxu0 %v3612
      %v6532 = vpop.f32.mrf.mxu0
      %v6533 = vadd.f32 0.0, %v6532
      %6534 = vmatmul.f32.gmra.mxu0 %v3615
      %v6535 = vpop.f32.mrf.mxu0
      %v6536 = vadd.f32 0.0, %v6535
      %6537 = vmatmul.f32.gmra.mxu0 %v3618
      %v6538 = vpop.f32.mrf.mxu0
      %v6539 = vadd.f32 0.0, %v6538
      %6540 = vmatmul.f32.gmra.mxu0 %v3621
      %v6541 = vpop.f32.mrf.mxu0
      %v6542 = vadd.f32 0.0, %v6541
      %6543 = vmatmul.f32.gmra.mxu0 %v3624
      %v6544 = vpop.f32.mrf.mxu0
      %v6545 = vadd.f32 0.0, %v6544
      %6546 = vmatmul.f32.gmra.mxu0 %v3627
      %v6547 = vpop.f32.mrf.mxu0
      %v6548 = vadd.f32 0.0, %v6547
      %6549 = vmatmul.f32.gmra.mxu0 %v3630
      %v6550 = vpop.f32.mrf.mxu0
      %v6551 = vadd.f32 0.0, %v6550
      %6552 = vmatmul.f32.gmra.mxu0 %v3633
      %v6553 = vpop.f32.mrf.mxu0
      %v6554 = vadd.f32 0.0, %v6553
      %6555 = vmatmul.f32.gmra.mxu0 %v3636
      %v6556 = vpop.f32.mrf.mxu0
      %v6557 = vadd.f32 0.0, %v6556
      %6558 = vmatmul.f32.gmra.mxu0 %v3639
      %v6559 = vpop.f32.mrf.mxu0
      %v6560 = vadd.f32 0.0, %v6559
      %6561 = vmatmul.f32.gmra.mxu0 %v3642
      %v6562 = vpop.f32.mrf.mxu0
      %v6563 = vadd.f32 0.0, %v6562
      %6564 = vmatmul.f32.gmra.mxu0 %v3645
      %v6565 = vpop.f32.mrf.mxu0
      %v6566 = vadd.f32 0.0, %v6565
      %6567 = vmatmul.f32.gmra.mxu0 %v3648
      %v6568 = vpop.f32.mrf.mxu0
      %v6569 = vadd.f32 0.0, %v6568
      %6570 = vmatmul.f32.gmra.mxu0 %v3651
      %v6571 = vpop.f32.mrf.mxu0
      %v6572 = vadd.f32 0.0, %v6571
      %6573 = vmatmul.f32.gmra.mxu0 %v3654
      %v6574 = vpop.f32.mrf.mxu0
      %v6575 = vadd.f32 0.0, %v6574
      %6576 = vmatmul.f32.gmra.mxu0 %v3657
      %v6577 = vpop.f32.mrf.mxu0
      %v6578 = vadd.f32 0.0, %v6577
      %6579 = vmatmul.f32.gmra.mxu0 %v3660
      %v6580 = vpop.f32.mrf.mxu0
      %v6581 = vadd.f32 0.0, %v6580
      %6582 = vmatmul.f32.gmra.mxu0 %v3663
      %v6583 = vpop.f32.mrf.mxu0
      %v6584 = vadd.f32 0.0, %v6583
      %6585 = vmatmul.f32.gmra.mxu0 %v3666
      %v6586 = vpop.f32.mrf.mxu0
      %v6587 = vadd.f32 0.0, %v6586
      %6588 = vmatmul.f32.gmra.mxu0 %v3669
      %v6589 = vpop.f32.mrf.mxu0
      %v6590 = vadd.f32 0.0, %v6589
      %6591 = vmatmul.f32.gmra.mxu0 %v3672
      %v6592 = vpop.f32.mrf.mxu0
      %v6593 = vadd.f32 0.0, %v6592
      %6594 = vmatmul.f32.gmra.mxu0 %v3675
      %v6595 = vpop.f32.mrf.mxu0
      %v6596 = vadd.f32 0.0, %v6595
      %6597 = vmatmul.f32.gmra.mxu0 %v3678
      %v6598 = vpop.f32.mrf.mxu0
      %v6599 = vadd.f32 0.0, %v6598
      %6600 = vmatmul.f32.gmra.mxu0 %v3681
      %v6601 = vpop.f32.mrf.mxu0
      %v6602 = vadd.f32 0.0, %v6601
      %6603 = vmatmul.f32.gmra.mxu0 %v3684
      %v6604 = vpop.f32.mrf.mxu0
      %v6605 = vadd.f32 0.0, %v6604
      %6606 = vmatmul.f32.gmra.mxu0 %v3687
      %v6607 = vpop.f32.mrf.mxu0
      %v6608 = vadd.f32 0.0, %v6607
      %6609 = vmatmul.f32.gmra.mxu0 %v3690
      %v6610 = vpop.f32.mrf.mxu0
      %v6611 = vadd.f32 0.0, %v6610
      %6612 = vmatmul.f32.gmra.mxu0 %v3693
      %v6613 = vpop.f32.mrf.mxu0
      %v6614 = vadd.f32 0.0, %v6613
      %6615 = vmatmul.f32.gmra.mxu0 %v3696
      %v6616 = vpop.f32.mrf.mxu0
      %v6617 = vadd.f32 0.0, %v6616
      %6618 = vmatmul.f32.gmra.mxu0 %v3699
      %v6619 = vpop.f32.mrf.mxu0
      %v6620 = vadd.f32 0.0, %v6619
      %6621 = vmatmul.f32.gmra.mxu0 %v3702
      %v6622 = vpop.f32.mrf.mxu0
      %v6623 = vadd.f32 0.0, %v6622
      %6624 = vmatmul.f32.gmra.mxu0 %v3705
      %v6625 = vpop.f32.mrf.mxu0
      %v6626 = vadd.f32 0.0, %v6625
      %6627 = vmatmul.f32.gmra.mxu0 %v3708
      %v6628 = vpop.f32.mrf.mxu0
      %v6629 = vadd.f32 0.0, %v6628
      %6630 = vmatmul.f32.gmra.mxu0 %v3711
      %v6631 = vpop.f32.mrf.mxu0
      %v6632 = vadd.f32 0.0, %v6631
      %6633 = vmatmul.f32.gmra.mxu0 %v3714
      %v6634 = vpop.f32.mrf.mxu0
      %v6635 = vadd.f32 0.0, %v6634
      %6636 = vmatmul.f32.gmra.mxu0 %v3717
      %v6637 = vpop.f32.mrf.mxu0
      %v6638 = vadd.f32 0.0, %v6637
      %6639 = vmatmul.f32.gmra.mxu0 %v3720
      %v6640 = vpop.f32.mrf.mxu0
      %v6641 = vadd.f32 0.0, %v6640
      %6642 = vmatmul.f32.gmra.mxu0 %v3723
      %v6643 = vpop.f32.mrf.mxu0
      %v6644 = vadd.f32 0.0, %v6643
      %6645 = vmatmul.f32.gmra.mxu0 %v3726
      %v6646 = vpop.f32.mrf.mxu0
      %v6647 = vadd.f32 0.0, %v6646
      %6648 = vmatmul.f32.gmra.mxu0 %v3729
      %v6649 = vpop.f32.mrf.mxu0
      %v6650 = vadd.f32 0.0, %v6649
      %6651 = vmatmul.f32.gmra.mxu0 %v3732
      %v6652 = vpop.f32.mrf.mxu0
      %v6653 = vadd.f32 0.0, %v6652
      %6654 = vmatmul.f32.gmra.mxu0 %v3735
      %v6655 = vpop.f32.mrf.mxu0
      %v6656 = vadd.f32 0.0, %v6655
      %6657 = vmatmul.f32.gmra.mxu0 %v3738
      %v6658 = vpop.f32.mrf.mxu0
      %v6659 = vadd.f32 0.0, %v6658
      %6660 = vmatmul.f32.gmra.mxu0 %v3741
      %v6661 = vpop.f32.mrf.mxu0
      %v6662 = vadd.f32 0.0, %v6661
      %6663 = vmatmul.f32.gmra.mxu0 %v3744
      %v6664 = vpop.f32.mrf.mxu0
      %v6665 = vadd.f32 0.0, %v6664
      %6666 = vmatmul.f32.gmra.mxu0 %v3747
      %v6667 = vpop.f32.mrf.mxu0
      %v6668 = vadd.f32 0.0, %v6667
      %6669 = vmatmul.f32.gmra.mxu0 %v3750
      %v6670 = vpop.f32.mrf.mxu0
      %v6671 = vadd.f32 0.0, %v6670
      %6672 = vmatmul.f32.gmra.mxu0 %v3753
      %v6673 = vpop.f32.mrf.mxu0
      %v6674 = vadd.f32 0.0, %v6673
      %6675 = vmatmul.f32.gmra.mxu0 %v3756
      %v6676 = vpop.f32.mrf.mxu0
      %v6677 = vadd.f32 0.0, %v6676
      %6678 = vmatmul.f32.gmra.mxu0 %v3759
      %v6679 = vpop.f32.mrf.mxu0
      %v6680 = vadd.f32 0.0, %v6679
      %6681 = vmatmul.f32.gmra.mxu0 %v3762
      %v6682 = vpop.f32.mrf.mxu0
      %v6683 = vadd.f32 0.0, %v6682
      %6684 = vmatmul.f32.gmra.mxu0 %v3765
      %v6685 = vpop.f32.mrf.mxu0
      %v6686 = vadd.f32 0.0, %v6685
      %6687 = vmatmul.f32.gmra.mxu0 %v3768
      %v6688 = vpop.f32.mrf.mxu0
      %v6689 = vadd.f32 0.0, %v6688
      %6690 = vmatmul.f32.gmra.mxu0 %v3771
      %v6691 = vpop.f32.mrf.mxu0
      %v6692 = vadd.f32 0.0, %v6691
      %6693 = vmatmul.f32.gmra.mxu0 %v3774
      %v6694 = vpop.f32.mrf.mxu0
      %v6695 = vadd.f32 0.0, %v6694
      %6696 = vmatmul.f32.gmra.mxu0 %v3777
      %v6697 = vpop.f32.mrf.mxu0
      %v6698 = vadd.f32 0.0, %v6697
      %6699 = vmatmul.f32.gmra.mxu0 %v3780
      %v6700 = vpop.f32.mrf.mxu0
      %v6701 = vadd.f32 0.0, %v6700
      %6702 = vmatmul.f32.gmra.mxu0 %v3783
      %v6703 = vpop.f32.mrf.mxu0
      %v6704 = vadd.f32 0.0, %v6703
      %6705 = vmatmul.f32.gmra.mxu0 %v3786
      %v6706 = vpop.f32.mrf.mxu0
      %v6707 = vadd.f32 0.0, %v6706
      %6708 = vmatmul.f32.gmra.mxu0 %v3789
      %v6709 = vpop.f32.mrf.mxu0
      %v6710 = vadd.f32 0.0, %v6709
      %6711 = vmatmul.f32.gmra.mxu0 %v3792
      %v6712 = vpop.f32.mrf.mxu0
      %v6713 = vadd.f32 0.0, %v6712
      %6714 = vmatmul.f32.gmra.mxu0 %v3795
      %v6715 = vpop.f32.mrf.mxu0
      %v6716 = vadd.f32 0.0, %v6715
      %6717 = vmatmul.f32.gmra.mxu0 %v3798
      %v6718 = vpop.f32.mrf.mxu0
      %v6719 = vadd.f32 0.0, %v6718
      %6720 = vmatmul.f32.gmra.mxu0 %v3801
      %v6721 = vpop.f32.mrf.mxu0
      %v6722 = vadd.f32 0.0, %v6721
      %6723 = vmatmul.f32.gmra.mxu0 %v3804
      %v6724 = vpop.f32.mrf.mxu0
      %v6725 = vadd.f32 0.0, %v6724
      %6726 = vmatmul.f32.gmra.mxu0 %v3807
      %v6727 = vpop.f32.mrf.mxu0
      %v6728 = vadd.f32 0.0, %v6727
      %6729 = vmatmul.f32.gmra.mxu0 %v3810
      %v6730 = vpop.f32.mrf.mxu0
      %v6731 = vadd.f32 0.0, %v6730
      %6732 = vmatmul.f32.gmra.mxu0 %v3813
      %v6733 = vpop.f32.mrf.mxu0
      %v6734 = vadd.f32 0.0, %v6733
      %6735 = vmatmul.f32.gmra.mxu0 %v3816
      %v6736 = vpop.f32.mrf.mxu0
      %v6737 = vadd.f32 0.0, %v6736
      %6738 = vmatmul.f32.gmra.mxu0 %v3819
      %v6739 = vpop.f32.mrf.mxu0
      %v6740 = vadd.f32 0.0, %v6739
      %6741 = vmatmul.f32.gmra.mxu0 %v3822
      %v6742 = vpop.f32.mrf.mxu0
      %v6743 = vadd.f32 0.0, %v6742
      %6744 = vmatmul.f32.gmra.mxu0 %v3825
      %v6745 = vpop.f32.mrf.mxu0
      %v6746 = vadd.f32 0.0, %v6745
      %6747 = vmatmul.f32.gmra.mxu0 %v3828
      %v6748 = vpop.f32.mrf.mxu0
      %v6749 = vadd.f32 0.0, %v6748
      %6750 = vmatmul.f32.gmra.mxu0 %v3831
      %v6751 = vpop.f32.mrf.mxu0
      %v6752 = vadd.f32 0.0, %v6751
      %6753 = vmatmul.f32.gmra.mxu0 %v3834
      %v6754 = vpop.f32.mrf.mxu0
      %v6755 = vadd.f32 0.0, %v6754
      %6756 = vmatmul.f32.gmra.mxu0 %v3837
      %v6757 = vpop.f32.mrf.mxu0
      %v6758 = vadd.f32 0.0, %v6757
      %6759 = vmatmul.f32.gmra.mxu0 %v3840
      %v6760 = vpop.f32.mrf.mxu0
      %v6761 = vadd.f32 0.0, %v6760
      %6762 = vmatmul.f32.gmra.mxu0 %v3843
      %v6763 = vpop.f32.mrf.mxu0
      %v6764 = vadd.f32 0.0, %v6763
      %6765 = vmatmul.f32.gmra.mxu0 %v3846
      %v6766 = vpop.f32.mrf.mxu0
      %v6767 = vadd.f32 0.0, %v6766
      %6768 = vmatmul.f32.gmra.mxu0 %v3849
      %v6769 = vpop.f32.mrf.mxu0
      %v6770 = vadd.f32 0.0, %v6769
      %6771 = vmatmul.f32.gmra.mxu0 %v3852
      %v6772 = vpop.f32.mrf.mxu0
      %v6773 = vadd.f32 0.0, %v6772
      %6774 = vmatmul.f32.gmra.mxu0 %v3855
      %v6775 = vpop.f32.mrf.mxu0
      %v6776 = vadd.f32 0.0, %v6775
      %6777 = vmatmul.f32.gmra.mxu0 %v3858
      %v6778 = vpop.f32.mrf.mxu0
      %v6779 = vadd.f32 0.0, %v6778
      %6780 = vmatmul.f32.gmra.mxu0 %v3861
      %v6781 = vpop.f32.mrf.mxu0
      %v6782 = vadd.f32 0.0, %v6781
      %6783 = vmatmul.f32.gmra.mxu0 %v3864
      %v6784 = vpop.f32.mrf.mxu0
      %v6785 = vadd.f32 0.0, %v6784
      %6786 = vmatmul.f32.gmra.mxu0 %v3867
      %v6787 = vpop.f32.mrf.mxu0
      %v6788 = vadd.f32 0.0, %v6787
      %6789 = vmatmul.f32.gmra.mxu0 %v3870
      %v6790 = vpop.f32.mrf.mxu0
      %v6791 = vadd.f32 0.0, %v6790
      %6792 = vmatmul.f32.gmra.mxu0 %v3873
      %v6793 = vpop.f32.mrf.mxu0
      %v6794 = vadd.f32 0.0, %v6793
      %6795 = vmatmul.f32.gmra.mxu0 %v3876
      %v6796 = vpop.f32.mrf.mxu0
      %v6797 = vadd.f32 0.0, %v6796
      %6798 = vmatmul.f32.gmra.mxu0 %v3879
      %v6799 = vpop.f32.mrf.mxu0
      %v6800 = vadd.f32 0.0, %v6799
      %6801 = vmatmul.f32.gmra.mxu0 %v3882
      %v6802 = vpop.f32.mrf.mxu0
      %v6803 = vadd.f32 0.0, %v6802
      %6804 = vmatmul.f32.gmra.mxu0 %v3885
      %v6805 = vpop.f32.mrf.mxu0
      %v6806 = vadd.f32 0.0, %v6805
      %6807 = vmatmul.f32.gmra.mxu0 %v3888
      %v6808 = vpop.f32.mrf.mxu0
      %v6809 = vadd.f32 0.0, %v6808
      %6810 = vmatmul.f32.gmra.mxu0 %v3891
      %v6811 = vpop.f32.mrf.mxu0
      %v6812 = vadd.f32 0.0, %v6811
      %6813 = vmatmul.f32.gmra.mxu0 %v3894
      %v6814 = vpop.f32.mrf.mxu0
      %v6815 = vadd.f32 0.0, %v6814
      %6816 = vmatmul.f32.gmra.mxu0 %v3897
      %v6817 = vpop.f32.mrf.mxu0
      %v6818 = vadd.f32 0.0, %v6817
      %6819 = vmatmul.f32.gmra.mxu0 %v3900
      %v6820 = vpop.f32.mrf.mxu0
      %v6821 = vadd.f32 0.0, %v6820
      %6822 = vmatmul.f32.gmra.mxu0 %v3903
      %v6823 = vpop.f32.mrf.mxu0
      %v6824 = vadd.f32 0.0, %v6823
      %6825 = vmatmul.f32.gmra.mxu0 %v3906
      %v6826 = vpop.f32.mrf.mxu0
      %v6827 = vadd.f32 0.0, %v6826
      %6828 = vmatmul.f32.gmra.mxu0 %v3909
      %v6829 = vpop.f32.mrf.mxu0
      %v6830 = vadd.f32 0.0, %v6829
      %6831 = vmatmul.f32.gmra.mxu0 %v3912
      %v6832 = vpop.f32.mrf.mxu0
      %v6833 = vadd.f32 0.0, %v6832
      %6834 = vmatmul.f32.gmra.mxu0 %v3915
      %v6835 = vpop.f32.mrf.mxu0
      %v6836 = vadd.f32 0.0, %v6835
      %6837 = vmatmul.f32.gmra.mxu0 %v3918
      %v6838 = vpop.f32.mrf.mxu0
      %v6839 = vadd.f32 0.0, %v6838
      %6840 = vmatmul.f32.gmra.mxu0 %v3921
      %v6841 = vpop.f32.mrf.mxu0
      %v6842 = vadd.f32 0.0, %v6841
      %6843 = vmatmul.f32.gmra.mxu0 %v3924
      %v6844 = vpop.f32.mrf.mxu0
      %v6845 = vadd.f32 0.0, %v6844
      %6846 = vmatmul.f32.gmra.mxu0 %v3927
      %v6847 = vpop.f32.mrf.mxu0
      %v6848 = vadd.f32 0.0, %v6847
      %6849 = vmatmul.f32.gmra.mxu0 %v3930
      %v6850 = vpop.f32.mrf.mxu0
      %v6851 = vadd.f32 0.0, %v6850
      %6852 = vmatmul.f32.gmra.mxu0 %v3933
      %v6853 = vpop.f32.mrf.mxu0
      %v6854 = vadd.f32 0.0, %v6853
      %6855 = vmatmul.f32.gmra.mxu0 %v3936
      %v6856 = vpop.f32.mrf.mxu0
      %v6857 = vadd.f32 0.0, %v6856
      %6858 = vmatmul.f32.gmra.mxu0 %v3939
      %v6859 = vpop.f32.mrf.mxu0
      %v6860 = vadd.f32 0.0, %v6859
      %6861 = vmatmul.f32.gmra.mxu0 %v3942
      %v6862 = vpop.f32.mrf.mxu0
      %v6863 = vadd.f32 0.0, %v6862
      %6864 = vmatmul.f32.gmra.mxu0 %v3945
      %v6865 = vpop.f32.mrf.mxu0
      %v6866 = vadd.f32 0.0, %v6865
      %6867 = vmatmul.f32.gmra.mxu0 %v3948
      %v6868 = vpop.f32.mrf.mxu0
      %v6869 = vadd.f32 0.0, %v6868
      %6870 = vmatmul.f32.gmra.mxu0 %v3951
      %v6871 = vpop.f32.mrf.mxu0
      %v6872 = vadd.f32 0.0, %v6871
      %6873 = vmatmul.f32.gmra.mxu0 %v3954
      %v6874 = vpop.f32.mrf.mxu0
      %v6875 = vadd.f32 0.0, %v6874
      %6876 = vmatmul.f32.gmra.mxu0 %v3957
      %v6877 = vpop.f32.mrf.mxu0
      %v6878 = vadd.f32 0.0, %v6877
      %6879 = vmatmul.f32.gmra.mxu0 %v3960
      %v6880 = vpop.f32.mrf.mxu0
      %v6881 = vadd.f32 0.0, %v6880
      %6882 = vmatmul.f32.gmra.mxu0 %v3963
      %v6883 = vpop.f32.mrf.mxu0
      %v6884 = vadd.f32 0.0, %v6883
      %6885 = vmatmul.f32.gmra.mxu0 %v3966
      %v6886 = vpop.f32.mrf.mxu0
      %v6887 = vadd.f32 0.0, %v6886
      %6888 = vmatmul.f32.gmra.mxu0 %v3969
      %v6889 = vpop.f32.mrf.mxu0
      %v6890 = vadd.f32 0.0, %v6889
      %6891 = vmatmul.f32.gmra.mxu0 %v3972
      %v6892 = vpop.f32.mrf.mxu0
      %v6893 = vadd.f32 0.0, %v6892
      %6894 = vmatmul.f32.gmra.mxu0 %v3975
      %v6895 = vpop.f32.mrf.mxu0
      %v6896 = vadd.f32 0.0, %v6895
      %6897 = vmatmul.f32.gmra.mxu0 %v3978
      %v6898 = vpop.f32.mrf.mxu0
      %v6899 = vadd.f32 0.0, %v6898
      %6900 = vmatmul.f32.gmra.mxu0 %v3981
      %v6901 = vpop.f32.mrf.mxu0
      %v6902 = vadd.f32 0.0, %v6901
      %6903 = vmatmul.f32.gmra.mxu0 %v3984
      %v6904 = vpop.f32.mrf.mxu0
      %v6905 = vadd.f32 0.0, %v6904
      %6906 = vmatmul.f32.gmra.mxu0 %v3987
      %v6907 = vpop.f32.mrf.mxu0
      %v6908 = vadd.f32 0.0, %v6907
      %6909 = vmatmul.f32.gmra.mxu0 %v3990
      %v6910 = vpop.f32.mrf.mxu0
      %v6911 = vadd.f32 0.0, %v6910
      %6912 = vmatmul.f32.gmra.mxu0 %v3993
      %v6913 = vpop.f32.mrf.mxu0
      %v6914 = vadd.f32 0.0, %v6913
      %6915 = vmatmul.f32.gmra.mxu0 %v3996
      %v6916 = vpop.f32.mrf.mxu0
      %v6917 = vadd.f32 0.0, %v6916
      %6918 = vmatmul.f32.gmra.mxu0 %v3999
      %v6919 = vpop.f32.mrf.mxu0
      %v6920 = vadd.f32 0.0, %v6919
      %6921 = vmatmul.f32.gmra.mxu0 %v4002
      %v6922 = vpop.f32.mrf.mxu0
      %v6923 = vadd.f32 0.0, %v6922
      %6924 = vmatmul.f32.gmra.mxu0 %v4005
      %v6925 = vpop.f32.mrf.mxu0
      %v6926 = vadd.f32 0.0, %v6925
      %6927 = vmatmul.f32.gmra.mxu0 %v4008
      %v6928 = vpop.f32.mrf.mxu0
      %v6929 = vadd.f32 0.0, %v6928
      %6930 = vmatmul.f32.gmra.mxu0 %v4011
      %v6931 = vpop.f32.mrf.mxu0
      %v6932 = vadd.f32 0.0, %v6931
      %6933 = vmatmul.f32.gmra.mxu0 %v4014
      %v6934 = vpop.f32.mrf.mxu0
      %v6935 = vadd.f32 0.0, %v6934
      %6936 = vmatmul.f32.gmra.mxu0 %v4017
      %v6937 = vpop.f32.mrf.mxu0
      %v6938 = vadd.f32 0.0, %v6937
      %6939 = vmatmul.f32.gmra.mxu0 %v4020
      %v6940 = vpop.f32.mrf.mxu0
      %v6941 = vadd.f32 0.0, %v6940
      %6942 = vmatmul.f32.gmra.mxu0 %v4023
      %v6943 = vpop.f32.mrf.mxu0
      %v6944 = vadd.f32 0.0, %v6943
      %6945 = vmatmul.f32.gmra.mxu0 %v4026
      %v6946 = vpop.f32.mrf.mxu0
      %v6947 = vadd.f32 0.0, %v6946
      %6948 = vmatmul.f32.gmra.mxu0 %v4029
      %v6949 = vpop.f32.mrf.mxu0
      %v6950 = vadd.f32 0.0, %v6949
      %6951 = vmatmul.f32.gmra.mxu0 %v4032
      %v6952 = vpop.f32.mrf.mxu0
      %v6953 = vadd.f32 0.0, %v6952
      %6954 = vmatmul.f32.gmra.mxu0 %v4035
      %v6955 = vpop.f32.mrf.mxu0
      %v6956 = vadd.f32 0.0, %v6955
      %6957 = vmatmul.f32.gmra.mxu0 %v4038
      %v6958 = vpop.f32.mrf.mxu0
      %v6959 = vadd.f32 0.0, %v6958
      %6960 = vmatmul.f32.gmra.mxu0 %v4041
      %v6961 = vpop.f32.mrf.mxu0
      %v6962 = vadd.f32 0.0, %v6961
      %6963 = vmatmul.f32.gmra.mxu0 %v4044
      %v6964 = vpop.f32.mrf.mxu0
      %v6965 = vadd.f32 0.0, %v6964
      %6966 = vdwg.mxu0
      %vm6967 = vcmask 261120
      %v6968 = vsel %vm6967, %v4064, -inf
      %v6969 = vsel %vm6967, %v4067, -inf
      %v6970 = vmax.f32 %v6968, %v6969
      %v6971 = vsel %vm6967, %v4070, -inf
      %v6972 = vmax.f32 %v6970, %v6971
      %v6973 = vsel %vm6967, %v4073, -inf
      %v6974 = vmax.f32 %v6972, %v6973
      %v6975 = vsel %vm6967, %v4076, -inf
      %v6976 = vmax.f32 %v6974, %v6975
      %v6977 = vsel %vm6967, %v4079, -inf
      %v6978 = vmax.f32 %v6976, %v6977
      %v6979 = vsel %vm6967, %v4082, -inf
      %v6980 = vmax.f32 %v6978, %v6979
      %v6981 = vsel %vm6967, %v4085, -inf
      %v6982 = vmax.f32 %v6980, %v6981
      %v6983 = vrot.slane %v6982, 4
      %v6984 = vmax.f32 %v6982, %v6983
      %v6985 = vrot.slane %v6984, 2
      %v6986 = vmax.f32 %v6984, %v6985
      %v6987 = vrot.slane %v6986, 1
      %v6988 = vmax.f32 %v6986, %v6987
      %v6989 = vsel %vm6967, %v4088, -inf
      %v6990 = vsel %vm6967, %v4091, -inf
      %v6991 = vmax.f32 %v6989, %v6990
      %v6992 = vsel %vm6967, %v4094, -inf
      %v6993 = vmax.f32 %v6991, %v6992
      %v6994 = vsel %vm6967, %v4097, -inf
      %v6995 = vmax.f32 %v6993, %v6994
      %v6996 = vsel %vm6967, %v4100, -inf
      %v6997 = vmax.f32 %v6995, %v6996
      %v6998 = vsel %vm6967, %v4103, -inf
      %v6999 = vmax.f32 %v6997, %v6998
      %v7000 = vsel %vm6967, %v4106, -inf
      %v7001 = vmax.f32 %v6999, %v7000
      %v7002 = vsel %vm6967, %v4109, -inf
      %v7003 = vmax.f32 %v7001, %v7002
      %v7004 = vrot.slane %v7003, 4
      %v7005 = vmax.f32 %v7003, %v7004
      %v7006 = vrot.slane %v7005, 2
      %v7007 = vmax.f32 %v7005, %v7006
      %v7008 = vrot.slane %v7007, 1
      %v7009 = vmax.f32 %v7007, %v7008
      %v7010 = vsel %vm6967, %v4112, -inf
      %v7011 = vsel %vm6967, %v4115, -inf
      %v7012 = vmax.f32 %v7010, %v7011
      %v7013 = vsel %vm6967, %v4118, -inf
      %v7014 = vmax.f32 %v7012, %v7013
      %v7015 = vsel %vm6967, %v4121, -inf
      %v7016 = vmax.f32 %v7014, %v7015
      %v7017 = vsel %vm6967, %v4124, -inf
      %v7018 = vmax.f32 %v7016, %v7017
      %v7019 = vsel %vm6967, %v4127, -inf
      %v7020 = vmax.f32 %v7018, %v7019
      %v7021 = vsel %vm6967, %v4130, -inf
      %v7022 = vmax.f32 %v7020, %v7021
      %v7023 = vsel %vm6967, %v4133, -inf
      %v7024 = vmax.f32 %v7022, %v7023
      %v7025 = vrot.slane %v7024, 4
      %v7026 = vmax.f32 %v7024, %v7025
      %v7027 = vrot.slane %v7026, 2
      %v7028 = vmax.f32 %v7026, %v7027
      %v7029 = vrot.slane %v7028, 1
      %v7030 = vmax.f32 %v7028, %v7029
      %v7031 = vsel %vm6967, %v4136, -inf
      %v7032 = vsel %vm6967, %v4139, -inf
      %v7033 = vmax.f32 %v7031, %v7032
      %v7034 = vsel %vm6967, %v4142, -inf
      %v7035 = vmax.f32 %v7033, %v7034
      %v7036 = vsel %vm6967, %v4145, -inf
      %v7037 = vmax.f32 %v7035, %v7036
      %v7038 = vsel %vm6967, %v4148, -inf
      %v7039 = vmax.f32 %v7037, %v7038
      %v7040 = vsel %vm6967, %v4151, -inf
      %v7041 = vmax.f32 %v7039, %v7040
      %v7042 = vsel %vm6967, %v4154, -inf
      %v7043 = vmax.f32 %v7041, %v7042
      %v7044 = vsel %vm6967, %v4157, -inf
      %v7045 = vmax.f32 %v7043, %v7044
      %v7046 = vrot.slane %v7045, 4
      %v7047 = vmax.f32 %v7045, %v7046
      %v7048 = vrot.slane %v7047, 2
      %v7049 = vmax.f32 %v7047, %v7048
      %v7050 = vrot.slane %v7049, 1
      %v7051 = vmax.f32 %v7049, %v7050
      %v7052 = vsel %vm6967, %v4160, -inf
      %v7053 = vsel %vm6967, %v4163, -inf
      %v7054 = vmax.f32 %v7052, %v7053
      %v7055 = vsel %vm6967, %v4166, -inf
      %v7056 = vmax.f32 %v7054, %v7055
      %v7057 = vsel %vm6967, %v4169, -inf
      %v7058 = vmax.f32 %v7056, %v7057
      %v7059 = vsel %vm6967, %v4172, -inf
      %v7060 = vmax.f32 %v7058, %v7059
      %v7061 = vsel %vm6967, %v4175, -inf
      %v7062 = vmax.f32 %v7060, %v7061
      %v7063 = vsel %vm6967, %v4178, -inf
      %v7064 = vmax.f32 %v7062, %v7063
      %v7065 = vsel %vm6967, %v4181, -inf
      %v7066 = vmax.f32 %v7064, %v7065
      %v7067 = vrot.slane %v7066, 4
      %v7068 = vmax.f32 %v7066, %v7067
      %v7069 = vrot.slane %v7068, 2
      %v7070 = vmax.f32 %v7068, %v7069
      %v7071 = vrot.slane %v7070, 1
      %v7072 = vmax.f32 %v7070, %v7071
      %v7073 = vsel %vm6967, %v4184, -inf
      %v7074 = vsel %vm6967, %v4187, -inf
      %v7075 = vmax.f32 %v7073, %v7074
      %v7076 = vsel %vm6967, %v4190, -inf
      %v7077 = vmax.f32 %v7075, %v7076
      %v7078 = vsel %vm6967, %v4193, -inf
      %v7079 = vmax.f32 %v7077, %v7078
      %v7080 = vsel %vm6967, %v4196, -inf
      %v7081 = vmax.f32 %v7079, %v7080
      %v7082 = vsel %vm6967, %v4199, -inf
      %v7083 = vmax.f32 %v7081, %v7082
      %v7084 = vsel %vm6967, %v4202, -inf
      %v7085 = vmax.f32 %v7083, %v7084
      %v7086 = vsel %vm6967, %v4205, -inf
      %v7087 = vmax.f32 %v7085, %v7086
      %v7088 = vrot.slane %v7087, 4
      %v7089 = vmax.f32 %v7087, %v7088
      %v7090 = vrot.slane %v7089, 2
      %v7091 = vmax.f32 %v7089, %v7090
      %v7092 = vrot.slane %v7091, 1
      %v7093 = vmax.f32 %v7091, %v7092
      %v7094 = vsel %vm6967, %v4208, -inf
      %v7095 = vsel %vm6967, %v4211, -inf
      %v7096 = vmax.f32 %v7094, %v7095
      %v7097 = vsel %vm6967, %v4214, -inf
      %v7098 = vmax.f32 %v7096, %v7097
      %v7099 = vsel %vm6967, %v4217, -inf
      %v7100 = vmax.f32 %v7098, %v7099
      %v7101 = vsel %vm6967, %v4220, -inf
      %v7102 = vmax.f32 %v7100, %v7101
      %v7103 = vsel %vm6967, %v4223, -inf
      %v7104 = vmax.f32 %v7102, %v7103
      %v7105 = vsel %vm6967, %v4226, -inf
      %v7106 = vmax.f32 %v7104, %v7105
      %v7107 = vsel %vm6967, %v4229, -inf
      %v7108 = vmax.f32 %v7106, %v7107
      %v7109 = vrot.slane %v7108, 4
      %v7110 = vmax.f32 %v7108, %v7109
      %v7111 = vrot.slane %v7110, 2
      %v7112 = vmax.f32 %v7110, %v7111
      %v7113 = vrot.slane %v7112, 1
      %v7114 = vmax.f32 %v7112, %v7113
      %v7115 = vsel %vm6967, %v4232, -inf
      %v7116 = vsel %vm6967, %v4235, -inf
      %v7117 = vmax.f32 %v7115, %v7116
      %v7118 = vsel %vm6967, %v4238, -inf
      %v7119 = vmax.f32 %v7117, %v7118
      %v7120 = vsel %vm6967, %v4241, -inf
      %v7121 = vmax.f32 %v7119, %v7120
      %v7122 = vsel %vm6967, %v4244, -inf
      %v7123 = vmax.f32 %v7121, %v7122
      %v7124 = vsel %vm6967, %v4247, -inf
      %v7125 = vmax.f32 %v7123, %v7124
      %v7126 = vsel %vm6967, %v4250, -inf
      %v7127 = vmax.f32 %v7125, %v7126
      %v7128 = vsel %vm6967, %v4253, -inf
      %v7129 = vmax.f32 %v7127, %v7128
      %v7130 = vrot.slane %v7129, 4
      %v7131 = vmax.f32 %v7129, %v7130
      %v7132 = vrot.slane %v7131, 2
      %v7133 = vmax.f32 %v7131, %v7132
      %v7134 = vrot.slane %v7133, 1
      %v7135 = vmax.f32 %v7133, %v7134
      %v7136 = vsel %vm6967, %v4256, -inf
      %v7137 = vsel %vm6967, %v4259, -inf
      %v7138 = vmax.f32 %v7136, %v7137
      %v7139 = vsel %vm6967, %v4262, -inf
      %v7140 = vmax.f32 %v7138, %v7139
      %v7141 = vsel %vm6967, %v4265, -inf
      %v7142 = vmax.f32 %v7140, %v7141
      %v7143 = vsel %vm6967, %v4268, -inf
      %v7144 = vmax.f32 %v7142, %v7143
      %v7145 = vsel %vm6967, %v4271, -inf
      %v7146 = vmax.f32 %v7144, %v7145
      %v7147 = vsel %vm6967, %v4274, -inf
      %v7148 = vmax.f32 %v7146, %v7147
      %v7149 = vsel %vm6967, %v4277, -inf
      %v7150 = vmax.f32 %v7148, %v7149
      %v7151 = vrot.slane %v7150, 4
      %v7152 = vmax.f32 %v7150, %v7151
      %v7153 = vrot.slane %v7152, 2
      %v7154 = vmax.f32 %v7152, %v7153
      %v7155 = vrot.slane %v7154, 1
      %v7156 = vmax.f32 %v7154, %v7155
      %v7157 = vsel %vm6967, %v4280, -inf
      %v7158 = vsel %vm6967, %v4283, -inf
      %v7159 = vmax.f32 %v7157, %v7158
      %v7160 = vsel %vm6967, %v4286, -inf
      %v7161 = vmax.f32 %v7159, %v7160
      %v7162 = vsel %vm6967, %v4289, -inf
      %v7163 = vmax.f32 %v7161, %v7162
      %v7164 = vsel %vm6967, %v4292, -inf
      %v7165 = vmax.f32 %v7163, %v7164
      %v7166 = vsel %vm6967, %v4295, -inf
      %v7167 = vmax.f32 %v7165, %v7166
      %v7168 = vsel %vm6967, %v4298, -inf
      %v7169 = vmax.f32 %v7167, %v7168
      %v7170 = vsel %vm6967, %v4301, -inf
      %v7171 = vmax.f32 %v7169, %v7170
      %v7172 = vrot.slane %v7171, 4
      %v7173 = vmax.f32 %v7171, %v7172
      %v7174 = vrot.slane %v7173, 2
      %v7175 = vmax.f32 %v7173, %v7174
      %v7176 = vrot.slane %v7175, 1
      %v7177 = vmax.f32 %v7175, %v7176
      %v7178 = vsel %vm6967, %v4304, -inf
      %v7179 = vsel %vm6967, %v4307, -inf
      %v7180 = vmax.f32 %v7178, %v7179
      %v7181 = vsel %vm6967, %v4310, -inf
      %v7182 = vmax.f32 %v7180, %v7181
      %v7183 = vsel %vm6967, %v4313, -inf
      %v7184 = vmax.f32 %v7182, %v7183
      %v7185 = vsel %vm6967, %v4316, -inf
      %v7186 = vmax.f32 %v7184, %v7185
      %v7187 = vsel %vm6967, %v4319, -inf
      %v7188 = vmax.f32 %v7186, %v7187
      %v7189 = vsel %vm6967, %v4322, -inf
      %v7190 = vmax.f32 %v7188, %v7189
      %v7191 = vsel %vm6967, %v4325, -inf
      %v7192 = vmax.f32 %v7190, %v7191
      %v7193 = vrot.slane %v7192, 4
      %v7194 = vmax.f32 %v7192, %v7193
      %v7195 = vrot.slane %v7194, 2
      %v7196 = vmax.f32 %v7194, %v7195
      %v7197 = vrot.slane %v7196, 1
      %v7198 = vmax.f32 %v7196, %v7197
      %v7199 = vsel %vm6967, %v4328, -inf
      %v7200 = vsel %vm6967, %v4331, -inf
      %v7201 = vmax.f32 %v7199, %v7200
      %v7202 = vsel %vm6967, %v4334, -inf
      %v7203 = vmax.f32 %v7201, %v7202
      %v7204 = vsel %vm6967, %v4337, -inf
      %v7205 = vmax.f32 %v7203, %v7204
      %v7206 = vsel %vm6967, %v4340, -inf
      %v7207 = vmax.f32 %v7205, %v7206
      %v7208 = vsel %vm6967, %v4343, -inf
      %v7209 = vmax.f32 %v7207, %v7208
      %v7210 = vsel %vm6967, %v4346, -inf
      %v7211 = vmax.f32 %v7209, %v7210
      %v7212 = vsel %vm6967, %v4349, -inf
      %v7213 = vmax.f32 %v7211, %v7212
      %v7214 = vrot.slane %v7213, 4
      %v7215 = vmax.f32 %v7213, %v7214
      %v7216 = vrot.slane %v7215, 2
      %v7217 = vmax.f32 %v7215, %v7216
      %v7218 = vrot.slane %v7217, 1
      %v7219 = vmax.f32 %v7217, %v7218
      %v7220 = vsel %vm6967, %v4352, -inf
      %v7221 = vsel %vm6967, %v4355, -inf
      %v7222 = vmax.f32 %v7220, %v7221
      %v7223 = vsel %vm6967, %v4358, -inf
      %v7224 = vmax.f32 %v7222, %v7223
      %v7225 = vsel %vm6967, %v4361, -inf
      %v7226 = vmax.f32 %v7224, %v7225
      %v7227 = vsel %vm6967, %v4364, -inf
      %v7228 = vmax.f32 %v7226, %v7227
      %v7229 = vsel %vm6967, %v4367, -inf
      %v7230 = vmax.f32 %v7228, %v7229
      %v7231 = vsel %vm6967, %v4370, -inf
      %v7232 = vmax.f32 %v7230, %v7231
      %v7233 = vsel %vm6967, %v4373, -inf
      %v7234 = vmax.f32 %v7232, %v7233
      %v7235 = vrot.slane %v7234, 4
      %v7236 = vmax.f32 %v7234, %v7235
      %v7237 = vrot.slane %v7236, 2
      %v7238 = vmax.f32 %v7236, %v7237
      %v7239 = vrot.slane %v7238, 1
      %v7240 = vmax.f32 %v7238, %v7239
      %v7241 = vsel %vm6967, %v4376, -inf
      %v7242 = vsel %vm6967, %v4379, -inf
      %v7243 = vmax.f32 %v7241, %v7242
      %v7244 = vsel %vm6967, %v4382, -inf
      %v7245 = vmax.f32 %v7243, %v7244
      %v7246 = vsel %vm6967, %v4385, -inf
      %v7247 = vmax.f32 %v7245, %v7246
      %v7248 = vsel %vm6967, %v4388, -inf
      %v7249 = vmax.f32 %v7247, %v7248
      %v7250 = vsel %vm6967, %v4391, -inf
      %v7251 = vmax.f32 %v7249, %v7250
      %v7252 = vsel %vm6967, %v4394, -inf
      %v7253 = vmax.f32 %v7251, %v7252
      %v7254 = vsel %vm6967, %v4397, -inf
      %v7255 = vmax.f32 %v7253, %v7254
      %v7256 = vrot.slane %v7255, 4
      %v7257 = vmax.f32 %v7255, %v7256
      %v7258 = vrot.slane %v7257, 2
      %v7259 = vmax.f32 %v7257, %v7258
      %v7260 = vrot.slane %v7259, 1
      %v7261 = vmax.f32 %v7259, %v7260
      %v7262 = vsel %vm6967, %v4400, -inf
      %v7263 = vsel %vm6967, %v4403, -inf
      %v7264 = vmax.f32 %v7262, %v7263
      %v7265 = vsel %vm6967, %v4406, -inf
      %v7266 = vmax.f32 %v7264, %v7265
      %v7267 = vsel %vm6967, %v4409, -inf
      %v7268 = vmax.f32 %v7266, %v7267
      %v7269 = vsel %vm6967, %v4412, -inf
      %v7270 = vmax.f32 %v7268, %v7269
      %v7271 = vsel %vm6967, %v4415, -inf
      %v7272 = vmax.f32 %v7270, %v7271
      %v7273 = vsel %vm6967, %v4418, -inf
      %v7274 = vmax.f32 %v7272, %v7273
      %v7275 = vsel %vm6967, %v4421, -inf
      %v7276 = vmax.f32 %v7274, %v7275
      %v7277 = vrot.slane %v7276, 4
      %v7278 = vmax.f32 %v7276, %v7277
      %v7279 = vrot.slane %v7278, 2
      %v7280 = vmax.f32 %v7278, %v7279
      %v7281 = vrot.slane %v7280, 1
      %v7282 = vmax.f32 %v7280, %v7281
      %v7283 = vsel %vm6967, %v4424, -inf
      %v7284 = vsel %vm6967, %v4427, -inf
      %v7285 = vmax.f32 %v7283, %v7284
      %v7286 = vsel %vm6967, %v4430, -inf
      %v7287 = vmax.f32 %v7285, %v7286
      %v7288 = vsel %vm6967, %v4433, -inf
      %v7289 = vmax.f32 %v7287, %v7288
      %v7290 = vsel %vm6967, %v4436, -inf
      %v7291 = vmax.f32 %v7289, %v7290
      %v7292 = vsel %vm6967, %v4439, -inf
      %v7293 = vmax.f32 %v7291, %v7292
      %v7294 = vsel %vm6967, %v4442, -inf
      %v7295 = vmax.f32 %v7293, %v7294
      %v7296 = vsel %vm6967, %v4445, -inf
      %v7297 = vmax.f32 %v7295, %v7296
      %v7298 = vrot.slane %v7297, 4
      %v7299 = vmax.f32 %v7297, %v7298
      %v7300 = vrot.slane %v7299, 2
      %v7301 = vmax.f32 %v7299, %v7300
      %v7302 = vrot.slane %v7301, 1
      %v7303 = vmax.f32 %v7301, %v7302
      %v7304 = vsel %vm6967, %v4448, -inf
      %v7305 = vsel %vm6967, %v4451, -inf
      %v7306 = vmax.f32 %v7304, %v7305
      %v7307 = vsel %vm6967, %v4454, -inf
      %v7308 = vmax.f32 %v7306, %v7307
      %v7309 = vsel %vm6967, %v4457, -inf
      %v7310 = vmax.f32 %v7308, %v7309
      %v7311 = vsel %vm6967, %v4460, -inf
      %v7312 = vmax.f32 %v7310, %v7311
      %v7313 = vsel %vm6967, %v4463, -inf
      %v7314 = vmax.f32 %v7312, %v7313
      %v7315 = vsel %vm6967, %v4466, -inf
      %v7316 = vmax.f32 %v7314, %v7315
      %v7317 = vsel %vm6967, %v4469, -inf
      %v7318 = vmax.f32 %v7316, %v7317
      %v7319 = vrot.slane %v7318, 4
      %v7320 = vmax.f32 %v7318, %v7319
      %v7321 = vrot.slane %v7320, 2
      %v7322 = vmax.f32 %v7320, %v7321
      %v7323 = vrot.slane %v7322, 1
      %v7324 = vmax.f32 %v7322, %v7323
      %v7325 = vsel %vm6967, %v4472, -inf
      %v7326 = vsel %vm6967, %v4475, -inf
      %v7327 = vmax.f32 %v7325, %v7326
      %v7328 = vsel %vm6967, %v4478, -inf
      %v7329 = vmax.f32 %v7327, %v7328
      %v7330 = vsel %vm6967, %v4481, -inf
      %v7331 = vmax.f32 %v7329, %v7330
      %v7332 = vsel %vm6967, %v4484, -inf
      %v7333 = vmax.f32 %v7331, %v7332
      %v7334 = vsel %vm6967, %v4487, -inf
      %v7335 = vmax.f32 %v7333, %v7334
      %v7336 = vsel %vm6967, %v4490, -inf
      %v7337 = vmax.f32 %v7335, %v7336
      %v7338 = vsel %vm6967, %v4493, -inf
      %v7339 = vmax.f32 %v7337, %v7338
      %v7340 = vrot.slane %v7339, 4
      %v7341 = vmax.f32 %v7339, %v7340
      %v7342 = vrot.slane %v7341, 2
      %v7343 = vmax.f32 %v7341, %v7342
      %v7344 = vrot.slane %v7343, 1
      %v7345 = vmax.f32 %v7343, %v7344
      %v7346 = vsel %vm6967, %v4496, -inf
      %v7347 = vsel %vm6967, %v4499, -inf
      %v7348 = vmax.f32 %v7346, %v7347
      %v7349 = vsel %vm6967, %v4502, -inf
      %v7350 = vmax.f32 %v7348, %v7349
      %v7351 = vsel %vm6967, %v4505, -inf
      %v7352 = vmax.f32 %v7350, %v7351
      %v7353 = vsel %vm6967, %v4508, -inf
      %v7354 = vmax.f32 %v7352, %v7353
      %v7355 = vsel %vm6967, %v4511, -inf
      %v7356 = vmax.f32 %v7354, %v7355
      %v7357 = vsel %vm6967, %v4514, -inf
      %v7358 = vmax.f32 %v7356, %v7357
      %v7359 = vsel %vm6967, %v4517, -inf
      %v7360 = vmax.f32 %v7358, %v7359
      %v7361 = vrot.slane %v7360, 4
      %v7362 = vmax.f32 %v7360, %v7361
      %v7363 = vrot.slane %v7362, 2
      %v7364 = vmax.f32 %v7362, %v7363
      %v7365 = vrot.slane %v7364, 1
      %v7366 = vmax.f32 %v7364, %v7365
      %v7367 = vsel %vm6967, %v4520, -inf
      %v7368 = vsel %vm6967, %v4523, -inf
      %v7369 = vmax.f32 %v7367, %v7368
      %v7370 = vsel %vm6967, %v4526, -inf
      %v7371 = vmax.f32 %v7369, %v7370
      %v7372 = vsel %vm6967, %v4529, -inf
      %v7373 = vmax.f32 %v7371, %v7372
      %v7374 = vsel %vm6967, %v4532, -inf
      %v7375 = vmax.f32 %v7373, %v7374
      %v7376 = vsel %vm6967, %v4535, -inf
      %v7377 = vmax.f32 %v7375, %v7376
      %v7378 = vsel %vm6967, %v4538, -inf
      %v7379 = vmax.f32 %v7377, %v7378
      %v7380 = vsel %vm6967, %v4541, -inf
      %v7381 = vmax.f32 %v7379, %v7380
      %v7382 = vrot.slane %v7381, 4
      %v7383 = vmax.f32 %v7381, %v7382
      %v7384 = vrot.slane %v7383, 2
      %v7385 = vmax.f32 %v7383, %v7384
      %v7386 = vrot.slane %v7385, 1
      %v7387 = vmax.f32 %v7385, %v7386
      %v7388 = vsel %vm6967, %v4544, -inf
      %v7389 = vsel %vm6967, %v4547, -inf
      %v7390 = vmax.f32 %v7388, %v7389
      %v7391 = vsel %vm6967, %v4550, -inf
      %v7392 = vmax.f32 %v7390, %v7391
      %v7393 = vsel %vm6967, %v4553, -inf
      %v7394 = vmax.f32 %v7392, %v7393
      %v7395 = vsel %vm6967, %v4556, -inf
      %v7396 = vmax.f32 %v7394, %v7395
      %v7397 = vsel %vm6967, %v4559, -inf
      %v7398 = vmax.f32 %v7396, %v7397
      %v7399 = vsel %vm6967, %v4562, -inf
      %v7400 = vmax.f32 %v7398, %v7399
      %v7401 = vsel %vm6967, %v4565, -inf
      %v7402 = vmax.f32 %v7400, %v7401
      %v7403 = vrot.slane %v7402, 4
      %v7404 = vmax.f32 %v7402, %v7403
      %v7405 = vrot.slane %v7404, 2
      %v7406 = vmax.f32 %v7404, %v7405
      %v7407 = vrot.slane %v7406, 1
      %v7408 = vmax.f32 %v7406, %v7407
      %v7409 = vsel %vm6967, %v4568, -inf
      %v7410 = vsel %vm6967, %v4571, -inf
      %v7411 = vmax.f32 %v7409, %v7410
      %v7412 = vsel %vm6967, %v4574, -inf
      %v7413 = vmax.f32 %v7411, %v7412
      %v7414 = vsel %vm6967, %v4577, -inf
      %v7415 = vmax.f32 %v7413, %v7414
      %v7416 = vsel %vm6967, %v4580, -inf
      %v7417 = vmax.f32 %v7415, %v7416
      %v7418 = vsel %vm6967, %v4583, -inf
      %v7419 = vmax.f32 %v7417, %v7418
      %v7420 = vsel %vm6967, %v4586, -inf
      %v7421 = vmax.f32 %v7419, %v7420
      %v7422 = vsel %vm6967, %v4589, -inf
      %v7423 = vmax.f32 %v7421, %v7422
      %v7424 = vrot.slane %v7423, 4
      %v7425 = vmax.f32 %v7423, %v7424
      %v7426 = vrot.slane %v7425, 2
      %v7427 = vmax.f32 %v7425, %v7426
      %v7428 = vrot.slane %v7427, 1
      %v7429 = vmax.f32 %v7427, %v7428
      %v7430 = vsel %vm6967, %v4592, -inf
      %v7431 = vsel %vm6967, %v4595, -inf
      %v7432 = vmax.f32 %v7430, %v7431
      %v7433 = vsel %vm6967, %v4598, -inf
      %v7434 = vmax.f32 %v7432, %v7433
      %v7435 = vsel %vm6967, %v4601, -inf
      %v7436 = vmax.f32 %v7434, %v7435
      %v7437 = vsel %vm6967, %v4604, -inf
      %v7438 = vmax.f32 %v7436, %v7437
      %v7439 = vsel %vm6967, %v4607, -inf
      %v7440 = vmax.f32 %v7438, %v7439
      %v7441 = vsel %vm6967, %v4610, -inf
      %v7442 = vmax.f32 %v7440, %v7441
      %v7443 = vsel %vm6967, %v4613, -inf
      %v7444 = vmax.f32 %v7442, %v7443
      %v7445 = vrot.slane %v7444, 4
      %v7446 = vmax.f32 %v7444, %v7445
      %v7447 = vrot.slane %v7446, 2
      %v7448 = vmax.f32 %v7446, %v7447
      %v7449 = vrot.slane %v7448, 1
      %v7450 = vmax.f32 %v7448, %v7449
      %v7451 = vsel %vm6967, %v4616, -inf
      %v7452 = vsel %vm6967, %v4619, -inf
      %v7453 = vmax.f32 %v7451, %v7452
      %v7454 = vsel %vm6967, %v4622, -inf
      %v7455 = vmax.f32 %v7453, %v7454
      %v7456 = vsel %vm6967, %v4625, -inf
      %v7457 = vmax.f32 %v7455, %v7456
      %v7458 = vsel %vm6967, %v4628, -inf
      %v7459 = vmax.f32 %v7457, %v7458
      %v7460 = vsel %vm6967, %v4631, -inf
      %v7461 = vmax.f32 %v7459, %v7460
      %v7462 = vsel %vm6967, %v4634, -inf
      %v7463 = vmax.f32 %v7461, %v7462
      %v7464 = vsel %vm6967, %v4637, -inf
      %v7465 = vmax.f32 %v7463, %v7464
      %v7466 = vrot.slane %v7465, 4
      %v7467 = vmax.f32 %v7465, %v7466
      %v7468 = vrot.slane %v7467, 2
      %v7469 = vmax.f32 %v7467, %v7468
      %v7470 = vrot.slane %v7469, 1
      %v7471 = vmax.f32 %v7469, %v7470
      %v7472 = vsel %vm6967, %v4640, -inf
      %v7473 = vsel %vm6967, %v4643, -inf
      %v7474 = vmax.f32 %v7472, %v7473
      %v7475 = vsel %vm6967, %v4646, -inf
      %v7476 = vmax.f32 %v7474, %v7475
      %v7477 = vsel %vm6967, %v4649, -inf
      %v7478 = vmax.f32 %v7476, %v7477
      %v7479 = vsel %vm6967, %v4652, -inf
      %v7480 = vmax.f32 %v7478, %v7479
      %v7481 = vsel %vm6967, %v4655, -inf
      %v7482 = vmax.f32 %v7480, %v7481
      %v7483 = vsel %vm6967, %v4658, -inf
      %v7484 = vmax.f32 %v7482, %v7483
      %v7485 = vsel %vm6967, %v4661, -inf
      %v7486 = vmax.f32 %v7484, %v7485
      %v7487 = vrot.slane %v7486, 4
      %v7488 = vmax.f32 %v7486, %v7487
      %v7489 = vrot.slane %v7488, 2
      %v7490 = vmax.f32 %v7488, %v7489
      %v7491 = vrot.slane %v7490, 1
      %v7492 = vmax.f32 %v7490, %v7491
      %v7493 = vsel %vm6967, %v4664, -inf
      %v7494 = vsel %vm6967, %v4667, -inf
      %v7495 = vmax.f32 %v7493, %v7494
      %v7496 = vsel %vm6967, %v4670, -inf
      %v7497 = vmax.f32 %v7495, %v7496
      %v7498 = vsel %vm6967, %v4673, -inf
      %v7499 = vmax.f32 %v7497, %v7498
      %v7500 = vsel %vm6967, %v4676, -inf
      %v7501 = vmax.f32 %v7499, %v7500
      %v7502 = vsel %vm6967, %v4679, -inf
      %v7503 = vmax.f32 %v7501, %v7502
      %v7504 = vsel %vm6967, %v4682, -inf
      %v7505 = vmax.f32 %v7503, %v7504
      %v7506 = vsel %vm6967, %v4685, -inf
      %v7507 = vmax.f32 %v7505, %v7506
      %v7508 = vrot.slane %v7507, 4
      %v7509 = vmax.f32 %v7507, %v7508
      %v7510 = vrot.slane %v7509, 2
      %v7511 = vmax.f32 %v7509, %v7510
      %v7512 = vrot.slane %v7511, 1
      %v7513 = vmax.f32 %v7511, %v7512
      %v7514 = vsel %vm6967, %v4688, -inf
      %v7515 = vsel %vm6967, %v4691, -inf
      %v7516 = vmax.f32 %v7514, %v7515
      %v7517 = vsel %vm6967, %v4694, -inf
      %v7518 = vmax.f32 %v7516, %v7517
      %v7519 = vsel %vm6967, %v4697, -inf
      %v7520 = vmax.f32 %v7518, %v7519
      %v7521 = vsel %vm6967, %v4700, -inf
      %v7522 = vmax.f32 %v7520, %v7521
      %v7523 = vsel %vm6967, %v4703, -inf
      %v7524 = vmax.f32 %v7522, %v7523
      %v7525 = vsel %vm6967, %v4706, -inf
      %v7526 = vmax.f32 %v7524, %v7525
      %v7527 = vsel %vm6967, %v4709, -inf
      %v7528 = vmax.f32 %v7526, %v7527
      %v7529 = vrot.slane %v7528, 4
      %v7530 = vmax.f32 %v7528, %v7529
      %v7531 = vrot.slane %v7530, 2
      %v7532 = vmax.f32 %v7530, %v7531
      %v7533 = vrot.slane %v7532, 1
      %v7534 = vmax.f32 %v7532, %v7533
      %v7535 = vsel %vm6967, %v4712, -inf
      %v7536 = vsel %vm6967, %v4715, -inf
      %v7537 = vmax.f32 %v7535, %v7536
      %v7538 = vsel %vm6967, %v4718, -inf
      %v7539 = vmax.f32 %v7537, %v7538
      %v7540 = vsel %vm6967, %v4721, -inf
      %v7541 = vmax.f32 %v7539, %v7540
      %v7542 = vsel %vm6967, %v4724, -inf
      %v7543 = vmax.f32 %v7541, %v7542
      %v7544 = vsel %vm6967, %v4727, -inf
      %v7545 = vmax.f32 %v7543, %v7544
      %v7546 = vsel %vm6967, %v4730, -inf
      %v7547 = vmax.f32 %v7545, %v7546
      %v7548 = vsel %vm6967, %v4733, -inf
      %v7549 = vmax.f32 %v7547, %v7548
      %v7550 = vrot.slane %v7549, 4
      %v7551 = vmax.f32 %v7549, %v7550
      %v7552 = vrot.slane %v7551, 2
      %v7553 = vmax.f32 %v7551, %v7552
      %v7554 = vrot.slane %v7553, 1
      %v7555 = vmax.f32 %v7553, %v7554
      %v7556 = vsel %vm6967, %v4736, -inf
      %v7557 = vsel %vm6967, %v4739, -inf
      %v7558 = vmax.f32 %v7556, %v7557
      %v7559 = vsel %vm6967, %v4742, -inf
      %v7560 = vmax.f32 %v7558, %v7559
      %v7561 = vsel %vm6967, %v4745, -inf
      %v7562 = vmax.f32 %v7560, %v7561
      %v7563 = vsel %vm6967, %v4748, -inf
      %v7564 = vmax.f32 %v7562, %v7563
      %v7565 = vsel %vm6967, %v4751, -inf
      %v7566 = vmax.f32 %v7564, %v7565
      %v7567 = vsel %vm6967, %v4754, -inf
      %v7568 = vmax.f32 %v7566, %v7567
      %v7569 = vsel %vm6967, %v4757, -inf
      %v7570 = vmax.f32 %v7568, %v7569
      %v7571 = vrot.slane %v7570, 4
      %v7572 = vmax.f32 %v7570, %v7571
      %v7573 = vrot.slane %v7572, 2
      %v7574 = vmax.f32 %v7572, %v7573
      %v7575 = vrot.slane %v7574, 1
      %v7576 = vmax.f32 %v7574, %v7575
      %v7577 = vsel %vm6967, %v4760, -inf
      %v7578 = vsel %vm6967, %v4763, -inf
      %v7579 = vmax.f32 %v7577, %v7578
      %v7580 = vsel %vm6967, %v4766, -inf
      %v7581 = vmax.f32 %v7579, %v7580
      %v7582 = vsel %vm6967, %v4769, -inf
      %v7583 = vmax.f32 %v7581, %v7582
      %v7584 = vsel %vm6967, %v4772, -inf
      %v7585 = vmax.f32 %v7583, %v7584
      %v7586 = vsel %vm6967, %v4775, -inf
      %v7587 = vmax.f32 %v7585, %v7586
      %v7588 = vsel %vm6967, %v4778, -inf
      %v7589 = vmax.f32 %v7587, %v7588
      %v7590 = vsel %vm6967, %v4781, -inf
      %v7591 = vmax.f32 %v7589, %v7590
      %v7592 = vrot.slane %v7591, 4
      %v7593 = vmax.f32 %v7591, %v7592
      %v7594 = vrot.slane %v7593, 2
      %v7595 = vmax.f32 %v7593, %v7594
      %v7596 = vrot.slane %v7595, 1
      %v7597 = vmax.f32 %v7595, %v7596
      %v7598 = vsel %vm6967, %v4784, -inf
      %v7599 = vsel %vm6967, %v4787, -inf
      %v7600 = vmax.f32 %v7598, %v7599
      %v7601 = vsel %vm6967, %v4790, -inf
      %v7602 = vmax.f32 %v7600, %v7601
      %v7603 = vsel %vm6967, %v4793, -inf
      %v7604 = vmax.f32 %v7602, %v7603
      %v7605 = vsel %vm6967, %v4796, -inf
      %v7606 = vmax.f32 %v7604, %v7605
      %v7607 = vsel %vm6967, %v4799, -inf
      %v7608 = vmax.f32 %v7606, %v7607
      %v7609 = vsel %vm6967, %v4802, -inf
      %v7610 = vmax.f32 %v7608, %v7609
      %v7611 = vsel %vm6967, %v4805, -inf
      %v7612 = vmax.f32 %v7610, %v7611
      %v7613 = vrot.slane %v7612, 4
      %v7614 = vmax.f32 %v7612, %v7613
      %v7615 = vrot.slane %v7614, 2
      %v7616 = vmax.f32 %v7614, %v7615
      %v7617 = vrot.slane %v7616, 1
      %v7618 = vmax.f32 %v7616, %v7617
      %v7619 = vsel %vm6967, %v4808, -inf
      %v7620 = vsel %vm6967, %v4811, -inf
      %v7621 = vmax.f32 %v7619, %v7620
      %v7622 = vsel %vm6967, %v4814, -inf
      %v7623 = vmax.f32 %v7621, %v7622
      %v7624 = vsel %vm6967, %v4817, -inf
      %v7625 = vmax.f32 %v7623, %v7624
      %v7626 = vsel %vm6967, %v4820, -inf
      %v7627 = vmax.f32 %v7625, %v7626
      %v7628 = vsel %vm6967, %v4823, -inf
      %v7629 = vmax.f32 %v7627, %v7628
      %v7630 = vsel %vm6967, %v4826, -inf
      %v7631 = vmax.f32 %v7629, %v7630
      %v7632 = vsel %vm6967, %v4829, -inf
      %v7633 = vmax.f32 %v7631, %v7632
      %v7634 = vrot.slane %v7633, 4
      %v7635 = vmax.f32 %v7633, %v7634
      %v7636 = vrot.slane %v7635, 2
      %v7637 = vmax.f32 %v7635, %v7636
      %v7638 = vrot.slane %v7637, 1
      %v7639 = vmax.f32 %v7637, %v7638
      %v7640 = vsel %vm6967, %v4832, -inf
      %v7641 = vsel %vm6967, %v4835, -inf
      %v7642 = vmax.f32 %v7640, %v7641
      %v7643 = vsel %vm6967, %v4838, -inf
      %v7644 = vmax.f32 %v7642, %v7643
      %v7645 = vsel %vm6967, %v4841, -inf
      %v7646 = vmax.f32 %v7644, %v7645
      %v7647 = vsel %vm6967, %v4844, -inf
      %v7648 = vmax.f32 %v7646, %v7647
      %v7649 = vsel %vm6967, %v4847, -inf
      %v7650 = vmax.f32 %v7648, %v7649
      %v7651 = vsel %vm6967, %v4850, -inf
      %v7652 = vmax.f32 %v7650, %v7651
      %v7653 = vsel %vm6967, %v4853, -inf
      %v7654 = vmax.f32 %v7652, %v7653
      %v7655 = vrot.slane %v7654, 4
      %v7656 = vmax.f32 %v7654, %v7655
      %v7657 = vrot.slane %v7656, 2
      %v7658 = vmax.f32 %v7656, %v7657
      %v7659 = vrot.slane %v7658, 1
      %v7660 = vmax.f32 %v7658, %v7659
      %v7661 = vsel %vm6967, %v4856, -inf
      %v7662 = vsel %vm6967, %v4859, -inf
      %v7663 = vmax.f32 %v7661, %v7662
      %v7664 = vsel %vm6967, %v4862, -inf
      %v7665 = vmax.f32 %v7663, %v7664
      %v7666 = vsel %vm6967, %v4865, -inf
      %v7667 = vmax.f32 %v7665, %v7666
      %v7668 = vsel %vm6967, %v4868, -inf
      %v7669 = vmax.f32 %v7667, %v7668
      %v7670 = vsel %vm6967, %v4871, -inf
      %v7671 = vmax.f32 %v7669, %v7670
      %v7672 = vsel %vm6967, %v4874, -inf
      %v7673 = vmax.f32 %v7671, %v7672
      %v7674 = vsel %vm6967, %v4877, -inf
      %v7675 = vmax.f32 %v7673, %v7674
      %v7676 = vrot.slane %v7675, 4
      %v7677 = vmax.f32 %v7675, %v7676
      %v7678 = vrot.slane %v7677, 2
      %v7679 = vmax.f32 %v7677, %v7678
      %v7680 = vrot.slane %v7679, 1
      %v7681 = vmax.f32 %v7679, %v7680
      %v7682 = vsel %vm6967, %v4880, -inf
      %v7683 = vsel %vm6967, %v4883, -inf
      %v7684 = vmax.f32 %v7682, %v7683
      %v7685 = vsel %vm6967, %v4886, -inf
      %v7686 = vmax.f32 %v7684, %v7685
      %v7687 = vsel %vm6967, %v4889, -inf
      %v7688 = vmax.f32 %v7686, %v7687
      %v7689 = vsel %vm6967, %v4892, -inf
      %v7690 = vmax.f32 %v7688, %v7689
      %v7691 = vsel %vm6967, %v4895, -inf
      %v7692 = vmax.f32 %v7690, %v7691
      %v7693 = vsel %vm6967, %v4898, -inf
      %v7694 = vmax.f32 %v7692, %v7693
      %v7695 = vsel %vm6967, %v4901, -inf
      %v7696 = vmax.f32 %v7694, %v7695
      %v7697 = vrot.slane %v7696, 4
      %v7698 = vmax.f32 %v7696, %v7697
      %v7699 = vrot.slane %v7698, 2
      %v7700 = vmax.f32 %v7698, %v7699
      %v7701 = vrot.slane %v7700, 1
      %v7702 = vmax.f32 %v7700, %v7701
      %v7703 = vsel %vm6967, %v4904, -inf
      %v7704 = vsel %vm6967, %v4907, -inf
      %v7705 = vmax.f32 %v7703, %v7704
      %v7706 = vsel %vm6967, %v4910, -inf
      %v7707 = vmax.f32 %v7705, %v7706
      %v7708 = vsel %vm6967, %v4913, -inf
      %v7709 = vmax.f32 %v7707, %v7708
      %v7710 = vsel %vm6967, %v4916, -inf
      %v7711 = vmax.f32 %v7709, %v7710
      %v7712 = vsel %vm6967, %v4919, -inf
      %v7713 = vmax.f32 %v7711, %v7712
      %v7714 = vsel %vm6967, %v4922, -inf
      %v7715 = vmax.f32 %v7713, %v7714
      %v7716 = vsel %vm6967, %v4925, -inf
      %v7717 = vmax.f32 %v7715, %v7716
      %v7718 = vrot.slane %v7717, 4
      %v7719 = vmax.f32 %v7717, %v7718
      %v7720 = vrot.slane %v7719, 2
      %v7721 = vmax.f32 %v7719, %v7720
      %v7722 = vrot.slane %v7721, 1
      %v7723 = vmax.f32 %v7721, %v7722
      %v7724 = vsel %vm6967, %v4928, -inf
      %v7725 = vsel %vm6967, %v4931, -inf
      %v7726 = vmax.f32 %v7724, %v7725
      %v7727 = vsel %vm6967, %v4934, -inf
      %v7728 = vmax.f32 %v7726, %v7727
      %v7729 = vsel %vm6967, %v4937, -inf
      %v7730 = vmax.f32 %v7728, %v7729
      %v7731 = vsel %vm6967, %v4940, -inf
      %v7732 = vmax.f32 %v7730, %v7731
      %v7733 = vsel %vm6967, %v4943, -inf
      %v7734 = vmax.f32 %v7732, %v7733
      %v7735 = vsel %vm6967, %v4946, -inf
      %v7736 = vmax.f32 %v7734, %v7735
      %v7737 = vsel %vm6967, %v4949, -inf
      %v7738 = vmax.f32 %v7736, %v7737
      %v7739 = vrot.slane %v7738, 4
      %v7740 = vmax.f32 %v7738, %v7739
      %v7741 = vrot.slane %v7740, 2
      %v7742 = vmax.f32 %v7740, %v7741
      %v7743 = vrot.slane %v7742, 1
      %v7744 = vmax.f32 %v7742, %v7743
      %v7745 = vsel %vm6967, %v4952, -inf
      %v7746 = vsel %vm6967, %v4955, -inf
      %v7747 = vmax.f32 %v7745, %v7746
      %v7748 = vsel %vm6967, %v4958, -inf
      %v7749 = vmax.f32 %v7747, %v7748
      %v7750 = vsel %vm6967, %v4961, -inf
      %v7751 = vmax.f32 %v7749, %v7750
      %v7752 = vsel %vm6967, %v4964, -inf
      %v7753 = vmax.f32 %v7751, %v7752
      %v7754 = vsel %vm6967, %v4967, -inf
      %v7755 = vmax.f32 %v7753, %v7754
      %v7756 = vsel %vm6967, %v4970, -inf
      %v7757 = vmax.f32 %v7755, %v7756
      %v7758 = vsel %vm6967, %v4973, -inf
      %v7759 = vmax.f32 %v7757, %v7758
      %v7760 = vrot.slane %v7759, 4
      %v7761 = vmax.f32 %v7759, %v7760
      %v7762 = vrot.slane %v7761, 2
      %v7763 = vmax.f32 %v7761, %v7762
      %v7764 = vrot.slane %v7763, 1
      %v7765 = vmax.f32 %v7763, %v7764
      %v7766 = vsel %vm6967, %v4976, -inf
      %v7767 = vsel %vm6967, %v4979, -inf
      %v7768 = vmax.f32 %v7766, %v7767
      %v7769 = vsel %vm6967, %v4982, -inf
      %v7770 = vmax.f32 %v7768, %v7769
      %v7771 = vsel %vm6967, %v4985, -inf
      %v7772 = vmax.f32 %v7770, %v7771
      %v7773 = vsel %vm6967, %v4988, -inf
      %v7774 = vmax.f32 %v7772, %v7773
      %v7775 = vsel %vm6967, %v4991, -inf
      %v7776 = vmax.f32 %v7774, %v7775
      %v7777 = vsel %vm6967, %v4994, -inf
      %v7778 = vmax.f32 %v7776, %v7777
      %v7779 = vsel %vm6967, %v4997, -inf
      %v7780 = vmax.f32 %v7778, %v7779
      %v7781 = vrot.slane %v7780, 4
      %v7782 = vmax.f32 %v7780, %v7781
      %v7783 = vrot.slane %v7782, 2
      %v7784 = vmax.f32 %v7782, %v7783
      %v7785 = vrot.slane %v7784, 1
      %v7786 = vmax.f32 %v7784, %v7785
      %v7787 = vsel %vm6967, %v5000, -inf
      %v7788 = vsel %vm6967, %v5003, -inf
      %v7789 = vmax.f32 %v7787, %v7788
      %v7790 = vsel %vm6967, %v5006, -inf
      %v7791 = vmax.f32 %v7789, %v7790
      %v7792 = vsel %vm6967, %v5009, -inf
      %v7793 = vmax.f32 %v7791, %v7792
      %v7794 = vsel %vm6967, %v5012, -inf
      %v7795 = vmax.f32 %v7793, %v7794
      %v7796 = vsel %vm6967, %v5015, -inf
      %v7797 = vmax.f32 %v7795, %v7796
      %v7798 = vsel %vm6967, %v5018, -inf
      %v7799 = vmax.f32 %v7797, %v7798
      %v7800 = vsel %vm6967, %v5021, -inf
      %v7801 = vmax.f32 %v7799, %v7800
      %v7802 = vrot.slane %v7801, 4
      %v7803 = vmax.f32 %v7801, %v7802
      %v7804 = vrot.slane %v7803, 2
      %v7805 = vmax.f32 %v7803, %v7804
      %v7806 = vrot.slane %v7805, 1
      %v7807 = vmax.f32 %v7805, %v7806
      %v7808 = vsel %vm6967, %v5024, -inf
      %v7809 = vsel %vm6967, %v5027, -inf
      %v7810 = vmax.f32 %v7808, %v7809
      %v7811 = vsel %vm6967, %v5030, -inf
      %v7812 = vmax.f32 %v7810, %v7811
      %v7813 = vsel %vm6967, %v5033, -inf
      %v7814 = vmax.f32 %v7812, %v7813
      %v7815 = vsel %vm6967, %v5036, -inf
      %v7816 = vmax.f32 %v7814, %v7815
      %v7817 = vsel %vm6967, %v5039, -inf
      %v7818 = vmax.f32 %v7816, %v7817
      %v7819 = vsel %vm6967, %v5042, -inf
      %v7820 = vmax.f32 %v7818, %v7819
      %v7821 = vsel %vm6967, %v5045, -inf
      %v7822 = vmax.f32 %v7820, %v7821
      %v7823 = vrot.slane %v7822, 4
      %v7824 = vmax.f32 %v7822, %v7823
      %v7825 = vrot.slane %v7824, 2
      %v7826 = vmax.f32 %v7824, %v7825
      %v7827 = vrot.slane %v7826, 1
      %v7828 = vmax.f32 %v7826, %v7827
      %v7829 = vsel %vm6967, %v5048, -inf
      %v7830 = vsel %vm6967, %v5051, -inf
      %v7831 = vmax.f32 %v7829, %v7830
      %v7832 = vsel %vm6967, %v5054, -inf
      %v7833 = vmax.f32 %v7831, %v7832
      %v7834 = vsel %vm6967, %v5057, -inf
      %v7835 = vmax.f32 %v7833, %v7834
      %v7836 = vsel %vm6967, %v5060, -inf
      %v7837 = vmax.f32 %v7835, %v7836
      %v7838 = vsel %vm6967, %v5063, -inf
      %v7839 = vmax.f32 %v7837, %v7838
      %v7840 = vsel %vm6967, %v5066, -inf
      %v7841 = vmax.f32 %v7839, %v7840
      %v7842 = vsel %vm6967, %v5069, -inf
      %v7843 = vmax.f32 %v7841, %v7842
      %v7844 = vrot.slane %v7843, 4
      %v7845 = vmax.f32 %v7843, %v7844
      %v7846 = vrot.slane %v7845, 2
      %v7847 = vmax.f32 %v7845, %v7846
      %v7848 = vrot.slane %v7847, 1
      %v7849 = vmax.f32 %v7847, %v7848
      %v7850 = vsel %vm6967, %v5072, -inf
      %v7851 = vsel %vm6967, %v5075, -inf
      %v7852 = vmax.f32 %v7850, %v7851
      %v7853 = vsel %vm6967, %v5078, -inf
      %v7854 = vmax.f32 %v7852, %v7853
      %v7855 = vsel %vm6967, %v5081, -inf
      %v7856 = vmax.f32 %v7854, %v7855
      %v7857 = vsel %vm6967, %v5084, -inf
      %v7858 = vmax.f32 %v7856, %v7857
      %v7859 = vsel %vm6967, %v5087, -inf
      %v7860 = vmax.f32 %v7858, %v7859
      %v7861 = vsel %vm6967, %v5090, -inf
      %v7862 = vmax.f32 %v7860, %v7861
      %v7863 = vsel %vm6967, %v5093, -inf
      %v7864 = vmax.f32 %v7862, %v7863
      %v7865 = vrot.slane %v7864, 4
      %v7866 = vmax.f32 %v7864, %v7865
      %v7867 = vrot.slane %v7866, 2
      %v7868 = vmax.f32 %v7866, %v7867
      %v7869 = vrot.slane %v7868, 1
      %v7870 = vmax.f32 %v7868, %v7869
      %v7871 = vsel %vm6967, %v5096, -inf
      %v7872 = vsel %vm6967, %v5099, -inf
      %v7873 = vmax.f32 %v7871, %v7872
      %v7874 = vsel %vm6967, %v5102, -inf
      %v7875 = vmax.f32 %v7873, %v7874
      %v7876 = vsel %vm6967, %v5105, -inf
      %v7877 = vmax.f32 %v7875, %v7876
      %v7878 = vsel %vm6967, %v5108, -inf
      %v7879 = vmax.f32 %v7877, %v7878
      %v7880 = vsel %vm6967, %v5111, -inf
      %v7881 = vmax.f32 %v7879, %v7880
      %v7882 = vsel %vm6967, %v5114, -inf
      %v7883 = vmax.f32 %v7881, %v7882
      %v7884 = vsel %vm6967, %v5117, -inf
      %v7885 = vmax.f32 %v7883, %v7884
      %v7886 = vrot.slane %v7885, 4
      %v7887 = vmax.f32 %v7885, %v7886
      %v7888 = vrot.slane %v7887, 2
      %v7889 = vmax.f32 %v7887, %v7888
      %v7890 = vrot.slane %v7889, 1
      %v7891 = vmax.f32 %v7889, %v7890
      %v7892 = vsel %vm6967, %v5120, -inf
      %v7893 = vsel %vm6967, %v5123, -inf
      %v7894 = vmax.f32 %v7892, %v7893
      %v7895 = vsel %vm6967, %v5126, -inf
      %v7896 = vmax.f32 %v7894, %v7895
      %v7897 = vsel %vm6967, %v5129, -inf
      %v7898 = vmax.f32 %v7896, %v7897
      %v7899 = vsel %vm6967, %v5132, -inf
      %v7900 = vmax.f32 %v7898, %v7899
      %v7901 = vsel %vm6967, %v5135, -inf
      %v7902 = vmax.f32 %v7900, %v7901
      %v7903 = vsel %vm6967, %v5138, -inf
      %v7904 = vmax.f32 %v7902, %v7903
      %v7905 = vsel %vm6967, %v5141, -inf
      %v7906 = vmax.f32 %v7904, %v7905
      %v7907 = vrot.slane %v7906, 4
      %v7908 = vmax.f32 %v7906, %v7907
      %v7909 = vrot.slane %v7908, 2
      %v7910 = vmax.f32 %v7908, %v7909
      %v7911 = vrot.slane %v7910, 1
      %v7912 = vmax.f32 %v7910, %v7911
      %v7913 = vsel %vm6967, %v5144, -inf
      %v7914 = vsel %vm6967, %v5147, -inf
      %v7915 = vmax.f32 %v7913, %v7914
      %v7916 = vsel %vm6967, %v5150, -inf
      %v7917 = vmax.f32 %v7915, %v7916
      %v7918 = vsel %vm6967, %v5153, -inf
      %v7919 = vmax.f32 %v7917, %v7918
      %v7920 = vsel %vm6967, %v5156, -inf
      %v7921 = vmax.f32 %v7919, %v7920
      %v7922 = vsel %vm6967, %v5159, -inf
      %v7923 = vmax.f32 %v7921, %v7922
      %v7924 = vsel %vm6967, %v5162, -inf
      %v7925 = vmax.f32 %v7923, %v7924
      %v7926 = vsel %vm6967, %v5165, -inf
      %v7927 = vmax.f32 %v7925, %v7926
      %v7928 = vrot.slane %v7927, 4
      %v7929 = vmax.f32 %v7927, %v7928
      %v7930 = vrot.slane %v7929, 2
      %v7931 = vmax.f32 %v7929, %v7930
      %v7932 = vrot.slane %v7931, 1
      %v7933 = vmax.f32 %v7931, %v7932
      %v7934 = vsel %vm6967, %v5168, -inf
      %v7935 = vsel %vm6967, %v5171, -inf
      %v7936 = vmax.f32 %v7934, %v7935
      %v7937 = vsel %vm6967, %v5174, -inf
      %v7938 = vmax.f32 %v7936, %v7937
      %v7939 = vsel %vm6967, %v5177, -inf
      %v7940 = vmax.f32 %v7938, %v7939
      %v7941 = vsel %vm6967, %v5180, -inf
      %v7942 = vmax.f32 %v7940, %v7941
      %v7943 = vsel %vm6967, %v5183, -inf
      %v7944 = vmax.f32 %v7942, %v7943
      %v7945 = vsel %vm6967, %v5186, -inf
      %v7946 = vmax.f32 %v7944, %v7945
      %v7947 = vsel %vm6967, %v5189, -inf
      %v7948 = vmax.f32 %v7946, %v7947
      %v7949 = vrot.slane %v7948, 4
      %v7950 = vmax.f32 %v7948, %v7949
      %v7951 = vrot.slane %v7950, 2
      %v7952 = vmax.f32 %v7950, %v7951
      %v7953 = vrot.slane %v7952, 1
      %v7954 = vmax.f32 %v7952, %v7953
      %v7955 = vsel %vm6967, %v5192, -inf
      %v7956 = vsel %vm6967, %v5195, -inf
      %v7957 = vmax.f32 %v7955, %v7956
      %v7958 = vsel %vm6967, %v5198, -inf
      %v7959 = vmax.f32 %v7957, %v7958
      %v7960 = vsel %vm6967, %v5201, -inf
      %v7961 = vmax.f32 %v7959, %v7960
      %v7962 = vsel %vm6967, %v5204, -inf
      %v7963 = vmax.f32 %v7961, %v7962
      %v7964 = vsel %vm6967, %v5207, -inf
      %v7965 = vmax.f32 %v7963, %v7964
      %v7966 = vsel %vm6967, %v5210, -inf
      %v7967 = vmax.f32 %v7965, %v7966
      %v7968 = vsel %vm6967, %v5213, -inf
      %v7969 = vmax.f32 %v7967, %v7968
      %v7970 = vrot.slane %v7969, 4
      %v7971 = vmax.f32 %v7969, %v7970
      %v7972 = vrot.slane %v7971, 2
      %v7973 = vmax.f32 %v7971, %v7972
      %v7974 = vrot.slane %v7973, 1
      %v7975 = vmax.f32 %v7973, %v7974
      %v7976 = vsel %vm6967, %v5216, -inf
      %v7977 = vsel %vm6967, %v5219, -inf
      %v7978 = vmax.f32 %v7976, %v7977
      %v7979 = vsel %vm6967, %v5222, -inf
      %v7980 = vmax.f32 %v7978, %v7979
      %v7981 = vsel %vm6967, %v5225, -inf
      %v7982 = vmax.f32 %v7980, %v7981
      %v7983 = vsel %vm6967, %v5228, -inf
      %v7984 = vmax.f32 %v7982, %v7983
      %v7985 = vsel %vm6967, %v5231, -inf
      %v7986 = vmax.f32 %v7984, %v7985
      %v7987 = vsel %vm6967, %v5234, -inf
      %v7988 = vmax.f32 %v7986, %v7987
      %v7989 = vsel %vm6967, %v5237, -inf
      %v7990 = vmax.f32 %v7988, %v7989
      %v7991 = vrot.slane %v7990, 4
      %v7992 = vmax.f32 %v7990, %v7991
      %v7993 = vrot.slane %v7992, 2
      %v7994 = vmax.f32 %v7992, %v7993
      %v7995 = vrot.slane %v7994, 1
      %v7996 = vmax.f32 %v7994, %v7995
      %v7997 = vsel %vm6967, %v5240, -inf
      %v7998 = vsel %vm6967, %v5243, -inf
      %v7999 = vmax.f32 %v7997, %v7998
      %v8000 = vsel %vm6967, %v5246, -inf
      %v8001 = vmax.f32 %v7999, %v8000
      %v8002 = vsel %vm6967, %v5249, -inf
      %v8003 = vmax.f32 %v8001, %v8002
      %v8004 = vsel %vm6967, %v5252, -inf
      %v8005 = vmax.f32 %v8003, %v8004
      %v8006 = vsel %vm6967, %v5255, -inf
      %v8007 = vmax.f32 %v8005, %v8006
      %v8008 = vsel %vm6967, %v5258, -inf
      %v8009 = vmax.f32 %v8007, %v8008
      %v8010 = vsel %vm6967, %v5261, -inf
      %v8011 = vmax.f32 %v8009, %v8010
      %v8012 = vrot.slane %v8011, 4
      %v8013 = vmax.f32 %v8011, %v8012
      %v8014 = vrot.slane %v8013, 2
      %v8015 = vmax.f32 %v8013, %v8014
      %v8016 = vrot.slane %v8015, 1
      %v8017 = vmax.f32 %v8015, %v8016
      %v8018 = vsel %vm6967, %v5264, -inf
      %v8019 = vsel %vm6967, %v5267, -inf
      %v8020 = vmax.f32 %v8018, %v8019
      %v8021 = vsel %vm6967, %v5270, -inf
      %v8022 = vmax.f32 %v8020, %v8021
      %v8023 = vsel %vm6967, %v5273, -inf
      %v8024 = vmax.f32 %v8022, %v8023
      %v8025 = vsel %vm6967, %v5276, -inf
      %v8026 = vmax.f32 %v8024, %v8025
      %v8027 = vsel %vm6967, %v5279, -inf
      %v8028 = vmax.f32 %v8026, %v8027
      %v8029 = vsel %vm6967, %v5282, -inf
      %v8030 = vmax.f32 %v8028, %v8029
      %v8031 = vsel %vm6967, %v5285, -inf
      %v8032 = vmax.f32 %v8030, %v8031
      %v8033 = vrot.slane %v8032, 4
      %v8034 = vmax.f32 %v8032, %v8033
      %v8035 = vrot.slane %v8034, 2
      %v8036 = vmax.f32 %v8034, %v8035
      %v8037 = vrot.slane %v8036, 1
      %v8038 = vmax.f32 %v8036, %v8037
      %v8039 = vsel %vm6967, %v5288, -inf
      %v8040 = vsel %vm6967, %v5291, -inf
      %v8041 = vmax.f32 %v8039, %v8040
      %v8042 = vsel %vm6967, %v5294, -inf
      %v8043 = vmax.f32 %v8041, %v8042
      %v8044 = vsel %vm6967, %v5297, -inf
      %v8045 = vmax.f32 %v8043, %v8044
      %v8046 = vsel %vm6967, %v5300, -inf
      %v8047 = vmax.f32 %v8045, %v8046
      %v8048 = vsel %vm6967, %v5303, -inf
      %v8049 = vmax.f32 %v8047, %v8048
      %v8050 = vsel %vm6967, %v5306, -inf
      %v8051 = vmax.f32 %v8049, %v8050
      %v8052 = vsel %vm6967, %v5309, -inf
      %v8053 = vmax.f32 %v8051, %v8052
      %v8054 = vrot.slane %v8053, 4
      %v8055 = vmax.f32 %v8053, %v8054
      %v8056 = vrot.slane %v8055, 2
      %v8057 = vmax.f32 %v8055, %v8056
      %v8058 = vrot.slane %v8057, 1
      %v8059 = vmax.f32 %v8057, %v8058
      %v8060 = vsel %vm6967, %v5312, -inf
      %v8061 = vsel %vm6967, %v5315, -inf
      %v8062 = vmax.f32 %v8060, %v8061
      %v8063 = vsel %vm6967, %v5318, -inf
      %v8064 = vmax.f32 %v8062, %v8063
      %v8065 = vsel %vm6967, %v5321, -inf
      %v8066 = vmax.f32 %v8064, %v8065
      %v8067 = vsel %vm6967, %v5324, -inf
      %v8068 = vmax.f32 %v8066, %v8067
      %v8069 = vsel %vm6967, %v5327, -inf
      %v8070 = vmax.f32 %v8068, %v8069
      %v8071 = vsel %vm6967, %v5330, -inf
      %v8072 = vmax.f32 %v8070, %v8071
      %v8073 = vsel %vm6967, %v5333, -inf
      %v8074 = vmax.f32 %v8072, %v8073
      %v8075 = vrot.slane %v8074, 4
      %v8076 = vmax.f32 %v8074, %v8075
      %v8077 = vrot.slane %v8076, 2
      %v8078 = vmax.f32 %v8076, %v8077
      %v8079 = vrot.slane %v8078, 1
      %v8080 = vmax.f32 %v8078, %v8079
      %v8081 = vsel %vm6967, %v5336, -inf
      %v8082 = vsel %vm6967, %v5339, -inf
      %v8083 = vmax.f32 %v8081, %v8082
      %v8084 = vsel %vm6967, %v5342, -inf
      %v8085 = vmax.f32 %v8083, %v8084
      %v8086 = vsel %vm6967, %v5345, -inf
      %v8087 = vmax.f32 %v8085, %v8086
      %v8088 = vsel %vm6967, %v5348, -inf
      %v8089 = vmax.f32 %v8087, %v8088
      %v8090 = vsel %vm6967, %v5351, -inf
      %v8091 = vmax.f32 %v8089, %v8090
      %v8092 = vsel %vm6967, %v5354, -inf
      %v8093 = vmax.f32 %v8091, %v8092
      %v8094 = vsel %vm6967, %v5357, -inf
      %v8095 = vmax.f32 %v8093, %v8094
      %v8096 = vrot.slane %v8095, 4
      %v8097 = vmax.f32 %v8095, %v8096
      %v8098 = vrot.slane %v8097, 2
      %v8099 = vmax.f32 %v8097, %v8098
      %v8100 = vrot.slane %v8099, 1
      %v8101 = vmax.f32 %v8099, %v8100
      %v8102 = vsel %vm6967, %v5360, -inf
      %v8103 = vsel %vm6967, %v5363, -inf
      %v8104 = vmax.f32 %v8102, %v8103
      %v8105 = vsel %vm6967, %v5366, -inf
      %v8106 = vmax.f32 %v8104, %v8105
      %v8107 = vsel %vm6967, %v5369, -inf
      %v8108 = vmax.f32 %v8106, %v8107
      %v8109 = vsel %vm6967, %v5372, -inf
      %v8110 = vmax.f32 %v8108, %v8109
      %v8111 = vsel %vm6967, %v5375, -inf
      %v8112 = vmax.f32 %v8110, %v8111
      %v8113 = vsel %vm6967, %v5378, -inf
      %v8114 = vmax.f32 %v8112, %v8113
      %v8115 = vsel %vm6967, %v5381, -inf
      %v8116 = vmax.f32 %v8114, %v8115
      %v8117 = vrot.slane %v8116, 4
      %v8118 = vmax.f32 %v8116, %v8117
      %v8119 = vrot.slane %v8118, 2
      %v8120 = vmax.f32 %v8118, %v8119
      %v8121 = vrot.slane %v8120, 1
      %v8122 = vmax.f32 %v8120, %v8121
      %v8123 = vsel %vm6967, %v5384, -inf
      %v8124 = vsel %vm6967, %v5387, -inf
      %v8125 = vmax.f32 %v8123, %v8124
      %v8126 = vsel %vm6967, %v5390, -inf
      %v8127 = vmax.f32 %v8125, %v8126
      %v8128 = vsel %vm6967, %v5393, -inf
      %v8129 = vmax.f32 %v8127, %v8128
      %v8130 = vsel %vm6967, %v5396, -inf
      %v8131 = vmax.f32 %v8129, %v8130
      %v8132 = vsel %vm6967, %v5399, -inf
      %v8133 = vmax.f32 %v8131, %v8132
      %v8134 = vsel %vm6967, %v5402, -inf
      %v8135 = vmax.f32 %v8133, %v8134
      %v8136 = vsel %vm6967, %v5405, -inf
      %v8137 = vmax.f32 %v8135, %v8136
      %v8138 = vrot.slane %v8137, 4
      %v8139 = vmax.f32 %v8137, %v8138
      %v8140 = vrot.slane %v8139, 2
      %v8141 = vmax.f32 %v8139, %v8140
      %v8142 = vrot.slane %v8141, 1
      %v8143 = vmax.f32 %v8141, %v8142
      %v8144 = vsel %vm6967, %v5408, -inf
      %v8145 = vsel %vm6967, %v5411, -inf
      %v8146 = vmax.f32 %v8144, %v8145
      %v8147 = vsel %vm6967, %v5414, -inf
      %v8148 = vmax.f32 %v8146, %v8147
      %v8149 = vsel %vm6967, %v5417, -inf
      %v8150 = vmax.f32 %v8148, %v8149
      %v8151 = vsel %vm6967, %v5420, -inf
      %v8152 = vmax.f32 %v8150, %v8151
      %v8153 = vsel %vm6967, %v5423, -inf
      %v8154 = vmax.f32 %v8152, %v8153
      %v8155 = vsel %vm6967, %v5426, -inf
      %v8156 = vmax.f32 %v8154, %v8155
      %v8157 = vsel %vm6967, %v5429, -inf
      %v8158 = vmax.f32 %v8156, %v8157
      %v8159 = vrot.slane %v8158, 4
      %v8160 = vmax.f32 %v8158, %v8159
      %v8161 = vrot.slane %v8160, 2
      %v8162 = vmax.f32 %v8160, %v8161
      %v8163 = vrot.slane %v8162, 1
      %v8164 = vmax.f32 %v8162, %v8163
      %v8165 = vsel %vm6967, %v5432, -inf
      %v8166 = vsel %vm6967, %v5435, -inf
      %v8167 = vmax.f32 %v8165, %v8166
      %v8168 = vsel %vm6967, %v5438, -inf
      %v8169 = vmax.f32 %v8167, %v8168
      %v8170 = vsel %vm6967, %v5441, -inf
      %v8171 = vmax.f32 %v8169, %v8170
      %v8172 = vsel %vm6967, %v5444, -inf
      %v8173 = vmax.f32 %v8171, %v8172
      %v8174 = vsel %vm6967, %v5447, -inf
      %v8175 = vmax.f32 %v8173, %v8174
      %v8176 = vsel %vm6967, %v5450, -inf
      %v8177 = vmax.f32 %v8175, %v8176
      %v8178 = vsel %vm6967, %v5453, -inf
      %v8179 = vmax.f32 %v8177, %v8178
      %v8180 = vrot.slane %v8179, 4
      %v8181 = vmax.f32 %v8179, %v8180
      %v8182 = vrot.slane %v8181, 2
      %v8183 = vmax.f32 %v8181, %v8182
      %v8184 = vrot.slane %v8183, 1
      %v8185 = vmax.f32 %v8183, %v8184
      %v8186 = vsel %vm6967, %v5456, -inf
      %v8187 = vsel %vm6967, %v5459, -inf
      %v8188 = vmax.f32 %v8186, %v8187
      %v8189 = vsel %vm6967, %v5462, -inf
      %v8190 = vmax.f32 %v8188, %v8189
      %v8191 = vsel %vm6967, %v5465, -inf
      %v8192 = vmax.f32 %v8190, %v8191
      %v8193 = vsel %vm6967, %v5468, -inf
      %v8194 = vmax.f32 %v8192, %v8193
      %v8195 = vsel %vm6967, %v5471, -inf
      %v8196 = vmax.f32 %v8194, %v8195
      %v8197 = vsel %vm6967, %v5474, -inf
      %v8198 = vmax.f32 %v8196, %v8197
      %v8199 = vsel %vm6967, %v5477, -inf
      %v8200 = vmax.f32 %v8198, %v8199
      %v8201 = vrot.slane %v8200, 4
      %v8202 = vmax.f32 %v8200, %v8201
      %v8203 = vrot.slane %v8202, 2
      %v8204 = vmax.f32 %v8202, %v8203
      %v8205 = vrot.slane %v8204, 1
      %v8206 = vmax.f32 %v8204, %v8205
      %v8207 = vsel %vm6967, %v5480, -inf
      %v8208 = vsel %vm6967, %v5483, -inf
      %v8209 = vmax.f32 %v8207, %v8208
      %v8210 = vsel %vm6967, %v5486, -inf
      %v8211 = vmax.f32 %v8209, %v8210
      %v8212 = vsel %vm6967, %v5489, -inf
      %v8213 = vmax.f32 %v8211, %v8212
      %v8214 = vsel %vm6967, %v5492, -inf
      %v8215 = vmax.f32 %v8213, %v8214
      %v8216 = vsel %vm6967, %v5495, -inf
      %v8217 = vmax.f32 %v8215, %v8216
      %v8218 = vsel %vm6967, %v5498, -inf
      %v8219 = vmax.f32 %v8217, %v8218
      %v8220 = vsel %vm6967, %v5501, -inf
      %v8221 = vmax.f32 %v8219, %v8220
      %v8222 = vrot.slane %v8221, 4
      %v8223 = vmax.f32 %v8221, %v8222
      %v8224 = vrot.slane %v8223, 2
      %v8225 = vmax.f32 %v8223, %v8224
      %v8226 = vrot.slane %v8225, 1
      %v8227 = vmax.f32 %v8225, %v8226
      %v8228 = vsel %vm6967, %v5504, -inf
      %v8229 = vsel %vm6967, %v5507, -inf
      %v8230 = vmax.f32 %v8228, %v8229
      %v8231 = vsel %vm6967, %v5510, -inf
      %v8232 = vmax.f32 %v8230, %v8231
      %v8233 = vsel %vm6967, %v5513, -inf
      %v8234 = vmax.f32 %v8232, %v8233
      %v8235 = vsel %vm6967, %v5516, -inf
      %v8236 = vmax.f32 %v8234, %v8235
      %v8237 = vsel %vm6967, %v5519, -inf
      %v8238 = vmax.f32 %v8236, %v8237
      %v8239 = vsel %vm6967, %v5522, -inf
      %v8240 = vmax.f32 %v8238, %v8239
      %v8241 = vsel %vm6967, %v5525, -inf
      %v8242 = vmax.f32 %v8240, %v8241
      %v8243 = vrot.slane %v8242, 4
      %v8244 = vmax.f32 %v8242, %v8243
      %v8245 = vrot.slane %v8244, 2
      %v8246 = vmax.f32 %v8244, %v8245
      %v8247 = vrot.slane %v8246, 1
      %v8248 = vmax.f32 %v8246, %v8247
      %v8249 = vsel %vm6967, %v5528, -inf
      %v8250 = vsel %vm6967, %v5531, -inf
      %v8251 = vmax.f32 %v8249, %v8250
      %v8252 = vsel %vm6967, %v5534, -inf
      %v8253 = vmax.f32 %v8251, %v8252
      %v8254 = vsel %vm6967, %v5537, -inf
      %v8255 = vmax.f32 %v8253, %v8254
      %v8256 = vsel %vm6967, %v5540, -inf
      %v8257 = vmax.f32 %v8255, %v8256
      %v8258 = vsel %vm6967, %v5543, -inf
      %v8259 = vmax.f32 %v8257, %v8258
      %v8260 = vsel %vm6967, %v5546, -inf
      %v8261 = vmax.f32 %v8259, %v8260
      %v8262 = vsel %vm6967, %v5549, -inf
      %v8263 = vmax.f32 %v8261, %v8262
      %v8264 = vrot.slane %v8263, 4
      %v8265 = vmax.f32 %v8263, %v8264
      %v8266 = vrot.slane %v8265, 2
      %v8267 = vmax.f32 %v8265, %v8266
      %v8268 = vrot.slane %v8267, 1
      %v8269 = vmax.f32 %v8267, %v8268
      %v8270 = vsel %vm6967, %v5552, -inf
      %v8271 = vsel %vm6967, %v5555, -inf
      %v8272 = vmax.f32 %v8270, %v8271
      %v8273 = vsel %vm6967, %v5558, -inf
      %v8274 = vmax.f32 %v8272, %v8273
      %v8275 = vsel %vm6967, %v5561, -inf
      %v8276 = vmax.f32 %v8274, %v8275
      %v8277 = vsel %vm6967, %v5564, -inf
      %v8278 = vmax.f32 %v8276, %v8277
      %v8279 = vsel %vm6967, %v5567, -inf
      %v8280 = vmax.f32 %v8278, %v8279
      %v8281 = vsel %vm6967, %v5570, -inf
      %v8282 = vmax.f32 %v8280, %v8281
      %v8283 = vsel %vm6967, %v5573, -inf
      %v8284 = vmax.f32 %v8282, %v8283
      %v8285 = vrot.slane %v8284, 4
      %v8286 = vmax.f32 %v8284, %v8285
      %v8287 = vrot.slane %v8286, 2
      %v8288 = vmax.f32 %v8286, %v8287
      %v8289 = vrot.slane %v8288, 1
      %v8290 = vmax.f32 %v8288, %v8289
      %v8291 = vsel %vm6967, %v5576, -inf
      %v8292 = vsel %vm6967, %v5579, -inf
      %v8293 = vmax.f32 %v8291, %v8292
      %v8294 = vsel %vm6967, %v5582, -inf
      %v8295 = vmax.f32 %v8293, %v8294
      %v8296 = vsel %vm6967, %v5585, -inf
      %v8297 = vmax.f32 %v8295, %v8296
      %v8298 = vsel %vm6967, %v5588, -inf
      %v8299 = vmax.f32 %v8297, %v8298
      %v8300 = vsel %vm6967, %v5591, -inf
      %v8301 = vmax.f32 %v8299, %v8300
      %v8302 = vsel %vm6967, %v5594, -inf
      %v8303 = vmax.f32 %v8301, %v8302
      %v8304 = vsel %vm6967, %v5597, -inf
      %v8305 = vmax.f32 %v8303, %v8304
      %v8306 = vrot.slane %v8305, 4
      %v8307 = vmax.f32 %v8305, %v8306
      %v8308 = vrot.slane %v8307, 2
      %v8309 = vmax.f32 %v8307, %v8308
      %v8310 = vrot.slane %v8309, 1
      %v8311 = vmax.f32 %v8309, %v8310
      %v8312 = vsel %vm6967, %v5600, -inf
      %v8313 = vsel %vm6967, %v5603, -inf
      %v8314 = vmax.f32 %v8312, %v8313
      %v8315 = vsel %vm6967, %v5606, -inf
      %v8316 = vmax.f32 %v8314, %v8315
      %v8317 = vsel %vm6967, %v5609, -inf
      %v8318 = vmax.f32 %v8316, %v8317
      %v8319 = vsel %vm6967, %v5612, -inf
      %v8320 = vmax.f32 %v8318, %v8319
      %v8321 = vsel %vm6967, %v5615, -inf
      %v8322 = vmax.f32 %v8320, %v8321
      %v8323 = vsel %vm6967, %v5618, -inf
      %v8324 = vmax.f32 %v8322, %v8323
      %v8325 = vsel %vm6967, %v5621, -inf
      %v8326 = vmax.f32 %v8324, %v8325
      %v8327 = vrot.slane %v8326, 4
      %v8328 = vmax.f32 %v8326, %v8327
      %v8329 = vrot.slane %v8328, 2
      %v8330 = vmax.f32 %v8328, %v8329
      %v8331 = vrot.slane %v8330, 1
      %v8332 = vmax.f32 %v8330, %v8331
      %v8333 = vsel %vm6967, %v5624, -inf
      %v8334 = vsel %vm6967, %v5627, -inf
      %v8335 = vmax.f32 %v8333, %v8334
      %v8336 = vsel %vm6967, %v5630, -inf
      %v8337 = vmax.f32 %v8335, %v8336
      %v8338 = vsel %vm6967, %v5633, -inf
      %v8339 = vmax.f32 %v8337, %v8338
      %v8340 = vsel %vm6967, %v5636, -inf
      %v8341 = vmax.f32 %v8339, %v8340
      %v8342 = vsel %vm6967, %v5639, -inf
      %v8343 = vmax.f32 %v8341, %v8342
      %v8344 = vsel %vm6967, %v5642, -inf
      %v8345 = vmax.f32 %v8343, %v8344
      %v8346 = vsel %vm6967, %v5645, -inf
      %v8347 = vmax.f32 %v8345, %v8346
      %v8348 = vrot.slane %v8347, 4
      %v8349 = vmax.f32 %v8347, %v8348
      %v8350 = vrot.slane %v8349, 2
      %v8351 = vmax.f32 %v8349, %v8350
      %v8352 = vrot.slane %v8351, 1
      %v8353 = vmax.f32 %v8351, %v8352
      %v8354 = vsel %vm6967, %v5648, -inf
      %v8355 = vsel %vm6967, %v5651, -inf
      %v8356 = vmax.f32 %v8354, %v8355
      %v8357 = vsel %vm6967, %v5654, -inf
      %v8358 = vmax.f32 %v8356, %v8357
      %v8359 = vsel %vm6967, %v5657, -inf
      %v8360 = vmax.f32 %v8358, %v8359
      %v8361 = vsel %vm6967, %v5660, -inf
      %v8362 = vmax.f32 %v8360, %v8361
      %v8363 = vsel %vm6967, %v5663, -inf
      %v8364 = vmax.f32 %v8362, %v8363
      %v8365 = vsel %vm6967, %v5666, -inf
      %v8366 = vmax.f32 %v8364, %v8365
      %v8367 = vsel %vm6967, %v5669, -inf
      %v8368 = vmax.f32 %v8366, %v8367
      %v8369 = vrot.slane %v8368, 4
      %v8370 = vmax.f32 %v8368, %v8369
      %v8371 = vrot.slane %v8370, 2
      %v8372 = vmax.f32 %v8370, %v8371
      %v8373 = vrot.slane %v8372, 1
      %v8374 = vmax.f32 %v8372, %v8373
      %v8375 = vsel %vm6967, %v5672, -inf
      %v8376 = vsel %vm6967, %v5675, -inf
      %v8377 = vmax.f32 %v8375, %v8376
      %v8378 = vsel %vm6967, %v5678, -inf
      %v8379 = vmax.f32 %v8377, %v8378
      %v8380 = vsel %vm6967, %v5681, -inf
      %v8381 = vmax.f32 %v8379, %v8380
      %v8382 = vsel %vm6967, %v5684, -inf
      %v8383 = vmax.f32 %v8381, %v8382
      %v8384 = vsel %vm6967, %v5687, -inf
      %v8385 = vmax.f32 %v8383, %v8384
      %v8386 = vsel %vm6967, %v5690, -inf
      %v8387 = vmax.f32 %v8385, %v8386
      %v8388 = vsel %vm6967, %v5693, -inf
      %v8389 = vmax.f32 %v8387, %v8388
      %v8390 = vrot.slane %v8389, 4
      %v8391 = vmax.f32 %v8389, %v8390
      %v8392 = vrot.slane %v8391, 2
      %v8393 = vmax.f32 %v8391, %v8392
      %v8394 = vrot.slane %v8393, 1
      %v8395 = vmax.f32 %v8393, %v8394
      %v8396 = vsel %vm6967, %v5696, -inf
      %v8397 = vsel %vm6967, %v5699, -inf
      %v8398 = vmax.f32 %v8396, %v8397
      %v8399 = vsel %vm6967, %v5702, -inf
      %v8400 = vmax.f32 %v8398, %v8399
      %v8401 = vsel %vm6967, %v5705, -inf
      %v8402 = vmax.f32 %v8400, %v8401
      %v8403 = vsel %vm6967, %v5708, -inf
      %v8404 = vmax.f32 %v8402, %v8403
      %v8405 = vsel %vm6967, %v5711, -inf
      %v8406 = vmax.f32 %v8404, %v8405
      %v8407 = vsel %vm6967, %v5714, -inf
      %v8408 = vmax.f32 %v8406, %v8407
      %v8409 = vsel %vm6967, %v5717, -inf
      %v8410 = vmax.f32 %v8408, %v8409
      %v8411 = vrot.slane %v8410, 4
      %v8412 = vmax.f32 %v8410, %v8411
      %v8413 = vrot.slane %v8412, 2
      %v8414 = vmax.f32 %v8412, %v8413
      %v8415 = vrot.slane %v8414, 1
      %v8416 = vmax.f32 %v8414, %v8415
      %v8417 = vsel %vm6967, %v5720, -inf
      %v8418 = vsel %vm6967, %v5723, -inf
      %v8419 = vmax.f32 %v8417, %v8418
      %v8420 = vsel %vm6967, %v5726, -inf
      %v8421 = vmax.f32 %v8419, %v8420
      %v8422 = vsel %vm6967, %v5729, -inf
      %v8423 = vmax.f32 %v8421, %v8422
      %v8424 = vsel %vm6967, %v5732, -inf
      %v8425 = vmax.f32 %v8423, %v8424
      %v8426 = vsel %vm6967, %v5735, -inf
      %v8427 = vmax.f32 %v8425, %v8426
      %v8428 = vsel %vm6967, %v5738, -inf
      %v8429 = vmax.f32 %v8427, %v8428
      %v8430 = vsel %vm6967, %v5741, -inf
      %v8431 = vmax.f32 %v8429, %v8430
      %v8432 = vrot.slane %v8431, 4
      %v8433 = vmax.f32 %v8431, %v8432
      %v8434 = vrot.slane %v8433, 2
      %v8435 = vmax.f32 %v8433, %v8434
      %v8436 = vrot.slane %v8435, 1
      %v8437 = vmax.f32 %v8435, %v8436
      %v8438 = vsel %vm6967, %v5744, -inf
      %v8439 = vsel %vm6967, %v5747, -inf
      %v8440 = vmax.f32 %v8438, %v8439
      %v8441 = vsel %vm6967, %v5750, -inf
      %v8442 = vmax.f32 %v8440, %v8441
      %v8443 = vsel %vm6967, %v5753, -inf
      %v8444 = vmax.f32 %v8442, %v8443
      %v8445 = vsel %vm6967, %v5756, -inf
      %v8446 = vmax.f32 %v8444, %v8445
      %v8447 = vsel %vm6967, %v5759, -inf
      %v8448 = vmax.f32 %v8446, %v8447
      %v8449 = vsel %vm6967, %v5762, -inf
      %v8450 = vmax.f32 %v8448, %v8449
      %v8451 = vsel %vm6967, %v5765, -inf
      %v8452 = vmax.f32 %v8450, %v8451
      %v8453 = vrot.slane %v8452, 4
      %v8454 = vmax.f32 %v8452, %v8453
      %v8455 = vrot.slane %v8454, 2
      %v8456 = vmax.f32 %v8454, %v8455
      %v8457 = vrot.slane %v8456, 1
      %v8458 = vmax.f32 %v8456, %v8457
      %v8459 = vsel %vm6967, %v5768, -inf
      %v8460 = vsel %vm6967, %v5771, -inf
      %v8461 = vmax.f32 %v8459, %v8460
      %v8462 = vsel %vm6967, %v5774, -inf
      %v8463 = vmax.f32 %v8461, %v8462
      %v8464 = vsel %vm6967, %v5777, -inf
      %v8465 = vmax.f32 %v8463, %v8464
      %v8466 = vsel %vm6967, %v5780, -inf
      %v8467 = vmax.f32 %v8465, %v8466
      %v8468 = vsel %vm6967, %v5783, -inf
      %v8469 = vmax.f32 %v8467, %v8468
      %v8470 = vsel %vm6967, %v5786, -inf
      %v8471 = vmax.f32 %v8469, %v8470
      %v8472 = vsel %vm6967, %v5789, -inf
      %v8473 = vmax.f32 %v8471, %v8472
      %v8474 = vrot.slane %v8473, 4
      %v8475 = vmax.f32 %v8473, %v8474
      %v8476 = vrot.slane %v8475, 2
      %v8477 = vmax.f32 %v8475, %v8476
      %v8478 = vrot.slane %v8477, 1
      %v8479 = vmax.f32 %v8477, %v8478
      %v8480 = vsel %vm6967, %v5792, -inf
      %v8481 = vsel %vm6967, %v5795, -inf
      %v8482 = vmax.f32 %v8480, %v8481
      %v8483 = vsel %vm6967, %v5798, -inf
      %v8484 = vmax.f32 %v8482, %v8483
      %v8485 = vsel %vm6967, %v5801, -inf
      %v8486 = vmax.f32 %v8484, %v8485
      %v8487 = vsel %vm6967, %v5804, -inf
      %v8488 = vmax.f32 %v8486, %v8487
      %v8489 = vsel %vm6967, %v5807, -inf
      %v8490 = vmax.f32 %v8488, %v8489
      %v8491 = vsel %vm6967, %v5810, -inf
      %v8492 = vmax.f32 %v8490, %v8491
      %v8493 = vsel %vm6967, %v5813, -inf
      %v8494 = vmax.f32 %v8492, %v8493
      %v8495 = vrot.slane %v8494, 4
      %v8496 = vmax.f32 %v8494, %v8495
      %v8497 = vrot.slane %v8496, 2
      %v8498 = vmax.f32 %v8496, %v8497
      %v8499 = vrot.slane %v8498, 1
      %v8500 = vmax.f32 %v8498, %v8499
      %v8501 = vsel %vm6967, %v5816, -inf
      %v8502 = vsel %vm6967, %v5819, -inf
      %v8503 = vmax.f32 %v8501, %v8502
      %v8504 = vsel %vm6967, %v5822, -inf
      %v8505 = vmax.f32 %v8503, %v8504
      %v8506 = vsel %vm6967, %v5825, -inf
      %v8507 = vmax.f32 %v8505, %v8506
      %v8508 = vsel %vm6967, %v5828, -inf
      %v8509 = vmax.f32 %v8507, %v8508
      %v8510 = vsel %vm6967, %v5831, -inf
      %v8511 = vmax.f32 %v8509, %v8510
      %v8512 = vsel %vm6967, %v5834, -inf
      %v8513 = vmax.f32 %v8511, %v8512
      %v8514 = vsel %vm6967, %v5837, -inf
      %v8515 = vmax.f32 %v8513, %v8514
      %v8516 = vrot.slane %v8515, 4
      %v8517 = vmax.f32 %v8515, %v8516
      %v8518 = vrot.slane %v8517, 2
      %v8519 = vmax.f32 %v8517, %v8518
      %v8520 = vrot.slane %v8519, 1
      %v8521 = vmax.f32 %v8519, %v8520
      %v8522 = vsel %vm6967, %v5840, -inf
      %v8523 = vsel %vm6967, %v5843, -inf
      %v8524 = vmax.f32 %v8522, %v8523
      %v8525 = vsel %vm6967, %v5846, -inf
      %v8526 = vmax.f32 %v8524, %v8525
      %v8527 = vsel %vm6967, %v5849, -inf
      %v8528 = vmax.f32 %v8526, %v8527
      %v8529 = vsel %vm6967, %v5852, -inf
      %v8530 = vmax.f32 %v8528, %v8529
      %v8531 = vsel %vm6967, %v5855, -inf
      %v8532 = vmax.f32 %v8530, %v8531
      %v8533 = vsel %vm6967, %v5858, -inf
      %v8534 = vmax.f32 %v8532, %v8533
      %v8535 = vsel %vm6967, %v5861, -inf
      %v8536 = vmax.f32 %v8534, %v8535
      %v8537 = vrot.slane %v8536, 4
      %v8538 = vmax.f32 %v8536, %v8537
      %v8539 = vrot.slane %v8538, 2
      %v8540 = vmax.f32 %v8538, %v8539
      %v8541 = vrot.slane %v8540, 1
      %v8542 = vmax.f32 %v8540, %v8541
      %v8543 = vsel %vm6967, %v5864, -inf
      %v8544 = vsel %vm6967, %v5867, -inf
      %v8545 = vmax.f32 %v8543, %v8544
      %v8546 = vsel %vm6967, %v5870, -inf
      %v8547 = vmax.f32 %v8545, %v8546
      %v8548 = vsel %vm6967, %v5873, -inf
      %v8549 = vmax.f32 %v8547, %v8548
      %v8550 = vsel %vm6967, %v5876, -inf
      %v8551 = vmax.f32 %v8549, %v8550
      %v8552 = vsel %vm6967, %v5879, -inf
      %v8553 = vmax.f32 %v8551, %v8552
      %v8554 = vsel %vm6967, %v5882, -inf
      %v8555 = vmax.f32 %v8553, %v8554
      %v8556 = vsel %vm6967, %v5885, -inf
      %v8557 = vmax.f32 %v8555, %v8556
      %v8558 = vrot.slane %v8557, 4
      %v8559 = vmax.f32 %v8557, %v8558
      %v8560 = vrot.slane %v8559, 2
      %v8561 = vmax.f32 %v8559, %v8560
      %v8562 = vrot.slane %v8561, 1
      %v8563 = vmax.f32 %v8561, %v8562
      %v8564 = vsel %vm6967, %v5888, -inf
      %v8565 = vsel %vm6967, %v5891, -inf
      %v8566 = vmax.f32 %v8564, %v8565
      %v8567 = vsel %vm6967, %v5894, -inf
      %v8568 = vmax.f32 %v8566, %v8567
      %v8569 = vsel %vm6967, %v5897, -inf
      %v8570 = vmax.f32 %v8568, %v8569
      %v8571 = vsel %vm6967, %v5900, -inf
      %v8572 = vmax.f32 %v8570, %v8571
      %v8573 = vsel %vm6967, %v5903, -inf
      %v8574 = vmax.f32 %v8572, %v8573
      %v8575 = vsel %vm6967, %v5906, -inf
      %v8576 = vmax.f32 %v8574, %v8575
      %v8577 = vsel %vm6967, %v5909, -inf
      %v8578 = vmax.f32 %v8576, %v8577
      %v8579 = vrot.slane %v8578, 4
      %v8580 = vmax.f32 %v8578, %v8579
      %v8581 = vrot.slane %v8580, 2
      %v8582 = vmax.f32 %v8580, %v8581
      %v8583 = vrot.slane %v8582, 1
      %v8584 = vmax.f32 %v8582, %v8583
      %v8585 = vsel %vm6967, %v5912, -inf
      %v8586 = vsel %vm6967, %v5915, -inf
      %v8587 = vmax.f32 %v8585, %v8586
      %v8588 = vsel %vm6967, %v5918, -inf
      %v8589 = vmax.f32 %v8587, %v8588
      %v8590 = vsel %vm6967, %v5921, -inf
      %v8591 = vmax.f32 %v8589, %v8590
      %v8592 = vsel %vm6967, %v5924, -inf
      %v8593 = vmax.f32 %v8591, %v8592
      %v8594 = vsel %vm6967, %v5927, -inf
      %v8595 = vmax.f32 %v8593, %v8594
      %v8596 = vsel %vm6967, %v5930, -inf
      %v8597 = vmax.f32 %v8595, %v8596
      %v8598 = vsel %vm6967, %v5933, -inf
      %v8599 = vmax.f32 %v8597, %v8598
      %v8600 = vrot.slane %v8599, 4
      %v8601 = vmax.f32 %v8599, %v8600
      %v8602 = vrot.slane %v8601, 2
      %v8603 = vmax.f32 %v8601, %v8602
      %v8604 = vrot.slane %v8603, 1
      %v8605 = vmax.f32 %v8603, %v8604
      %v8606 = vsel %vm6967, %v5936, -inf
      %v8607 = vsel %vm6967, %v5939, -inf
      %v8608 = vmax.f32 %v8606, %v8607
      %v8609 = vsel %vm6967, %v5942, -inf
      %v8610 = vmax.f32 %v8608, %v8609
      %v8611 = vsel %vm6967, %v5945, -inf
      %v8612 = vmax.f32 %v8610, %v8611
      %v8613 = vsel %vm6967, %v5948, -inf
      %v8614 = vmax.f32 %v8612, %v8613
      %v8615 = vsel %vm6967, %v5951, -inf
      %v8616 = vmax.f32 %v8614, %v8615
      %v8617 = vsel %vm6967, %v5954, -inf
      %v8618 = vmax.f32 %v8616, %v8617
      %v8619 = vsel %vm6967, %v5957, -inf
      %v8620 = vmax.f32 %v8618, %v8619
      %v8621 = vrot.slane %v8620, 4
      %v8622 = vmax.f32 %v8620, %v8621
      %v8623 = vrot.slane %v8622, 2
      %v8624 = vmax.f32 %v8622, %v8623
      %v8625 = vrot.slane %v8624, 1
      %v8626 = vmax.f32 %v8624, %v8625
      %v8627 = vsel %vm6967, %v5960, -inf
      %v8628 = vsel %vm6967, %v5963, -inf
      %v8629 = vmax.f32 %v8627, %v8628
      %v8630 = vsel %vm6967, %v5966, -inf
      %v8631 = vmax.f32 %v8629, %v8630
      %v8632 = vsel %vm6967, %v5969, -inf
      %v8633 = vmax.f32 %v8631, %v8632
      %v8634 = vsel %vm6967, %v5972, -inf
      %v8635 = vmax.f32 %v8633, %v8634
      %v8636 = vsel %vm6967, %v5975, -inf
      %v8637 = vmax.f32 %v8635, %v8636
      %v8638 = vsel %vm6967, %v5978, -inf
      %v8639 = vmax.f32 %v8637, %v8638
      %v8640 = vsel %vm6967, %v5981, -inf
      %v8641 = vmax.f32 %v8639, %v8640
      %v8642 = vrot.slane %v8641, 4
      %v8643 = vmax.f32 %v8641, %v8642
      %v8644 = vrot.slane %v8643, 2
      %v8645 = vmax.f32 %v8643, %v8644
      %v8646 = vrot.slane %v8645, 1
      %v8647 = vmax.f32 %v8645, %v8646
      %v8648 = vsel %vm6967, %v5984, -inf
      %v8649 = vsel %vm6967, %v5987, -inf
      %v8650 = vmax.f32 %v8648, %v8649
      %v8651 = vsel %vm6967, %v5990, -inf
      %v8652 = vmax.f32 %v8650, %v8651
      %v8653 = vsel %vm6967, %v5993, -inf
      %v8654 = vmax.f32 %v8652, %v8653
      %v8655 = vsel %vm6967, %v5996, -inf
      %v8656 = vmax.f32 %v8654, %v8655
      %v8657 = vsel %vm6967, %v5999, -inf
      %v8658 = vmax.f32 %v8656, %v8657
      %v8659 = vsel %vm6967, %v6002, -inf
      %v8660 = vmax.f32 %v8658, %v8659
      %v8661 = vsel %vm6967, %v6005, -inf
      %v8662 = vmax.f32 %v8660, %v8661
      %v8663 = vrot.slane %v8662, 4
      %v8664 = vmax.f32 %v8662, %v8663
      %v8665 = vrot.slane %v8664, 2
      %v8666 = vmax.f32 %v8664, %v8665
      %v8667 = vrot.slane %v8666, 1
      %v8668 = vmax.f32 %v8666, %v8667
      %v8669 = vsel %vm6967, %v6008, -inf
      %v8670 = vsel %vm6967, %v6011, -inf
      %v8671 = vmax.f32 %v8669, %v8670
      %v8672 = vsel %vm6967, %v6014, -inf
      %v8673 = vmax.f32 %v8671, %v8672
      %v8674 = vsel %vm6967, %v6017, -inf
      %v8675 = vmax.f32 %v8673, %v8674
      %v8676 = vsel %vm6967, %v6020, -inf
      %v8677 = vmax.f32 %v8675, %v8676
      %v8678 = vsel %vm6967, %v6023, -inf
      %v8679 = vmax.f32 %v8677, %v8678
      %v8680 = vsel %vm6967, %v6026, -inf
      %v8681 = vmax.f32 %v8679, %v8680
      %v8682 = vsel %vm6967, %v6029, -inf
      %v8683 = vmax.f32 %v8681, %v8682
      %v8684 = vrot.slane %v8683, 4
      %v8685 = vmax.f32 %v8683, %v8684
      %v8686 = vrot.slane %v8685, 2
      %v8687 = vmax.f32 %v8685, %v8686
      %v8688 = vrot.slane %v8687, 1
      %v8689 = vmax.f32 %v8687, %v8688
      %v8690 = vsel %vm6967, %v6032, -inf
      %v8691 = vsel %vm6967, %v6035, -inf
      %v8692 = vmax.f32 %v8690, %v8691
      %v8693 = vsel %vm6967, %v6038, -inf
      %v8694 = vmax.f32 %v8692, %v8693
      %v8695 = vsel %vm6967, %v6041, -inf
      %v8696 = vmax.f32 %v8694, %v8695
      %v8697 = vsel %vm6967, %v6044, -inf
      %v8698 = vmax.f32 %v8696, %v8697
      %v8699 = vsel %vm6967, %v6047, -inf
      %v8700 = vmax.f32 %v8698, %v8699
      %v8701 = vsel %vm6967, %v6050, -inf
      %v8702 = vmax.f32 %v8700, %v8701
      %v8703 = vsel %vm6967, %v6053, -inf
      %v8704 = vmax.f32 %v8702, %v8703
      %v8705 = vrot.slane %v8704, 4
      %v8706 = vmax.f32 %v8704, %v8705
      %v8707 = vrot.slane %v8706, 2
      %v8708 = vmax.f32 %v8706, %v8707
      %v8709 = vrot.slane %v8708, 1
      %v8710 = vmax.f32 %v8708, %v8709
      %v8711 = vsel %vm6967, %v6056, -inf
      %v8712 = vsel %vm6967, %v6059, -inf
      %v8713 = vmax.f32 %v8711, %v8712
      %v8714 = vsel %vm6967, %v6062, -inf
      %v8715 = vmax.f32 %v8713, %v8714
      %v8716 = vsel %vm6967, %v6065, -inf
      %v8717 = vmax.f32 %v8715, %v8716
      %v8718 = vsel %vm6967, %v6068, -inf
      %v8719 = vmax.f32 %v8717, %v8718
      %v8720 = vsel %vm6967, %v6071, -inf
      %v8721 = vmax.f32 %v8719, %v8720
      %v8722 = vsel %vm6967, %v6074, -inf
      %v8723 = vmax.f32 %v8721, %v8722
      %v8724 = vsel %vm6967, %v6077, -inf
      %v8725 = vmax.f32 %v8723, %v8724
      %v8726 = vrot.slane %v8725, 4
      %v8727 = vmax.f32 %v8725, %v8726
      %v8728 = vrot.slane %v8727, 2
      %v8729 = vmax.f32 %v8727, %v8728
      %v8730 = vrot.slane %v8729, 1
      %v8731 = vmax.f32 %v8729, %v8730
      %v8732 = vsel %vm6967, %v6080, -inf
      %v8733 = vsel %vm6967, %v6083, -inf
      %v8734 = vmax.f32 %v8732, %v8733
      %v8735 = vsel %vm6967, %v6086, -inf
      %v8736 = vmax.f32 %v8734, %v8735
      %v8737 = vsel %vm6967, %v6089, -inf
      %v8738 = vmax.f32 %v8736, %v8737
      %v8739 = vsel %vm6967, %v6092, -inf
      %v8740 = vmax.f32 %v8738, %v8739
      %v8741 = vsel %vm6967, %v6095, -inf
      %v8742 = vmax.f32 %v8740, %v8741
      %v8743 = vsel %vm6967, %v6098, -inf
      %v8744 = vmax.f32 %v8742, %v8743
      %v8745 = vsel %vm6967, %v6101, -inf
      %v8746 = vmax.f32 %v8744, %v8745
      %v8747 = vrot.slane %v8746, 4
      %v8748 = vmax.f32 %v8746, %v8747
      %v8749 = vrot.slane %v8748, 2
      %v8750 = vmax.f32 %v8748, %v8749
      %v8751 = vrot.slane %v8750, 1
      %v8752 = vmax.f32 %v8750, %v8751
      %v8753 = vsel %vm6967, %v6104, -inf
      %v8754 = vsel %vm6967, %v6107, -inf
      %v8755 = vmax.f32 %v8753, %v8754
      %v8756 = vsel %vm6967, %v6110, -inf
      %v8757 = vmax.f32 %v8755, %v8756
      %v8758 = vsel %vm6967, %v6113, -inf
      %v8759 = vmax.f32 %v8757, %v8758
      %v8760 = vsel %vm6967, %v6116, -inf
      %v8761 = vmax.f32 %v8759, %v8760
      %v8762 = vsel %vm6967, %v6119, -inf
      %v8763 = vmax.f32 %v8761, %v8762
      %v8764 = vsel %vm6967, %v6122, -inf
      %v8765 = vmax.f32 %v8763, %v8764
      %v8766 = vsel %vm6967, %v6125, -inf
      %v8767 = vmax.f32 %v8765, %v8766
      %v8768 = vrot.slane %v8767, 4
      %v8769 = vmax.f32 %v8767, %v8768
      %v8770 = vrot.slane %v8769, 2
      %v8771 = vmax.f32 %v8769, %v8770
      %v8772 = vrot.slane %v8771, 1
      %v8773 = vmax.f32 %v8771, %v8772
      %v8774 = vsel %vm6967, %v6128, -inf
      %v8775 = vsel %vm6967, %v6131, -inf
      %v8776 = vmax.f32 %v8774, %v8775
      %v8777 = vsel %vm6967, %v6134, -inf
      %v8778 = vmax.f32 %v8776, %v8777
      %v8779 = vsel %vm6967, %v6137, -inf
      %v8780 = vmax.f32 %v8778, %v8779
      %v8781 = vsel %vm6967, %v6140, -inf
      %v8782 = vmax.f32 %v8780, %v8781
      %v8783 = vsel %vm6967, %v6143, -inf
      %v8784 = vmax.f32 %v8782, %v8783
      %v8785 = vsel %vm6967, %v6146, -inf
      %v8786 = vmax.f32 %v8784, %v8785
      %v8787 = vsel %vm6967, %v6149, -inf
      %v8788 = vmax.f32 %v8786, %v8787
      %v8789 = vrot.slane %v8788, 4
      %v8790 = vmax.f32 %v8788, %v8789
      %v8791 = vrot.slane %v8790, 2
      %v8792 = vmax.f32 %v8790, %v8791
      %v8793 = vrot.slane %v8792, 1
      %v8794 = vmax.f32 %v8792, %v8793
      %v8795 = vsel %vm6967, %v6152, -inf
      %v8796 = vsel %vm6967, %v6155, -inf
      %v8797 = vmax.f32 %v8795, %v8796
      %v8798 = vsel %vm6967, %v6158, -inf
      %v8799 = vmax.f32 %v8797, %v8798
      %v8800 = vsel %vm6967, %v6161, -inf
      %v8801 = vmax.f32 %v8799, %v8800
      %v8802 = vsel %vm6967, %v6164, -inf
      %v8803 = vmax.f32 %v8801, %v8802
      %v8804 = vsel %vm6967, %v6167, -inf
      %v8805 = vmax.f32 %v8803, %v8804
      %v8806 = vsel %vm6967, %v6170, -inf
      %v8807 = vmax.f32 %v8805, %v8806
      %v8808 = vsel %vm6967, %v6173, -inf
      %v8809 = vmax.f32 %v8807, %v8808
      %v8810 = vrot.slane %v8809, 4
      %v8811 = vmax.f32 %v8809, %v8810
      %v8812 = vrot.slane %v8811, 2
      %v8813 = vmax.f32 %v8811, %v8812
      %v8814 = vrot.slane %v8813, 1
      %v8815 = vmax.f32 %v8813, %v8814
      %v8816 = vsel %vm6967, %v6176, -inf
      %v8817 = vsel %vm6967, %v6179, -inf
      %v8818 = vmax.f32 %v8816, %v8817
      %v8819 = vsel %vm6967, %v6182, -inf
      %v8820 = vmax.f32 %v8818, %v8819
      %v8821 = vsel %vm6967, %v6185, -inf
      %v8822 = vmax.f32 %v8820, %v8821
      %v8823 = vsel %vm6967, %v6188, -inf
      %v8824 = vmax.f32 %v8822, %v8823
      %v8825 = vsel %vm6967, %v6191, -inf
      %v8826 = vmax.f32 %v8824, %v8825
      %v8827 = vsel %vm6967, %v6194, -inf
      %v8828 = vmax.f32 %v8826, %v8827
      %v8829 = vsel %vm6967, %v6197, -inf
      %v8830 = vmax.f32 %v8828, %v8829
      %v8831 = vrot.slane %v8830, 4
      %v8832 = vmax.f32 %v8830, %v8831
      %v8833 = vrot.slane %v8832, 2
      %v8834 = vmax.f32 %v8832, %v8833
      %v8835 = vrot.slane %v8834, 1
      %v8836 = vmax.f32 %v8834, %v8835
      %v8837 = vsel %vm6967, %v6200, -inf
      %v8838 = vsel %vm6967, %v6203, -inf
      %v8839 = vmax.f32 %v8837, %v8838
      %v8840 = vsel %vm6967, %v6206, -inf
      %v8841 = vmax.f32 %v8839, %v8840
      %v8842 = vsel %vm6967, %v6209, -inf
      %v8843 = vmax.f32 %v8841, %v8842
      %v8844 = vsel %vm6967, %v6212, -inf
      %v8845 = vmax.f32 %v8843, %v8844
      %v8846 = vsel %vm6967, %v6215, -inf
      %v8847 = vmax.f32 %v8845, %v8846
      %v8848 = vsel %vm6967, %v6218, -inf
      %v8849 = vmax.f32 %v8847, %v8848
      %v8850 = vsel %vm6967, %v6221, -inf
      %v8851 = vmax.f32 %v8849, %v8850
      %v8852 = vrot.slane %v8851, 4
      %v8853 = vmax.f32 %v8851, %v8852
      %v8854 = vrot.slane %v8853, 2
      %v8855 = vmax.f32 %v8853, %v8854
      %v8856 = vrot.slane %v8855, 1
      %v8857 = vmax.f32 %v8855, %v8856
      %v8858 = vsel %vm6967, %v6224, -inf
      %v8859 = vsel %vm6967, %v6227, -inf
      %v8860 = vmax.f32 %v8858, %v8859
      %v8861 = vsel %vm6967, %v6230, -inf
      %v8862 = vmax.f32 %v8860, %v8861
      %v8863 = vsel %vm6967, %v6233, -inf
      %v8864 = vmax.f32 %v8862, %v8863
      %v8865 = vsel %vm6967, %v6236, -inf
      %v8866 = vmax.f32 %v8864, %v8865
      %v8867 = vsel %vm6967, %v6239, -inf
      %v8868 = vmax.f32 %v8866, %v8867
      %v8869 = vsel %vm6967, %v6242, -inf
      %v8870 = vmax.f32 %v8868, %v8869
      %v8871 = vsel %vm6967, %v6245, -inf
      %v8872 = vmax.f32 %v8870, %v8871
      %v8873 = vrot.slane %v8872, 4
      %v8874 = vmax.f32 %v8872, %v8873
      %v8875 = vrot.slane %v8874, 2
      %v8876 = vmax.f32 %v8874, %v8875
      %v8877 = vrot.slane %v8876, 1
      %v8878 = vmax.f32 %v8876, %v8877
      %v8879 = vsel %vm6967, %v6248, -inf
      %v8880 = vsel %vm6967, %v6251, -inf
      %v8881 = vmax.f32 %v8879, %v8880
      %v8882 = vsel %vm6967, %v6254, -inf
      %v8883 = vmax.f32 %v8881, %v8882
      %v8884 = vsel %vm6967, %v6257, -inf
      %v8885 = vmax.f32 %v8883, %v8884
      %v8886 = vsel %vm6967, %v6260, -inf
      %v8887 = vmax.f32 %v8885, %v8886
      %v8888 = vsel %vm6967, %v6263, -inf
      %v8889 = vmax.f32 %v8887, %v8888
      %v8890 = vsel %vm6967, %v6266, -inf
      %v8891 = vmax.f32 %v8889, %v8890
      %v8892 = vsel %vm6967, %v6269, -inf
      %v8893 = vmax.f32 %v8891, %v8892
      %v8894 = vrot.slane %v8893, 4
      %v8895 = vmax.f32 %v8893, %v8894
      %v8896 = vrot.slane %v8895, 2
      %v8897 = vmax.f32 %v8895, %v8896
      %v8898 = vrot.slane %v8897, 1
      %v8899 = vmax.f32 %v8897, %v8898
      %v8900 = vsel %vm6967, %v6272, -inf
      %v8901 = vsel %vm6967, %v6275, -inf
      %v8902 = vmax.f32 %v8900, %v8901
      %v8903 = vsel %vm6967, %v6278, -inf
      %v8904 = vmax.f32 %v8902, %v8903
      %v8905 = vsel %vm6967, %v6281, -inf
      %v8906 = vmax.f32 %v8904, %v8905
      %v8907 = vsel %vm6967, %v6284, -inf
      %v8908 = vmax.f32 %v8906, %v8907
      %v8909 = vsel %vm6967, %v6287, -inf
      %v8910 = vmax.f32 %v8908, %v8909
      %v8911 = vsel %vm6967, %v6290, -inf
      %v8912 = vmax.f32 %v8910, %v8911
      %v8913 = vsel %vm6967, %v6293, -inf
      %v8914 = vmax.f32 %v8912, %v8913
      %v8915 = vrot.slane %v8914, 4
      %v8916 = vmax.f32 %v8914, %v8915
      %v8917 = vrot.slane %v8916, 2
      %v8918 = vmax.f32 %v8916, %v8917
      %v8919 = vrot.slane %v8918, 1
      %v8920 = vmax.f32 %v8918, %v8919
      %v8921 = vsel %vm6967, %v6296, -inf
      %v8922 = vsel %vm6967, %v6299, -inf
      %v8923 = vmax.f32 %v8921, %v8922
      %v8924 = vsel %vm6967, %v6302, -inf
      %v8925 = vmax.f32 %v8923, %v8924
      %v8926 = vsel %vm6967, %v6305, -inf
      %v8927 = vmax.f32 %v8925, %v8926
      %v8928 = vsel %vm6967, %v6308, -inf
      %v8929 = vmax.f32 %v8927, %v8928
      %v8930 = vsel %vm6967, %v6311, -inf
      %v8931 = vmax.f32 %v8929, %v8930
      %v8932 = vsel %vm6967, %v6314, -inf
      %v8933 = vmax.f32 %v8931, %v8932
      %v8934 = vsel %vm6967, %v6317, -inf
      %v8935 = vmax.f32 %v8933, %v8934
      %v8936 = vrot.slane %v8935, 4
      %v8937 = vmax.f32 %v8935, %v8936
      %v8938 = vrot.slane %v8937, 2
      %v8939 = vmax.f32 %v8937, %v8938
      %v8940 = vrot.slane %v8939, 1
      %v8941 = vmax.f32 %v8939, %v8940
      %v8942 = vsel %vm6967, %v6320, -inf
      %v8943 = vsel %vm6967, %v6323, -inf
      %v8944 = vmax.f32 %v8942, %v8943
      %v8945 = vsel %vm6967, %v6326, -inf
      %v8946 = vmax.f32 %v8944, %v8945
      %v8947 = vsel %vm6967, %v6329, -inf
      %v8948 = vmax.f32 %v8946, %v8947
      %v8949 = vsel %vm6967, %v6332, -inf
      %v8950 = vmax.f32 %v8948, %v8949
      %v8951 = vsel %vm6967, %v6335, -inf
      %v8952 = vmax.f32 %v8950, %v8951
      %v8953 = vsel %vm6967, %v6338, -inf
      %v8954 = vmax.f32 %v8952, %v8953
      %v8955 = vsel %vm6967, %v6341, -inf
      %v8956 = vmax.f32 %v8954, %v8955
      %v8957 = vrot.slane %v8956, 4
      %v8958 = vmax.f32 %v8956, %v8957
      %v8959 = vrot.slane %v8958, 2
      %v8960 = vmax.f32 %v8958, %v8959
      %v8961 = vrot.slane %v8960, 1
      %v8962 = vmax.f32 %v8960, %v8961
      %v8963 = vsel %vm6967, %v6344, -inf
      %v8964 = vsel %vm6967, %v6347, -inf
      %v8965 = vmax.f32 %v8963, %v8964
      %v8966 = vsel %vm6967, %v6350, -inf
      %v8967 = vmax.f32 %v8965, %v8966
      %v8968 = vsel %vm6967, %v6353, -inf
      %v8969 = vmax.f32 %v8967, %v8968
      %v8970 = vsel %vm6967, %v6356, -inf
      %v8971 = vmax.f32 %v8969, %v8970
      %v8972 = vsel %vm6967, %v6359, -inf
      %v8973 = vmax.f32 %v8971, %v8972
      %v8974 = vsel %vm6967, %v6362, -inf
      %v8975 = vmax.f32 %v8973, %v8974
      %v8976 = vsel %vm6967, %v6365, -inf
      %v8977 = vmax.f32 %v8975, %v8976
      %v8978 = vrot.slane %v8977, 4
      %v8979 = vmax.f32 %v8977, %v8978
      %v8980 = vrot.slane %v8979, 2
      %v8981 = vmax.f32 %v8979, %v8980
      %v8982 = vrot.slane %v8981, 1
      %v8983 = vmax.f32 %v8981, %v8982
      %v8984 = vsel %vm6967, %v6368, -inf
      %v8985 = vsel %vm6967, %v6371, -inf
      %v8986 = vmax.f32 %v8984, %v8985
      %v8987 = vsel %vm6967, %v6374, -inf
      %v8988 = vmax.f32 %v8986, %v8987
      %v8989 = vsel %vm6967, %v6377, -inf
      %v8990 = vmax.f32 %v8988, %v8989
      %v8991 = vsel %vm6967, %v6380, -inf
      %v8992 = vmax.f32 %v8990, %v8991
      %v8993 = vsel %vm6967, %v6383, -inf
      %v8994 = vmax.f32 %v8992, %v8993
      %v8995 = vsel %vm6967, %v6386, -inf
      %v8996 = vmax.f32 %v8994, %v8995
      %v8997 = vsel %vm6967, %v6389, -inf
      %v8998 = vmax.f32 %v8996, %v8997
      %v8999 = vrot.slane %v8998, 4
      %v9000 = vmax.f32 %v8998, %v8999
      %v9001 = vrot.slane %v9000, 2
      %v9002 = vmax.f32 %v9000, %v9001
      %v9003 = vrot.slane %v9002, 1
      %v9004 = vmax.f32 %v9002, %v9003
      %v9005 = vsel %vm6967, %v6392, -inf
      %v9006 = vsel %vm6967, %v6395, -inf
      %v9007 = vmax.f32 %v9005, %v9006
      %v9008 = vsel %vm6967, %v6398, -inf
      %v9009 = vmax.f32 %v9007, %v9008
      %v9010 = vsel %vm6967, %v6401, -inf
      %v9011 = vmax.f32 %v9009, %v9010
      %v9012 = vsel %vm6967, %v6404, -inf
      %v9013 = vmax.f32 %v9011, %v9012
      %v9014 = vsel %vm6967, %v6407, -inf
      %v9015 = vmax.f32 %v9013, %v9014
      %v9016 = vsel %vm6967, %v6410, -inf
      %v9017 = vmax.f32 %v9015, %v9016
      %v9018 = vsel %vm6967, %v6413, -inf
      %v9019 = vmax.f32 %v9017, %v9018
      %v9020 = vrot.slane %v9019, 4
      %v9021 = vmax.f32 %v9019, %v9020
      %v9022 = vrot.slane %v9021, 2
      %v9023 = vmax.f32 %v9021, %v9022
      %v9024 = vrot.slane %v9023, 1
      %v9025 = vmax.f32 %v9023, %v9024
      %v9026 = vsel %vm6967, %v6416, -inf
      %v9027 = vsel %vm6967, %v6419, -inf
      %v9028 = vmax.f32 %v9026, %v9027
      %v9029 = vsel %vm6967, %v6422, -inf
      %v9030 = vmax.f32 %v9028, %v9029
      %v9031 = vsel %vm6967, %v6425, -inf
      %v9032 = vmax.f32 %v9030, %v9031
      %v9033 = vsel %vm6967, %v6428, -inf
      %v9034 = vmax.f32 %v9032, %v9033
      %v9035 = vsel %vm6967, %v6431, -inf
      %v9036 = vmax.f32 %v9034, %v9035
      %v9037 = vsel %vm6967, %v6434, -inf
      %v9038 = vmax.f32 %v9036, %v9037
      %v9039 = vsel %vm6967, %v6437, -inf
      %v9040 = vmax.f32 %v9038, %v9039
      %v9041 = vrot.slane %v9040, 4
      %v9042 = vmax.f32 %v9040, %v9041
      %v9043 = vrot.slane %v9042, 2
      %v9044 = vmax.f32 %v9042, %v9043
      %v9045 = vrot.slane %v9044, 1
      %v9046 = vmax.f32 %v9044, %v9045
      %v9047 = vsel %vm6967, %v6440, -inf
      %v9048 = vsel %vm6967, %v6443, -inf
      %v9049 = vmax.f32 %v9047, %v9048
      %v9050 = vsel %vm6967, %v6446, -inf
      %v9051 = vmax.f32 %v9049, %v9050
      %v9052 = vsel %vm6967, %v6449, -inf
      %v9053 = vmax.f32 %v9051, %v9052
      %v9054 = vsel %vm6967, %v6452, -inf
      %v9055 = vmax.f32 %v9053, %v9054
      %v9056 = vsel %vm6967, %v6455, -inf
      %v9057 = vmax.f32 %v9055, %v9056
      %v9058 = vsel %vm6967, %v6458, -inf
      %v9059 = vmax.f32 %v9057, %v9058
      %v9060 = vsel %vm6967, %v6461, -inf
      %v9061 = vmax.f32 %v9059, %v9060
      %v9062 = vrot.slane %v9061, 4
      %v9063 = vmax.f32 %v9061, %v9062
      %v9064 = vrot.slane %v9063, 2
      %v9065 = vmax.f32 %v9063, %v9064
      %v9066 = vrot.slane %v9065, 1
      %v9067 = vmax.f32 %v9065, %v9066
      %v9068 = vsel %vm6967, %v6464, -inf
      %v9069 = vsel %vm6967, %v6467, -inf
      %v9070 = vmax.f32 %v9068, %v9069
      %v9071 = vsel %vm6967, %v6470, -inf
      %v9072 = vmax.f32 %v9070, %v9071
      %v9073 = vsel %vm6967, %v6473, -inf
      %v9074 = vmax.f32 %v9072, %v9073
      %v9075 = vsel %vm6967, %v6476, -inf
      %v9076 = vmax.f32 %v9074, %v9075
      %v9077 = vsel %vm6967, %v6479, -inf
      %v9078 = vmax.f32 %v9076, %v9077
      %v9079 = vsel %vm6967, %v6482, -inf
      %v9080 = vmax.f32 %v9078, %v9079
      %v9081 = vsel %vm6967, %v6485, -inf
      %v9082 = vmax.f32 %v9080, %v9081
      %v9083 = vrot.slane %v9082, 4
      %v9084 = vmax.f32 %v9082, %v9083
      %v9085 = vrot.slane %v9084, 2
      %v9086 = vmax.f32 %v9084, %v9085
      %v9087 = vrot.slane %v9086, 1
      %v9088 = vmax.f32 %v9086, %v9087
      %v9089 = vsel %vm6967, %v6488, -inf
      %v9090 = vsel %vm6967, %v6491, -inf
      %v9091 = vmax.f32 %v9089, %v9090
      %v9092 = vsel %vm6967, %v6494, -inf
      %v9093 = vmax.f32 %v9091, %v9092
      %v9094 = vsel %vm6967, %v6497, -inf
      %v9095 = vmax.f32 %v9093, %v9094
      %v9096 = vsel %vm6967, %v6500, -inf
      %v9097 = vmax.f32 %v9095, %v9096
      %v9098 = vsel %vm6967, %v6503, -inf
      %v9099 = vmax.f32 %v9097, %v9098
      %v9100 = vsel %vm6967, %v6506, -inf
      %v9101 = vmax.f32 %v9099, %v9100
      %v9102 = vsel %vm6967, %v6509, -inf
      %v9103 = vmax.f32 %v9101, %v9102
      %v9104 = vrot.slane %v9103, 4
      %v9105 = vmax.f32 %v9103, %v9104
      %v9106 = vrot.slane %v9105, 2
      %v9107 = vmax.f32 %v9105, %v9106
      %v9108 = vrot.slane %v9107, 1
      %v9109 = vmax.f32 %v9107, %v9108
      %v9110 = vsel %vm6967, %v6512, -inf
      %v9111 = vsel %vm6967, %v6515, -inf
      %v9112 = vmax.f32 %v9110, %v9111
      %v9113 = vsel %vm6967, %v6518, -inf
      %v9114 = vmax.f32 %v9112, %v9113
      %v9115 = vsel %vm6967, %v6521, -inf
      %v9116 = vmax.f32 %v9114, %v9115
      %v9117 = vsel %vm6967, %v6524, -inf
      %v9118 = vmax.f32 %v9116, %v9117
      %v9119 = vsel %vm6967, %v6527, -inf
      %v9120 = vmax.f32 %v9118, %v9119
      %v9121 = vsel %vm6967, %v6530, -inf
      %v9122 = vmax.f32 %v9120, %v9121
      %v9123 = vsel %vm6967, %v6533, -inf
      %v9124 = vmax.f32 %v9122, %v9123
      %v9125 = vrot.slane %v9124, 4
      %v9126 = vmax.f32 %v9124, %v9125
      %v9127 = vrot.slane %v9126, 2
      %v9128 = vmax.f32 %v9126, %v9127
      %v9129 = vrot.slane %v9128, 1
      %v9130 = vmax.f32 %v9128, %v9129
      %v9131 = vsel %vm6967, %v6536, -inf
      %v9132 = vsel %vm6967, %v6539, -inf
      %v9133 = vmax.f32 %v9131, %v9132
      %v9134 = vsel %vm6967, %v6542, -inf
      %v9135 = vmax.f32 %v9133, %v9134
      %v9136 = vsel %vm6967, %v6545, -inf
      %v9137 = vmax.f32 %v9135, %v9136
      %v9138 = vsel %vm6967, %v6548, -inf
      %v9139 = vmax.f32 %v9137, %v9138
      %v9140 = vsel %vm6967, %v6551, -inf
      %v9141 = vmax.f32 %v9139, %v9140
      %v9142 = vsel %vm6967, %v6554, -inf
      %v9143 = vmax.f32 %v9141, %v9142
      %v9144 = vsel %vm6967, %v6557, -inf
      %v9145 = vmax.f32 %v9143, %v9144
      %v9146 = vrot.slane %v9145, 4
      %v9147 = vmax.f32 %v9145, %v9146
      %v9148 = vrot.slane %v9147, 2
      %v9149 = vmax.f32 %v9147, %v9148
      %v9150 = vrot.slane %v9149, 1
      %v9151 = vmax.f32 %v9149, %v9150
      %v9152 = vsel %vm6967, %v6560, -inf
      %v9153 = vsel %vm6967, %v6563, -inf
      %v9154 = vmax.f32 %v9152, %v9153
      %v9155 = vsel %vm6967, %v6566, -inf
      %v9156 = vmax.f32 %v9154, %v9155
      %v9157 = vsel %vm6967, %v6569, -inf
      %v9158 = vmax.f32 %v9156, %v9157
      %v9159 = vsel %vm6967, %v6572, -inf
      %v9160 = vmax.f32 %v9158, %v9159
      %v9161 = vsel %vm6967, %v6575, -inf
      %v9162 = vmax.f32 %v9160, %v9161
      %v9163 = vsel %vm6967, %v6578, -inf
      %v9164 = vmax.f32 %v9162, %v9163
      %v9165 = vsel %vm6967, %v6581, -inf
      %v9166 = vmax.f32 %v9164, %v9165
      %v9167 = vrot.slane %v9166, 4
      %v9168 = vmax.f32 %v9166, %v9167
      %v9169 = vrot.slane %v9168, 2
      %v9170 = vmax.f32 %v9168, %v9169
      %v9171 = vrot.slane %v9170, 1
      %v9172 = vmax.f32 %v9170, %v9171
      %v9173 = vsel %vm6967, %v6584, -inf
      %v9174 = vsel %vm6967, %v6587, -inf
      %v9175 = vmax.f32 %v9173, %v9174
      %v9176 = vsel %vm6967, %v6590, -inf
      %v9177 = vmax.f32 %v9175, %v9176
      %v9178 = vsel %vm6967, %v6593, -inf
      %v9179 = vmax.f32 %v9177, %v9178
      %v9180 = vsel %vm6967, %v6596, -inf
      %v9181 = vmax.f32 %v9179, %v9180
      %v9182 = vsel %vm6967, %v6599, -inf
      %v9183 = vmax.f32 %v9181, %v9182
      %v9184 = vsel %vm6967, %v6602, -inf
      %v9185 = vmax.f32 %v9183, %v9184
      %v9186 = vsel %vm6967, %v6605, -inf
      %v9187 = vmax.f32 %v9185, %v9186
      %v9188 = vrot.slane %v9187, 4
      %v9189 = vmax.f32 %v9187, %v9188
      %v9190 = vrot.slane %v9189, 2
      %v9191 = vmax.f32 %v9189, %v9190
      %v9192 = vrot.slane %v9191, 1
      %v9193 = vmax.f32 %v9191, %v9192
      %v9194 = vsel %vm6967, %v6608, -inf
      %v9195 = vsel %vm6967, %v6611, -inf
      %v9196 = vmax.f32 %v9194, %v9195
      %v9197 = vsel %vm6967, %v6614, -inf
      %v9198 = vmax.f32 %v9196, %v9197
      %v9199 = vsel %vm6967, %v6617, -inf
      %v9200 = vmax.f32 %v9198, %v9199
      %v9201 = vsel %vm6967, %v6620, -inf
      %v9202 = vmax.f32 %v9200, %v9201
      %v9203 = vsel %vm6967, %v6623, -inf
      %v9204 = vmax.f32 %v9202, %v9203
      %v9205 = vsel %vm6967, %v6626, -inf
      %v9206 = vmax.f32 %v9204, %v9205
      %v9207 = vsel %vm6967, %v6629, -inf
      %v9208 = vmax.f32 %v9206, %v9207
      %v9209 = vrot.slane %v9208, 4
      %v9210 = vmax.f32 %v9208, %v9209
      %v9211 = vrot.slane %v9210, 2
      %v9212 = vmax.f32 %v9210, %v9211
      %v9213 = vrot.slane %v9212, 1
      %v9214 = vmax.f32 %v9212, %v9213
      %v9215 = vsel %vm6967, %v6632, -inf
      %v9216 = vsel %vm6967, %v6635, -inf
      %v9217 = vmax.f32 %v9215, %v9216
      %v9218 = vsel %vm6967, %v6638, -inf
      %v9219 = vmax.f32 %v9217, %v9218
      %v9220 = vsel %vm6967, %v6641, -inf
      %v9221 = vmax.f32 %v9219, %v9220
      %v9222 = vsel %vm6967, %v6644, -inf
      %v9223 = vmax.f32 %v9221, %v9222
      %v9224 = vsel %vm6967, %v6647, -inf
      %v9225 = vmax.f32 %v9223, %v9224
      %v9226 = vsel %vm6967, %v6650, -inf
      %v9227 = vmax.f32 %v9225, %v9226
      %v9228 = vsel %vm6967, %v6653, -inf
      %v9229 = vmax.f32 %v9227, %v9228
      %v9230 = vrot.slane %v9229, 4
      %v9231 = vmax.f32 %v9229, %v9230
      %v9232 = vrot.slane %v9231, 2
      %v9233 = vmax.f32 %v9231, %v9232
      %v9234 = vrot.slane %v9233, 1
      %v9235 = vmax.f32 %v9233, %v9234
      %v9236 = vsel %vm6967, %v6656, -inf
      %v9237 = vsel %vm6967, %v6659, -inf
      %v9238 = vmax.f32 %v9236, %v9237
      %v9239 = vsel %vm6967, %v6662, -inf
      %v9240 = vmax.f32 %v9238, %v9239
      %v9241 = vsel %vm6967, %v6665, -inf
      %v9242 = vmax.f32 %v9240, %v9241
      %v9243 = vsel %vm6967, %v6668, -inf
      %v9244 = vmax.f32 %v9242, %v9243
      %v9245 = vsel %vm6967, %v6671, -inf
      %v9246 = vmax.f32 %v9244, %v9245
      %v9247 = vsel %vm6967, %v6674, -inf
      %v9248 = vmax.f32 %v9246, %v9247
      %v9249 = vsel %vm6967, %v6677, -inf
      %v9250 = vmax.f32 %v9248, %v9249
      %v9251 = vrot.slane %v9250, 4
      %v9252 = vmax.f32 %v9250, %v9251
      %v9253 = vrot.slane %v9252, 2
      %v9254 = vmax.f32 %v9252, %v9253
      %v9255 = vrot.slane %v9254, 1
      %v9256 = vmax.f32 %v9254, %v9255
      %v9257 = vsel %vm6967, %v6680, -inf
      %v9258 = vsel %vm6967, %v6683, -inf
      %v9259 = vmax.f32 %v9257, %v9258
      %v9260 = vsel %vm6967, %v6686, -inf
      %v9261 = vmax.f32 %v9259, %v9260
      %v9262 = vsel %vm6967, %v6689, -inf
      %v9263 = vmax.f32 %v9261, %v9262
      %v9264 = vsel %vm6967, %v6692, -inf
      %v9265 = vmax.f32 %v9263, %v9264
      %v9266 = vsel %vm6967, %v6695, -inf
      %v9267 = vmax.f32 %v9265, %v9266
      %v9268 = vsel %vm6967, %v6698, -inf
      %v9269 = vmax.f32 %v9267, %v9268
      %v9270 = vsel %vm6967, %v6701, -inf
      %v9271 = vmax.f32 %v9269, %v9270
      %v9272 = vrot.slane %v9271, 4
      %v9273 = vmax.f32 %v9271, %v9272
      %v9274 = vrot.slane %v9273, 2
      %v9275 = vmax.f32 %v9273, %v9274
      %v9276 = vrot.slane %v9275, 1
      %v9277 = vmax.f32 %v9275, %v9276
      %v9278 = vsel %vm6967, %v6704, -inf
      %v9279 = vsel %vm6967, %v6707, -inf
      %v9280 = vmax.f32 %v9278, %v9279
      %v9281 = vsel %vm6967, %v6710, -inf
      %v9282 = vmax.f32 %v9280, %v9281
      %v9283 = vsel %vm6967, %v6713, -inf
      %v9284 = vmax.f32 %v9282, %v9283
      %v9285 = vsel %vm6967, %v6716, -inf
      %v9286 = vmax.f32 %v9284, %v9285
      %v9287 = vsel %vm6967, %v6719, -inf
      %v9288 = vmax.f32 %v9286, %v9287
      %v9289 = vsel %vm6967, %v6722, -inf
      %v9290 = vmax.f32 %v9288, %v9289
      %v9291 = vsel %vm6967, %v6725, -inf
      %v9292 = vmax.f32 %v9290, %v9291
      %v9293 = vrot.slane %v9292, 4
      %v9294 = vmax.f32 %v9292, %v9293
      %v9295 = vrot.slane %v9294, 2
      %v9296 = vmax.f32 %v9294, %v9295
      %v9297 = vrot.slane %v9296, 1
      %v9298 = vmax.f32 %v9296, %v9297
      %v9299 = vsel %vm6967, %v6728, -inf
      %v9300 = vsel %vm6967, %v6731, -inf
      %v9301 = vmax.f32 %v9299, %v9300
      %v9302 = vsel %vm6967, %v6734, -inf
      %v9303 = vmax.f32 %v9301, %v9302
      %v9304 = vsel %vm6967, %v6737, -inf
      %v9305 = vmax.f32 %v9303, %v9304
      %v9306 = vsel %vm6967, %v6740, -inf
      %v9307 = vmax.f32 %v9305, %v9306
      %v9308 = vsel %vm6967, %v6743, -inf
      %v9309 = vmax.f32 %v9307, %v9308
      %v9310 = vsel %vm6967, %v6746, -inf
      %v9311 = vmax.f32 %v9309, %v9310
      %v9312 = vsel %vm6967, %v6749, -inf
      %v9313 = vmax.f32 %v9311, %v9312
      %v9314 = vrot.slane %v9313, 4
      %v9315 = vmax.f32 %v9313, %v9314
      %v9316 = vrot.slane %v9315, 2
      %v9317 = vmax.f32 %v9315, %v9316
      %v9318 = vrot.slane %v9317, 1
      %v9319 = vmax.f32 %v9317, %v9318
      %v9320 = vsel %vm6967, %v6752, -inf
      %v9321 = vsel %vm6967, %v6755, -inf
      %v9322 = vmax.f32 %v9320, %v9321
      %v9323 = vsel %vm6967, %v6758, -inf
      %v9324 = vmax.f32 %v9322, %v9323
      %v9325 = vsel %vm6967, %v6761, -inf
      %v9326 = vmax.f32 %v9324, %v9325
      %v9327 = vsel %vm6967, %v6764, -inf
      %v9328 = vmax.f32 %v9326, %v9327
      %v9329 = vsel %vm6967, %v6767, -inf
      %v9330 = vmax.f32 %v9328, %v9329
      %v9331 = vsel %vm6967, %v6770, -inf
      %v9332 = vmax.f32 %v9330, %v9331
      %v9333 = vsel %vm6967, %v6773, -inf
      %v9334 = vmax.f32 %v9332, %v9333
      %v9335 = vrot.slane %v9334, 4
      %v9336 = vmax.f32 %v9334, %v9335
      %v9337 = vrot.slane %v9336, 2
      %v9338 = vmax.f32 %v9336, %v9337
      %v9339 = vrot.slane %v9338, 1
      %v9340 = vmax.f32 %v9338, %v9339
      %v9341 = vsel %vm6967, %v6776, -inf
      %v9342 = vsel %vm6967, %v6779, -inf
      %v9343 = vmax.f32 %v9341, %v9342
      %v9344 = vsel %vm6967, %v6782, -inf
      %v9345 = vmax.f32 %v9343, %v9344
      %v9346 = vsel %vm6967, %v6785, -inf
      %v9347 = vmax.f32 %v9345, %v9346
      %v9348 = vsel %vm6967, %v6788, -inf
      %v9349 = vmax.f32 %v9347, %v9348
      %v9350 = vsel %vm6967, %v6791, -inf
      %v9351 = vmax.f32 %v9349, %v9350
      %v9352 = vsel %vm6967, %v6794, -inf
      %v9353 = vmax.f32 %v9351, %v9352
      %v9354 = vsel %vm6967, %v6797, -inf
      %v9355 = vmax.f32 %v9353, %v9354
      %v9356 = vrot.slane %v9355, 4
      %v9357 = vmax.f32 %v9355, %v9356
      %v9358 = vrot.slane %v9357, 2
      %v9359 = vmax.f32 %v9357, %v9358
      %v9360 = vrot.slane %v9359, 1
      %v9361 = vmax.f32 %v9359, %v9360
      %v9362 = vsel %vm6967, %v6800, -inf
      %v9363 = vsel %vm6967, %v6803, -inf
      %v9364 = vmax.f32 %v9362, %v9363
      %v9365 = vsel %vm6967, %v6806, -inf
      %v9366 = vmax.f32 %v9364, %v9365
      %v9367 = vsel %vm6967, %v6809, -inf
      %v9368 = vmax.f32 %v9366, %v9367
      %v9369 = vsel %vm6967, %v6812, -inf
      %v9370 = vmax.f32 %v9368, %v9369
      %v9371 = vsel %vm6967, %v6815, -inf
      %v9372 = vmax.f32 %v9370, %v9371
      %v9373 = vsel %vm6967, %v6818, -inf
      %v9374 = vmax.f32 %v9372, %v9373
      %v9375 = vsel %vm6967, %v6821, -inf
      %v9376 = vmax.f32 %v9374, %v9375
      %v9377 = vrot.slane %v9376, 4
      %v9378 = vmax.f32 %v9376, %v9377
      %v9379 = vrot.slane %v9378, 2
      %v9380 = vmax.f32 %v9378, %v9379
      %v9381 = vrot.slane %v9380, 1
      %v9382 = vmax.f32 %v9380, %v9381
      %v9383 = vsel %vm6967, %v6824, -inf
      %v9384 = vsel %vm6967, %v6827, -inf
      %v9385 = vmax.f32 %v9383, %v9384
      %v9386 = vsel %vm6967, %v6830, -inf
      %v9387 = vmax.f32 %v9385, %v9386
      %v9388 = vsel %vm6967, %v6833, -inf
      %v9389 = vmax.f32 %v9387, %v9388
      %v9390 = vsel %vm6967, %v6836, -inf
      %v9391 = vmax.f32 %v9389, %v9390
      %v9392 = vsel %vm6967, %v6839, -inf
      %v9393 = vmax.f32 %v9391, %v9392
      %v9394 = vsel %vm6967, %v6842, -inf
      %v9395 = vmax.f32 %v9393, %v9394
      %v9396 = vsel %vm6967, %v6845, -inf
      %v9397 = vmax.f32 %v9395, %v9396
      %v9398 = vrot.slane %v9397, 4
      %v9399 = vmax.f32 %v9397, %v9398
      %v9400 = vrot.slane %v9399, 2
      %v9401 = vmax.f32 %v9399, %v9400
      %v9402 = vrot.slane %v9401, 1
      %v9403 = vmax.f32 %v9401, %v9402
      %v9404 = vsel %vm6967, %v6848, -inf
      %v9405 = vsel %vm6967, %v6851, -inf
      %v9406 = vmax.f32 %v9404, %v9405
      %v9407 = vsel %vm6967, %v6854, -inf
      %v9408 = vmax.f32 %v9406, %v9407
      %v9409 = vsel %vm6967, %v6857, -inf
      %v9410 = vmax.f32 %v9408, %v9409
      %v9411 = vsel %vm6967, %v6860, -inf
      %v9412 = vmax.f32 %v9410, %v9411
      %v9413 = vsel %vm6967, %v6863, -inf
      %v9414 = vmax.f32 %v9412, %v9413
      %v9415 = vsel %vm6967, %v6866, -inf
      %v9416 = vmax.f32 %v9414, %v9415
      %v9417 = vsel %vm6967, %v6869, -inf
      %v9418 = vmax.f32 %v9416, %v9417
      %v9419 = vrot.slane %v9418, 4
      %v9420 = vmax.f32 %v9418, %v9419
      %v9421 = vrot.slane %v9420, 2
      %v9422 = vmax.f32 %v9420, %v9421
      %v9423 = vrot.slane %v9422, 1
      %v9424 = vmax.f32 %v9422, %v9423
      %v9425 = vsel %vm6967, %v6872, -inf
      %v9426 = vsel %vm6967, %v6875, -inf
      %v9427 = vmax.f32 %v9425, %v9426
      %v9428 = vsel %vm6967, %v6878, -inf
      %v9429 = vmax.f32 %v9427, %v9428
      %v9430 = vsel %vm6967, %v6881, -inf
      %v9431 = vmax.f32 %v9429, %v9430
      %v9432 = vsel %vm6967, %v6884, -inf
      %v9433 = vmax.f32 %v9431, %v9432
      %v9434 = vsel %vm6967, %v6887, -inf
      %v9435 = vmax.f32 %v9433, %v9434
      %v9436 = vsel %vm6967, %v6890, -inf
      %v9437 = vmax.f32 %v9435, %v9436
      %v9438 = vsel %vm6967, %v6893, -inf
      %v9439 = vmax.f32 %v9437, %v9438
      %v9440 = vrot.slane %v9439, 4
      %v9441 = vmax.f32 %v9439, %v9440
      %v9442 = vrot.slane %v9441, 2
      %v9443 = vmax.f32 %v9441, %v9442
      %v9444 = vrot.slane %v9443, 1
      %v9445 = vmax.f32 %v9443, %v9444
      %v9446 = vsel %vm6967, %v6896, -inf
      %v9447 = vsel %vm6967, %v6899, -inf
      %v9448 = vmax.f32 %v9446, %v9447
      %v9449 = vsel %vm6967, %v6902, -inf
      %v9450 = vmax.f32 %v9448, %v9449
      %v9451 = vsel %vm6967, %v6905, -inf
      %v9452 = vmax.f32 %v9450, %v9451
      %v9453 = vsel %vm6967, %v6908, -inf
      %v9454 = vmax.f32 %v9452, %v9453
      %v9455 = vsel %vm6967, %v6911, -inf
      %v9456 = vmax.f32 %v9454, %v9455
      %v9457 = vsel %vm6967, %v6914, -inf
      %v9458 = vmax.f32 %v9456, %v9457
      %v9459 = vsel %vm6967, %v6917, -inf
      %v9460 = vmax.f32 %v9458, %v9459
      %v9461 = vrot.slane %v9460, 4
      %v9462 = vmax.f32 %v9460, %v9461
      %v9463 = vrot.slane %v9462, 2
      %v9464 = vmax.f32 %v9462, %v9463
      %v9465 = vrot.slane %v9464, 1
      %v9466 = vmax.f32 %v9464, %v9465
      %v9467 = vsel %vm6967, %v6920, -inf
      %v9468 = vsel %vm6967, %v6923, -inf
      %v9469 = vmax.f32 %v9467, %v9468
      %v9470 = vsel %vm6967, %v6926, -inf
      %v9471 = vmax.f32 %v9469, %v9470
      %v9472 = vsel %vm6967, %v6929, -inf
      %v9473 = vmax.f32 %v9471, %v9472
      %v9474 = vsel %vm6967, %v6932, -inf
      %v9475 = vmax.f32 %v9473, %v9474
      %v9476 = vsel %vm6967, %v6935, -inf
      %v9477 = vmax.f32 %v9475, %v9476
      %v9478 = vsel %vm6967, %v6938, -inf
      %v9479 = vmax.f32 %v9477, %v9478
      %v9480 = vsel %vm6967, %v6941, -inf
      %v9481 = vmax.f32 %v9479, %v9480
      %v9482 = vrot.slane %v9481, 4
      %v9483 = vmax.f32 %v9481, %v9482
      %v9484 = vrot.slane %v9483, 2
      %v9485 = vmax.f32 %v9483, %v9484
      %v9486 = vrot.slane %v9485, 1
      %v9487 = vmax.f32 %v9485, %v9486
      %v9488 = vsel %vm6967, %v6944, -inf
      %v9489 = vsel %vm6967, %v6947, -inf
      %v9490 = vmax.f32 %v9488, %v9489
      %v9491 = vsel %vm6967, %v6950, -inf
      %v9492 = vmax.f32 %v9490, %v9491
      %v9493 = vsel %vm6967, %v6953, -inf
      %v9494 = vmax.f32 %v9492, %v9493
      %v9495 = vsel %vm6967, %v6956, -inf
      %v9496 = vmax.f32 %v9494, %v9495
      %v9497 = vsel %vm6967, %v6959, -inf
      %v9498 = vmax.f32 %v9496, %v9497
      %v9499 = vsel %vm6967, %v6962, -inf
      %v9500 = vmax.f32 %v9498, %v9499
      %v9501 = vsel %vm6967, %v6965, -inf
      %v9502 = vmax.f32 %v9500, %v9501
      %v9503 = vrot.slane %v9502, 4
      %v9504 = vmax.f32 %v9502, %v9503
      %v9505 = vrot.slane %v9504, 2
      %v9506 = vmax.f32 %v9504, %v9505
      %v9507 = vrot.slane %v9506, 1
      %v9508 = vmax.f32 %v9506, %v9507
      %v9509 = vld [vmem:[%s2] sm:$0x1]
      %v9511 = vperm.slane %v9509, 0
      %v9513 = vadd.f32 %v6988, %v9511
      %v9514 = vadd.f32 %v7009, %v9511
      %v9515 = vadd.f32 %v7030, %v9511
      %v9516 = vadd.f32 %v7051, %v9511
      %v9517 = vadd.f32 %v7072, %v9511
      %v9518 = vadd.f32 %v7093, %v9511
      %v9519 = vadd.f32 %v7114, %v9511
      %v9520 = vadd.f32 %v7135, %v9511
      %v9521 = vadd.f32 %v7156, %v9511
      %v9522 = vadd.f32 %v7177, %v9511
      %v9523 = vadd.f32 %v7198, %v9511
      %v9524 = vadd.f32 %v7219, %v9511
      %v9525 = vadd.f32 %v7240, %v9511
      %v9526 = vadd.f32 %v7261, %v9511
      %v9527 = vadd.f32 %v7282, %v9511
      %v9528 = vadd.f32 %v7303, %v9511
      %v9529 = vadd.f32 %v7324, %v9511
      %v9530 = vadd.f32 %v7345, %v9511
      %v9531 = vadd.f32 %v7366, %v9511
      %v9532 = vadd.f32 %v7387, %v9511
      %v9533 = vadd.f32 %v7408, %v9511
      %v9534 = vadd.f32 %v7429, %v9511
      %v9535 = vadd.f32 %v7450, %v9511
      %v9536 = vadd.f32 %v7471, %v9511
      %v9537 = vadd.f32 %v7492, %v9511
      %v9538 = vadd.f32 %v7513, %v9511
      %v9539 = vadd.f32 %v7534, %v9511
      %v9540 = vadd.f32 %v7555, %v9511
      %v9541 = vadd.f32 %v7576, %v9511
      %v9542 = vadd.f32 %v7597, %v9511
      %v9543 = vadd.f32 %v7618, %v9511
      %v9544 = vadd.f32 %v7639, %v9511
      %v9545 = vadd.f32 %v7660, %v9511
      %v9546 = vadd.f32 %v7681, %v9511
      %v9547 = vadd.f32 %v7702, %v9511
      %v9548 = vadd.f32 %v7723, %v9511
      %v9549 = vadd.f32 %v7744, %v9511
      %v9550 = vadd.f32 %v7765, %v9511
      %v9551 = vadd.f32 %v7786, %v9511
      %v9552 = vadd.f32 %v7807, %v9511
      %v9553 = vadd.f32 %v7828, %v9511
      %v9554 = vadd.f32 %v7849, %v9511
      %v9555 = vadd.f32 %v7870, %v9511
      %v9556 = vadd.f32 %v7891, %v9511
      %v9557 = vadd.f32 %v7912, %v9511
      %v9558 = vadd.f32 %v7933, %v9511
      %v9559 = vadd.f32 %v7954, %v9511
      %v9560 = vadd.f32 %v7975, %v9511
      %v9561 = vadd.f32 %v7996, %v9511
      %v9562 = vadd.f32 %v8017, %v9511
      %v9563 = vadd.f32 %v8038, %v9511
      %v9564 = vadd.f32 %v8059, %v9511
      %v9565 = vadd.f32 %v8080, %v9511
      %v9566 = vadd.f32 %v8101, %v9511
      %v9567 = vadd.f32 %v8122, %v9511
      %v9568 = vadd.f32 %v8143, %v9511
      %v9569 = vadd.f32 %v8164, %v9511
      %v9570 = vadd.f32 %v8185, %v9511
      %v9571 = vadd.f32 %v8206, %v9511
      %v9572 = vadd.f32 %v8227, %v9511
      %v9573 = vadd.f32 %v8248, %v9511
      %v9574 = vadd.f32 %v8269, %v9511
      %v9575 = vadd.f32 %v8290, %v9511
      %v9576 = vadd.f32 %v8311, %v9511
      %v9577 = vadd.f32 %v8332, %v9511
      %v9578 = vadd.f32 %v8353, %v9511
      %v9579 = vadd.f32 %v8374, %v9511
      %v9580 = vadd.f32 %v8395, %v9511
      %v9581 = vadd.f32 %v8416, %v9511
      %v9582 = vadd.f32 %v8437, %v9511
      %v9583 = vadd.f32 %v8458, %v9511
      %v9584 = vadd.f32 %v8479, %v9511
      %v9585 = vadd.f32 %v8500, %v9511
      %v9586 = vadd.f32 %v8521, %v9511
      %v9587 = vadd.f32 %v8542, %v9511
      %v9588 = vadd.f32 %v8563, %v9511
      %v9589 = vadd.f32 %v8584, %v9511
      %v9590 = vadd.f32 %v8605, %v9511
      %v9591 = vadd.f32 %v8626, %v9511
      %v9592 = vadd.f32 %v8647, %v9511
      %v9593 = vadd.f32 %v8668, %v9511
      %v9594 = vadd.f32 %v8689, %v9511
      %v9595 = vadd.f32 %v8710, %v9511
      %v9596 = vadd.f32 %v8731, %v9511
      %v9597 = vadd.f32 %v8752, %v9511
      %v9598 = vadd.f32 %v8773, %v9511
      %v9599 = vadd.f32 %v8794, %v9511
      %v9600 = vadd.f32 %v8815, %v9511
      %v9601 = vadd.f32 %v8836, %v9511
      %v9602 = vadd.f32 %v8857, %v9511
      %v9603 = vadd.f32 %v8878, %v9511
      %v9604 = vadd.f32 %v8899, %v9511
      %v9605 = vadd.f32 %v8920, %v9511
      %v9606 = vadd.f32 %v8941, %v9511
      %v9607 = vadd.f32 %v8962, %v9511
      %v9608 = vadd.f32 %v8983, %v9511
      %v9609 = vadd.f32 %v9004, %v9511
      %v9610 = vadd.f32 %v9025, %v9511
      %v9611 = vadd.f32 %v9046, %v9511
      %v9612 = vadd.f32 %v9067, %v9511
      %v9613 = vadd.f32 %v9088, %v9511
      %v9614 = vadd.f32 %v9109, %v9511
      %v9615 = vadd.f32 %v9130, %v9511
      %v9616 = vadd.f32 %v9151, %v9511
      %v9617 = vadd.f32 %v9172, %v9511
      %v9618 = vadd.f32 %v9193, %v9511
      %v9619 = vadd.f32 %v9214, %v9511
      %v9620 = vadd.f32 %v9235, %v9511
      %v9621 = vadd.f32 %v9256, %v9511
      %v9622 = vadd.f32 %v9277, %v9511
      %v9623 = vadd.f32 %v9298, %v9511
      %v9624 = vadd.f32 %v9319, %v9511
      %v9625 = vadd.f32 %v9340, %v9511
      %v9626 = vadd.f32 %v9361, %v9511
      %v9627 = vadd.f32 %v9382, %v9511
      %v9628 = vadd.f32 %v9403, %v9511
      %v9629 = vadd.f32 %v9424, %v9511
      %v9630 = vadd.f32 %v9445, %v9511
      %v9631 = vadd.f32 %v9466, %v9511
      %v9632 = vadd.f32 %v9487, %v9511
      %v9633 = vadd.f32 %v9508, %v9511
      %v9634 = vmax.f32 %v9513, 0.0
      %v9635 = vmax.f32 %v9514, 0.0
      %v9636 = vmax.f32 %v9515, 0.0
      %v9637 = vmax.f32 %v9516, 0.0
      %v9638 = vmax.f32 %v9517, 0.0
      %v9639 = vmax.f32 %v9518, 0.0
      %v9640 = vmax.f32 %v9519, 0.0
      %v9641 = vmax.f32 %v9520, 0.0
      %v9642 = vmax.f32 %v9521, 0.0
      %v9643 = vmax.f32 %v9522, 0.0
      %v9644 = vmax.f32 %v9523, 0.0
      %v9645 = vmax.f32 %v9524, 0.0
      %v9646 = vmax.f32 %v9525, 0.0
      %v9647 = vmax.f32 %v9526, 0.0
      %v9648 = vmax.f32 %v9527, 0.0
      %v9649 = vmax.f32 %v9528, 0.0
      %v9650 = vmax.f32 %v9529, 0.0
      %v9651 = vmax.f32 %v9530, 0.0
      %v9652 = vmax.f32 %v9531, 0.0
      %v9653 = vmax.f32 %v9532, 0.0
      %v9654 = vmax.f32 %v9533, 0.0
      %v9655 = vmax.f32 %v9534, 0.0
      %v9656 = vmax.f32 %v9535, 0.0
      %v9657 = vmax.f32 %v9536, 0.0
      %v9658 = vmax.f32 %v9537, 0.0
      %v9659 = vmax.f32 %v9538, 0.0
      %v9660 = vmax.f32 %v9539, 0.0
      %v9661 = vmax.f32 %v9540, 0.0
      %v9662 = vmax.f32 %v9541, 0.0
      %v9663 = vmax.f32 %v9542, 0.0
      %v9664 = vmax.f32 %v9543, 0.0
      %v9665 = vmax.f32 %v9544, 0.0
      %v9666 = vmax.f32 %v9545, 0.0
      %v9667 = vmax.f32 %v9546, 0.0
      %v9668 = vmax.f32 %v9547, 0.0
      %v9669 = vmax.f32 %v9548, 0.0
      %v9670 = vmax.f32 %v9549, 0.0
      %v9671 = vmax.f32 %v9550, 0.0
      %v9672 = vmax.f32 %v9551, 0.0
      %v9673 = vmax.f32 %v9552, 0.0
      %v9674 = vmax.f32 %v9553, 0.0
      %v9675 = vmax.f32 %v9554, 0.0
      %v9676 = vmax.f32 %v9555, 0.0
      %v9677 = vmax.f32 %v9556, 0.0
      %v9678 = vmax.f32 %v9557, 0.0
      %v9679 = vmax.f32 %v9558, 0.0
      %v9680 = vmax.f32 %v9559, 0.0
      %v9681 = vmax.f32 %v9560, 0.0
      %v9682 = vmax.f32 %v9561, 0.0
      %v9683 = vmax.f32 %v9562, 0.0
      %v9684 = vmax.f32 %v9563, 0.0
      %v9685 = vmax.f32 %v9564, 0.0
      %v9686 = vmax.f32 %v9565, 0.0
      %v9687 = vmax.f32 %v9566, 0.0
      %v9688 = vmax.f32 %v9567, 0.0
      %v9689 = vmax.f32 %v9568, 0.0
      %v9690 = vmax.f32 %v9569, 0.0
      %v9691 = vmax.f32 %v9570, 0.0
      %v9692 = vmax.f32 %v9571, 0.0
      %v9693 = vmax.f32 %v9572, 0.0
      %v9694 = vmax.f32 %v9573, 0.0
      %v9695 = vmax.f32 %v9574, 0.0
      %v9696 = vmax.f32 %v9575, 0.0
      %v9697 = vmax.f32 %v9576, 0.0
      %v9698 = vmax.f32 %v9577, 0.0
      %v9699 = vmax.f32 %v9578, 0.0
      %v9700 = vmax.f32 %v9579, 0.0
      %v9701 = vmax.f32 %v9580, 0.0
      %v9702 = vmax.f32 %v9581, 0.0
      %v9703 = vmax.f32 %v9582, 0.0
      %v9704 = vmax.f32 %v9583, 0.0
      %v9705 = vmax.f32 %v9584, 0.0
      %v9706 = vmax.f32 %v9585, 0.0
      %v9707 = vmax.f32 %v9586, 0.0
      %v9708 = vmax.f32 %v9587, 0.0
      %v9709 = vmax.f32 %v9588, 0.0
      %v9710 = vmax.f32 %v9589, 0.0
      %v9711 = vmax.f32 %v9590, 0.0
      %v9712 = vmax.f32 %v9591, 0.0
      %v9713 = vmax.f32 %v9592, 0.0
      %v9714 = vmax.f32 %v9593, 0.0
      %v9715 = vmax.f32 %v9594, 0.0
      %v9716 = vmax.f32 %v9595, 0.0
      %v9717 = vmax.f32 %v9596, 0.0
      %v9718 = vmax.f32 %v9597, 0.0
      %v9719 = vmax.f32 %v9598, 0.0
      %v9720 = vmax.f32 %v9599, 0.0
      %v9721 = vmax.f32 %v9600, 0.0
      %v9722 = vmax.f32 %v9601, 0.0
      %v9723 = vmax.f32 %v9602, 0.0
      %v9724 = vmax.f32 %v9603, 0.0
      %v9725 = vmax.f32 %v9604, 0.0
      %v9726 = vmax.f32 %v9605, 0.0
      %v9727 = vmax.f32 %v9606, 0.0
      %v9728 = vmax.f32 %v9607, 0.0
      %v9729 = vmax.f32 %v9608, 0.0
      %v9730 = vmax.f32 %v9609, 0.0
      %v9731 = vmax.f32 %v9610, 0.0
      %v9732 = vmax.f32 %v9611, 0.0
      %v9733 = vmax.f32 %v9612, 0.0
      %v9734 = vmax.f32 %v9613, 0.0
      %v9735 = vmax.f32 %v9614, 0.0
      %v9736 = vmax.f32 %v9615, 0.0
      %v9737 = vmax.f32 %v9616, 0.0
      %v9738 = vmax.f32 %v9617, 0.0
      %v9739 = vmax.f32 %v9618, 0.0
      %v9740 = vmax.f32 %v9619, 0.0
      %v9741 = vmax.f32 %v9620, 0.0
      %v9742 = vmax.f32 %v9621, 0.0
      %v9743 = vmax.f32 %v9622, 0.0
      %v9744 = vmax.f32 %v9623, 0.0
      %v9745 = vmax.f32 %v9624, 0.0
      %v9746 = vmax.f32 %v9625, 0.0
      %v9747 = vmax.f32 %v9626, 0.0
      %v9748 = vmax.f32 %v9627, 0.0
      %v9749 = vmax.f32 %v9628, 0.0
      %v9750 = vmax.f32 %v9629, 0.0
      %v9751 = vmax.f32 %v9630, 0.0
      %v9752 = vmax.f32 %v9631, 0.0
      %v9753 = vmax.f32 %v9632, 0.0
      %v9754 = vmax.f32 %v9633, 0.0
      %v9876 = vrot.slane %v9635, 7
      %vm9877 = vcmask 1041409
      %v9878 = vsel %vm9877, %v9876, %v9634
      %v9879 = vrot.slane %v9636, 6
      %vm9880 = vcmask 1042434
      %v9881 = vsel %vm9880, %v9879, %v9878
      %v9882 = vrot.slane %v9637, 5
      %vm9883 = vcmask 1043459
      %v9884 = vsel %vm9883, %v9882, %v9881
      %v9885 = vrot.slane %v9638, 4
      %vm9886 = vcmask 1044484
      %v9887 = vsel %vm9886, %v9885, %v9884
      %v9888 = vrot.slane %v9639, 3
      %vm9889 = vcmask 1045509
      %v9890 = vsel %vm9889, %v9888, %v9887
      %v9891 = vrot.slane %v9640, 2
      %vm9892 = vcmask 1046534
      %v9893 = vsel %vm9892, %v9891, %v9890
      %v9894 = vrot.slane %v9641, 1
      %vm9895 = vcmask 1047559
      %v9896 = vsel %vm9895, %v9894, %v9893
      %v9897 = vrot.slane %v9643, 7
      %v9898 = vsel %vm9877, %v9897, %v9642
      %v9899 = vrot.slane %v9644, 6
      %v9900 = vsel %vm9880, %v9899, %v9898
      %v9901 = vrot.slane %v9645, 5
      %v9902 = vsel %vm9883, %v9901, %v9900
      %v9903 = vrot.slane %v9646, 4
      %v9904 = vsel %vm9886, %v9903, %v9902
      %v9905 = vrot.slane %v9647, 3
      %v9906 = vsel %vm9889, %v9905, %v9904
      %v9907 = vrot.slane %v9648, 2
      %v9908 = vsel %vm9892, %v9907, %v9906
      %v9909 = vrot.slane %v9649, 1
      %v9910 = vsel %vm9895, %v9909, %v9908
      %v9911 = vrot.slane %v9651, 7
      %v9912 = vsel %vm9877, %v9911, %v9650
      %v9913 = vrot.slane %v9652, 6
      %v9914 = vsel %vm9880, %v9913, %v9912
      %v9915 = vrot.slane %v9653, 5
      %v9916 = vsel %vm9883, %v9915, %v9914
      %v9917 = vrot.slane %v9654, 4
      %v9918 = vsel %vm9886, %v9917, %v9916
      %v9919 = vrot.slane %v9655, 3
      %v9920 = vsel %vm9889, %v9919, %v9918
      %v9921 = vrot.slane %v9656, 2
      %v9922 = vsel %vm9892, %v9921, %v9920
      %v9923 = vrot.slane %v9657, 1
      %v9924 = vsel %vm9895, %v9923, %v9922
      %v9925 = vrot.slane %v9659, 7
      %v9926 = vsel %vm9877, %v9925, %v9658
      %v9927 = vrot.slane %v9660, 6
      %v9928 = vsel %vm9880, %v9927, %v9926
      %v9929 = vrot.slane %v9661, 5
      %v9930 = vsel %vm9883, %v9929, %v9928
      %v9931 = vrot.slane %v9662, 4
      %v9932 = vsel %vm9886, %v9931, %v9930
      %v9933 = vrot.slane %v9663, 3
      %v9934 = vsel %vm9889, %v9933, %v9932
      %v9935 = vrot.slane %v9664, 2
      %v9936 = vsel %vm9892, %v9935, %v9934
      %v9937 = vrot.slane %v9665, 1
      %v9938 = vsel %vm9895, %v9937, %v9936
      %v9939 = vrot.slane %v9667, 7
      %v9940 = vsel %vm9877, %v9939, %v9666
      %v9941 = vrot.slane %v9668, 6
      %v9942 = vsel %vm9880, %v9941, %v9940
      %v9943 = vrot.slane %v9669, 5
      %v9944 = vsel %vm9883, %v9943, %v9942
      %v9945 = vrot.slane %v9670, 4
      %v9946 = vsel %vm9886, %v9945, %v9944
      %v9947 = vrot.slane %v9671, 3
      %v9948 = vsel %vm9889, %v9947, %v9946
      %v9949 = vrot.slane %v9672, 2
      %v9950 = vsel %vm9892, %v9949, %v9948
      %v9951 = vrot.slane %v9673, 1
      %v9952 = vsel %vm9895, %v9951, %v9950
      %v9953 = vrot.slane %v9675, 7
      %v9954 = vsel %vm9877, %v9953, %v9674
      %v9955 = vrot.slane %v9676, 6
      %v9956 = vsel %vm9880, %v9955, %v9954
      %v9957 = vrot.slane %v9677, 5
      %v9958 = vsel %vm9883, %v9957, %v9956
      %v9959 = vrot.slane %v9678, 4
      %v9960 = vsel %vm9886, %v9959, %v9958
      %v9961 = vrot.slane %v9679, 3
      %v9962 = vsel %vm9889, %v9961, %v9960
      %v9963 = vrot.slane %v9680, 2
      %v9964 = vsel %vm9892, %v9963, %v9962
      %v9965 = vrot.slane %v9681, 1
      %v9966 = vsel %vm9895, %v9965, %v9964
      %v9967 = vrot.slane %v9683, 7
      %v9968 = vsel %vm9877, %v9967, %v9682
      %v9969 = vrot.slane %v9684, 6
      %v9970 = vsel %vm9880, %v9969, %v9968
      %v9971 = vrot.slane %v9685, 5
      %v9972 = vsel %vm9883, %v9971, %v9970
      %v9973 = vrot.slane %v9686, 4
      %v9974 = vsel %vm9886, %v9973, %v9972
      %v9975 = vrot.slane %v9687, 3
      %v9976 = vsel %vm9889, %v9975, %v9974
      %v9977 = vrot.slane %v9688, 2
      %v9978 = vsel %vm9892, %v9977, %v9976
      %v9979 = vrot.slane %v9689, 1
      %v9980 = vsel %vm9895, %v9979, %v9978
      %v9981 = vrot.slane %v9691, 7
      %v9982 = vsel %vm9877, %v9981, %v9690
      %v9983 = vrot.slane %v9692, 6
      %v9984 = vsel %vm9880, %v9983, %v9982
      %v9985 = vrot.slane %v9693, 5
      %v9986 = vsel %vm9883, %v9985, %v9984
      %v9987 = vrot.slane %v9694, 4
      %v9988 = vsel %vm9886, %v9987, %v9986
      %v9989 = vrot.slane %v9695, 3
      %v9990 = vsel %vm9889, %v9989, %v9988
      %v9991 = vrot.slane %v9696, 2
      %v9992 = vsel %vm9892, %v9991, %v9990
      %v9993 = vrot.slane %v9697, 1
      %v9994 = vsel %vm9895, %v9993, %v9992
      %v9995 = vrot.slane %v9699, 7
      %v9996 = vsel %vm9877, %v9995, %v9698
      %v9997 = vrot.slane %v9700, 6
      %v9998 = vsel %vm9880, %v9997, %v9996
      %v9999 = vrot.slane %v9701, 5
      %v10000 = vsel %vm9883, %v9999, %v9998
      %v10001 = vrot.slane %v9702, 4
      %v10002 = vsel %vm9886, %v10001, %v10000
      %v10003 = vrot.slane %v9703, 3
      %v10004 = vsel %vm9889, %v10003, %v10002
      %v10005 = vrot.slane %v9704, 2
      %v10006 = vsel %vm9892, %v10005, %v10004
      %v10007 = vrot.slane %v9705, 1
      %v10008 = vsel %vm9895, %v10007, %v10006
      %v10009 = vrot.slane %v9707, 7
      %v10010 = vsel %vm9877, %v10009, %v9706
      %v10011 = vrot.slane %v9708, 6
      %v10012 = vsel %vm9880, %v10011, %v10010
      %v10013 = vrot.slane %v9709, 5
      %v10014 = vsel %vm9883, %v10013, %v10012
      %v10015 = vrot.slane %v9710, 4
      %v10016 = vsel %vm9886, %v10015, %v10014
      %v10017 = vrot.slane %v9711, 3
      %v10018 = vsel %vm9889, %v10017, %v10016
      %v10019 = vrot.slane %v9712, 2
      %v10020 = vsel %vm9892, %v10019, %v10018
      %v10021 = vrot.slane %v9713, 1
      %v10022 = vsel %vm9895, %v10021, %v10020
      %v10023 = vrot.slane %v9715, 7
      %v10024 = vsel %vm9877, %v10023, %v9714
      %v10025 = vrot.slane %v9716, 6
      %v10026 = vsel %vm9880, %v10025, %v10024
      %v10027 = vrot.slane %v9717, 5
      %v10028 = vsel %vm9883, %v10027, %v10026
      %v10029 = vrot.slane %v9718, 4
      %v10030 = vsel %vm9886, %v10029, %v10028
      %v10031 = vrot.slane %v9719, 3
      %v10032 = vsel %vm9889, %v10031, %v10030
      %v10033 = vrot.slane %v9720, 2
      %v10034 = vsel %vm9892, %v10033, %v10032
      %v10035 = vrot.slane %v9721, 1
      %v10036 = vsel %vm9895, %v10035, %v10034
      %v10037 = vrot.slane %v9723, 7
      %v10038 = vsel %vm9877, %v10037, %v9722
      %v10039 = vrot.slane %v9724, 6
      %v10040 = vsel %vm9880, %v10039, %v10038
      %v10041 = vrot.slane %v9725, 5
      %v10042 = vsel %vm9883, %v10041, %v10040
      %v10043 = vrot.slane %v9726, 4
      %v10044 = vsel %vm9886, %v10043, %v10042
      %v10045 = vrot.slane %v9727, 3
      %v10046 = vsel %vm9889, %v10045, %v10044
      %v10047 = vrot.slane %v9728, 2
      %v10048 = vsel %vm9892, %v10047, %v10046
      %v10049 = vrot.slane %v9729, 1
      %v10050 = vsel %vm9895, %v10049, %v10048
      %v10051 = vrot.slane %v9731, 7
      %v10052 = vsel %vm9877, %v10051, %v9730
      %v10053 = vrot.slane %v9732, 6
      %v10054 = vsel %vm9880, %v10053, %v10052
      %v10055 = vrot.slane %v9733, 5
      %v10056 = vsel %vm9883, %v10055, %v10054
      %v10057 = vrot.slane %v9734, 4
      %v10058 = vsel %vm9886, %v10057, %v10056
      %v10059 = vrot.slane %v9735, 3
      %v10060 = vsel %vm9889, %v10059, %v10058
      %v10061 = vrot.slane %v9736, 2
      %v10062 = vsel %vm9892, %v10061, %v10060
      %v10063 = vrot.slane %v9737, 1
      %v10064 = vsel %vm9895, %v10063, %v10062
      %v10065 = vrot.slane %v9739, 7
      %v10066 = vsel %vm9877, %v10065, %v9738
      %v10067 = vrot.slane %v9740, 6
      %v10068 = vsel %vm9880, %v10067, %v10066
      %v10069 = vrot.slane %v9741, 5
      %v10070 = vsel %vm9883, %v10069, %v10068
      %v10071 = vrot.slane %v9742, 4
      %v10072 = vsel %vm9886, %v10071, %v10070
      %v10073 = vrot.slane %v9743, 3
      %v10074 = vsel %vm9889, %v10073, %v10072
      %v10075 = vrot.slane %v9744, 2
      %v10076 = vsel %vm9892, %v10075, %v10074
      %v10077 = vrot.slane %v9745, 1
      %v10078 = vsel %vm9895, %v10077, %v10076
      %v10079 = vrot.slane %v9747, 7
      %v10080 = vsel %vm9877, %v10079, %v9746
      %v10081 = vrot.slane %v9748, 6
      %v10082 = vsel %vm9880, %v10081, %v10080
      %v10083 = vrot.slane %v9749, 5
      %v10084 = vsel %vm9883, %v10083, %v10082
      %v10085 = vrot.slane %v9750, 4
      %v10086 = vsel %vm9886, %v10085, %v10084
      %v10087 = vrot.slane %v9751, 3
      %v10088 = vsel %vm9889, %v10087, %v10086
      %v10089 = vrot.slane %v9752, 2
      %v10090 = vsel %vm9892, %v10089, %v10088
      %v10091 = vrot.slane %v9753, 1
      %v10092 = vsel %vm9895, %v10091, %v10090
      %10109 = vst.msk [vmem:[%s170] sm:$0xff] %vm6967, %v9896
      %10110 = vst.msk [vmem:[%s170 + $0x8] sm:$0xff] %vm6967, %v9910
      %10111 = vst.msk [vmem:[%s170 + $0x10] sm:$0xff] %vm6967, %v9924
      %10112 = vst.msk [vmem:[%s170 + $0x18] sm:$0xff] %vm6967, %v9938
      %10113 = vst.msk [vmem:[%s170 + $0x20] sm:$0xff] %vm6967, %v9952
      %10114 = vst.msk [vmem:[%s170 + $0x28] sm:$0xff] %vm6967, %v9966
      %10115 = vst.msk [vmem:[%s170 + $0x30] sm:$0xff] %vm6967, %v9980
      %10116 = vst.msk [vmem:[%s170 + $0x38] sm:$0xff] %vm6967, %v9994
      %10117 = vst.msk [vmem:[%s170 + $0x40] sm:$0xff] %vm6967, %v10008
      %10118 = vst.msk [vmem:[%s170 + $0x48] sm:$0xff] %vm6967, %v10022
      %10119 = vst.msk [vmem:[%s170 + $0x50] sm:$0xff] %vm6967, %v10036
      %10120 = vst.msk [vmem:[%s170 + $0x58] sm:$0xff] %vm6967, %v10050
      %10121 = vst.msk [vmem:[%s170 + $0x60] sm:$0xff] %vm6967, %v10064
      %10122 = vst.msk [vmem:[%s170 + $0x68] sm:$0xff] %vm6967, %v10078
      %10123 = vst.msk [vmem:[%s170 + $0x70] sm:$0xff] %vm6967, %v10092
      %vm10124 = vcmask 253952
      %10125 = vst.msk [vmem:[%s170 + $0x78] sm:$0x1] %vm10124, %v9754
      %p10126 = scmp.lt.s32.totalorder %s14, 1
      %s10127 = scalar_select %p10126, %s14, 1
      %s10128 = smul.addr %s10127, 16
      %s10129 = smul.addr %s10128, 8
      %s10130 = scalar_lea.vmem %s3, %s10129
      // Predicated region
      $region33: #{conv_model_forward.2} parent=31 // pred_check
        %p10131 = pneg %p100
      $region34: #{conv_model_forward.2} parent=31 // pred_check_branch
        %10133 = sbr.rel (%p10131) target = $region36
      $region35: #{conv_model_forward.2} parent=31 // pred_region
        _
      $region36: #{conv_model_forward.2} parent=31 // pred_fallthru
        _
    $region32: #{conv_model_forward.2} parent=5 // pred_fallthru
      _
    %p10134 = scmp.le.s32.totalorder 2, %s9
    // Predicated region
    $region37: #{conv_model_forward.2} parent=5 // pred_check
      %p10135 = pneg %p10134
    $region38: #{conv_model_forward.2} parent=5 // pred_check_branch
      %10137 = sbr.rel (%p10135) target = $region40
    $region39: #{conv_model_forward.2} parent=5 // pred_region
      %s10138 = ssub.s32 %s9, 2
      // Predicated region
      $region41: #{conv_model_forward.2} parent=39 // pred_check
        %p10139 = pneg %p106
      $region42: #{conv_model_forward.2} parent=39 // pred_check_branch
        %10141 = sbr.rel (%p10139) target = $region44
      $region43: #{conv_model_forward.2} parent=39 // pred_region
        %p10142 = scmp.lt.s32.totalorder %s15, 1
        %s10143 = scalar_select %p10142, %s15, 1
        %s10144 = smul.addr %s10143, 16
        %s10145 = smul.addr %s10144, 8
        %s10146 = scalar_lea.vmem %s3, %s10145
      $region44: #{conv_model_forward.2} parent=39 // pred_fallthru
        _
    $region40: #{conv_model_forward.2} parent=5 // pred_fallthru
      _
  $region6: #{conv_model_forward.2} parent=0 // loop_footer
    %s13 = sadd.s32 1, %s9
  $region7: #{conv_model_forward.2} parent=0 // loop_footer_branch
    %8 = sbr.rel target = $region3
  $region8: #{conv_model_forward.2} parent=0 // loop_exit
    _

// kernel: conv_model_forward.3
$region0: #{conv_model_forward.3}
  #allocation0 [shape = 'u32[]', space=smem, size = 0x4, offset = 0x4, fixed_abs, tag = 'smem constant byte address 0x4 - core index']
  #allocation1 [shape = 'u32[72,128]{1,0:T(1,128)}', space=vmem, size = 0x9000, scoped, tag = 'internal scratch']
  #allocation2 [shape = 'f32[2,2048]{1,0:T(2,128)}', space=vmem, size = 0x4000, scoped, tag = 'scratch operand']
  %s0 = inlined_call_operand.vmem [shape: f32[128,512], index: 0, kind: input, shape index: {}]
  %s1 = inlined_call_operand.vmem [shape: f32[512,128], index: 1, kind: input, shape index: {}]
  %s2 = inlined_call_operand.vmem [shape: f32[1,128], index: 2, kind: input, shape index: {}]
  %s3 = inlined_call_operand.vmem [shape: f32[2048,512], index: 3, kind: input, shape index: {}]
  %s4 = inlined_call_operand.vmem [shape: f32[1,512], index: 4, kind: input, shape index: {}]
  %s5 = inlined_call_operand.vmem [shape: f32[512,128], index: 5, kind: input, shape index: {}]
  %s6 = inlined_call_operand.vmem [shape: f32[1,128], index: 6, kind: input, shape index: {}]
  %s7 = inlined_call_operand.hbm [shape: f32[2,128], index: 7, kind: output, shape index: {}]
  %s8 = sld [smem:[#allocation0]]
  $region38: #{conv_model_forward.3} parent=0
    _
  %s10 = ssub.s32 1, %s8
  %s11 = scalar_select 0, %s10, %s8
  $region1: #{conv_model_forward.3} parent=0
    #allocation3 [shape = 'u8[1024]{0}', space=vmem, size = 0x400, scoped, tag = 'output window, operand 0, single buffered']
    #allocation4 [shape = 's32[1]{0}', space=sflag, size = 0x4, scoped, tag = 'scoped memory for conv_model_forward.3']
    %12 = vsyncpa [#allocation4], 0
    // Predicated region
    $region2: #{conv_model_forward.3} parent=1 // pred_check
      _
    $region3: #{conv_model_forward.3} parent=1 // pred_check_branch
      %14 = sbr.rel (0) target = $region5
    $region4: #{conv_model_forward.3} parent=1 // pred_region
      _
    $region5: #{conv_model_forward.3} parent=1 // pred_fallthru
      _
    // Predicated region
    $region6: #{conv_model_forward.3} parent=1 // pred_check
      _
    $region7: #{conv_model_forward.3} parent=1 // pred_check_branch
      %16 = sbr.rel (0) target = $region9
    $region8: #{conv_model_forward.3} parent=1 // pred_region
      _
    $region9: #{conv_model_forward.3} parent=1 // pred_fallthru
      _
    // Predicated region
    $region10: #{conv_model_forward.3} parent=1 // pred_check
      _
    $region11: #{conv_model_forward.3} parent=1 // pred_check_branch
      %18 = sbr.rel (0) target = $region13
    $region12: #{conv_model_forward.3} parent=1 // pred_region
      _
    $region13: #{conv_model_forward.3} parent=1 // pred_fallthru
      _
    // Predicated region
    $region14: #{conv_model_forward.3} parent=1 // pred_check
      _
    $region15: #{conv_model_forward.3} parent=1 // pred_check_branch
      %20 = sbr.rel (0) target = $region17
    $region16: #{conv_model_forward.3} parent=1 // pred_region
      _
    $region17: #{conv_model_forward.3} parent=1 // pred_fallthru
      _
    // Predicated region
    $region18: #{conv_model_forward.3} parent=1 // pred_check
      _
    $region19: #{conv_model_forward.3} parent=1 // pred_check_branch
      %22 = sbr.rel (0) target = $region21
    $region20: #{conv_model_forward.3} parent=1 // pred_region
      _
    $region21: #{conv_model_forward.3} parent=1 // pred_fallthru
      _
    // Predicated region
    $region22: #{conv_model_forward.3} parent=1 // pred_check
      _
    $region23: #{conv_model_forward.3} parent=1 // pred_check_branch
      %24 = sbr.rel (0) target = $region25
    $region24: #{conv_model_forward.3} parent=1 // pred_region
      _
    $region25: #{conv_model_forward.3} parent=1 // pred_fallthru
      _
    // Predicated region
    $region26: #{conv_model_forward.3} parent=1 // pred_check
      _
    $region27: #{conv_model_forward.3} parent=1 // pred_check_branch
      %26 = sbr.rel (0) target = $region29
    $region28: #{conv_model_forward.3} parent=1 // pred_region
      _
    $region29: #{conv_model_forward.3} parent=1 // pred_fallthru
      _
    %v27 = vld [vmem:[%s0] sm:$0xff]
    %v28 = vld [vmem:[%s0 + $0x8] sm:$0xff]
    %v29 = vld [vmem:[%s0 + $0x10] sm:$0xff]
    %v30 = vld [vmem:[%s0 + $0x18] sm:$0xff]
    %v31 = vld [vmem:[%s0 + $0x20] sm:$0xff]
    %v32 = vld [vmem:[%s0 + $0x28] sm:$0xff]
    %v33 = vld [vmem:[%s0 + $0x30] sm:$0xff]
    %v34 = vld [vmem:[%s0 + $0x38] sm:$0xff]
    %v35 = vld [vmem:[%s0 + $0x40] sm:$0xff]
    %v36 = vld [vmem:[%s0 + $0x48] sm:$0xff]
    %v37 = vld [vmem:[%s0 + $0x50] sm:$0xff]
    %v38 = vld [vmem:[%s0 + $0x58] sm:$0xff]
    %v39 = vld [vmem:[%s0 + $0x60] sm:$0xff]
    %v40 = vld [vmem:[%s0 + $0x68] sm:$0xff]
    %v41 = vld [vmem:[%s0 + $0x70] sm:$0xff]
    %v42 = vld [vmem:[%s0 + $0x78] sm:$0xff]
    %v43 = vld [vmem:[%s0 + $0x80] sm:$0xff]
    %v44 = vld [vmem:[%s0 + $0x88] sm:$0xff]
    %v45 = vld [vmem:[%s0 + $0x90] sm:$0xff]
    %v46 = vld [vmem:[%s0 + $0x98] sm:$0xff]
    %v47 = vld [vmem:[%s0 + $0xa0] sm:$0xff]
    %v48 = vld [vmem:[%s0 + $0xa8] sm:$0xff]
    %v49 = vld [vmem:[%s0 + $0xb0] sm:$0xff]
    %v50 = vld [vmem:[%s0 + $0xb8] sm:$0xff]
    %v51 = vld [vmem:[%s0 + $0xc0] sm:$0xff]
    %v52 = vld [vmem:[%s0 + $0xc8] sm:$0xff]
    %v53 = vld [vmem:[%s0 + $0xd0] sm:$0xff]
    %v54 = vld [vmem:[%s0 + $0xd8] sm:$0xff]
    %v55 = vld [vmem:[%s0 + $0xe0] sm:$0xff]
    %v56 = vld [vmem:[%s0 + $0xe8] sm:$0xff]
    %v57 = vld [vmem:[%s0 + $0xf0] sm:$0xff]
    %v58 = vld [vmem:[%s0 + $0xf8] sm:$0xff]
    %v59 = vld [vmem:[%s0 + $0x100] sm:$0xff]
    %v60 = vld [vmem:[%s0 + $0x108] sm:$0xff]
    %v61 = vld [vmem:[%s0 + $0x110] sm:$0xff]
    %v62 = vld [vmem:[%s0 + $0x118] sm:$0xff]
    %v63 = vld [vmem:[%s0 + $0x120] sm:$0xff]
    %v64 = vld [vmem:[%s0 + $0x128] sm:$0xff]
    %v65 = vld [vmem:[%s0 + $0x130] sm:$0xff]
    %v66 = vld [vmem:[%s0 + $0x138] sm:$0xff]
    %v67 = vld [vmem:[%s0 + $0x140] sm:$0xff]
    %v68 = vld [vmem:[%s0 + $0x148] sm:$0xff]
    %v69 = vld [vmem:[%s0 + $0x150] sm:$0xff]
    %v70 = vld [vmem:[%s0 + $0x158] sm:$0xff]
    %v71 = vld [vmem:[%s0 + $0x160] sm:$0xff]
    %v72 = vld [vmem:[%s0 + $0x168] sm:$0xff]
    %v73 = vld [vmem:[%s0 + $0x170] sm:$0xff]
    %v74 = vld [vmem:[%s0 + $0x178] sm:$0xff]
    %v75 = vld [vmem:[%s0 + $0x180] sm:$0xff]
    %v76 = vld [vmem:[%s0 + $0x188] sm:$0xff]
    %v77 = vld [vmem:[%s0 + $0x190] sm:$0xff]
    %v78 = vld [vmem:[%s0 + $0x198] sm:$0xff]
    %v79 = vld [vmem:[%s0 + $0x1a0] sm:$0xff]
    %v80 = vld [vmem:[%s0 + $0x1a8] sm:$0xff]
    %v81 = vld [vmem:[%s0 + $0x1b0] sm:$0xff]
    %v82 = vld [vmem:[%s0 + $0x1b8] sm:$0xff]
    %v83 = vld [vmem:[%s0 + $0x1c0] sm:$0xff]
    %v84 = vld [vmem:[%s0 + $0x1c8] sm:$0xff]
    %v85 = vld [vmem:[%s0 + $0x1d0] sm:$0xff]
    %v86 = vld [vmem:[%s0 + $0x1d8] sm:$0xff]
    %v87 = vld [vmem:[%s0 + $0x1e0] sm:$0xff]
    %v88 = vld [vmem:[%s0 + $0x1e8] sm:$0xff]
    %v89 = vld [vmem:[%s0 + $0x1f0] sm:$0xff]
    %v90 = vld [vmem:[%s0 + $0x1f8] sm:$0xff]
    %v91 = vld [vmem:[%s1] sm:$0xff]
    %v92 = vld [vmem:[%s1 + $0x8] sm:$0xff]
    %v93 = vld [vmem:[%s1 + $0x10] sm:$0xff]
    %v94 = vld [vmem:[%s1 + $0x18] sm:$0xff]
    %v95 = vld [vmem:[%s1 + $0x20] sm:$0xff]
    %v96 = vld [vmem:[%s1 + $0x28] sm:$0xff]
    %v97 = vld [vmem:[%s1 + $0x30] sm:$0xff]
    %v98 = vld [vmem:[%s1 + $0x38] sm:$0xff]
    %v99 = vld [vmem:[%s1 + $0x40] sm:$0xff]
    %v100 = vld [vmem:[%s1 + $0x48] sm:$0xff]
    %v101 = vld [vmem:[%s1 + $0x50] sm:$0xff]
    %v102 = vld [vmem:[%s1 + $0x58] sm:$0xff]
    %v103 = vld [vmem:[%s1 + $0x60] sm:$0xff]
    %v104 = vld [vmem:[%s1 + $0x68] sm:$0xff]
    %v105 = vld [vmem:[%s1 + $0x70] sm:$0xff]
    %v106 = vld [vmem:[%s1 + $0x78] sm:$0xff]
    %v107 = vld [vmem:[%s1 + $0x80] sm:$0xff]
    %v108 = vld [vmem:[%s1 + $0x88] sm:$0xff]
    %v109 = vld [vmem:[%s1 + $0x90] sm:$0xff]
    %v110 = vld [vmem:[%s1 + $0x98] sm:$0xff]
    %v111 = vld [vmem:[%s1 + $0xa0] sm:$0xff]
    %v112 = vld [vmem:[%s1 + $0xa8] sm:$0xff]
    %v113 = vld [vmem:[%s1 + $0xb0] sm:$0xff]
    %v114 = vld [vmem:[%s1 + $0xb8] sm:$0xff]
    %v115 = vld [vmem:[%s1 + $0xc0] sm:$0xff]
    %v116 = vld [vmem:[%s1 + $0xc8] sm:$0xff]
    %v117 = vld [vmem:[%s1 + $0xd0] sm:$0xff]
    %v118 = vld [vmem:[%s1 + $0xd8] sm:$0xff]
    %v119 = vld [vmem:[%s1 + $0xe0] sm:$0xff]
    %v120 = vld [vmem:[%s1 + $0xe8] sm:$0xff]
    %v121 = vld [vmem:[%s1 + $0xf0] sm:$0xff]
    %v122 = vld [vmem:[%s1 + $0xf8] sm:$0xff]
    %v123 = vld [vmem:[%s1 + $0x100] sm:$0xff]
    %v124 = vld [vmem:[%s1 + $0x108] sm:$0xff]
    %v125 = vld [vmem:[%s1 + $0x110] sm:$0xff]
    %v126 = vld [vmem:[%s1 + $0x118] sm:$0xff]
    %v127 = vld [vmem:[%s1 + $0x120] sm:$0xff]
    %v128 = vld [vmem:[%s1 + $0x128] sm:$0xff]
    %v129 = vld [vmem:[%s1 + $0x130] sm:$0xff]
    %v130 = vld [vmem:[%s1 + $0x138] sm:$0xff]
    %v131 = vld [vmem:[%s1 + $0x140] sm:$0xff]
    %v132 = vld [vmem:[%s1 + $0x148] sm:$0xff]
    %v133 = vld [vmem:[%s1 + $0x150] sm:$0xff]
    %v134 = vld [vmem:[%s1 + $0x158] sm:$0xff]
    %v135 = vld [vmem:[%s1 + $0x160] sm:$0xff]
    %v136 = vld [vmem:[%s1 + $0x168] sm:$0xff]
    %v137 = vld [vmem:[%s1 + $0x170] sm:$0xff]
    %v138 = vld [vmem:[%s1 + $0x178] sm:$0xff]
    %v139 = vld [vmem:[%s1 + $0x180] sm:$0xff]
    %v140 = vld [vmem:[%s1 + $0x188] sm:$0xff]
    %v141 = vld [vmem:[%s1 + $0x190] sm:$0xff]
    %v142 = vld [vmem:[%s1 + $0x198] sm:$0xff]
    %v143 = vld [vmem:[%s1 + $0x1a0] sm:$0xff]
    %v144 = vld [vmem:[%s1 + $0x1a8] sm:$0xff]
    %v145 = vld [vmem:[%s1 + $0x1b0] sm:$0xff]
    %v146 = vld [vmem:[%s1 + $0x1b8] sm:$0xff]
    %v147 = vld [vmem:[%s1 + $0x1c0] sm:$0xff]
    %v148 = vld [vmem:[%s1 + $0x1c8] sm:$0xff]
    %v149 = vld [vmem:[%s1 + $0x1d0] sm:$0xff]
    %v150 = vld [vmem:[%s1 + $0x1d8] sm:$0xff]
    %v151 = vld [vmem:[%s1 + $0x1e0] sm:$0xff]
    %v152 = vld [vmem:[%s1 + $0x1e8] sm:$0xff]
    %v153 = vld [vmem:[%s1 + $0x1f0] sm:$0xff]
    %v154 = vld [vmem:[%s1 + $0x1f8] sm:$0xff]
    %155 = vmatpush.msra.mxu0 %v106
    %156 = vmatpush.msra.mxu0 %v105
    %157 = vmatpush.msra.mxu0 %v104
    %158 = vmatpush.msra.mxu0 %v103
    %159 = vmatpush.msra.mxu0 %v102
    %160 = vmatpush.msra.mxu0 %v101
    %161 = vmatpush.msra.mxu0 %v100
    %162 = vmatpush.msra.mxu0 %v99
    %163 = vmatpush.msra.mxu0 %v98
    %164 = vmatpush.msra.mxu0 %v97
    %165 = vmatpush.msra.mxu0 %v96
    %166 = vmatpush.msra.mxu0 %v95
    %167 = vmatpush.msra.mxu0 %v94
    %168 = vmatpush.msra.mxu0 %v93
    %169 = vmatpush.msra.mxu0 %v92
    %170 = vmatpush.msra.mxu0 %v91
    %171 = vmatmul.f32.gmra.mxu0 %v27
    %v172 = vpop.f32.mrf.mxu0
    %v173 = vadd.f32 0.0, %v172
    %174 = vmatmul.f32.gmra.mxu0 %v31
    %v175 = vpop.f32.mrf.mxu0
    %v176 = vadd.f32 0.0, %v175
    %177 = vmatmul.f32.gmra.mxu0 %v35
    %v178 = vpop.f32.mrf.mxu0
    %v179 = vadd.f32 0.0, %v178
    %180 = vmatmul.f32.gmra.mxu0 %v39
    %v181 = vpop.f32.mrf.mxu0
    %v182 = vadd.f32 0.0, %v181
    %183 = vmatmul.f32.gmra.mxu0 %v43
    %v184 = vpop.f32.mrf.mxu0
    %v185 = vadd.f32 0.0, %v184
    %186 = vmatmul.f32.gmra.mxu0 %v47
    %v187 = vpop.f32.mrf.mxu0
    %v188 = vadd.f32 0.0, %v187
    %189 = vmatmul.f32.gmra.mxu0 %v51
    %v190 = vpop.f32.mrf.mxu0
    %v191 = vadd.f32 0.0, %v190
    %192 = vmatmul.f32.gmra.mxu0 %v55
    %v193 = vpop.f32.mrf.mxu0
    %v194 = vadd.f32 0.0, %v193
    %195 = vmatmul.f32.gmra.mxu0 %v59
    %v196 = vpop.f32.mrf.mxu0
    %v197 = vadd.f32 0.0, %v196
    %198 = vmatmul.f32.gmra.mxu0 %v63
    %v199 = vpop.f32.mrf.mxu0
    %v200 = vadd.f32 0.0, %v199
    %201 = vmatmul.f32.gmra.mxu0 %v67
    %v202 = vpop.f32.mrf.mxu0
    %v203 = vadd.f32 0.0, %v202
    %204 = vmatmul.f32.gmra.mxu0 %v71
    %v205 = vpop.f32.mrf.mxu0
    %v206 = vadd.f32 0.0, %v205
    %207 = vmatmul.f32.gmra.mxu0 %v75
    %v208 = vpop.f32.mrf.mxu0
    %v209 = vadd.f32 0.0, %v208
    %210 = vmatmul.f32.gmra.mxu0 %v79
    %v211 = vpop.f32.mrf.mxu0
    %v212 = vadd.f32 0.0, %v211
    %213 = vmatmul.f32.gmra.mxu0 %v83
    %v214 = vpop.f32.mrf.mxu0
    %v215 = vadd.f32 0.0, %v214
    %216 = vmatmul.f32.gmra.mxu0 %v87
    %v217 = vpop.f32.mrf.mxu0
    %v218 = vadd.f32 0.0, %v217
    %219 = vdwg.mxu0
    %220 = vmatpush.msra.mxu0 %v122
    %221 = vmatpush.msra.mxu0 %v121
    %222 = vmatpush.msra.mxu0 %v120
    %223 = vmatpush.msra.mxu0 %v119
    %224 = vmatpush.msra.mxu0 %v118
    %225 = vmatpush.msra.mxu0 %v117
    %226 = vmatpush.msra.mxu0 %v116
    %227 = vmatpush.msra.mxu0 %v115
    %228 = vmatpush.msra.mxu0 %v114
    %229 = vmatpush.msra.mxu0 %v113
    %230 = vmatpush.msra.mxu0 %v112
    %231 = vmatpush.msra.mxu0 %v111
    %232 = vmatpush.msra.mxu0 %v110
    %233 = vmatpush.msra.mxu0 %v109
    %234 = vmatpush.msra.mxu0 %v108
    %235 = vmatpush.msra.mxu0 %v107
    %236 = vmatmul.f32.gmra.mxu0 %v28
    %v237 = vpop.f32.mrf.mxu0
    %v238 = vadd.f32 %v173, %v237
    %239 = vmatmul.f32.gmra.mxu0 %v32
    %v240 = vpop.f32.mrf.mxu0
    %v241 = vadd.f32 %v176, %v240
    %242 = vmatmul.f32.gmra.mxu0 %v36
    %v243 = vpop.f32.mrf.mxu0
    %v244 = vadd.f32 %v179, %v243
    %245 = vmatmul.f32.gmra.mxu0 %v40
    %v246 = vpop.f32.mrf.mxu0
    %v247 = vadd.f32 %v182, %v246
    %248 = vmatmul.f32.gmra.mxu0 %v44
    %v249 = vpop.f32.mrf.mxu0
    %v250 = vadd.f32 %v185, %v249
    %251 = vmatmul.f32.gmra.mxu0 %v48
    %v252 = vpop.f32.mrf.mxu0
    %v253 = vadd.f32 %v188, %v252
    %254 = vmatmul.f32.gmra.mxu0 %v52
    %v255 = vpop.f32.mrf.mxu0
    %v256 = vadd.f32 %v191, %v255
    %257 = vmatmul.f32.gmra.mxu0 %v56
    %v258 = vpop.f32.mrf.mxu0
    %v259 = vadd.f32 %v194, %v258
    %260 = vmatmul.f32.gmra.mxu0 %v60
    %v261 = vpop.f32.mrf.mxu0
    %v262 = vadd.f32 %v197, %v261
    %263 = vmatmul.f32.gmra.mxu0 %v64
    %v264 = vpop.f32.mrf.mxu0
    %v265 = vadd.f32 %v200, %v264
    %266 = vmatmul.f32.gmra.mxu0 %v68
    %v267 = vpop.f32.mrf.mxu0
    %v268 = vadd.f32 %v203, %v267
    %269 = vmatmul.f32.gmra.mxu0 %v72
    %v270 = vpop.f32.mrf.mxu0
    %v271 = vadd.f32 %v206, %v270
    %272 = vmatmul.f32.gmra.mxu0 %v76
    %v273 = vpop.f32.mrf.mxu0
    %v274 = vadd.f32 %v209, %v273
    %275 = vmatmul.f32.gmra.mxu0 %v80
    %v276 = vpop.f32.mrf.mxu0
    %v277 = vadd.f32 %v212, %v276
    %278 = vmatmul.f32.gmra.mxu0 %v84
    %v279 = vpop.f32.mrf.mxu0
    %v280 = vadd.f32 %v215, %v279
    %281 = vmatmul.f32.gmra.mxu0 %v88
    %v282 = vpop.f32.mrf.mxu0
    %v283 = vadd.f32 %v218, %v282
    %284 = vdwg.mxu0
    %285 = vmatpush.msra.mxu0 %v138
    %286 = vmatpush.msra.mxu0 %v137
    %287 = vmatpush.msra.mxu0 %v136
    %288 = vmatpush.msra.mxu0 %v135
    %289 = vmatpush.msra.mxu0 %v134
    %290 = vmatpush.msra.mxu0 %v133
    %291 = vmatpush.msra.mxu0 %v132
    %292 = vmatpush.msra.mxu0 %v131
    %293 = vmatpush.msra.mxu0 %v130
    %294 = vmatpush.msra.mxu0 %v129
    %295 = vmatpush.msra.mxu0 %v128
    %296 = vmatpush.msra.mxu0 %v127
    %297 = vmatpush.msra.mxu0 %v126
    %298 = vmatpush.msra.mxu0 %v125
    %299 = vmatpush.msra.mxu0 %v124
    %300 = vmatpush.msra.mxu0 %v123
    %301 = vmatmul.f32.gmra.mxu0 %v29
    %v302 = vpop.f32.mrf.mxu0
    %v303 = vadd.f32 %v238, %v302
    %304 = vmatmul.f32.gmra.mxu0 %v33
    %v305 = vpop.f32.mrf.mxu0
    %v306 = vadd.f32 %v241, %v305
    %307 = vmatmul.f32.gmra.mxu0 %v37
    %v308 = vpop.f32.mrf.mxu0
    %v309 = vadd.f32 %v244, %v308
    %310 = vmatmul.f32.gmra.mxu0 %v41
    %v311 = vpop.f32.mrf.mxu0
    %v312 = vadd.f32 %v247, %v311
    %313 = vmatmul.f32.gmra.mxu0 %v45
    %v314 = vpop.f32.mrf.mxu0
    %v315 = vadd.f32 %v250, %v314
    %316 = vmatmul.f32.gmra.mxu0 %v49
    %v317 = vpop.f32.mrf.mxu0
    %v318 = vadd.f32 %v253, %v317
    %319 = vmatmul.f32.gmra.mxu0 %v53
    %v320 = vpop.f32.mrf.mxu0
    %v321 = vadd.f32 %v256, %v320
    %322 = vmatmul.f32.gmra.mxu0 %v57
    %v323 = vpop.f32.mrf.mxu0
    %v324 = vadd.f32 %v259, %v323
    %325 = vmatmul.f32.gmra.mxu0 %v61
    %v326 = vpop.f32.mrf.mxu0
    %v327 = vadd.f32 %v262, %v326
    %328 = vmatmul.f32.gmra.mxu0 %v65
    %v329 = vpop.f32.mrf.mxu0
    %v330 = vadd.f32 %v265, %v329
    %331 = vmatmul.f32.gmra.mxu0 %v69
    %v332 = vpop.f32.mrf.mxu0
    %v333 = vadd.f32 %v268, %v332
    %334 = vmatmul.f32.gmra.mxu0 %v73
    %v335 = vpop.f32.mrf.mxu0
    %v336 = vadd.f32 %v271, %v335
    %337 = vmatmul.f32.gmra.mxu0 %v77
    %v338 = vpop.f32.mrf.mxu0
    %v339 = vadd.f32 %v274, %v338
    %340 = vmatmul.f32.gmra.mxu0 %v81
    %v341 = vpop.f32.mrf.mxu0
    %v342 = vadd.f32 %v277, %v341
    %343 = vmatmul.f32.gmra.mxu0 %v85
    %v344 = vpop.f32.mrf.mxu0
    %v345 = vadd.f32 %v280, %v344
    %346 = vmatmul.f32.gmra.mxu0 %v89
    %v347 = vpop.f32.mrf.mxu0
    %v348 = vadd.f32 %v283, %v347
    %349 = vdwg.mxu0
    %350 = vmatpush.msra.mxu0 %v154
    %351 = vmatpush.msra.mxu0 %v153
    %352 = vmatpush.msra.mxu0 %v152
    %353 = vmatpush.msra.mxu0 %v151
    %354 = vmatpush.msra.mxu0 %v150
    %355 = vmatpush.msra.mxu0 %v149
    %356 = vmatpush.msra.mxu0 %v148
    %357 = vmatpush.msra.mxu0 %v147
    %358 = vmatpush.msra.mxu0 %v146
    %359 = vmatpush.msra.mxu0 %v145
    %360 = vmatpush.msra.mxu0 %v144
    %361 = vmatpush.msra.mxu0 %v143
    %362 = vmatpush.msra.mxu0 %v142
    %363 = vmatpush.msra.mxu0 %v141
    %364 = vmatpush.msra.mxu0 %v140
    %365 = vmatpush.msra.mxu0 %v139
    %366 = vmatmul.f32.gmra.mxu0 %v30
    %v367 = vpop.f32.mrf.mxu0
    %v368 = vadd.f32 %v303, %v367
    %369 = vmatmul.f32.gmra.mxu0 %v34
    %v370 = vpop.f32.mrf.mxu0
    %v371 = vadd.f32 %v306, %v370
    %372 = vmatmul.f32.gmra.mxu0 %v38
    %v373 = vpop.f32.mrf.mxu0
    %v374 = vadd.f32 %v309, %v373
    %375 = vmatmul.f32.gmra.mxu0 %v42
    %v376 = vpop.f32.mrf.mxu0
    %v377 = vadd.f32 %v312, %v376
    %378 = vmatmul.f32.gmra.mxu0 %v46
    %v379 = vpop.f32.mrf.mxu0
    %v380 = vadd.f32 %v315, %v379
    %381 = vmatmul.f32.gmra.mxu0 %v50
    %v382 = vpop.f32.mrf.mxu0
    %v383 = vadd.f32 %v318, %v382
    %384 = vmatmul.f32.gmra.mxu0 %v54
    %v385 = vpop.f32.mrf.mxu0
    %v386 = vadd.f32 %v321, %v385
    %387 = vmatmul.f32.gmra.mxu0 %v58
    %v388 = vpop.f32.mrf.mxu0
    %v389 = vadd.f32 %v324, %v388
    %390 = vmatmul.f32.gmra.mxu0 %v62
    %v391 = vpop.f32.mrf.mxu0
    %v392 = vadd.f32 %v327, %v391
    %393 = vmatmul.f32.gmra.mxu0 %v66
    %v394 = vpop.f32.mrf.mxu0
    %v395 = vadd.f32 %v330, %v394
    %396 = vmatmul.f32.gmra.mxu0 %v70
    %v397 = vpop.f32.mrf.mxu0
    %v398 = vadd.f32 %v333, %v397
    %399 = vmatmul.f32.gmra.mxu0 %v74
    %v400 = vpop.f32.mrf.mxu0
    %v401 = vadd.f32 %v336, %v400
    %402 = vmatmul.f32.gmra.mxu0 %v78
    %v403 = vpop.f32.mrf.mxu0
    %v404 = vadd.f32 %v339, %v403
    %405 = vmatmul.f32.gmra.mxu0 %v82
    %v406 = vpop.f32.mrf.mxu0
    %v407 = vadd.f32 %v342, %v406
    %408 = vmatmul.f32.gmra.mxu0 %v86
    %v409 = vpop.f32.mrf.mxu0
    %v410 = vadd.f32 %v345, %v409
    %411 = vmatmul.f32.gmra.mxu0 %v90
    %v412 = vpop.f32.mrf.mxu0
    %v413 = vadd.f32 %v348, %v412
    %414 = vdwg.mxu0
    %v415 = vmax.f32 %v368, %v380
    %v416 = vmax.f32 %v415, %v392
    %v417 = vmax.f32 %v416, %v404
    %v418 = vmax.f32 %v371, %v383
    %v419 = vmax.f32 %v418, %v395
    %v420 = vmax.f32 %v419, %v407
    %v421 = vmax.f32 %v374, %v386
    %v422 = vmax.f32 %v421, %v398
    %v423 = vmax.f32 %v422, %v410
    %v424 = vmax.f32 %v377, %v389
    %v425 = vmax.f32 %v424, %v401
    %v426 = vmax.f32 %v425, %v413
    %v427 = vld [vmem:[%s2] sm:$0x1]
    %v429 = vperm.slane %v427, 0
    %v431 = vadd.f32 %v417, %v429
    %v432 = vadd.f32 %v420, %v429
    %v433 = vadd.f32 %v423, %v429
    %v434 = vadd.f32 %v426, %v429
    %v435 = vmax.f32 %v431, 0.0
    %v436 = vmax.f32 %v432, 0.0
    %v437 = vmax.f32 %v433, 0.0
    %v438 = vmax.f32 %v434, 0.0
    %439 = vst [vmem:[#allocation2] sm:$0x1] %v435
    %v441 = vrot.slane %v435, 7
    %v442 = vrot.slane %v441, 2
    %444 = vst [vmem:[#allocation2 + $0x2] sm:$0x1] %v442
    %445 = vst.sshfl [vmem:[#allocation1] sm:$0xff pattern:$0x73625140] %v435
    %s446 = scalar_lea.vmem [#allocation1], 1
    %v447 = vld [vmem:[%s446] ss:$4 sm:$0xff]
    %449 = vst [vmem:[#allocation2 + $0x4] sm:$0x1] %v447
    %450 = vst.sshfl [vmem:[#allocation1] sm:$0xff pattern:$0x73625140] %v435
    %s451 = scalar_lea.vmem [#allocation1], 1
    %v452 = vld [vmem:[%s451] ss:$4 sm:$0xff]
    %v453 = vrot.slane %v452, 7
    %v454 = vrot.slane %v453, 2
    %456 = vst [vmem:[#allocation2 + $0x6] sm:$0x1] %v454
    %457 = vst.sshfl [vmem:[#allocation1] sm:$0xff pattern:$0x73625140] %v435
    %s458 = scalar_lea.vmem [#allocation1], 2
    %v459 = vld [vmem:[%s458] ss:$4 sm:$0xff]
    %461 = vst [vmem:[#allocation2 + $0x8] sm:$0x1] %v459
    %462 = vst.sshfl [vmem:[#allocation1] sm:$0xff pattern:$0x73625140] %v435
    %s463 = scalar_lea.vmem [#allocation1], 2
    %v464 = vld [vmem:[%s463] ss:$4 sm:$0xff]
    %v465 = vrot.slane %v464, 7
    %v466 = vrot.slane %v465, 2
    %468 = vst [vmem:[#allocation2 + $0xa] sm:$0x1] %v466
    %469 = vst.sshfl [vmem:[#allocation1] sm:$0xff pattern:$0x73625140] %v435
    %s470 = scalar_lea.vmem [#allocation1], 3
    %v471 = vld [vmem:[%s470] ss:$4 sm:$0xff]
    %473 = vst [vmem:[#allocation2 + $0xc] sm:$0x1] %v471
    %474 = vst.sshfl [vmem:[#allocation1] sm:$0xff pattern:$0x73625140] %v435
    %s475 = scalar_lea.vmem [#allocation1], 3
    %v476 = vld [vmem:[%s475] ss:$4 sm:$0xff]
    %v477 = vrot.slane %v476, 7
    %v478 = vrot.slane %v477, 2
    %480 = vst [vmem:[#allocation2 + $0xe] sm:$0x1] %v478
    %481 = vst [vmem:[#allocation2 + $0x10] sm:$0x1] %v436
    %v483 = vrot.slane %v436, 7
    %v484 = vrot.slane %v483, 2
    %486 = vst [vmem:[#allocation2 + $0x12] sm:$0x1] %v484
    %487 = vst.sshfl [vmem:[#allocation1] sm:$0xff pattern:$0x73625140] %v436
    %s488 = scalar_lea.vmem [#allocation1], 1
    %v489 = vld [vmem:[%s488] ss:$4 sm:$0xff]
    %491 = vst [vmem:[#allocation2 + $0x14] sm:$0x1] %v489
    %492 = vst.sshfl [vmem:[#allocation1] sm:$0xff pattern:$0x73625140] %v436
    %s493 = scalar_lea.vmem [#allocation1], 1
    %v494 = vld [vmem:[%s493] ss:$4 sm:$0xff]
    %v495 = vrot.slane %v494, 7
    %v496 = vrot.slane %v495, 2
    %498 = vst [vmem:[#allocation2 + $0x16] sm:$0x1] %v496
    %499 = vst.sshfl [vmem:[#allocation1] sm:$0xff pattern:$0x73625140] %v436
    %s500 = scalar_lea.vmem [#allocation1], 2
    %v501 = vld [vmem:[%s500] ss:$4 sm:$0xff]
    %503 = vst [vmem:[#allocation2 + $0x18] sm:$0x1] %v501
    %504 = vst.sshfl [vmem:[#allocation1] sm:$0xff pattern:$0x73625140] %v436
    %s505 = scalar_lea.vmem [#allocation1], 2
    %v506 = vld [vmem:[%s505] ss:$4 sm:$0xff]
    %v507 = vrot.slane %v506, 7
    %v508 = vrot.slane %v507, 2
    %510 = vst [vmem:[#allocation2 + $0x1a] sm:$0x1] %v508
    %511 = vst.sshfl [vmem:[#allocation1] sm:$0xff pattern:$0x73625140] %v436
    %s512 = scalar_lea.vmem [#allocation1], 3
    %v513 = vld [vmem:[%s512] ss:$4 sm:$0xff]
    %515 = vst [vmem:[#allocation2 + $0x1c] sm:$0x1] %v513
    %516 = vst.sshfl [vmem:[#allocation1] sm:$0xff pattern:$0x73625140] %v436
    %s517 = scalar_lea.vmem [#allocation1], 3
    %v518 = vld [vmem:[%s517] ss:$4 sm:$0xff]
    %v519 = vrot.slane %v518, 7
    %v520 = vrot.slane %v519, 2
    %522 = vst [vmem:[#allocation2 + $0x1e] sm:$0x1] %v520
    %523 = vst [vmem:[#allocation2 + $0x1] sm:$0x1] %v437
    %v525 = vrot.slane %v437, 7
    %v526 = vrot.slane %v525, 2
    %528 = vst [vmem:[#allocation2 + $0x3] sm:$0x1] %v526
    %529 = vst.sshfl [vmem:[#allocation1] sm:$0xff pattern:$0x73625140] %v437
    %s530 = scalar_lea.vmem [#allocation1], 1
    %v531 = vld [vmem:[%s530] ss:$4 sm:$0xff]
    %533 = vst [vmem:[#allocation2 + $0x5] sm:$0x1] %v531
    %534 = vst.sshfl [vmem:[#allocation1] sm:$0xff pattern:$0x73625140] %v437
    %s535 = scalar_lea.vmem [#allocation1], 1
    %v536 = vld [vmem:[%s535] ss:$4 sm:$0xff]
    %v537 = vrot.slane %v536, 7
    %v538 = vrot.slane %v537, 2
    %540 = vst [vmem:[#allocation2 + $0x7] sm:$0x1] %v538
    %541 = vst.sshfl [vmem:[#allocation1] sm:$0xff pattern:$0x73625140] %v437
    %s542 = scalar_lea.vmem [#allocation1], 2
    %v543 = vld [vmem:[%s542] ss:$4 sm:$0xff]
    %545 = vst [vmem:[#allocation2 + $0x9] sm:$0x1] %v543
    %546 = vst.sshfl [vmem:[#allocation1] sm:$0xff pattern:$0x73625140] %v437
    %s547 = scalar_lea.vmem [#allocation1], 2
    %v548 = vld [vmem:[%s547] ss:$4 sm:$0xff]
    %v549 = vrot.slane %v548, 7
    %v550 = vrot.slane %v549, 2
    %552 = vst [vmem:[#allocation2 + $0xb] sm:$0x1] %v550
    %553 = vst.sshfl [vmem:[#allocation1] sm:$0xff pattern:$0x73625140] %v437
    %s554 = scalar_lea.vmem [#allocation1], 3
    %v555 = vld [vmem:[%s554] ss:$4 sm:$0xff]
    %557 = vst [vmem:[#allocation2 + $0xd] sm:$0x1] %v555
    %558 = vst.sshfl [vmem:[#allocation1] sm:$0xff pattern:$0x73625140] %v437
    %s559 = scalar_lea.vmem [#allocation1], 3
    %v560 = vld [vmem:[%s559] ss:$4 sm:$0xff]
    %v561 = vrot.slane %v560, 7
    %v562 = vrot.slane %v561, 2
    %564 = vst [vmem:[#allocation2 + $0xf] sm:$0x1] %v562
    %565 = vst [vmem:[#allocation2 + $0x11] sm:$0x1] %v438
    %v567 = vrot.slane %v438, 7
    %v568 = vrot.slane %v567, 2
    %570 = vst [vmem:[#allocation2 + $0x13] sm:$0x1] %v568
    %571 = vst.sshfl [vmem:[#allocation1] sm:$0xff pattern:$0x73625140] %v438
    %s572 = scalar_lea.vmem [#allocation1], 1
    %v573 = vld [vmem:[%s572] ss:$4 sm:$0xff]
    %575 = vst [vmem:[#allocation2 + $0x15] sm:$0x1] %v573
    %576 = vst.sshfl [vmem:[#allocation1] sm:$0xff pattern:$0x73625140] %v438
    %s577 = scalar_lea.vmem [#allocation1], 1
    %v578 = vld [vmem:[%s577] ss:$4 sm:$0xff]
    %v579 = vrot.slane %v578, 7
    %v580 = vrot.slane %v579, 2
    %582 = vst [vmem:[#allocation2 + $0x17] sm:$0x1] %v580
    %583 = vst.sshfl [vmem:[#allocation1] sm:$0xff pattern:$0x73625140] %v438
    %s584 = scalar_lea.vmem [#allocation1], 2
    %v585 = vld [vmem:[%s584] ss:$4 sm:$0xff]
    %587 = vst [vmem:[#allocation2 + $0x19] sm:$0x1] %v585
    %588 = vst.sshfl [vmem:[#allocation1] sm:$0xff pattern:$0x73625140] %v438
    %s589 = scalar_lea.vmem [#allocation1], 2
    %v590 = vld [vmem:[%s589] ss:$4 sm:$0xff]
    %v591 = vrot.slane %v590, 7
    %v592 = vrot.slane %v591, 2
    %594 = vst [vmem:[#allocation2 + $0x1b] sm:$0x1] %v592
    %595 = vst.sshfl [vmem:[#allocation1] sm:$0xff pattern:$0x73625140] %v438
    %s596 = scalar_lea.vmem [#allocation1], 3
    %v597 = vld [vmem:[%s596] ss:$4 sm:$0xff]
    %599 = vst [vmem:[#allocation2 + $0x1d] sm:$0x1] %v597
    %600 = vst.sshfl [vmem:[#allocation1] sm:$0xff pattern:$0x73625140] %v438
    %s601 = scalar_lea.vmem [#allocation1], 3
    %v602 = vld [vmem:[%s601] ss:$4 sm:$0xff]
    %v603 = vrot.slane %v602, 7
    %v604 = vrot.slane %v603, 2
    %606 = vst [vmem:[#allocation2 + $0x1f] sm:$0x1] %v604
    %v607 = vld [vmem:[#allocation2] sm:$0xff]
    %v608 = vld [vmem:[#allocation2 + $0x8] sm:$0xff]
    %v609 = vld [vmem:[#allocation2 + $0x10] sm:$0xff]
    %v610 = vld [vmem:[#allocation2 + $0x18] sm:$0xff]
    %v611 = vld [vmem:[%s3] sm:$0xff]
    %v612 = vld [vmem:[%s3 + $0x8] sm:$0xff]
    %v613 = vld [vmem:[%s3 + $0x10] sm:$0xff]
    %v614 = vld [vmem:[%s3 + $0x18] sm:$0xff]
    %v615 = vld [vmem:[%s3 + $0x20] sm:$0xff]
    %v616 = vld [vmem:[%s3 + $0x28] sm:$0xff]
    %v617 = vld [vmem:[%s3 + $0x30] sm:$0xff]
    %v618 = vld [vmem:[%s3 + $0x38] sm:$0xff]
    %v619 = vld [vmem:[%s3 + $0x40] sm:$0xff]
    %v620 = vld [vmem:[%s3 + $0x48] sm:$0xff]
    %v621 = vld [vmem:[%s3 + $0x50] sm:$0xff]
    %v622 = vld [vmem:[%s3 + $0x58] sm:$0xff]
    %v623 = vld [vmem:[%s3 + $0x60] sm:$0xff]
    %v624 = vld [vmem:[%s3 + $0x68] sm:$0xff]
    %v625 = vld [vmem:[%s3 + $0x70] sm:$0xff]
    %v626 = vld [vmem:[%s3 + $0x78] sm:$0xff]
    %v627 = vld [vmem:[%s3 + $0x80] sm:$0xff]
    %v628 = vld [vmem:[%s3 + $0x88] sm:$0xff]
    %v629 = vld [vmem:[%s3 + $0x90] sm:$0xff]
    %v630 = vld [vmem:[%s3 + $0x98] sm:$0xff]
    %v631 = vld [vmem:[%s3 + $0xa0] sm:$0xff]
    %v632 = vld [vmem:[%s3 + $0xa8] sm:$0xff]
    %v633 = vld [vmem:[%s3 + $0xb0] sm:$0xff]
    %v634 = vld [vmem:[%s3 + $0xb8] sm:$0xff]
    %v635 = vld [vmem:[%s3 + $0xc0] sm:$0xff]
    %v636 = vld [vmem:[%s3 + $0xc8] sm:$0xff]
    %v637 = vld [vmem:[%s3 + $0xd0] sm:$0xff]
    %v638 = vld [vmem:[%s3 + $0xd8] sm:$0xff]
    %v639 = vld [vmem:[%s3 + $0xe0] sm:$0xff]
    %v640 = vld [vmem:[%s3 + $0xe8] sm:$0xff]
    %v641 = vld [vmem:[%s3 + $0xf0] sm:$0xff]
    %v642 = vld [vmem:[%s3 + $0xf8] sm:$0xff]
    %v643 = vld [vmem:[%s3 + $0x100] sm:$0xff]
    %v644 = vld [vmem:[%s3 + $0x108] sm:$0xff]
    %v645 = vld [vmem:[%s3 + $0x110] sm:$0xff]
    %v646 = vld [vmem:[%s3 + $0x118] sm:$0xff]
    %v647 = vld [vmem:[%s3 + $0x120] sm:$0xff]
    %v648 = vld [vmem:[%s3 + $0x128] sm:$0xff]
    %v649 = vld [vmem:[%s3 + $0x130] sm:$0xff]
    %v650 = vld [vmem:[%s3 + $0x138] sm:$0xff]
    %v651 = vld [vmem:[%s3 + $0x140] sm:$0xff]
    %v652 = vld [vmem:[%s3 + $0x148] sm:$0xff]
    %v653 = vld [vmem:[%s3 + $0x150] sm:$0xff]
    %v654 = vld [vmem:[%s3 + $0x158] sm:$0xff]
    %v655 = vld [vmem:[%s3 + $0x160] sm:$0xff]
    %v656 = vld [vmem:[%s3 + $0x168] sm:$0xff]
    %v657 = vld [vmem:[%s3 + $0x170] sm:$0xff]
    %v658 = vld [vmem:[%s3 + $0x178] sm:$0xff]
    %v659 = vld [vmem:[%s3 + $0x180] sm:$0xff]
    %v660 = vld [vmem:[%s3 + $0x188] sm:$0xff]
    %v661 = vld [vmem:[%s3 + $0x190] sm:$0xff]
    %v662 = vld [vmem:[%s3 + $0x198] sm:$0xff]
    %v663 = vld [vmem:[%s3 + $0x1a0] sm:$0xff]
    %v664 = vld [vmem:[%s3 + $0x1a8] sm:$0xff]
    %v665 = vld [vmem:[%s3 + $0x1b0] sm:$0xff]
    %v666 = vld [vmem:[%s3 + $0x1b8] sm:$0xff]
    %v667 = vld [vmem:[%s3 + $0x1c0] sm:$0xff]
    %v668 = vld [vmem:[%s3 + $0x1c8] sm:$0xff]
    %v669 = vld [vmem:[%s3 + $0x1d0] sm:$0xff]
    %v670 = vld [vmem:[%s3 + $0x1d8] sm:$0xff]
    %v671 = vld [vmem:[%s3 + $0x1e0] sm:$0xff]
    %v672 = vld [vmem:[%s3 + $0x1e8] sm:$0xff]
    %v673 = vld [vmem:[%s3 + $0x1f0] sm:$0xff]
    %v674 = vld [vmem:[%s3 + $0x1f8] sm:$0xff]
    %v675 = vld [vmem:[%s3 + $0x200] sm:$0xff]
    %v676 = vld [vmem:[%s3 + $0x208] sm:$0xff]
    %v677 = vld [vmem:[%s3 + $0x210] sm:$0xff]
    %v678 = vld [vmem:[%s3 + $0x218] sm:$0xff]
    %v679 = vld [vmem:[%s3 + $0x220] sm:$0xff]
    %v680 = vld [vmem:[%s3 + $0x228] sm:$0xff]
    %v681 = vld [vmem:[%s3 + $0x230] sm:$0xff]
    %v682 = vld [vmem:[%s3 + $0x238] sm:$0xff]
    %v683 = vld [vmem:[%s3 + $0x240] sm:$0xff]
    %v684 = vld [vmem:[%s3 + $0x248] sm:$0xff]
    %v685 = vld [vmem:[%s3 + $0x250] sm:$0xff]
    %v686 = vld [vmem:[%s3 + $0x258] sm:$0xff]
    %v687 = vld [vmem:[%s3 + $0x260] sm:$0xff]
    %v688 = vld [vmem:[%s3 + $0x268] sm:$0xff]
    %v689 = vld [vmem:[%s3 + $0x270] sm:$0xff]
    %v690 = vld [vmem:[%s3 + $0x278] sm:$0xff]
    %v691 = vld [vmem:[%s3 + $0x280] sm:$0xff]
    %v692 = vld [vmem:[%s3 + $0x288] sm:$0xff]
    %v693 = vld [vmem:[%s3 + $0x290] sm:$0xff]
    %v694 = vld [vmem:[%s3 + $0x298] sm:$0xff]
    %v695 = vld [vmem:[%s3 + $0x2a0] sm:$0xff]
    %v696 = vld [vmem:[%s3 + $0x2a8] sm:$0xff]
    %v697 = vld [vmem:[%s3 + $0x2b0] sm:$0xff]
    %v698 = vld [vmem:[%s3 + $0x2b8] sm:$0xff]
    %v699 = vld [vmem:[%s3 + $0x2c0] sm:$0xff]
    %v700 = vld [vmem:[%s3 + $0x2c8] sm:$0xff]
    %v701 = vld [vmem:[%s3 + $0x2d0] sm:$0xff]
    %v702 = vld [vmem:[%s3 + $0x2d8] sm:$0xff]
    %v703 = vld [vmem:[%s3 + $0x2e0] sm:$0xff]
    %v704 = vld [vmem:[%s3 + $0x2e8] sm:$0xff]
    %v705 = vld [vmem:[%s3 + $0x2f0] sm:$0xff]
    %v706 = vld [vmem:[%s3 + $0x2f8] sm:$0xff]
    %v707 = vld [vmem:[%s3 + $0x300] sm:$0xff]
    %v708 = vld [vmem:[%s3 + $0x308] sm:$0xff]
    %v709 = vld [vmem:[%s3 + $0x310] sm:$0xff]
    %v710 = vld [vmem:[%s3 + $0x318] sm:$0xff]
    %v711 = vld [vmem:[%s3 + $0x320] sm:$0xff]
    %v712 = vld [vmem:[%s3 + $0x328] sm:$0xff]
    %v713 = vld [vmem:[%s3 + $0x330] sm:$0xff]
    %v714 = vld [vmem:[%s3 + $0x338] sm:$0xff]
    %v715 = vld [vmem:[%s3 + $0x340] sm:$0xff]
    %v716 = vld [vmem:[%s3 + $0x348] sm:$0xff]
    %v717 = vld [vmem:[%s3 + $0x350] sm:$0xff]
    %v718 = vld [vmem:[%s3 + $0x358] sm:$0xff]
    %v719 = vld [vmem:[%s3 + $0x360] sm:$0xff]
    %v720 = vld [vmem:[%s3 + $0x368] sm:$0xff]
    %v721 = vld [vmem:[%s3 + $0x370] sm:$0xff]
    %v722 = vld [vmem:[%s3 + $0x378] sm:$0xff]
    %v723 = vld [vmem:[%s3 + $0x380] sm:$0xff]
    %v724 = vld [vmem:[%s3 + $0x388] sm:$0xff]
    %v725 = vld [vmem:[%s3 + $0x390] sm:$0xff]
    %v726 = vld [vmem:[%s3 + $0x398] sm:$0xff]
    %v727 = vld [vmem:[%s3 + $0x3a0] sm:$0xff]
    %v728 = vld [vmem:[%s3 + $0x3a8] sm:$0xff]
    %v729 = vld [vmem:[%s3 + $0x3b0] sm:$0xff]
    %v730 = vld [vmem:[%s3 + $0x3b8] sm:$0xff]
    %v731 = vld [vmem:[%s3 + $0x3c0] sm:$0xff]
    %v732 = vld [vmem:[%s3 + $0x3c8] sm:$0xff]
    %v733 = vld [vmem:[%s3 + $0x3d0] sm:$0xff]
    %v734 = vld [vmem:[%s3 + $0x3d8] sm:$0xff]
    %v735 = vld [vmem:[%s3 + $0x3e0] sm:$0xff]
    %v736 = vld [vmem:[%s3 + $0x3e8] sm:$0xff]
    %v737 = vld [vmem:[%s3 + $0x3f0] sm:$0xff]
    %v738 = vld [vmem:[%s3 + $0x3f8] sm:$0xff]
    %v739 = vld [vmem:[%s3 + $0x400] sm:$0xff]
    %v740 = vld [vmem:[%s3 + $0x408] sm:$0xff]
    %v741 = vld [vmem:[%s3 + $0x410] sm:$0xff]
    %v742 = vld [vmem:[%s3 + $0x418] sm:$0xff]
    %v743 = vld [vmem:[%s3 + $0x420] sm:$0xff]
    %v744 = vld [vmem:[%s3 + $0x428] sm:$0xff]
    %v745 = vld [vmem:[%s3 + $0x430] sm:$0xff]
    %v746 = vld [vmem:[%s3 + $0x438] sm:$0xff]
    %v747 = vld [vmem:[%s3 + $0x440] sm:$0xff]
    %v748 = vld [vmem:[%s3 + $0x448] sm:$0xff]
    %v749 = vld [vmem:[%s3 + $0x450] sm:$0xff]
    %v750 = vld [vmem:[%s3 + $0x458] sm:$0xff]
    %v751 = vld [vmem:[%s3 + $0x460] sm:$0xff]
    %v752 = vld [vmem:[%s3 + $0x468] sm:$0xff]
    %v753 = vld [vmem:[%s3 + $0x470] sm:$0xff]
    %v754 = vld [vmem:[%s3 + $0x478] sm:$0xff]
    %v755 = vld [vmem:[%s3 + $0x480] sm:$0xff]
    %v756 = vld [vmem:[%s3 + $0x488] sm:$0xff]
    %v757 = vld [vmem:[%s3 + $0x490] sm:$0xff]
    %v758 = vld [vmem:[%s3 + $0x498] sm:$0xff]
    %v759 = vld [vmem:[%s3 + $0x4a0] sm:$0xff]
    %v760 = vld [vmem:[%s3 + $0x4a8] sm:$0xff]
    %v761 = vld [vmem:[%s3 + $0x4b0] sm:$0xff]
    %v762 = vld [vmem:[%s3 + $0x4b8] sm:$0xff]
    %v763 = vld [vmem:[%s3 + $0x4c0] sm:$0xff]
    %v764 = vld [vmem:[%s3 + $0x4c8] sm:$0xff]
    %v765 = vld [vmem:[%s3 + $0x4d0] sm:$0xff]
    %v766 = vld [vmem:[%s3 + $0x4d8] sm:$0xff]
    %v767 = vld [vmem:[%s3 + $0x4e0] sm:$0xff]
    %v768 = vld [vmem:[%s3 + $0x4e8] sm:$0xff]
    %v769 = vld [vmem:[%s3 + $0x4f0] sm:$0xff]
    %v770 = vld [vmem:[%s3 + $0x4f8] sm:$0xff]
    %v771 = vld [vmem:[%s3 + $0x500] sm:$0xff]
    %v772 = vld [vmem:[%s3 + $0x508] sm:$0xff]
    %v773 = vld [vmem:[%s3 + $0x510] sm:$0xff]
    %v774 = vld [vmem:[%s3 + $0x518] sm:$0xff]
    %v775 = vld [vmem:[%s3 + $0x520] sm:$0xff]
    %v776 = vld [vmem:[%s3 + $0x528] sm:$0xff]
    %v777 = vld [vmem:[%s3 + $0x530] sm:$0xff]
    %v778 = vld [vmem:[%s3 + $0x538] sm:$0xff]
    %v779 = vld [vmem:[%s3 + $0x540] sm:$0xff]
    %v780 = vld [vmem:[%s3 + $0x548] sm:$0xff]
    %v781 = vld [vmem:[%s3 + $0x550] sm:$0xff]
    %v782 = vld [vmem:[%s3 + $0x558] sm:$0xff]
    %v783 = vld [vmem:[%s3 + $0x560] sm:$0xff]
    %v784 = vld [vmem:[%s3 + $0x568] sm:$0xff]
    %v785 = vld [vmem:[%s3 + $0x570] sm:$0xff]
    %v786 = vld [vmem:[%s3 + $0x578] sm:$0xff]
    %v787 = vld [vmem:[%s3 + $0x580] sm:$0xff]
    %v788 = vld [vmem:[%s3 + $0x588] sm:$0xff]
    %v789 = vld [vmem:[%s3 + $0x590] sm:$0xff]
    %v790 = vld [vmem:[%s3 + $0x598] sm:$0xff]
    %v791 = vld [vmem:[%s3 + $0x5a0] sm:$0xff]
    %v792 = vld [vmem:[%s3 + $0x5a8] sm:$0xff]
    %v793 = vld [vmem:[%s3 + $0x5b0] sm:$0xff]
    %v794 = vld [vmem:[%s3 + $0x5b8] sm:$0xff]
    %v795 = vld [vmem:[%s3 + $0x5c0] sm:$0xff]
    %v796 = vld [vmem:[%s3 + $0x5c8] sm:$0xff]
    %v797 = vld [vmem:[%s3 + $0x5d0] sm:$0xff]
    %v798 = vld [vmem:[%s3 + $0x5d8] sm:$0xff]
    %v799 = vld [vmem:[%s3 + $0x5e0] sm:$0xff]
    %v800 = vld [vmem:[%s3 + $0x5e8] sm:$0xff]
    %v801 = vld [vmem:[%s3 + $0x5f0] sm:$0xff]
    %v802 = vld [vmem:[%s3 + $0x5f8] sm:$0xff]
    %v803 = vld [vmem:[%s3 + $0x600] sm:$0xff]
    %v804 = vld [vmem:[%s3 + $0x608] sm:$0xff]
    %v805 = vld [vmem:[%s3 + $0x610] sm:$0xff]
    %v806 = vld [vmem:[%s3 + $0x618] sm:$0xff]
    %v807 = vld [vmem:[%s3 + $0x620] sm:$0xff]
    %v808 = vld [vmem:[%s3 + $0x628] sm:$0xff]
    %v809 = vld [vmem:[%s3 + $0x630] sm:$0xff]
    %v810 = vld [vmem:[%s3 + $0x638] sm:$0xff]
    %v811 = vld [vmem:[%s3 + $0x640] sm:$0xff]
    %v812 = vld [vmem:[%s3 + $0x648] sm:$0xff]
    %v813 = vld [vmem:[%s3 + $0x650] sm:$0xff]
    %v814 = vld [vmem:[%s3 + $0x658] sm:$0xff]
    %v815 = vld [vmem:[%s3 + $0x660] sm:$0xff]
    %v816 = vld [vmem:[%s3 + $0x668] sm:$0xff]
    %v817 = vld [vmem:[%s3 + $0x670] sm:$0xff]
    %v818 = vld [vmem:[%s3 + $0x678] sm:$0xff]
    %v819 = vld [vmem:[%s3 + $0x680] sm:$0xff]
    %v820 = vld [vmem:[%s3 + $0x688] sm:$0xff]
    %v821 = vld [vmem:[%s3 + $0x690] sm:$0xff]
    %v822 = vld [vmem:[%s3 + $0x698] sm:$0xff]
    %v823 = vld [vmem:[%s3 + $0x6a0] sm:$0xff]
    %v824 = vld [vmem:[%s3 + $0x6a8] sm:$0xff]
    %v825 = vld [vmem:[%s3 + $0x6b0] sm:$0xff]
    %v826 = vld [vmem:[%s3 + $0x6b8] sm:$0xff]
    %v827 = vld [vmem:[%s3 + $0x6c0] sm:$0xff]
    %v828 = vld [vmem:[%s3 + $0x6c8] sm:$0xff]
    %v829 = vld [vmem:[%s3 + $0x6d0] sm:$0xff]
    %v830 = vld [vmem:[%s3 + $0x6d8] sm:$0xff]
    %v831 = vld [vmem:[%s3 + $0x6e0] sm:$0xff]
    %v832 = vld [vmem:[%s3 + $0x6e8] sm:$0xff]
    %v833 = vld [vmem:[%s3 + $0x6f0] sm:$0xff]
    %v834 = vld [vmem:[%s3 + $0x6f8] sm:$0xff]
    %v835 = vld [vmem:[%s3 + $0x700] sm:$0xff]
    %v836 = vld [vmem:[%s3 + $0x708] sm:$0xff]
    %v837 = vld [vmem:[%s3 + $0x710] sm:$0xff]
    %v838 = vld [vmem:[%s3 + $0x718] sm:$0xff]
    %v839 = vld [vmem:[%s3 + $0x720] sm:$0xff]
    %v840 = vld [vmem:[%s3 + $0x728] sm:$0xff]
    %v841 = vld [vmem:[%s3 + $0x730] sm:$0xff]
    %v842 = vld [vmem:[%s3 + $0x738] sm:$0xff]
    %v843 = vld [vmem:[%s3 + $0x740] sm:$0xff]
    %v844 = vld [vmem:[%s3 + $0x748] sm:$0xff]
    %v845 = vld [vmem:[%s3 + $0x750] sm:$0xff]
    %v846 = vld [vmem:[%s3 + $0x758] sm:$0xff]
    %v847 = vld [vmem:[%s3 + $0x760] sm:$0xff]
    %v848 = vld [vmem:[%s3 + $0x768] sm:$0xff]
    %v849 = vld [vmem:[%s3 + $0x770] sm:$0xff]
    %v850 = vld [vmem:[%s3 + $0x778] sm:$0xff]
    %v851 = vld [vmem:[%s3 + $0x780] sm:$0xff]
    %v852 = vld [vmem:[%s3 + $0x788] sm:$0xff]
    %v853 = vld [vmem:[%s3 + $0x790] sm:$0xff]
    %v854 = vld [vmem:[%s3 + $0x798] sm:$0xff]
    %v855 = vld [vmem:[%s3 + $0x7a0] sm:$0xff]
    %v856 = vld [vmem:[%s3 + $0x7a8] sm:$0xff]
    %v857 = vld [vmem:[%s3 + $0x7b0] sm:$0xff]
    %v858 = vld [vmem:[%s3 + $0x7b8] sm:$0xff]
    %v859 = vld [vmem:[%s3 + $0x7c0] sm:$0xff]
    %v860 = vld [vmem:[%s3 + $0x7c8] sm:$0xff]
    %v861 = vld [vmem:[%s3 + $0x7d0] sm:$0xff]
    %v862 = vld [vmem:[%s3 + $0x7d8] sm:$0xff]
    %v863 = vld [vmem:[%s3 + $0x7e0] sm:$0xff]
    %v864 = vld [vmem:[%s3 + $0x7e8] sm:$0xff]
    %v865 = vld [vmem:[%s3 + $0x7f0] sm:$0xff]
    %v866 = vld [vmem:[%s3 + $0x7f8] sm:$0xff]
    %v867 = vld [vmem:[%s3 + $0x800] sm:$0xff]
    %v868 = vld [vmem:[%s3 + $0x808] sm:$0xff]
    %v869 = vld [vmem:[%s3 + $0x810] sm:$0xff]
    %v870 = vld [vmem:[%s3 + $0x818] sm:$0xff]
    %v871 = vld [vmem:[%s3 + $0x820] sm:$0xff]
    %v872 = vld [vmem:[%s3 + $0x828] sm:$0xff]
    %v873 = vld [vmem:[%s3 + $0x830] sm:$0xff]
    %v874 = vld [vmem:[%s3 + $0x838] sm:$0xff]
    %v875 = vld [vmem:[%s3 + $0x840] sm:$0xff]
    %v876 = vld [vmem:[%s3 + $0x848] sm:$0xff]
    %v877 = vld [vmem:[%s3 + $0x850] sm:$0xff]
    %v878 = vld [vmem:[%s3 + $0x858] sm:$0xff]
    %v879 = vld [vmem:[%s3 + $0x860] sm:$0xff]
    %v880 = vld [vmem:[%s3 + $0x868] sm:$0xff]
    %v881 = vld [vmem:[%s3 + $0x870] sm:$0xff]
    %v882 = vld [vmem:[%s3 + $0x878] sm:$0xff]
    %v883 = vld [vmem:[%s3 + $0x880] sm:$0xff]
    %v884 = vld [vmem:[%s3 + $0x888] sm:$0xff]
    %v885 = vld [vmem:[%s3 + $0x890] sm:$0xff]
    %v886 = vld [vmem:[%s3 + $0x898] sm:$0xff]
    %v887 = vld [vmem:[%s3 + $0x8a0] sm:$0xff]
    %v888 = vld [vmem:[%s3 + $0x8a8] sm:$0xff]
    %v889 = vld [vmem:[%s3 + $0x8b0] sm:$0xff]
    %v890 = vld [vmem:[%s3 + $0x8b8] sm:$0xff]
    %v891 = vld [vmem:[%s3 + $0x8c0] sm:$0xff]
    %v892 = vld [vmem:[%s3 + $0x8c8] sm:$0xff]
    %v893 = vld [vmem:[%s3 + $0x8d0] sm:$0xff]
    %v894 = vld [vmem:[%s3 + $0x8d8] sm:$0xff]
    %v895 = vld [vmem:[%s3 + $0x8e0] sm:$0xff]
    %v896 = vld [vmem:[%s3 + $0x8e8] sm:$0xff]
    %v897 = vld [vmem:[%s3 + $0x8f0] sm:$0xff]
    %v898 = vld [vmem:[%s3 + $0x8f8] sm:$0xff]
    %v899 = vld [vmem:[%s3 + $0x900] sm:$0xff]
    %v900 = vld [vmem:[%s3 + $0x908] sm:$0xff]
    %v901 = vld [vmem:[%s3 + $0x910] sm:$0xff]
    %v902 = vld [vmem:[%s3 + $0x918] sm:$0xff]
    %v903 = vld [vmem:[%s3 + $0x920] sm:$0xff]
    %v904 = vld [vmem:[%s3 + $0x928] sm:$0xff]
    %v905 = vld [vmem:[%s3 + $0x930] sm:$0xff]
    %v906 = vld [vmem:[%s3 + $0x938] sm:$0xff]
    %v907 = vld [vmem:[%s3 + $0x940] sm:$0xff]
    %v908 = vld [vmem:[%s3 + $0x948] sm:$0xff]
    %v909 = vld [vmem:[%s3 + $0x950] sm:$0xff]
    %v910 = vld [vmem:[%s3 + $0x958] sm:$0xff]
    %v911 = vld [vmem:[%s3 + $0x960] sm:$0xff]
    %v912 = vld [vmem:[%s3 + $0x968] sm:$0xff]
    %v913 = vld [vmem:[%s3 + $0x970] sm:$0xff]
    %v914 = vld [vmem:[%s3 + $0x978] sm:$0xff]
    %v915 = vld [vmem:[%s3 + $0x980] sm:$0xff]
    %v916 = vld [vmem:[%s3 + $0x988] sm:$0xff]
    %v917 = vld [vmem:[%s3 + $0x990] sm:$0xff]
    %v918 = vld [vmem:[%s3 + $0x998] sm:$0xff]
    %v919 = vld [vmem:[%s3 + $0x9a0] sm:$0xff]
    %v920 = vld [vmem:[%s3 + $0x9a8] sm:$0xff]
    %v921 = vld [vmem:[%s3 + $0x9b0] sm:$0xff]
    %v922 = vld [vmem:[%s3 + $0x9b8] sm:$0xff]
    %v923 = vld [vmem:[%s3 + $0x9c0] sm:$0xff]
    %v924 = vld [vmem:[%s3 + $0x9c8] sm:$0xff]
    %v925 = vld [vmem:[%s3 + $0x9d0] sm:$0xff]
    %v926 = vld [vmem:[%s3 + $0x9d8] sm:$0xff]
    %v927 = vld [vmem:[%s3 + $0x9e0] sm:$0xff]
    %v928 = vld [vmem:[%s3 + $0x9e8] sm:$0xff]
    %v929 = vld [vmem:[%s3 + $0x9f0] sm:$0xff]
    %v930 = vld [vmem:[%s3 + $0x9f8] sm:$0xff]
    %v931 = vld [vmem:[%s3 + $0xa00] sm:$0xff]
    %v932 = vld [vmem:[%s3 + $0xa08] sm:$0xff]
    %v933 = vld [vmem:[%s3 + $0xa10] sm:$0xff]
    %v934 = vld [vmem:[%s3 + $0xa18] sm:$0xff]
    %v935 = vld [vmem:[%s3 + $0xa20] sm:$0xff]
    %v936 = vld [vmem:[%s3 + $0xa28] sm:$0xff]
    %v937 = vld [vmem:[%s3 + $0xa30] sm:$0xff]
    %v938 = vld [vmem:[%s3 + $0xa38] sm:$0xff]
    %v939 = vld [vmem:[%s3 + $0xa40] sm:$0xff]
    %v940 = vld [vmem:[%s3 + $0xa48] sm:$0xff]
    %v941 = vld [vmem:[%s3 + $0xa50] sm:$0xff]
    %v942 = vld [vmem:[%s3 + $0xa58] sm:$0xff]
    %v943 = vld [vmem:[%s3 + $0xa60] sm:$0xff]
    %v944 = vld [vmem:[%s3 + $0xa68] sm:$0xff]
    %v945 = vld [vmem:[%s3 + $0xa70] sm:$0xff]
    %v946 = vld [vmem:[%s3 + $0xa78] sm:$0xff]
    %v947 = vld [vmem:[%s3 + $0xa80] sm:$0xff]
    %v948 = vld [vmem:[%s3 + $0xa88] sm:$0xff]
    %v949 = vld [vmem:[%s3 + $0xa90] sm:$0xff]
    %v950 = vld [vmem:[%s3 + $0xa98] sm:$0xff]
    %v951 = vld [vmem:[%s3 + $0xaa0] sm:$0xff]
    %v952 = vld [vmem:[%s3 + $0xaa8] sm:$0xff]
    %v953 = vld [vmem:[%s3 + $0xab0] sm:$0xff]
    %v954 = vld [vmem:[%s3 + $0xab8] sm:$0xff]
    %v955 = vld [vmem:[%s3 + $0xac0] sm:$0xff]
    %v956 = vld [vmem:[%s3 + $0xac8] sm:$0xff]
    %v957 = vld [vmem:[%s3 + $0xad0] sm:$0xff]
    %v958 = vld [vmem:[%s3 + $0xad8] sm:$0xff]
    %v959 = vld [vmem:[%s3 + $0xae0] sm:$0xff]
    %v960 = vld [vmem:[%s3 + $0xae8] sm:$0xff]
    %v961 = vld [vmem:[%s3 + $0xaf0] sm:$0xff]
    %v962 = vld [vmem:[%s3 + $0xaf8] sm:$0xff]
    %v963 = vld [vmem:[%s3 + $0xb00] sm:$0xff]
    %v964 = vld [vmem:[%s3 + $0xb08] sm:$0xff]
    %v965 = vld [vmem:[%s3 + $0xb10] sm:$0xff]
    %v966 = vld [vmem:[%s3 + $0xb18] sm:$0xff]
    %v967 = vld [vmem:[%s3 + $0xb20] sm:$0xff]
    %v968 = vld [vmem:[%s3 + $0xb28] sm:$0xff]
    %v969 = vld [vmem:[%s3 + $0xb30] sm:$0xff]
    %v970 = vld [vmem:[%s3 + $0xb38] sm:$0xff]
    %v971 = vld [vmem:[%s3 + $0xb40] sm:$0xff]
    %v972 = vld [vmem:[%s3 + $0xb48] sm:$0xff]
    %v973 = vld [vmem:[%s3 + $0xb50] sm:$0xff]
    %v974 = vld [vmem:[%s3 + $0xb58] sm:$0xff]
    %v975 = vld [vmem:[%s3 + $0xb60] sm:$0xff]
    %v976 = vld [vmem:[%s3 + $0xb68] sm:$0xff]
    %v977 = vld [vmem:[%s3 + $0xb70] sm:$0xff]
    %v978 = vld [vmem:[%s3 + $0xb78] sm:$0xff]
    %v979 = vld [vmem:[%s3 + $0xb80] sm:$0xff]
    %v980 = vld [vmem:[%s3 + $0xb88] sm:$0xff]
    %v981 = vld [vmem:[%s3 + $0xb90] sm:$0xff]
    %v982 = vld [vmem:[%s3 + $0xb98] sm:$0xff]
    %v983 = vld [vmem:[%s3 + $0xba0] sm:$0xff]
    %v984 = vld [vmem:[%s3 + $0xba8] sm:$0xff]
    %v985 = vld [vmem:[%s3 + $0xbb0] sm:$0xff]
    %v986 = vld [vmem:[%s3 + $0xbb8] sm:$0xff]
    %v987 = vld [vmem:[%s3 + $0xbc0] sm:$0xff]
    %v988 = vld [vmem:[%s3 + $0xbc8] sm:$0xff]
    %v989 = vld [vmem:[%s3 + $0xbd0] sm:$0xff]
    %v990 = vld [vmem:[%s3 + $0xbd8] sm:$0xff]
    %v991 = vld [vmem:[%s3 + $0xbe0] sm:$0xff]
    %v992 = vld [vmem:[%s3 + $0xbe8] sm:$0xff]
    %v993 = vld [vmem:[%s3 + $0xbf0] sm:$0xff]
    %v994 = vld [vmem:[%s3 + $0xbf8] sm:$0xff]
    %v995 = vld [vmem:[%s3 + $0xc00] sm:$0xff]
    %v996 = vld [vmem:[%s3 + $0xc08] sm:$0xff]
    %v997 = vld [vmem:[%s3 + $0xc10] sm:$0xff]
    %v998 = vld [vmem:[%s3 + $0xc18] sm:$0xff]
    %v999 = vld [vmem:[%s3 + $0xc20] sm:$0xff]
    %v1000 = vld [vmem:[%s3 + $0xc28] sm:$0xff]
    %v1001 = vld [vmem:[%s3 + $0xc30] sm:$0xff]
    %v1002 = vld [vmem:[%s3 + $0xc38] sm:$0xff]
    %v1003 = vld [vmem:[%s3 + $0xc40] sm:$0xff]
    %v1004 = vld [vmem:[%s3 + $0xc48] sm:$0xff]
    %v1005 = vld [vmem:[%s3 + $0xc50] sm:$0xff]
    %v1006 = vld [vmem:[%s3 + $0xc58] sm:$0xff]
    %v1007 = vld [vmem:[%s3 + $0xc60] sm:$0xff]
    %v1008 = vld [vmem:[%s3 + $0xc68] sm:$0xff]
    %v1009 = vld [vmem:[%s3 + $0xc70] sm:$0xff]
    %v1010 = vld [vmem:[%s3 + $0xc78] sm:$0xff]
    %v1011 = vld [vmem:[%s3 + $0xc80] sm:$0xff]
    %v1012 = vld [vmem:[%s3 + $0xc88] sm:$0xff]
    %v1013 = vld [vmem:[%s3 + $0xc90] sm:$0xff]
    %v1014 = vld [vmem:[%s3 + $0xc98] sm:$0xff]
    %v1015 = vld [vmem:[%s3 + $0xca0] sm:$0xff]
    %v1016 = vld [vmem:[%s3 + $0xca8] sm:$0xff]
    %v1017 = vld [vmem:[%s3 + $0xcb0] sm:$0xff]
    %v1018 = vld [vmem:[%s3 + $0xcb8] sm:$0xff]
    %v1019 = vld [vmem:[%s3 + $0xcc0] sm:$0xff]
    %v1020 = vld [vmem:[%s3 + $0xcc8] sm:$0xff]
    %v1021 = vld [vmem:[%s3 + $0xcd0] sm:$0xff]
    %v1022 = vld [vmem:[%s3 + $0xcd8] sm:$0xff]
    %v1023 = vld [vmem:[%s3 + $0xce0] sm:$0xff]
    %v1024 = vld [vmem:[%s3 + $0xce8] sm:$0xff]
    %v1025 = vld [vmem:[%s3 + $0xcf0] sm:$0xff]
    %v1026 = vld [vmem:[%s3 + $0xcf8] sm:$0xff]
    %v1027 = vld [vmem:[%s3 + $0xd00] sm:$0xff]
    %v1028 = vld [vmem:[%s3 + $0xd08] sm:$0xff]
    %v1029 = vld [vmem:[%s3 + $0xd10] sm:$0xff]
    %v1030 = vld [vmem:[%s3 + $0xd18] sm:$0xff]
    %v1031 = vld [vmem:[%s3 + $0xd20] sm:$0xff]
    %v1032 = vld [vmem:[%s3 + $0xd28] sm:$0xff]
    %v1033 = vld [vmem:[%s3 + $0xd30] sm:$0xff]
    %v1034 = vld [vmem:[%s3 + $0xd38] sm:$0xff]
    %v1035 = vld [vmem:[%s3 + $0xd40] sm:$0xff]
    %v1036 = vld [vmem:[%s3 + $0xd48] sm:$0xff]
    %v1037 = vld [vmem:[%s3 + $0xd50] sm:$0xff]
    %v1038 = vld [vmem:[%s3 + $0xd58] sm:$0xff]
    %v1039 = vld [vmem:[%s3 + $0xd60] sm:$0xff]
    %v1040 = vld [vmem:[%s3 + $0xd68] sm:$0xff]
    %v1041 = vld [vmem:[%s3 + $0xd70] sm:$0xff]
    %v1042 = vld [vmem:[%s3 + $0xd78] sm:$0xff]
    %v1043 = vld [vmem:[%s3 + $0xd80] sm:$0xff]
    %v1044 = vld [vmem:[%s3 + $0xd88] sm:$0xff]
    %v1045 = vld [vmem:[%s3 + $0xd90] sm:$0xff]
    %v1046 = vld [vmem:[%s3 + $0xd98] sm:$0xff]
    %v1047 = vld [vmem:[%s3 + $0xda0] sm:$0xff]
    %v1048 = vld [vmem:[%s3 + $0xda8] sm:$0xff]
    %v1049 = vld [vmem:[%s3 + $0xdb0] sm:$0xff]
    %v1050 = vld [vmem:[%s3 + $0xdb8] sm:$0xff]
    %v1051 = vld [vmem:[%s3 + $0xdc0] sm:$0xff]
    %v1052 = vld [vmem:[%s3 + $0xdc8] sm:$0xff]
    %v1053 = vld [vmem:[%s3 + $0xdd0] sm:$0xff]
    %v1054 = vld [vmem:[%s3 + $0xdd8] sm:$0xff]
    %v1055 = vld [vmem:[%s3 + $0xde0] sm:$0xff]
    %v1056 = vld [vmem:[%s3 + $0xde8] sm:$0xff]
    %v1057 = vld [vmem:[%s3 + $0xdf0] sm:$0xff]
    %v1058 = vld [vmem:[%s3 + $0xdf8] sm:$0xff]
    %v1059 = vld [vmem:[%s3 + $0xe00] sm:$0xff]
    %v1060 = vld [vmem:[%s3 + $0xe08] sm:$0xff]
    %v1061 = vld [vmem:[%s3 + $0xe10] sm:$0xff]
    %v1062 = vld [vmem:[%s3 + $0xe18] sm:$0xff]
    %v1063 = vld [vmem:[%s3 + $0xe20] sm:$0xff]
    %v1064 = vld [vmem:[%s3 + $0xe28] sm:$0xff]
    %v1065 = vld [vmem:[%s3 + $0xe30] sm:$0xff]
    %v1066 = vld [vmem:[%s3 + $0xe38] sm:$0xff]
    %v1067 = vld [vmem:[%s3 + $0xe40] sm:$0xff]
    %v1068 = vld [vmem:[%s3 + $0xe48] sm:$0xff]
    %v1069 = vld [vmem:[%s3 + $0xe50] sm:$0xff]
    %v1070 = vld [vmem:[%s3 + $0xe58] sm:$0xff]
    %v1071 = vld [vmem:[%s3 + $0xe60] sm:$0xff]
    %v1072 = vld [vmem:[%s3 + $0xe68] sm:$0xff]
    %v1073 = vld [vmem:[%s3 + $0xe70] sm:$0xff]
    %v1074 = vld [vmem:[%s3 + $0xe78] sm:$0xff]
    %v1075 = vld [vmem:[%s3 + $0xe80] sm:$0xff]
    %v1076 = vld [vmem:[%s3 + $0xe88] sm:$0xff]
    %v1077 = vld [vmem:[%s3 + $0xe90] sm:$0xff]
    %v1078 = vld [vmem:[%s3 + $0xe98] sm:$0xff]
    %v1079 = vld [vmem:[%s3 + $0xea0] sm:$0xff]
    %v1080 = vld [vmem:[%s3 + $0xea8] sm:$0xff]
    %v1081 = vld [vmem:[%s3 + $0xeb0] sm:$0xff]
    %v1082 = vld [vmem:[%s3 + $0xeb8] sm:$0xff]
    %v1083 = vld [vmem:[%s3 + $0xec0] sm:$0xff]
    %v1084 = vld [vmem:[%s3 + $0xec8] sm:$0xff]
    %v1085 = vld [vmem:[%s3 + $0xed0] sm:$0xff]
    %v1086 = vld [vmem:[%s3 + $0xed8] sm:$0xff]
    %v1087 = vld [vmem:[%s3 + $0xee0] sm:$0xff]
    %v1088 = vld [vmem:[%s3 + $0xee8] sm:$0xff]
    %v1089 = vld [vmem:[%s3 + $0xef0] sm:$0xff]
    %v1090 = vld [vmem:[%s3 + $0xef8] sm:$0xff]
    %v1091 = vld [vmem:[%s3 + $0xf00] sm:$0xff]
    %v1092 = vld [vmem:[%s3 + $0xf08] sm:$0xff]
    %v1093 = vld [vmem:[%s3 + $0xf10] sm:$0xff]
    %v1094 = vld [vmem:[%s3 + $0xf18] sm:$0xff]
    %v1095 = vld [vmem:[%s3 + $0xf20] sm:$0xff]
    %v1096 = vld [vmem:[%s3 + $0xf28] sm:$0xff]
    %v1097 = vld [vmem:[%s3 + $0xf30] sm:$0xff]
    %v1098 = vld [vmem:[%s3 + $0xf38] sm:$0xff]
    %v1099 = vld [vmem:[%s3 + $0xf40] sm:$0xff]
    %v1100 = vld [vmem:[%s3 + $0xf48] sm:$0xff]
    %v1101 = vld [vmem:[%s3 + $0xf50] sm:$0xff]
    %v1102 = vld [vmem:[%s3 + $0xf58] sm:$0xff]
    %v1103 = vld [vmem:[%s3 + $0xf60] sm:$0xff]
    %v1104 = vld [vmem:[%s3 + $0xf68] sm:$0xff]
    %v1105 = vld [vmem:[%s3 + $0xf70] sm:$0xff]
    %v1106 = vld [vmem:[%s3 + $0xf78] sm:$0xff]
    %v1107 = vld [vmem:[%s3 + $0xf80] sm:$0xff]
    %v1108 = vld [vmem:[%s3 + $0xf88] sm:$0xff]
    %v1109 = vld [vmem:[%s3 + $0xf90] sm:$0xff]
    %v1110 = vld [vmem:[%s3 + $0xf98] sm:$0xff]
    %v1111 = vld [vmem:[%s3 + $0xfa0] sm:$0xff]
    %v1112 = vld [vmem:[%s3 + $0xfa8] sm:$0xff]
    %v1113 = vld [vmem:[%s3 + $0xfb0] sm:$0xff]
    %v1114 = vld [vmem:[%s3 + $0xfb8] sm:$0xff]
    %v1115 = vld [vmem:[%s3 + $0xfc0] sm:$0xff]
    %v1116 = vld [vmem:[%s3 + $0xfc8] sm:$0xff]
    %v1117 = vld [vmem:[%s3 + $0xfd0] sm:$0xff]
    %v1118 = vld [vmem:[%s3 + $0xfd8] sm:$0xff]
    %v1119 = vld [vmem:[%s3 + $0xfe0] sm:$0xff]
    %v1120 = vld [vmem:[%s3 + $0xfe8] sm:$0xff]
    %v1121 = vld [vmem:[%s3 + $0xff0] sm:$0xff]
    %v1122 = vld [vmem:[%s3 + $0xff8] sm:$0xff]
    %v1123 = vld [vmem:[%s3 + $0x1000] sm:$0xff]
    %v1124 = vld [vmem:[%s3 + $0x1008] sm:$0xff]
    %v1125 = vld [vmem:[%s3 + $0x1010] sm:$0xff]
    %v1126 = vld [vmem:[%s3 + $0x1018] sm:$0xff]
    %v1127 = vld [vmem:[%s3 + $0x1020] sm:$0xff]
    %v1128 = vld [vmem:[%s3 + $0x1028] sm:$0xff]
    %v1129 = vld [vmem:[%s3 + $0x1030] sm:$0xff]
    %v1130 = vld [vmem:[%s3 + $0x1038] sm:$0xff]
    %v1131 = vld [vmem:[%s3 + $0x1040] sm:$0xff]
    %v1132 = vld [vmem:[%s3 + $0x1048] sm:$0xff]
    %v1133 = vld [vmem:[%s3 + $0x1050] sm:$0xff]
    %v1134 = vld [vmem:[%s3 + $0x1058] sm:$0xff]
    %v1135 = vld [vmem:[%s3 + $0x1060] sm:$0xff]
    %v1136 = vld [vmem:[%s3 + $0x1068] sm:$0xff]
    %v1137 = vld [vmem:[%s3 + $0x1070] sm:$0xff]
    %v1138 = vld [vmem:[%s3 + $0x1078] sm:$0xff]
    %v1139 = vld [vmem:[%s3 + $0x1080] sm:$0xff]
    %v1140 = vld [vmem:[%s3 + $0x1088] sm:$0xff]
    %v1141 = vld [vmem:[%s3 + $0x1090] sm:$0xff]
    %v1142 = vld [vmem:[%s3 + $0x1098] sm:$0xff]
    %v1143 = vld [vmem:[%s3 + $0x10a0] sm:$0xff]
    %v1144 = vld [vmem:[%s3 + $0x10a8] sm:$0xff]
    %v1145 = vld [vmem:[%s3 + $0x10b0] sm:$0xff]
    %v1146 = vld [vmem:[%s3 + $0x10b8] sm:$0xff]
    %v1147 = vld [vmem:[%s3 + $0x10c0] sm:$0xff]
    %v1148 = vld [vmem:[%s3 + $0x10c8] sm:$0xff]
    %v1149 = vld [vmem:[%s3 + $0x10d0] sm:$0xff]
    %v1150 = vld [vmem:[%s3 + $0x10d8] sm:$0xff]
    %v1151 = vld [vmem:[%s3 + $0x10e0] sm:$0xff]
    %v1152 = vld [vmem:[%s3 + $0x10e8] sm:$0xff]
    %v1153 = vld [vmem:[%s3 + $0x10f0] sm:$0xff]
    %v1154 = vld [vmem:[%s3 + $0x10f8] sm:$0xff]
    %v1155 = vld [vmem:[%s3 + $0x1100] sm:$0xff]
    %v1156 = vld [vmem:[%s3 + $0x1108] sm:$0xff]
    %v1157 = vld [vmem:[%s3 + $0x1110] sm:$0xff]
    %v1158 = vld [vmem:[%s3 + $0x1118] sm:$0xff]
    %v1159 = vld [vmem:[%s3 + $0x1120] sm:$0xff]
    %v1160 = vld [vmem:[%s3 + $0x1128] sm:$0xff]
    %v1161 = vld [vmem:[%s3 + $0x1130] sm:$0xff]
    %v1162 = vld [vmem:[%s3 + $0x1138] sm:$0xff]
    %v1163 = vld [vmem:[%s3 + $0x1140] sm:$0xff]
    %v1164 = vld [vmem:[%s3 + $0x1148] sm:$0xff]
    %v1165 = vld [vmem:[%s3 + $0x1150] sm:$0xff]
    %v1166 = vld [vmem:[%s3 + $0x1158] sm:$0xff]
    %v1167 = vld [vmem:[%s3 + $0x1160] sm:$0xff]
    %v1168 = vld [vmem:[%s3 + $0x1168] sm:$0xff]
    %v1169 = vld [vmem:[%s3 + $0x1170] sm:$0xff]
    %v1170 = vld [vmem:[%s3 + $0x1178] sm:$0xff]
    %v1171 = vld [vmem:[%s3 + $0x1180] sm:$0xff]
    %v1172 = vld [vmem:[%s3 + $0x1188] sm:$0xff]
    %v1173 = vld [vmem:[%s3 + $0x1190] sm:$0xff]
    %v1174 = vld [vmem:[%s3 + $0x1198] sm:$0xff]
    %v1175 = vld [vmem:[%s3 + $0x11a0] sm:$0xff]
    %v1176 = vld [vmem:[%s3 + $0x11a8] sm:$0xff]
    %v1177 = vld [vmem:[%s3 + $0x11b0] sm:$0xff]
    %v1178 = vld [vmem:[%s3 + $0x11b8] sm:$0xff]
    %v1179 = vld [vmem:[%s3 + $0x11c0] sm:$0xff]
    %v1180 = vld [vmem:[%s3 + $0x11c8] sm:$0xff]
    %v1181 = vld [vmem:[%s3 + $0x11d0] sm:$0xff]
    %v1182 = vld [vmem:[%s3 + $0x11d8] sm:$0xff]
    %v1183 = vld [vmem:[%s3 + $0x11e0] sm:$0xff]
    %v1184 = vld [vmem:[%s3 + $0x11e8] sm:$0xff]
    %v1185 = vld [vmem:[%s3 + $0x11f0] sm:$0xff]
    %v1186 = vld [vmem:[%s3 + $0x11f8] sm:$0xff]
    %v1187 = vld [vmem:[%s3 + $0x1200] sm:$0xff]
    %v1188 = vld [vmem:[%s3 + $0x1208] sm:$0xff]
    %v1189 = vld [vmem:[%s3 + $0x1210] sm:$0xff]
    %v1190 = vld [vmem:[%s3 + $0x1218] sm:$0xff]
    %v1191 = vld [vmem:[%s3 + $0x1220] sm:$0xff]
    %v1192 = vld [vmem:[%s3 + $0x1228] sm:$0xff]
    %v1193 = vld [vmem:[%s3 + $0x1230] sm:$0xff]
    %v1194 = vld [vmem:[%s3 + $0x1238] sm:$0xff]
    %v1195 = vld [vmem:[%s3 + $0x1240] sm:$0xff]
    %v1196 = vld [vmem:[%s3 + $0x1248] sm:$0xff]
    %v1197 = vld [vmem:[%s3 + $0x1250] sm:$0xff]
    %v1198 = vld [vmem:[%s3 + $0x1258] sm:$0xff]
    %v1199 = vld [vmem:[%s3 + $0x1260] sm:$0xff]
    %v1200 = vld [vmem:[%s3 + $0x1268] sm:$0xff]
    %v1201 = vld [vmem:[%s3 + $0x1270] sm:$0xff]
    %v1202 = vld [vmem:[%s3 + $0x1278] sm:$0xff]
    %v1203 = vld [vmem:[%s3 + $0x1280] sm:$0xff]
    %v1204 = vld [vmem:[%s3 + $0x1288] sm:$0xff]
    %v1205 = vld [vmem:[%s3 + $0x1290] sm:$0xff]
    %v1206 = vld [vmem:[%s3 + $0x1298] sm:$0xff]
    %v1207 = vld [vmem:[%s3 + $0x12a0] sm:$0xff]
    %v1208 = vld [vmem:[%s3 + $0x12a8] sm:$0xff]
    %v1209 = vld [vmem:[%s3 + $0x12b0] sm:$0xff]
    %v1210 = vld [vmem:[%s3 + $0x12b8] sm:$0xff]
    %v1211 = vld [vmem:[%s3 + $0x12c0] sm:$0xff]
    %v1212 = vld [vmem:[%s3 + $0x12c8] sm:$0xff]
    %v1213 = vld [vmem:[%s3 + $0x12d0] sm:$0xff]
    %v1214 = vld [vmem:[%s3 + $0x12d8] sm:$0xff]
    %v1215 = vld [vmem:[%s3 + $0x12e0] sm:$0xff]
    %v1216 = vld [vmem:[%s3 + $0x12e8] sm:$0xff]
    %v1217 = vld [vmem:[%s3 + $0x12f0] sm:$0xff]
    %v1218 = vld [vmem:[%s3 + $0x12f8] sm:$0xff]
    %v1219 = vld [vmem:[%s3 + $0x1300] sm:$0xff]
    %v1220 = vld [vmem:[%s3 + $0x1308] sm:$0xff]
    %v1221 = vld [vmem:[%s3 + $0x1310] sm:$0xff]
    %v1222 = vld [vmem:[%s3 + $0x1318] sm:$0xff]
    %v1223 = vld [vmem:[%s3 + $0x1320] sm:$0xff]
    %v1224 = vld [vmem:[%s3 + $0x1328] sm:$0xff]
    %v1225 = vld [vmem:[%s3 + $0x1330] sm:$0xff]
    %v1226 = vld [vmem:[%s3 + $0x1338] sm:$0xff]
    %v1227 = vld [vmem:[%s3 + $0x1340] sm:$0xff]
    %v1228 = vld [vmem:[%s3 + $0x1348] sm:$0xff]
    %v1229 = vld [vmem:[%s3 + $0x1350] sm:$0xff]
    %v1230 = vld [vmem:[%s3 + $0x1358] sm:$0xff]
    %v1231 = vld [vmem:[%s3 + $0x1360] sm:$0xff]
    %v1232 = vld [vmem:[%s3 + $0x1368] sm:$0xff]
    %v1233 = vld [vmem:[%s3 + $0x1370] sm:$0xff]
    %v1234 = vld [vmem:[%s3 + $0x1378] sm:$0xff]
    %v1235 = vld [vmem:[%s3 + $0x1380] sm:$0xff]
    %v1236 = vld [vmem:[%s3 + $0x1388] sm:$0xff]
    %v1237 = vld [vmem:[%s3 + $0x1390] sm:$0xff]
    %v1238 = vld [vmem:[%s3 + $0x1398] sm:$0xff]
    %v1239 = vld [vmem:[%s3 + $0x13a0] sm:$0xff]
    %v1240 = vld [vmem:[%s3 + $0x13a8] sm:$0xff]
    %v1241 = vld [vmem:[%s3 + $0x13b0] sm:$0xff]
    %v1242 = vld [vmem:[%s3 + $0x13b8] sm:$0xff]
    %v1243 = vld [vmem:[%s3 + $0x13c0] sm:$0xff]
    %v1244 = vld [vmem:[%s3 + $0x13c8] sm:$0xff]
    %v1245 = vld [vmem:[%s3 + $0x13d0] sm:$0xff]
    %v1246 = vld [vmem:[%s3 + $0x13d8] sm:$0xff]
    %v1247 = vld [vmem:[%s3 + $0x13e0] sm:$0xff]
    %v1248 = vld [vmem:[%s3 + $0x13e8] sm:$0xff]
    %v1249 = vld [vmem:[%s3 + $0x13f0] sm:$0xff]
    %v1250 = vld [vmem:[%s3 + $0x13f8] sm:$0xff]
    %v1251 = vld [vmem:[%s3 + $0x1400] sm:$0xff]
    %v1252 = vld [vmem:[%s3 + $0x1408] sm:$0xff]
    %v1253 = vld [vmem:[%s3 + $0x1410] sm:$0xff]
    %v1254 = vld [vmem:[%s3 + $0x1418] sm:$0xff]
    %v1255 = vld [vmem:[%s3 + $0x1420] sm:$0xff]
    %v1256 = vld [vmem:[%s3 + $0x1428] sm:$0xff]
    %v1257 = vld [vmem:[%s3 + $0x1430] sm:$0xff]
    %v1258 = vld [vmem:[%s3 + $0x1438] sm:$0xff]
    %v1259 = vld [vmem:[%s3 + $0x1440] sm:$0xff]
    %v1260 = vld [vmem:[%s3 + $0x1448] sm:$0xff]
    %v1261 = vld [vmem:[%s3 + $0x1450] sm:$0xff]
    %v1262 = vld [vmem:[%s3 + $0x1458] sm:$0xff]
    %v1263 = vld [vmem:[%s3 + $0x1460] sm:$0xff]
    %v1264 = vld [vmem:[%s3 + $0x1468] sm:$0xff]
    %v1265 = vld [vmem:[%s3 + $0x1470] sm:$0xff]
    %v1266 = vld [vmem:[%s3 + $0x1478] sm:$0xff]
    %v1267 = vld [vmem:[%s3 + $0x1480] sm:$0xff]
    %v1268 = vld [vmem:[%s3 + $0x1488] sm:$0xff]
    %v1269 = vld [vmem:[%s3 + $0x1490] sm:$0xff]
    %v1270 = vld [vmem:[%s3 + $0x1498] sm:$0xff]
    %v1271 = vld [vmem:[%s3 + $0x14a0] sm:$0xff]
    %v1272 = vld [vmem:[%s3 + $0x14a8] sm:$0xff]
    %v1273 = vld [vmem:[%s3 + $0x14b0] sm:$0xff]
    %v1274 = vld [vmem:[%s3 + $0x14b8] sm:$0xff]
    %v1275 = vld [vmem:[%s3 + $0x14c0] sm:$0xff]
    %v1276 = vld [vmem:[%s3 + $0x14c8] sm:$0xff]
    %v1277 = vld [vmem:[%s3 + $0x14d0] sm:$0xff]
    %v1278 = vld [vmem:[%s3 + $0x14d8] sm:$0xff]
    %v1279 = vld [vmem:[%s3 + $0x14e0] sm:$0xff]
    %v1280 = vld [vmem:[%s3 + $0x14e8] sm:$0xff]
    %v1281 = vld [vmem:[%s3 + $0x14f0] sm:$0xff]
    %v1282 = vld [vmem:[%s3 + $0x14f8] sm:$0xff]
    %v1283 = vld [vmem:[%s3 + $0x1500] sm:$0xff]
    %v1284 = vld [vmem:[%s3 + $0x1508] sm:$0xff]
    %v1285 = vld [vmem:[%s3 + $0x1510] sm:$0xff]
    %v1286 = vld [vmem:[%s3 + $0x1518] sm:$0xff]
    %v1287 = vld [vmem:[%s3 + $0x1520] sm:$0xff]
    %v1288 = vld [vmem:[%s3 + $0x1528] sm:$0xff]
    %v1289 = vld [vmem:[%s3 + $0x1530] sm:$0xff]
    %v1290 = vld [vmem:[%s3 + $0x1538] sm:$0xff]
    %v1291 = vld [vmem:[%s3 + $0x1540] sm:$0xff]
    %v1292 = vld [vmem:[%s3 + $0x1548] sm:$0xff]
    %v1293 = vld [vmem:[%s3 + $0x1550] sm:$0xff]
    %v1294 = vld [vmem:[%s3 + $0x1558] sm:$0xff]
    %v1295 = vld [vmem:[%s3 + $0x1560] sm:$0xff]
    %v1296 = vld [vmem:[%s3 + $0x1568] sm:$0xff]
    %v1297 = vld [vmem:[%s3 + $0x1570] sm:$0xff]
    %v1298 = vld [vmem:[%s3 + $0x1578] sm:$0xff]
    %v1299 = vld [vmem:[%s3 + $0x1580] sm:$0xff]
    %v1300 = vld [vmem:[%s3 + $0x1588] sm:$0xff]
    %v1301 = vld [vmem:[%s3 + $0x1590] sm:$0xff]
    %v1302 = vld [vmem:[%s3 + $0x1598] sm:$0xff]
    %v1303 = vld [vmem:[%s3 + $0x15a0] sm:$0xff]
    %v1304 = vld [vmem:[%s3 + $0x15a8] sm:$0xff]
    %v1305 = vld [vmem:[%s3 + $0x15b0] sm:$0xff]
    %v1306 = vld [vmem:[%s3 + $0x15b8] sm:$0xff]
    %v1307 = vld [vmem:[%s3 + $0x15c0] sm:$0xff]
    %v1308 = vld [vmem:[%s3 + $0x15c8] sm:$0xff]
    %v1309 = vld [vmem:[%s3 + $0x15d0] sm:$0xff]
    %v1310 = vld [vmem:[%s3 + $0x15d8] sm:$0xff]
    %v1311 = vld [vmem:[%s3 + $0x15e0] sm:$0xff]
    %v1312 = vld [vmem:[%s3 + $0x15e8] sm:$0xff]
    %v1313 = vld [vmem:[%s3 + $0x15f0] sm:$0xff]
    %v1314 = vld [vmem:[%s3 + $0x15f8] sm:$0xff]
    %v1315 = vld [vmem:[%s3 + $0x1600] sm:$0xff]
    %v1316 = vld [vmem:[%s3 + $0x1608] sm:$0xff]
    %v1317 = vld [vmem:[%s3 + $0x1610] sm:$0xff]
    %v1318 = vld [vmem:[%s3 + $0x1618] sm:$0xff]
    %v1319 = vld [vmem:[%s3 + $0x1620] sm:$0xff]
    %v1320 = vld [vmem:[%s3 + $0x1628] sm:$0xff]
    %v1321 = vld [vmem:[%s3 + $0x1630] sm:$0xff]
    %v1322 = vld [vmem:[%s3 + $0x1638] sm:$0xff]
    %v1323 = vld [vmem:[%s3 + $0x1640] sm:$0xff]
    %v1324 = vld [vmem:[%s3 + $0x1648] sm:$0xff]
    %v1325 = vld [vmem:[%s3 + $0x1650] sm:$0xff]
    %v1326 = vld [vmem:[%s3 + $0x1658] sm:$0xff]
    %v1327 = vld [vmem:[%s3 + $0x1660] sm:$0xff]
    %v1328 = vld [vmem:[%s3 + $0x1668] sm:$0xff]
    %v1329 = vld [vmem:[%s3 + $0x1670] sm:$0xff]
    %v1330 = vld [vmem:[%s3 + $0x1678] sm:$0xff]
    %v1331 = vld [vmem:[%s3 + $0x1680] sm:$0xff]
    %v1332 = vld [vmem:[%s3 + $0x1688] sm:$0xff]
    %v1333 = vld [vmem:[%s3 + $0x1690] sm:$0xff]
    %v1334 = vld [vmem:[%s3 + $0x1698] sm:$0xff]
    %v1335 = vld [vmem:[%s3 + $0x16a0] sm:$0xff]
    %v1336 = vld [vmem:[%s3 + $0x16a8] sm:$0xff]
    %v1337 = vld [vmem:[%s3 + $0x16b0] sm:$0xff]
    %v1338 = vld [vmem:[%s3 + $0x16b8] sm:$0xff]
    %v1339 = vld [vmem:[%s3 + $0x16c0] sm:$0xff]
    %v1340 = vld [vmem:[%s3 + $0x16c8] sm:$0xff]
    %v1341 = vld [vmem:[%s3 + $0x16d0] sm:$0xff]
    %v1342 = vld [vmem:[%s3 + $0x16d8] sm:$0xff]
    %v1343 = vld [vmem:[%s3 + $0x16e0] sm:$0xff]
    %v1344 = vld [vmem:[%s3 + $0x16e8] sm:$0xff]
    %v1345 = vld [vmem:[%s3 + $0x16f0] sm:$0xff]
    %v1346 = vld [vmem:[%s3 + $0x16f8] sm:$0xff]
    %v1347 = vld [vmem:[%s3 + $0x1700] sm:$0xff]
    %v1348 = vld [vmem:[%s3 + $0x1708] sm:$0xff]
    %v1349 = vld [vmem:[%s3 + $0x1710] sm:$0xff]
    %v1350 = vld [vmem:[%s3 + $0x1718] sm:$0xff]
    %v1351 = vld [vmem:[%s3 + $0x1720] sm:$0xff]
    %v1352 = vld [vmem:[%s3 + $0x1728] sm:$0xff]
    %v1353 = vld [vmem:[%s3 + $0x1730] sm:$0xff]
    %v1354 = vld [vmem:[%s3 + $0x1738] sm:$0xff]
    %v1355 = vld [vmem:[%s3 + $0x1740] sm:$0xff]
    %v1356 = vld [vmem:[%s3 + $0x1748] sm:$0xff]
    %v1357 = vld [vmem:[%s3 + $0x1750] sm:$0xff]
    %v1358 = vld [vmem:[%s3 + $0x1758] sm:$0xff]
    %v1359 = vld [vmem:[%s3 + $0x1760] sm:$0xff]
    %v1360 = vld [vmem:[%s3 + $0x1768] sm:$0xff]
    %v1361 = vld [vmem:[%s3 + $0x1770] sm:$0xff]
    %v1362 = vld [vmem:[%s3 + $0x1778] sm:$0xff]
    %v1363 = vld [vmem:[%s3 + $0x1780] sm:$0xff]
    %v1364 = vld [vmem:[%s3 + $0x1788] sm:$0xff]
    %v1365 = vld [vmem:[%s3 + $0x1790] sm:$0xff]
    %v1366 = vld [vmem:[%s3 + $0x1798] sm:$0xff]
    %v1367 = vld [vmem:[%s3 + $0x17a0] sm:$0xff]
    %v1368 = vld [vmem:[%s3 + $0x17a8] sm:$0xff]
    %v1369 = vld [vmem:[%s3 + $0x17b0] sm:$0xff]
    %v1370 = vld [vmem:[%s3 + $0x17b8] sm:$0xff]
    %v1371 = vld [vmem:[%s3 + $0x17c0] sm:$0xff]
    %v1372 = vld [vmem:[%s3 + $0x17c8] sm:$0xff]
    %v1373 = vld [vmem:[%s3 + $0x17d0] sm:$0xff]
    %v1374 = vld [vmem:[%s3 + $0x17d8] sm:$0xff]
    %v1375 = vld [vmem:[%s3 + $0x17e0] sm:$0xff]
    %v1376 = vld [vmem:[%s3 + $0x17e8] sm:$0xff]
    %v1377 = vld [vmem:[%s3 + $0x17f0] sm:$0xff]
    %v1378 = vld [vmem:[%s3 + $0x17f8] sm:$0xff]
    %v1379 = vld [vmem:[%s3 + $0x1800] sm:$0xff]
    %v1380 = vld [vmem:[%s3 + $0x1808] sm:$0xff]
    %v1381 = vld [vmem:[%s3 + $0x1810] sm:$0xff]
    %v1382 = vld [vmem:[%s3 + $0x1818] sm:$0xff]
    %v1383 = vld [vmem:[%s3 + $0x1820] sm:$0xff]
    %v1384 = vld [vmem:[%s3 + $0x1828] sm:$0xff]
    %v1385 = vld [vmem:[%s3 + $0x1830] sm:$0xff]
    %v1386 = vld [vmem:[%s3 + $0x1838] sm:$0xff]
    %v1387 = vld [vmem:[%s3 + $0x1840] sm:$0xff]
    %v1388 = vld [vmem:[%s3 + $0x1848] sm:$0xff]
    %v1389 = vld [vmem:[%s3 + $0x1850] sm:$0xff]
    %v1390 = vld [vmem:[%s3 + $0x1858] sm:$0xff]
    %v1391 = vld [vmem:[%s3 + $0x1860] sm:$0xff]
    %v1392 = vld [vmem:[%s3 + $0x1868] sm:$0xff]
    %v1393 = vld [vmem:[%s3 + $0x1870] sm:$0xff]
    %v1394 = vld [vmem:[%s3 + $0x1878] sm:$0xff]
    %v1395 = vld [vmem:[%s3 + $0x1880] sm:$0xff]
    %v1396 = vld [vmem:[%s3 + $0x1888] sm:$0xff]
    %v1397 = vld [vmem:[%s3 + $0x1890] sm:$0xff]
    %v1398 = vld [vmem:[%s3 + $0x1898] sm:$0xff]
    %v1399 = vld [vmem:[%s3 + $0x18a0] sm:$0xff]
    %v1400 = vld [vmem:[%s3 + $0x18a8] sm:$0xff]
    %v1401 = vld [vmem:[%s3 + $0x18b0] sm:$0xff]
    %v1402 = vld [vmem:[%s3 + $0x18b8] sm:$0xff]
    %v1403 = vld [vmem:[%s3 + $0x18c0] sm:$0xff]
    %v1404 = vld [vmem:[%s3 + $0x18c8] sm:$0xff]
    %v1405 = vld [vmem:[%s3 + $0x18d0] sm:$0xff]
    %v1406 = vld [vmem:[%s3 + $0x18d8] sm:$0xff]
    %v1407 = vld [vmem:[%s3 + $0x18e0] sm:$0xff]
    %v1408 = vld [vmem:[%s3 + $0x18e8] sm:$0xff]
    %v1409 = vld [vmem:[%s3 + $0x18f0] sm:$0xff]
    %v1410 = vld [vmem:[%s3 + $0x18f8] sm:$0xff]
    %v1411 = vld [vmem:[%s3 + $0x1900] sm:$0xff]
    %v1412 = vld [vmem:[%s3 + $0x1908] sm:$0xff]
    %v1413 = vld [vmem:[%s3 + $0x1910] sm:$0xff]
    %v1414 = vld [vmem:[%s3 + $0x1918] sm:$0xff]
    %v1415 = vld [vmem:[%s3 + $0x1920] sm:$0xff]
    %v1416 = vld [vmem:[%s3 + $0x1928] sm:$0xff]
    %v1417 = vld [vmem:[%s3 + $0x1930] sm:$0xff]
    %v1418 = vld [vmem:[%s3 + $0x1938] sm:$0xff]
    %v1419 = vld [vmem:[%s3 + $0x1940] sm:$0xff]
    %v1420 = vld [vmem:[%s3 + $0x1948] sm:$0xff]
    %v1421 = vld [vmem:[%s3 + $0x1950] sm:$0xff]
    %v1422 = vld [vmem:[%s3 + $0x1958] sm:$0xff]
    %v1423 = vld [vmem:[%s3 + $0x1960] sm:$0xff]
    %v1424 = vld [vmem:[%s3 + $0x1968] sm:$0xff]
    %v1425 = vld [vmem:[%s3 + $0x1970] sm:$0xff]
    %v1426 = vld [vmem:[%s3 + $0x1978] sm:$0xff]
    %v1427 = vld [vmem:[%s3 + $0x1980] sm:$0xff]
    %v1428 = vld [vmem:[%s3 + $0x1988] sm:$0xff]
    %v1429 = vld [vmem:[%s3 + $0x1990] sm:$0xff]
    %v1430 = vld [vmem:[%s3 + $0x1998] sm:$0xff]
    %v1431 = vld [vmem:[%s3 + $0x19a0] sm:$0xff]
    %v1432 = vld [vmem:[%s3 + $0x19a8] sm:$0xff]
    %v1433 = vld [vmem:[%s3 + $0x19b0] sm:$0xff]
    %v1434 = vld [vmem:[%s3 + $0x19b8] sm:$0xff]
    %v1435 = vld [vmem:[%s3 + $0x19c0] sm:$0xff]
    %v1436 = vld [vmem:[%s3 + $0x19c8] sm:$0xff]
    %v1437 = vld [vmem:[%s3 + $0x19d0] sm:$0xff]
    %v1438 = vld [vmem:[%s3 + $0x19d8] sm:$0xff]
    %v1439 = vld [vmem:[%s3 + $0x19e0] sm:$0xff]
    %v1440 = vld [vmem:[%s3 + $0x19e8] sm:$0xff]
    %v1441 = vld [vmem:[%s3 + $0x19f0] sm:$0xff]
    %v1442 = vld [vmem:[%s3 + $0x19f8] sm:$0xff]
    %v1443 = vld [vmem:[%s3 + $0x1a00] sm:$0xff]
    %v1444 = vld [vmem:[%s3 + $0x1a08] sm:$0xff]
    %v1445 = vld [vmem:[%s3 + $0x1a10] sm:$0xff]
    %v1446 = vld [vmem:[%s3 + $0x1a18] sm:$0xff]
    %v1447 = vld [vmem:[%s3 + $0x1a20] sm:$0xff]
    %v1448 = vld [vmem:[%s3 + $0x1a28] sm:$0xff]
    %v1449 = vld [vmem:[%s3 + $0x1a30] sm:$0xff]
    %v1450 = vld [vmem:[%s3 + $0x1a38] sm:$0xff]
    %v1451 = vld [vmem:[%s3 + $0x1a40] sm:$0xff]
    %v1452 = vld [vmem:[%s3 + $0x1a48] sm:$0xff]
    %v1453 = vld [vmem:[%s3 + $0x1a50] sm:$0xff]
    %v1454 = vld [vmem:[%s3 + $0x1a58] sm:$0xff]
    %v1455 = vld [vmem:[%s3 + $0x1a60] sm:$0xff]
    %v1456 = vld [vmem:[%s3 + $0x1a68] sm:$0xff]
    %v1457 = vld [vmem:[%s3 + $0x1a70] sm:$0xff]
    %v1458 = vld [vmem:[%s3 + $0x1a78] sm:$0xff]
    %v1459 = vld [vmem:[%s3 + $0x1a80] sm:$0xff]
    %v1460 = vld [vmem:[%s3 + $0x1a88] sm:$0xff]
    %v1461 = vld [vmem:[%s3 + $0x1a90] sm:$0xff]
    %v1462 = vld [vmem:[%s3 + $0x1a98] sm:$0xff]
    %v1463 = vld [vmem:[%s3 + $0x1aa0] sm:$0xff]
    %v1464 = vld [vmem:[%s3 + $0x1aa8] sm:$0xff]
    %v1465 = vld [vmem:[%s3 + $0x1ab0] sm:$0xff]
    %v1466 = vld [vmem:[%s3 + $0x1ab8] sm:$0xff]
    %v1467 = vld [vmem:[%s3 + $0x1ac0] sm:$0xff]
    %v1468 = vld [vmem:[%s3 + $0x1ac8] sm:$0xff]
    %v1469 = vld [vmem:[%s3 + $0x1ad0] sm:$0xff]
    %v1470 = vld [vmem:[%s3 + $0x1ad8] sm:$0xff]
    %v1471 = vld [vmem:[%s3 + $0x1ae0] sm:$0xff]
    %v1472 = vld [vmem:[%s3 + $0x1ae8] sm:$0xff]
    %v1473 = vld [vmem:[%s3 + $0x1af0] sm:$0xff]
    %v1474 = vld [vmem:[%s3 + $0x1af8] sm:$0xff]
    %v1475 = vld [vmem:[%s3 + $0x1b00] sm:$0xff]
    %v1476 = vld [vmem:[%s3 + $0x1b08] sm:$0xff]
    %v1477 = vld [vmem:[%s3 + $0x1b10] sm:$0xff]
    %v1478 = vld [vmem:[%s3 + $0x1b18] sm:$0xff]
    %v1479 = vld [vmem:[%s3 + $0x1b20] sm:$0xff]
    %v1480 = vld [vmem:[%s3 + $0x1b28] sm:$0xff]
    %v1481 = vld [vmem:[%s3 + $0x1b30] sm:$0xff]
    %v1482 = vld [vmem:[%s3 + $0x1b38] sm:$0xff]
    %v1483 = vld [vmem:[%s3 + $0x1b40] sm:$0xff]
    %v1484 = vld [vmem:[%s3 + $0x1b48] sm:$0xff]
    %v1485 = vld [vmem:[%s3 + $0x1b50] sm:$0xff]
    %v1486 = vld [vmem:[%s3 + $0x1b58] sm:$0xff]
    %v1487 = vld [vmem:[%s3 + $0x1b60] sm:$0xff]
    %v1488 = vld [vmem:[%s3 + $0x1b68] sm:$0xff]
    %v1489 = vld [vmem:[%s3 + $0x1b70] sm:$0xff]
    %v1490 = vld [vmem:[%s3 + $0x1b78] sm:$0xff]
    %v1491 = vld [vmem:[%s3 + $0x1b80] sm:$0xff]
    %v1492 = vld [vmem:[%s3 + $0x1b88] sm:$0xff]
    %v1493 = vld [vmem:[%s3 + $0x1b90] sm:$0xff]
    %v1494 = vld [vmem:[%s3 + $0x1b98] sm:$0xff]
    %v1495 = vld [vmem:[%s3 + $0x1ba0] sm:$0xff]
    %v1496 = vld [vmem:[%s3 + $0x1ba8] sm:$0xff]
    %v1497 = vld [vmem:[%s3 + $0x1bb0] sm:$0xff]
    %v1498 = vld [vmem:[%s3 + $0x1bb8] sm:$0xff]
    %v1499 = vld [vmem:[%s3 + $0x1bc0] sm:$0xff]
    %v1500 = vld [vmem:[%s3 + $0x1bc8] sm:$0xff]
    %v1501 = vld [vmem:[%s3 + $0x1bd0] sm:$0xff]
    %v1502 = vld [vmem:[%s3 + $0x1bd8] sm:$0xff]
    %v1503 = vld [vmem:[%s3 + $0x1be0] sm:$0xff]
    %v1504 = vld [vmem:[%s3 + $0x1be8] sm:$0xff]
    %v1505 = vld [vmem:[%s3 + $0x1bf0] sm:$0xff]
    %v1506 = vld [vmem:[%s3 + $0x1bf8] sm:$0xff]
    %v1507 = vld [vmem:[%s3 + $0x1c00] sm:$0xff]
    %v1508 = vld [vmem:[%s3 + $0x1c08] sm:$0xff]
    %v1509 = vld [vmem:[%s3 + $0x1c10] sm:$0xff]
    %v1510 = vld [vmem:[%s3 + $0x1c18] sm:$0xff]
    %v1511 = vld [vmem:[%s3 + $0x1c20] sm:$0xff]
    %v1512 = vld [vmem:[%s3 + $0x1c28] sm:$0xff]
    %v1513 = vld [vmem:[%s3 + $0x1c30] sm:$0xff]
    %v1514 = vld [vmem:[%s3 + $0x1c38] sm:$0xff]
    %v1515 = vld [vmem:[%s3 + $0x1c40] sm:$0xff]
    %v1516 = vld [vmem:[%s3 + $0x1c48] sm:$0xff]
    %v1517 = vld [vmem:[%s3 + $0x1c50] sm:$0xff]
    %v1518 = vld [vmem:[%s3 + $0x1c58] sm:$0xff]
    %v1519 = vld [vmem:[%s3 + $0x1c60] sm:$0xff]
    %v1520 = vld [vmem:[%s3 + $0x1c68] sm:$0xff]
    %v1521 = vld [vmem:[%s3 + $0x1c70] sm:$0xff]
    %v1522 = vld [vmem:[%s3 + $0x1c78] sm:$0xff]
    %v1523 = vld [vmem:[%s3 + $0x1c80] sm:$0xff]
    %v1524 = vld [vmem:[%s3 + $0x1c88] sm:$0xff]
    %v1525 = vld [vmem:[%s3 + $0x1c90] sm:$0xff]
    %v1526 = vld [vmem:[%s3 + $0x1c98] sm:$0xff]
    %v1527 = vld [vmem:[%s3 + $0x1ca0] sm:$0xff]
    %v1528 = vld [vmem:[%s3 + $0x1ca8] sm:$0xff]
    %v1529 = vld [vmem:[%s3 + $0x1cb0] sm:$0xff]
    %v1530 = vld [vmem:[%s3 + $0x1cb8] sm:$0xff]
    %v1531 = vld [vmem:[%s3 + $0x1cc0] sm:$0xff]
    %v1532 = vld [vmem:[%s3 + $0x1cc8] sm:$0xff]
    %v1533 = vld [vmem:[%s3 + $0x1cd0] sm:$0xff]
    %v1534 = vld [vmem:[%s3 + $0x1cd8] sm:$0xff]
    %v1535 = vld [vmem:[%s3 + $0x1ce0] sm:$0xff]
    %v1536 = vld [vmem:[%s3 + $0x1ce8] sm:$0xff]
    %v1537 = vld [vmem:[%s3 + $0x1cf0] sm:$0xff]
    %v1538 = vld [vmem:[%s3 + $0x1cf8] sm:$0xff]
    %v1539 = vld [vmem:[%s3 + $0x1d00] sm:$0xff]
    %v1540 = vld [vmem:[%s3 + $0x1d08] sm:$0xff]
    %v1541 = vld [vmem:[%s3 + $0x1d10] sm:$0xff]
    %v1542 = vld [vmem:[%s3 + $0x1d18] sm:$0xff]
    %v1543 = vld [vmem:[%s3 + $0x1d20] sm:$0xff]
    %v1544 = vld [vmem:[%s3 + $0x1d28] sm:$0xff]
    %v1545 = vld [vmem:[%s3 + $0x1d30] sm:$0xff]
    %v1546 = vld [vmem:[%s3 + $0x1d38] sm:$0xff]
    %v1547 = vld [vmem:[%s3 + $0x1d40] sm:$0xff]
    %v1548 = vld [vmem:[%s3 + $0x1d48] sm:$0xff]
    %v1549 = vld [vmem:[%s3 + $0x1d50] sm:$0xff]
    %v1550 = vld [vmem:[%s3 + $0x1d58] sm:$0xff]
    %v1551 = vld [vmem:[%s3 + $0x1d60] sm:$0xff]
    %v1552 = vld [vmem:[%s3 + $0x1d68] sm:$0xff]
    %v1553 = vld [vmem:[%s3 + $0x1d70] sm:$0xff]
    %v1554 = vld [vmem:[%s3 + $0x1d78] sm:$0xff]
    %v1555 = vld [vmem:[%s3 + $0x1d80] sm:$0xff]
    %v1556 = vld [vmem:[%s3 + $0x1d88] sm:$0xff]
    %v1557 = vld [vmem:[%s3 + $0x1d90] sm:$0xff]
    %v1558 = vld [vmem:[%s3 + $0x1d98] sm:$0xff]
    %v1559 = vld [vmem:[%s3 + $0x1da0] sm:$0xff]
    %v1560 = vld [vmem:[%s3 + $0x1da8] sm:$0xff]
    %v1561 = vld [vmem:[%s3 + $0x1db0] sm:$0xff]
    %v1562 = vld [vmem:[%s3 + $0x1db8] sm:$0xff]
    %v1563 = vld [vmem:[%s3 + $0x1dc0] sm:$0xff]
    %v1564 = vld [vmem:[%s3 + $0x1dc8] sm:$0xff]
    %v1565 = vld [vmem:[%s3 + $0x1dd0] sm:$0xff]
    %v1566 = vld [vmem:[%s3 + $0x1dd8] sm:$0xff]
    %v1567 = vld [vmem:[%s3 + $0x1de0] sm:$0xff]
    %v1568 = vld [vmem:[%s3 + $0x1de8] sm:$0xff]
    %v1569 = vld [vmem:[%s3 + $0x1df0] sm:$0xff]
    %v1570 = vld [vmem:[%s3 + $0x1df8] sm:$0xff]
    %v1571 = vld [vmem:[%s3 + $0x1e00] sm:$0xff]
    %v1572 = vld [vmem:[%s3 + $0x1e08] sm:$0xff]
    %v1573 = vld [vmem:[%s3 + $0x1e10] sm:$0xff]
    %v1574 = vld [vmem:[%s3 + $0x1e18] sm:$0xff]
    %v1575 = vld [vmem:[%s3 + $0x1e20] sm:$0xff]
    %v1576 = vld [vmem:[%s3 + $0x1e28] sm:$0xff]
    %v1577 = vld [vmem:[%s3 + $0x1e30] sm:$0xff]
    %v1578 = vld [vmem:[%s3 + $0x1e38] sm:$0xff]
    %v1579 = vld [vmem:[%s3 + $0x1e40] sm:$0xff]
    %v1580 = vld [vmem:[%s3 + $0x1e48] sm:$0xff]
    %v1581 = vld [vmem:[%s3 + $0x1e50] sm:$0xff]
    %v1582 = vld [vmem:[%s3 + $0x1e58] sm:$0xff]
    %v1583 = vld [vmem:[%s3 + $0x1e60] sm:$0xff]
    %v1584 = vld [vmem:[%s3 + $0x1e68] sm:$0xff]
    %v1585 = vld [vmem:[%s3 + $0x1e70] sm:$0xff]
    %v1586 = vld [vmem:[%s3 + $0x1e78] sm:$0xff]
    %v1587 = vld [vmem:[%s3 + $0x1e80] sm:$0xff]
    %v1588 = vld [vmem:[%s3 + $0x1e88] sm:$0xff]
    %v1589 = vld [vmem:[%s3 + $0x1e90] sm:$0xff]
    %v1590 = vld [vmem:[%s3 + $0x1e98] sm:$0xff]
    %v1591 = vld [vmem:[%s3 + $0x1ea0] sm:$0xff]
    %v1592 = vld [vmem:[%s3 + $0x1ea8] sm:$0xff]
    %v1593 = vld [vmem:[%s3 + $0x1eb0] sm:$0xff]
    %v1594 = vld [vmem:[%s3 + $0x1eb8] sm:$0xff]
    %v1595 = vld [vmem:[%s3 + $0x1ec0] sm:$0xff]
    %v1596 = vld [vmem:[%s3 + $0x1ec8] sm:$0xff]
    %v1597 = vld [vmem:[%s3 + $0x1ed0] sm:$0xff]
    %v1598 = vld [vmem:[%s3 + $0x1ed8] sm:$0xff]
    %v1599 = vld [vmem:[%s3 + $0x1ee0] sm:$0xff]
    %v1600 = vld [vmem:[%s3 + $0x1ee8] sm:$0xff]
    %v1601 = vld [vmem:[%s3 + $0x1ef0] sm:$0xff]
    %v1602 = vld [vmem:[%s3 + $0x1ef8] sm:$0xff]
    %v1603 = vld [vmem:[%s3 + $0x1f00] sm:$0xff]
    %v1604 = vld [vmem:[%s3 + $0x1f08] sm:$0xff]
    %v1605 = vld [vmem:[%s3 + $0x1f10] sm:$0xff]
    %v1606 = vld [vmem:[%s3 + $0x1f18] sm:$0xff]
    %v1607 = vld [vmem:[%s3 + $0x1f20] sm:$0xff]
    %v1608 = vld [vmem:[%s3 + $0x1f28] sm:$0xff]
    %v1609 = vld [vmem:[%s3 + $0x1f30] sm:$0xff]
    %v1610 = vld [vmem:[%s3 + $0x1f38] sm:$0xff]
    %v1611 = vld [vmem:[%s3 + $0x1f40] sm:$0xff]
    %v1612 = vld [vmem:[%s3 + $0x1f48] sm:$0xff]
    %v1613 = vld [vmem:[%s3 + $0x1f50] sm:$0xff]
    %v1614 = vld [vmem:[%s3 + $0x1f58] sm:$0xff]
    %v1615 = vld [vmem:[%s3 + $0x1f60] sm:$0xff]
    %v1616 = vld [vmem:[%s3 + $0x1f68] sm:$0xff]
    %v1617 = vld [vmem:[%s3 + $0x1f70] sm:$0xff]
    %v1618 = vld [vmem:[%s3 + $0x1f78] sm:$0xff]
    %v1619 = vld [vmem:[%s3 + $0x1f80] sm:$0xff]
    %v1620 = vld [vmem:[%s3 + $0x1f88] sm:$0xff]
    %v1621 = vld [vmem:[%s3 + $0x1f90] sm:$0xff]
    %v1622 = vld [vmem:[%s3 + $0x1f98] sm:$0xff]
    %v1623 = vld [vmem:[%s3 + $0x1fa0] sm:$0xff]
    %v1624 = vld [vmem:[%s3 + $0x1fa8] sm:$0xff]
    %v1625 = vld [vmem:[%s3 + $0x1fb0] sm:$0xff]
    %v1626 = vld [vmem:[%s3 + $0x1fb8] sm:$0xff]
    %v1627 = vld [vmem:[%s3 + $0x1fc0] sm:$0xff]
    %v1628 = vld [vmem:[%s3 + $0x1fc8] sm:$0xff]
    %v1629 = vld [vmem:[%s3 + $0x1fd0] sm:$0xff]
    %v1630 = vld [vmem:[%s3 + $0x1fd8] sm:$0xff]
    %v1631 = vld [vmem:[%s3 + $0x1fe0] sm:$0xff]
    %v1632 = vld [vmem:[%s3 + $0x1fe8] sm:$0xff]
    %v1633 = vld [vmem:[%s3 + $0x1ff0] sm:$0xff]
    %v1634 = vld [vmem:[%s3 + $0x1ff8] sm:$0xff]
    %v1635 = vld [vmem:[%s4] sm:$0xf]
    %v1637 = vperm.slane %v1635, 0
    %v1638 = vperm.slane %v1635, 1
    %v1639 = vperm.slane %v1635, 2
    %v1640 = vperm.slane %v1635, 3
    %1649 = vst [vmem:[#allocation1] ss:$4 sm:$0xff] %v607
    %s1650 = scalar_lea.vmem [#allocation1], 32
    %1651 = vst [vmem:[%s1650] ss:$4 sm:$0xff] %v608
    %v1652 = vld.sshfl [vmem:[#allocation1] sm:$0xff pattern:$0x73625140]
    %v1653 = vld.sshfl [vmem:[#allocation1 + $0x8] sm:$0xff pattern:$0x73625140]
    %v1654 = vld.sshfl [vmem:[#allocation1 + $0x10] sm:$0xff pattern:$0x73625140]
    %v1655 = vld.sshfl [vmem:[#allocation1 + $0x18] sm:$0xff pattern:$0x73625140]
    %v1656 = vld.sshfl [vmem:[#allocation1 + $0x20] sm:$0xff pattern:$0x73625140]
    %v1657 = vld.sshfl [vmem:[#allocation1 + $0x28] sm:$0xff pattern:$0x73625140]
    %v1658 = vld.sshfl [vmem:[#allocation1 + $0x30] sm:$0xff pattern:$0x73625140]
    %v1659 = vld.sshfl [vmem:[#allocation1 + $0x38] sm:$0xff pattern:$0x73625140]
    %1660 = vst [vmem:[#allocation1] ss:$4 sm:$0xff] %v609
    %1661 = vst [vmem:[%s1650] ss:$4 sm:$0xff] %v610
    %v1662 = vld.sshfl [vmem:[#allocation1] sm:$0xff pattern:$0x73625140]
    %v1663 = vld.sshfl [vmem:[#allocation1 + $0x8] sm:$0xff pattern:$0x73625140]
    %v1664 = vld.sshfl [vmem:[#allocation1 + $0x10] sm:$0xff pattern:$0x73625140]
    %v1665 = vld.sshfl [vmem:[#allocation1 + $0x18] sm:$0xff pattern:$0x73625140]
    %v1666 = vld.sshfl [vmem:[#allocation1 + $0x20] sm:$0xff pattern:$0x73625140]
    %v1667 = vld.sshfl [vmem:[#allocation1 + $0x28] sm:$0xff pattern:$0x73625140]
    %v1668 = vld.sshfl [vmem:[#allocation1 + $0x30] sm:$0xff pattern:$0x73625140]
    %v1669 = vld.sshfl [vmem:[#allocation1 + $0x38] sm:$0xff pattern:$0x73625140]
    %1686 = vmatpush.msra.mxu0 %v671
    %1687 = vmatpush.msra.mxu0 %v667
    %1688 = vmatpush.msra.mxu0 %v663
    %1689 = vmatpush.msra.mxu0 %v659
    %1690 = vmatpush.msra.mxu0 %v655
    %1691 = vmatpush.msra.mxu0 %v651
    %1692 = vmatpush.msra.mxu0 %v647
    %1693 = vmatpush.msra.mxu0 %v643
    %1694 = vmatpush.msra.mxu0 %v639
    %1695 = vmatpush.msra.mxu0 %v635
    %1696 = vmatpush.msra.mxu0 %v631
    %1697 = vmatpush.msra.mxu0 %v627
    %1698 = vmatpush.msra.mxu0 %v623
    %1699 = vmatpush.msra.mxu0 %v619
    %1700 = vmatpush.msra.mxu0 %v615
    %1701 = vmatpush.msra.mxu0 %v611
    %1702 = vmatmul.f32.gmra.mxu0 %v1652
    %v1703 = vpop.f32.mrf.mxu0
    %v1704 = vadd.f32 %v1637, %v1703
    %1705 = vdwg.mxu0
    %1706 = vmatpush.msra.mxu0 %v735
    %1707 = vmatpush.msra.mxu0 %v731
    %1708 = vmatpush.msra.mxu0 %v727
    %1709 = vmatpush.msra.mxu0 %v723
    %1710 = vmatpush.msra.mxu0 %v719
    %1711 = vmatpush.msra.mxu0 %v715
    %1712 = vmatpush.msra.mxu0 %v711
    %1713 = vmatpush.msra.mxu0 %v707
    %1714 = vmatpush.msra.mxu0 %v703
    %1715 = vmatpush.msra.mxu0 %v699
    %1716 = vmatpush.msra.mxu0 %v695
    %1717 = vmatpush.msra.mxu0 %v691
    %1718 = vmatpush.msra.mxu0 %v687
    %1719 = vmatpush.msra.mxu0 %v683
    %1720 = vmatpush.msra.mxu0 %v679
    %1721 = vmatpush.msra.mxu0 %v675
    %1722 = vmatmul.f32.gmra.mxu0 %v1653
    %v1723 = vpop.f32.mrf.mxu0
    %v1724 = vadd.f32 %v1704, %v1723
    %1725 = vdwg.mxu0
    %1726 = vmatpush.msra.mxu0 %v799
    %1727 = vmatpush.msra.mxu0 %v795
    %1728 = vmatpush.msra.mxu0 %v791
    %1729 = vmatpush.msra.mxu0 %v787
    %1730 = vmatpush.msra.mxu0 %v783
    %1731 = vmatpush.msra.mxu0 %v779
    %1732 = vmatpush.msra.mxu0 %v775
    %1733 = vmatpush.msra.mxu0 %v771
    %1734 = vmatpush.msra.mxu0 %v767
    %1735 = vmatpush.msra.mxu0 %v763
    %1736 = vmatpush.msra.mxu0 %v759
    %1737 = vmatpush.msra.mxu0 %v755
    %1738 = vmatpush.msra.mxu0 %v751
    %1739 = vmatpush.msra.mxu0 %v747
    %1740 = vmatpush.msra.mxu0 %v743
    %1741 = vmatpush.msra.mxu0 %v739
    %1742 = vmatmul.f32.gmra.mxu0 %v1654
    %v1743 = vpop.f32.mrf.mxu0
    %v1744 = vadd.f32 %v1724, %v1743
    %1745 = vdwg.mxu0
    %1746 = vmatpush.msra.mxu0 %v863
    %1747 = vmatpush.msra.mxu0 %v859
    %1748 = vmatpush.msra.mxu0 %v855
    %1749 = vmatpush.msra.mxu0 %v851
    %1750 = vmatpush.msra.mxu0 %v847
    %1751 = vmatpush.msra.mxu0 %v843
    %1752 = vmatpush.msra.mxu0 %v839
    %1753 = vmatpush.msra.mxu0 %v835
    %1754 = vmatpush.msra.mxu0 %v831
    %1755 = vmatpush.msra.mxu0 %v827
    %1756 = vmatpush.msra.mxu0 %v823
    %1757 = vmatpush.msra.mxu0 %v819
    %1758 = vmatpush.msra.mxu0 %v815
    %1759 = vmatpush.msra.mxu0 %v811
    %1760 = vmatpush.msra.mxu0 %v807
    %1761 = vmatpush.msra.mxu0 %v803
    %1762 = vmatmul.f32.gmra.mxu0 %v1655
    %v1763 = vpop.f32.mrf.mxu0
    %v1764 = vadd.f32 %v1744, %v1763
    %1765 = vdwg.mxu0
    %1766 = vmatpush.msra.mxu0 %v927
    %1767 = vmatpush.msra.mxu0 %v923
    %1768 = vmatpush.msra.mxu0 %v919
    %1769 = vmatpush.msra.mxu0 %v915
    %1770 = vmatpush.msra.mxu0 %v911
    %1771 = vmatpush.msra.mxu0 %v907
    %1772 = vmatpush.msra.mxu0 %v903
    %1773 = vmatpush.msra.mxu0 %v899
    %1774 = vmatpush.msra.mxu0 %v895
    %1775 = vmatpush.msra.mxu0 %v891
    %1776 = vmatpush.msra.mxu0 %v887
    %1777 = vmatpush.msra.mxu0 %v883
    %1778 = vmatpush.msra.mxu0 %v879
    %1779 = vmatpush.msra.mxu0 %v875
    %1780 = vmatpush.msra.mxu0 %v871
    %1781 = vmatpush.msra.mxu0 %v867
    %1782 = vmatmul.f32.gmra.mxu0 %v1656
    %v1783 = vpop.f32.mrf.mxu0
    %v1784 = vadd.f32 %v1764, %v1783
    %1785 = vdwg.mxu0
    %1786 = vmatpush.msra.mxu0 %v991
    %1787 = vmatpush.msra.mxu0 %v987
    %1788 = vmatpush.msra.mxu0 %v983
    %1789 = vmatpush.msra.mxu0 %v979
    %1790 = vmatpush.msra.mxu0 %v975
    %1791 = vmatpush.msra.mxu0 %v971
    %1792 = vmatpush.msra.mxu0 %v967
    %1793 = vmatpush.msra.mxu0 %v963
    %1794 = vmatpush.msra.mxu0 %v959
    %1795 = vmatpush.msra.mxu0 %v955
    %1796 = vmatpush.msra.mxu0 %v951
    %1797 = vmatpush.msra.mxu0 %v947
    %1798 = vmatpush.msra.mxu0 %v943
    %1799 = vmatpush.msra.mxu0 %v939
    %1800 = vmatpush.msra.mxu0 %v935
    %1801 = vmatpush.msra.mxu0 %v931
    %1802 = vmatmul.f32.gmra.mxu0 %v1657
    %v1803 = vpop.f32.mrf.mxu0
    %v1804 = vadd.f32 %v1784, %v1803
    %1805 = vdwg.mxu0
    %1806 = vmatpush.msra.mxu0 %v1055
    %1807 = vmatpush.msra.mxu0 %v1051
    %1808 = vmatpush.msra.mxu0 %v1047
    %1809 = vmatpush.msra.mxu0 %v1043
    %1810 = vmatpush.msra.mxu0 %v1039
    %1811 = vmatpush.msra.mxu0 %v1035
    %1812 = vmatpush.msra.mxu0 %v1031
    %1813 = vmatpush.msra.mxu0 %v1027
    %1814 = vmatpush.msra.mxu0 %v1023
    %1815 = vmatpush.msra.mxu0 %v1019
    %1816 = vmatpush.msra.mxu0 %v1015
    %1817 = vmatpush.msra.mxu0 %v1011
    %1818 = vmatpush.msra.mxu0 %v1007
    %1819 = vmatpush.msra.mxu0 %v1003
    %1820 = vmatpush.msra.mxu0 %v999
    %1821 = vmatpush.msra.mxu0 %v995
    %1822 = vmatmul.f32.gmra.mxu0 %v1658
    %v1823 = vpop.f32.mrf.mxu0
    %v1824 = vadd.f32 %v1804, %v1823
    %1825 = vdwg.mxu0
    %1826 = vmatpush.msra.mxu0 %v1119
    %1827 = vmatpush.msra.mxu0 %v1115
    %1828 = vmatpush.msra.mxu0 %v1111
    %1829 = vmatpush.msra.mxu0 %v1107
    %1830 = vmatpush.msra.mxu0 %v1103
    %1831 = vmatpush.msra.mxu0 %v1099
    %1832 = vmatpush.msra.mxu0 %v1095
    %1833 = vmatpush.msra.mxu0 %v1091
    %1834 = vmatpush.msra.mxu0 %v1087
    %1835 = vmatpush.msra.mxu0 %v1083
    %1836 = vmatpush.msra.mxu0 %v1079
    %1837 = vmatpush.msra.mxu0 %v1075
    %1838 = vmatpush.msra.mxu0 %v1071
    %1839 = vmatpush.msra.mxu0 %v1067
    %1840 = vmatpush.msra.mxu0 %v1063
    %1841 = vmatpush.msra.mxu0 %v1059
    %1842 = vmatmul.f32.gmra.mxu0 %v1659
    %v1843 = vpop.f32.mrf.mxu0
    %v1844 = vadd.f32 %v1824, %v1843
    %1845 = vdwg.mxu0
    %1846 = vmatpush.msra.mxu0 %v1183
    %1847 = vmatpush.msra.mxu0 %v1179
    %1848 = vmatpush.msra.mxu0 %v1175
    %1849 = vmatpush.msra.mxu0 %v1171
    %1850 = vmatpush.msra.mxu0 %v1167
    %1851 = vmatpush.msra.mxu0 %v1163
    %1852 = vmatpush.msra.mxu0 %v1159
    %1853 = vmatpush.msra.mxu0 %v1155
    %1854 = vmatpush.msra.mxu0 %v1151
    %1855 = vmatpush.msra.mxu0 %v1147
    %1856 = vmatpush.msra.mxu0 %v1143
    %1857 = vmatpush.msra.mxu0 %v1139
    %1858 = vmatpush.msra.mxu0 %v1135
    %1859 = vmatpush.msra.mxu0 %v1131
    %1860 = vmatpush.msra.mxu0 %v1127
    %1861 = vmatpush.msra.mxu0 %v1123
    %1862 = vmatmul.f32.gmra.mxu0 %v1662
    %v1863 = vpop.f32.mrf.mxu0
    %v1864 = vadd.f32 %v1844, %v1863
    %1865 = vdwg.mxu0
    %1866 = vmatpush.msra.mxu0 %v1247
    %1867 = vmatpush.msra.mxu0 %v1243
    %1868 = vmatpush.msra.mxu0 %v1239
    %1869 = vmatpush.msra.mxu0 %v1235
    %1870 = vmatpush.msra.mxu0 %v1231
    %1871 = vmatpush.msra.mxu0 %v1227
    %1872 = vmatpush.msra.mxu0 %v1223
    %1873 = vmatpush.msra.mxu0 %v1219
    %1874 = vmatpush.msra.mxu0 %v1215
    %1875 = vmatpush.msra.mxu0 %v1211
    %1876 = vmatpush.msra.mxu0 %v1207
    %1877 = vmatpush.msra.mxu0 %v1203
    %1878 = vmatpush.msra.mxu0 %v1199
    %1879 = vmatpush.msra.mxu0 %v1195
    %1880 = vmatpush.msra.mxu0 %v1191
    %1881 = vmatpush.msra.mxu0 %v1187
    %1882 = vmatmul.f32.gmra.mxu0 %v1663
    %v1883 = vpop.f32.mrf.mxu0
    %v1884 = vadd.f32 %v1864, %v1883
    %1885 = vdwg.mxu0
    %1886 = vmatpush.msra.mxu0 %v1311
    %1887 = vmatpush.msra.mxu0 %v1307
    %1888 = vmatpush.msra.mxu0 %v1303
    %1889 = vmatpush.msra.mxu0 %v1299
    %1890 = vmatpush.msra.mxu0 %v1295
    %1891 = vmatpush.msra.mxu0 %v1291
    %1892 = vmatpush.msra.mxu0 %v1287
    %1893 = vmatpush.msra.mxu0 %v1283
    %1894 = vmatpush.msra.mxu0 %v1279
    %1895 = vmatpush.msra.mxu0 %v1275
    %1896 = vmatpush.msra.mxu0 %v1271
    %1897 = vmatpush.msra.mxu0 %v1267
    %1898 = vmatpush.msra.mxu0 %v1263
    %1899 = vmatpush.msra.mxu0 %v1259
    %1900 = vmatpush.msra.mxu0 %v1255
    %1901 = vmatpush.msra.mxu0 %v1251
    %1902 = vmatmul.f32.gmra.mxu0 %v1664
    %v1903 = vpop.f32.mrf.mxu0
    %v1904 = vadd.f32 %v1884, %v1903
    %1905 = vdwg.mxu0
    %1906 = vmatpush.msra.mxu0 %v1375
    %1907 = vmatpush.msra.mxu0 %v1371
    %1908 = vmatpush.msra.mxu0 %v1367
    %1909 = vmatpush.msra.mxu0 %v1363
    %1910 = vmatpush.msra.mxu0 %v1359
    %1911 = vmatpush.msra.mxu0 %v1355
    %1912 = vmatpush.msra.mxu0 %v1351
    %1913 = vmatpush.msra.mxu0 %v1347
    %1914 = vmatpush.msra.mxu0 %v1343
    %1915 = vmatpush.msra.mxu0 %v1339
    %1916 = vmatpush.msra.mxu0 %v1335
    %1917 = vmatpush.msra.mxu0 %v1331
    %1918 = vmatpush.msra.mxu0 %v1327
    %1919 = vmatpush.msra.mxu0 %v1323
    %1920 = vmatpush.msra.mxu0 %v1319
    %1921 = vmatpush.msra.mxu0 %v1315
    %1922 = vmatmul.f32.gmra.mxu0 %v1665
    %v1923 = vpop.f32.mrf.mxu0
    %v1924 = vadd.f32 %v1904, %v1923
    %1925 = vdwg.mxu0
    %1926 = vmatpush.msra.mxu0 %v1439
    %1927 = vmatpush.msra.mxu0 %v1435
    %1928 = vmatpush.msra.mxu0 %v1431
    %1929 = vmatpush.msra.mxu0 %v1427
    %1930 = vmatpush.msra.mxu0 %v1423
    %1931 = vmatpush.msra.mxu0 %v1419
    %1932 = vmatpush.msra.mxu0 %v1415
    %1933 = vmatpush.msra.mxu0 %v1411
    %1934 = vmatpush.msra.mxu0 %v1407
    %1935 = vmatpush.msra.mxu0 %v1403
    %1936 = vmatpush.msra.mxu0 %v1399
    %1937 = vmatpush.msra.mxu0 %v1395
    %1938 = vmatpush.msra.mxu0 %v1391
    %1939 = vmatpush.msra.mxu0 %v1387
    %1940 = vmatpush.msra.mxu0 %v1383
    %1941 = vmatpush.msra.mxu0 %v1379
    %1942 = vmatmul.f32.gmra.mxu0 %v1666
    %v1943 = vpop.f32.mrf.mxu0
    %v1944 = vadd.f32 %v1924, %v1943
    %1945 = vdwg.mxu0
    %1946 = vmatpush.msra.mxu0 %v1503
    %1947 = vmatpush.msra.mxu0 %v1499
    %1948 = vmatpush.msra.mxu0 %v1495
    %1949 = vmatpush.msra.mxu0 %v1491
    %1950 = vmatpush.msra.mxu0 %v1487
    %1951 = vmatpush.msra.mxu0 %v1483
    %1952 = vmatpush.msra.mxu0 %v1479
    %1953 = vmatpush.msra.mxu0 %v1475
    %1954 = vmatpush.msra.mxu0 %v1471
    %1955 = vmatpush.msra.mxu0 %v1467
    %1956 = vmatpush.msra.mxu0 %v1463
    %1957 = vmatpush.msra.mxu0 %v1459
    %1958 = vmatpush.msra.mxu0 %v1455
    %1959 = vmatpush.msra.mxu0 %v1451
    %1960 = vmatpush.msra.mxu0 %v1447
    %1961 = vmatpush.msra.mxu0 %v1443
    %1962 = vmatmul.f32.gmra.mxu0 %v1667
    %v1963 = vpop.f32.mrf.mxu0
    %v1964 = vadd.f32 %v1944, %v1963
    %1965 = vdwg.mxu0
    %1966 = vmatpush.msra.mxu0 %v1567
    %1967 = vmatpush.msra.mxu0 %v1563
    %1968 = vmatpush.msra.mxu0 %v1559
    %1969 = vmatpush.msra.mxu0 %v1555
    %1970 = vmatpush.msra.mxu0 %v1551
    %1971 = vmatpush.msra.mxu0 %v1547
    %1972 = vmatpush.msra.mxu0 %v1543
    %1973 = vmatpush.msra.mxu0 %v1539
    %1974 = vmatpush.msra.mxu0 %v1535
    %1975 = vmatpush.msra.mxu0 %v1531
    %1976 = vmatpush.msra.mxu0 %v1527
    %1977 = vmatpush.msra.mxu0 %v1523
    %1978 = vmatpush.msra.mxu0 %v1519
    %1979 = vmatpush.msra.mxu0 %v1515
    %1980 = vmatpush.msra.mxu0 %v1511
    %1981 = vmatpush.msra.mxu0 %v1507
    %1982 = vmatmul.f32.gmra.mxu0 %v1668
    %v1983 = vpop.f32.mrf.mxu0
    %v1984 = vadd.f32 %v1964, %v1983
    %1985 = vdwg.mxu0
    %1986 = vmatpush.msra.mxu0 %v1631
    %1987 = vmatpush.msra.mxu0 %v1627
    %1988 = vmatpush.msra.mxu0 %v1623
    %1989 = vmatpush.msra.mxu0 %v1619
    %1990 = vmatpush.msra.mxu0 %v1615
    %1991 = vmatpush.msra.mxu0 %v1611
    %1992 = vmatpush.msra.mxu0 %v1607
    %1993 = vmatpush.msra.mxu0 %v1603
    %1994 = vmatpush.msra.mxu0 %v1599
    %1995 = vmatpush.msra.mxu0 %v1595
    %1996 = vmatpush.msra.mxu0 %v1591
    %1997 = vmatpush.msra.mxu0 %v1587
    %1998 = vmatpush.msra.mxu0 %v1583
    %1999 = vmatpush.msra.mxu0 %v1579
    %2000 = vmatpush.msra.mxu0 %v1575
    %2001 = vmatpush.msra.mxu0 %v1571
    %2002 = vmatmul.f32.gmra.mxu0 %v1669
    %v2003 = vpop.f32.mrf.mxu0
    %v2004 = vadd.f32 %v1984, %v2003
    %2005 = vdwg.mxu0
    %2006 = vmatpush.msra.mxu0 %v672
    %2007 = vmatpush.msra.mxu0 %v668
    %2008 = vmatpush.msra.mxu0 %v664
    %2009 = vmatpush.msra.mxu0 %v660
    %2010 = vmatpush.msra.mxu0 %v656
    %2011 = vmatpush.msra.mxu0 %v652
    %2012 = vmatpush.msra.mxu0 %v648
    %2013 = vmatpush.msra.mxu0 %v644
    %2014 = vmatpush.msra.mxu0 %v640
    %2015 = vmatpush.msra.mxu0 %v636
    %2016 = vmatpush.msra.mxu0 %v632
    %2017 = vmatpush.msra.mxu0 %v628
    %2018 = vmatpush.msra.mxu0 %v624
    %2019 = vmatpush.msra.mxu0 %v620
    %2020 = vmatpush.msra.mxu0 %v616
    %2021 = vmatpush.msra.mxu0 %v612
    %2022 = vmatmul.f32.gmra.mxu0 %v1652
    %v2023 = vpop.f32.mrf.mxu0
    %v2024 = vadd.f32 %v1638, %v2023
    %2025 = vdwg.mxu0
    %2026 = vmatpush.msra.mxu0 %v736
    %2027 = vmatpush.msra.mxu0 %v732
    %2028 = vmatpush.msra.mxu0 %v728
    %2029 = vmatpush.msra.mxu0 %v724
    %2030 = vmatpush.msra.mxu0 %v720
    %2031 = vmatpush.msra.mxu0 %v716
    %2032 = vmatpush.msra.mxu0 %v712
    %2033 = vmatpush.msra.mxu0 %v708
    %2034 = vmatpush.msra.mxu0 %v704
    %2035 = vmatpush.msra.mxu0 %v700
    %2036 = vmatpush.msra.mxu0 %v696
    %2037 = vmatpush.msra.mxu0 %v692
    %2038 = vmatpush.msra.mxu0 %v688
    %2039 = vmatpush.msra.mxu0 %v684
    %2040 = vmatpush.msra.mxu0 %v680
    %2041 = vmatpush.msra.mxu0 %v676
    %2042 = vmatmul.f32.gmra.mxu0 %v1653
    %v2043 = vpop.f32.mrf.mxu0
    %v2044 = vadd.f32 %v2024, %v2043
    %2045 = vdwg.mxu0
    %2046 = vmatpush.msra.mxu0 %v800
    %2047 = vmatpush.msra.mxu0 %v796
    %2048 = vmatpush.msra.mxu0 %v792
    %2049 = vmatpush.msra.mxu0 %v788
    %2050 = vmatpush.msra.mxu0 %v784
    %2051 = vmatpush.msra.mxu0 %v780
    %2052 = vmatpush.msra.mxu0 %v776
    %2053 = vmatpush.msra.mxu0 %v772
    %2054 = vmatpush.msra.mxu0 %v768
    %2055 = vmatpush.msra.mxu0 %v764
    %2056 = vmatpush.msra.mxu0 %v760
    %2057 = vmatpush.msra.mxu0 %v756
    %2058 = vmatpush.msra.mxu0 %v752
    %2059 = vmatpush.msra.mxu0 %v748
    %2060 = vmatpush.msra.mxu0 %v744
    %2061 = vmatpush.msra.mxu0 %v740
    %2062 = vmatmul.f32.gmra.mxu0 %v1654
    %v2063 = vpop.f32.mrf.mxu0
    %v2064 = vadd.f32 %v2044, %v2063
    %2065 = vdwg.mxu0
    %2066 = vmatpush.msra.mxu0 %v864
    %2067 = vmatpush.msra.mxu0 %v860
    %2068 = vmatpush.msra.mxu0 %v856
    %2069 = vmatpush.msra.mxu0 %v852
    %2070 = vmatpush.msra.mxu0 %v848
    %2071 = vmatpush.msra.mxu0 %v844
    %2072 = vmatpush.msra.mxu0 %v840
    %2073 = vmatpush.msra.mxu0 %v836
    %2074 = vmatpush.msra.mxu0 %v832
    %2075 = vmatpush.msra.mxu0 %v828
    %2076 = vmatpush.msra.mxu0 %v824
    %2077 = vmatpush.msra.mxu0 %v820
    %2078 = vmatpush.msra.mxu0 %v816
    %2079 = vmatpush.msra.mxu0 %v812
    %2080 = vmatpush.msra.mxu0 %v808
    %2081 = vmatpush.msra.mxu0 %v804
    %2082 = vmatmul.f32.gmra.mxu0 %v1655
    %v2083 = vpop.f32.mrf.mxu0
    %v2084 = vadd.f32 %v2064, %v2083
    %2085 = vdwg.mxu0
    %2086 = vmatpush.msra.mxu0 %v928
    %2087 = vmatpush.msra.mxu0 %v924
    %2088 = vmatpush.msra.mxu0 %v920
    %2089 = vmatpush.msra.mxu0 %v916
    %2090 = vmatpush.msra.mxu0 %v912
    %2091 = vmatpush.msra.mxu0 %v908
    %2092 = vmatpush.msra.mxu0 %v904
    %2093 = vmatpush.msra.mxu0 %v900
    %2094 = vmatpush.msra.mxu0 %v896
    %2095 = vmatpush.msra.mxu0 %v892
    %2096 = vmatpush.msra.mxu0 %v888
    %2097 = vmatpush.msra.mxu0 %v884
    %2098 = vmatpush.msra.mxu0 %v880
    %2099 = vmatpush.msra.mxu0 %v876
    %2100 = vmatpush.msra.mxu0 %v872
    %2101 = vmatpush.msra.mxu0 %v868
    %2102 = vmatmul.f32.gmra.mxu0 %v1656
    %v2103 = vpop.f32.mrf.mxu0
    %v2104 = vadd.f32 %v2084, %v2103
    %2105 = vdwg.mxu0
    %2106 = vmatpush.msra.mxu0 %v992
    %2107 = vmatpush.msra.mxu0 %v988
    %2108 = vmatpush.msra.mxu0 %v984
    %2109 = vmatpush.msra.mxu0 %v980
    %2110 = vmatpush.msra.mxu0 %v976
    %2111 = vmatpush.msra.mxu0 %v972
    %2112 = vmatpush.msra.mxu0 %v968
    %2113 = vmatpush.msra.mxu0 %v964
    %2114 = vmatpush.msra.mxu0 %v960
    %2115 = vmatpush.msra.mxu0 %v956
    %2116 = vmatpush.msra.mxu0 %v952
    %2117 = vmatpush.msra.mxu0 %v948
    %2118 = vmatpush.msra.mxu0 %v944
    %2119 = vmatpush.msra.mxu0 %v940
    %2120 = vmatpush.msra.mxu0 %v936
    %2121 = vmatpush.msra.mxu0 %v932
    %2122 = vmatmul.f32.gmra.mxu0 %v1657
    %v2123 = vpop.f32.mrf.mxu0
    %v2124 = vadd.f32 %v2104, %v2123
    %2125 = vdwg.mxu0
    %2126 = vmatpush.msra.mxu0 %v1056
    %2127 = vmatpush.msra.mxu0 %v1052
    %2128 = vmatpush.msra.mxu0 %v1048
    %2129 = vmatpush.msra.mxu0 %v1044
    %2130 = vmatpush.msra.mxu0 %v1040
    %2131 = vmatpush.msra.mxu0 %v1036
    %2132 = vmatpush.msra.mxu0 %v1032
    %2133 = vmatpush.msra.mxu0 %v1028
    %2134 = vmatpush.msra.mxu0 %v1024
    %2135 = vmatpush.msra.mxu0 %v1020
    %2136 = vmatpush.msra.mxu0 %v1016
    %2137 = vmatpush.msra.mxu0 %v1012
    %2138 = vmatpush.msra.mxu0 %v1008
    %2139 = vmatpush.msra.mxu0 %v1004
    %2140 = vmatpush.msra.mxu0 %v1000
    %2141 = vmatpush.msra.mxu0 %v996
    %2142 = vmatmul.f32.gmra.mxu0 %v1658
    %v2143 = vpop.f32.mrf.mxu0
    %v2144 = vadd.f32 %v2124, %v2143
    %2145 = vdwg.mxu0
    %2146 = vmatpush.msra.mxu0 %v1120
    %2147 = vmatpush.msra.mxu0 %v1116
    %2148 = vmatpush.msra.mxu0 %v1112
    %2149 = vmatpush.msra.mxu0 %v1108
    %2150 = vmatpush.msra.mxu0 %v1104
    %2151 = vmatpush.msra.mxu0 %v1100
    %2152 = vmatpush.msra.mxu0 %v1096
    %2153 = vmatpush.msra.mxu0 %v1092
    %2154 = vmatpush.msra.mxu0 %v1088
    %2155 = vmatpush.msra.mxu0 %v1084
    %2156 = vmatpush.msra.mxu0 %v1080
    %2157 = vmatpush.msra.mxu0 %v1076
    %2158 = vmatpush.msra.mxu0 %v1072
    %2159 = vmatpush.msra.mxu0 %v1068
    %2160 = vmatpush.msra.mxu0 %v1064
    %2161 = vmatpush.msra.mxu0 %v1060
    %2162 = vmatmul.f32.gmra.mxu0 %v1659
    %v2163 = vpop.f32.mrf.mxu0
    %v2164 = vadd.f32 %v2144, %v2163
    %2165 = vdwg.mxu0
    %2166 = vmatpush.msra.mxu0 %v1184
    %2167 = vmatpush.msra.mxu0 %v1180
    %2168 = vmatpush.msra.mxu0 %v1176
    %2169 = vmatpush.msra.mxu0 %v1172
    %2170 = vmatpush.msra.mxu0 %v1168
    %2171 = vmatpush.msra.mxu0 %v1164
    %2172 = vmatpush.msra.mxu0 %v1160
    %2173 = vmatpush.msra.mxu0 %v1156
    %2174 = vmatpush.msra.mxu0 %v1152
    %2175 = vmatpush.msra.mxu0 %v1148
    %2176 = vmatpush.msra.mxu0 %v1144
    %2177 = vmatpush.msra.mxu0 %v1140
    %2178 = vmatpush.msra.mxu0 %v1136
    %2179 = vmatpush.msra.mxu0 %v1132
    %2180 = vmatpush.msra.mxu0 %v1128
    %2181 = vmatpush.msra.mxu0 %v1124
    %2182 = vmatmul.f32.gmra.mxu0 %v1662
    %v2183 = vpop.f32.mrf.mxu0
    %v2184 = vadd.f32 %v2164, %v2183
    %2185 = vdwg.mxu0
    %2186 = vmatpush.msra.mxu0 %v1248
    %2187 = vmatpush.msra.mxu0 %v1244
    %2188 = vmatpush.msra.mxu0 %v1240
    %2189 = vmatpush.msra.mxu0 %v1236
    %2190 = vmatpush.msra.mxu0 %v1232
    %2191 = vmatpush.msra.mxu0 %v1228
    %2192 = vmatpush.msra.mxu0 %v1224
    %2193 = vmatpush.msra.mxu0 %v1220
    %2194 = vmatpush.msra.mxu0 %v1216
    %2195 = vmatpush.msra.mxu0 %v1212
    %2196 = vmatpush.msra.mxu0 %v1208
    %2197 = vmatpush.msra.mxu0 %v1204
    %2198 = vmatpush.msra.mxu0 %v1200
    %2199 = vmatpush.msra.mxu0 %v1196
    %2200 = vmatpush.msra.mxu0 %v1192
    %2201 = vmatpush.msra.mxu0 %v1188
    %2202 = vmatmul.f32.gmra.mxu0 %v1663
    %v2203 = vpop.f32.mrf.mxu0
    %v2204 = vadd.f32 %v2184, %v2203
    %2205 = vdwg.mxu0
    %2206 = vmatpush.msra.mxu0 %v1312
    %2207 = vmatpush.msra.mxu0 %v1308
    %2208 = vmatpush.msra.mxu0 %v1304
    %2209 = vmatpush.msra.mxu0 %v1300
    %2210 = vmatpush.msra.mxu0 %v1296
    %2211 = vmatpush.msra.mxu0 %v1292
    %2212 = vmatpush.msra.mxu0 %v1288
    %2213 = vmatpush.msra.mxu0 %v1284
    %2214 = vmatpush.msra.mxu0 %v1280
    %2215 = vmatpush.msra.mxu0 %v1276
    %2216 = vmatpush.msra.mxu0 %v1272
    %2217 = vmatpush.msra.mxu0 %v1268
    %2218 = vmatpush.msra.mxu0 %v1264
    %2219 = vmatpush.msra.mxu0 %v1260
    %2220 = vmatpush.msra.mxu0 %v1256
    %2221 = vmatpush.msra.mxu0 %v1252
    %2222 = vmatmul.f32.gmra.mxu0 %v1664
    %v2223 = vpop.f32.mrf.mxu0
    %v2224 = vadd.f32 %v2204, %v2223
    %2225 = vdwg.mxu0
    %2226 = vmatpush.msra.mxu0 %v1376
    %2227 = vmatpush.msra.mxu0 %v1372
    %2228 = vmatpush.msra.mxu0 %v1368
    %2229 = vmatpush.msra.mxu0 %v1364
    %2230 = vmatpush.msra.mxu0 %v1360
    %2231 = vmatpush.msra.mxu0 %v1356
    %2232 = vmatpush.msra.mxu0 %v1352
    %2233 = vmatpush.msra.mxu0 %v1348
    %2234 = vmatpush.msra.mxu0 %v1344
    %2235 = vmatpush.msra.mxu0 %v1340
    %2236 = vmatpush.msra.mxu0 %v1336
    %2237 = vmatpush.msra.mxu0 %v1332
    %2238 = vmatpush.msra.mxu0 %v1328
    %2239 = vmatpush.msra.mxu0 %v1324
    %2240 = vmatpush.msra.mxu0 %v1320
    %2241 = vmatpush.msra.mxu0 %v1316
    %2242 = vmatmul.f32.gmra.mxu0 %v1665
    %v2243 = vpop.f32.mrf.mxu0
    %v2244 = vadd.f32 %v2224, %v2243
    %2245 = vdwg.mxu0
    %2246 = vmatpush.msra.mxu0 %v1440
    %2247 = vmatpush.msra.mxu0 %v1436
    %2248 = vmatpush.msra.mxu0 %v1432
    %2249 = vmatpush.msra.mxu0 %v1428
    %2250 = vmatpush.msra.mxu0 %v1424
    %2251 = vmatpush.msra.mxu0 %v1420
    %2252 = vmatpush.msra.mxu0 %v1416
    %2253 = vmatpush.msra.mxu0 %v1412
    %2254 = vmatpush.msra.mxu0 %v1408
    %2255 = vmatpush.msra.mxu0 %v1404
    %2256 = vmatpush.msra.mxu0 %v1400
    %2257 = vmatpush.msra.mxu0 %v1396
    %2258 = vmatpush.msra.mxu0 %v1392
    %2259 = vmatpush.msra.mxu0 %v1388
    %2260 = vmatpush.msra.mxu0 %v1384
    %2261 = vmatpush.msra.mxu0 %v1380
    %2262 = vmatmul.f32.gmra.mxu0 %v1666
    %v2263 = vpop.f32.mrf.mxu0
    %v2264 = vadd.f32 %v2244, %v2263
    %2265 = vdwg.mxu0
    %2266 = vmatpush.msra.mxu0 %v1504
    %2267 = vmatpush.msra.mxu0 %v1500
    %2268 = vmatpush.msra.mxu0 %v1496
    %2269 = vmatpush.msra.mxu0 %v1492
    %2270 = vmatpush.msra.mxu0 %v1488
    %2271 = vmatpush.msra.mxu0 %v1484
    %2272 = vmatpush.msra.mxu0 %v1480
    %2273 = vmatpush.msra.mxu0 %v1476
    %2274 = vmatpush.msra.mxu0 %v1472
    %2275 = vmatpush.msra.mxu0 %v1468
    %2276 = vmatpush.msra.mxu0 %v1464
    %2277 = vmatpush.msra.mxu0 %v1460
    %2278 = vmatpush.msra.mxu0 %v1456
    %2279 = vmatpush.msra.mxu0 %v1452
    %2280 = vmatpush.msra.mxu0 %v1448
    %2281 = vmatpush.msra.mxu0 %v1444
    %2282 = vmatmul.f32.gmra.mxu0 %v1667
    %v2283 = vpop.f32.mrf.mxu0
    %v2284 = vadd.f32 %v2264, %v2283
    %2285 = vdwg.mxu0
    %2286 = vmatpush.msra.mxu0 %v1568
    %2287 = vmatpush.msra.mxu0 %v1564
    %2288 = vmatpush.msra.mxu0 %v1560
    %2289 = vmatpush.msra.mxu0 %v1556
    %2290 = vmatpush.msra.mxu0 %v1552
    %2291 = vmatpush.msra.mxu0 %v1548
    %2292 = vmatpush.msra.mxu0 %v1544
    %2293 = vmatpush.msra.mxu0 %v1540
    %2294 = vmatpush.msra.mxu0 %v1536
    %2295 = vmatpush.msra.mxu0 %v1532
    %2296 = vmatpush.msra.mxu0 %v1528
    %2297 = vmatpush.msra.mxu0 %v1524
    %2298 = vmatpush.msra.mxu0 %v1520
    %2299 = vmatpush.msra.mxu0 %v1516
    %2300 = vmatpush.msra.mxu0 %v1512
    %2301 = vmatpush.msra.mxu0 %v1508
    %2302 = vmatmul.f32.gmra.mxu0 %v1668
    %v2303 = vpop.f32.mrf.mxu0
    %v2304 = vadd.f32 %v2284, %v2303
    %2305 = vdwg.mxu0
    %2306 = vmatpush.msra.mxu0 %v1632
    %2307 = vmatpush.msra.mxu0 %v1628
    %2308 = vmatpush.msra.mxu0 %v1624
    %2309 = vmatpush.msra.mxu0 %v1620
    %2310 = vmatpush.msra.mxu0 %v1616
    %2311 = vmatpush.msra.mxu0 %v1612
    %2312 = vmatpush.msra.mxu0 %v1608
    %2313 = vmatpush.msra.mxu0 %v1604
    %2314 = vmatpush.msra.mxu0 %v1600
    %2315 = vmatpush.msra.mxu0 %v1596
    %2316 = vmatpush.msra.mxu0 %v1592
    %2317 = vmatpush.msra.mxu0 %v1588
    %2318 = vmatpush.msra.mxu0 %v1584
    %2319 = vmatpush.msra.mxu0 %v1580
    %2320 = vmatpush.msra.mxu0 %v1576
    %2321 = vmatpush.msra.mxu0 %v1572
    %2322 = vmatmul.f32.gmra.mxu0 %v1669
    %v2323 = vpop.f32.mrf.mxu0
    %v2324 = vadd.f32 %v2304, %v2323
    %2325 = vdwg.mxu0
    %2326 = vmatpush.msra.mxu0 %v673
    %2327 = vmatpush.msra.mxu0 %v669
    %2328 = vmatpush.msra.mxu0 %v665
    %2329 = vmatpush.msra.mxu0 %v661
    %2330 = vmatpush.msra.mxu0 %v657
    %2331 = vmatpush.msra.mxu0 %v653
    %2332 = vmatpush.msra.mxu0 %v649
    %2333 = vmatpush.msra.mxu0 %v645
    %2334 = vmatpush.msra.mxu0 %v641
    %2335 = vmatpush.msra.mxu0 %v637
    %2336 = vmatpush.msra.mxu0 %v633
    %2337 = vmatpush.msra.mxu0 %v629
    %2338 = vmatpush.msra.mxu0 %v625
    %2339 = vmatpush.msra.mxu0 %v621
    %2340 = vmatpush.msra.mxu0 %v617
    %2341 = vmatpush.msra.mxu0 %v613
    %2342 = vmatmul.f32.gmra.mxu0 %v1652
    %v2343 = vpop.f32.mrf.mxu0
    %v2344 = vadd.f32 %v1639, %v2343
    %2345 = vdwg.mxu0
    %2346 = vmatpush.msra.mxu0 %v737
    %2347 = vmatpush.msra.mxu0 %v733
    %2348 = vmatpush.msra.mxu0 %v729
    %2349 = vmatpush.msra.mxu0 %v725
    %2350 = vmatpush.msra.mxu0 %v721
    %2351 = vmatpush.msra.mxu0 %v717
    %2352 = vmatpush.msra.mxu0 %v713
    %2353 = vmatpush.msra.mxu0 %v709
    %2354 = vmatpush.msra.mxu0 %v705
    %2355 = vmatpush.msra.mxu0 %v701
    %2356 = vmatpush.msra.mxu0 %v697
    %2357 = vmatpush.msra.mxu0 %v693
    %2358 = vmatpush.msra.mxu0 %v689
    %2359 = vmatpush.msra.mxu0 %v685
    %2360 = vmatpush.msra.mxu0 %v681
    %2361 = vmatpush.msra.mxu0 %v677
    %2362 = vmatmul.f32.gmra.mxu0 %v1653
    %v2363 = vpop.f32.mrf.mxu0
    %v2364 = vadd.f32 %v2344, %v2363
    %2365 = vdwg.mxu0
    %2366 = vmatpush.msra.mxu0 %v801
    %2367 = vmatpush.msra.mxu0 %v797
    %2368 = vmatpush.msra.mxu0 %v793
    %2369 = vmatpush.msra.mxu0 %v789
    %2370 = vmatpush.msra.mxu0 %v785
    %2371 = vmatpush.msra.mxu0 %v781
    %2372 = vmatpush.msra.mxu0 %v777
    %2373 = vmatpush.msra.mxu0 %v773
    %2374 = vmatpush.msra.mxu0 %v769
    %2375 = vmatpush.msra.mxu0 %v765
    %2376 = vmatpush.msra.mxu0 %v761
    %2377 = vmatpush.msra.mxu0 %v757
    %2378 = vmatpush.msra.mxu0 %v753
    %2379 = vmatpush.msra.mxu0 %v749
    %2380 = vmatpush.msra.mxu0 %v745
    %2381 = vmatpush.msra.mxu0 %v741
    %2382 = vmatmul.f32.gmra.mxu0 %v1654
    %v2383 = vpop.f32.mrf.mxu0
    %v2384 = vadd.f32 %v2364, %v2383
    %2385 = vdwg.mxu0
    %2386 = vmatpush.msra.mxu0 %v865
    %2387 = vmatpush.msra.mxu0 %v861
    %2388 = vmatpush.msra.mxu0 %v857
    %2389 = vmatpush.msra.mxu0 %v853
    %2390 = vmatpush.msra.mxu0 %v849
    %2391 = vmatpush.msra.mxu0 %v845
    %2392 = vmatpush.msra.mxu0 %v841
    %2393 = vmatpush.msra.mxu0 %v837
    %2394 = vmatpush.msra.mxu0 %v833
    %2395 = vmatpush.msra.mxu0 %v829
    %2396 = vmatpush.msra.mxu0 %v825
    %2397 = vmatpush.msra.mxu0 %v821
    %2398 = vmatpush.msra.mxu0 %v817
    %2399 = vmatpush.msra.mxu0 %v813
    %2400 = vmatpush.msra.mxu0 %v809
    %2401 = vmatpush.msra.mxu0 %v805
    %2402 = vmatmul.f32.gmra.mxu0 %v1655
    %v2403 = vpop.f32.mrf.mxu0
    %v2404 = vadd.f32 %v2384, %v2403
    %2405 = vdwg.mxu0
    %2406 = vmatpush.msra.mxu0 %v929
    %2407 = vmatpush.msra.mxu0 %v925
    %2408 = vmatpush.msra.mxu0 %v921
    %2409 = vmatpush.msra.mxu0 %v917
    %2410 = vmatpush.msra.mxu0 %v913
    %2411 = vmatpush.msra.mxu0 %v909
    %2412 = vmatpush.msra.mxu0 %v905
    %2413 = vmatpush.msra.mxu0 %v901
    %2414 = vmatpush.msra.mxu0 %v897
    %2415 = vmatpush.msra.mxu0 %v893
    %2416 = vmatpush.msra.mxu0 %v889
    %2417 = vmatpush.msra.mxu0 %v885
    %2418 = vmatpush.msra.mxu0 %v881
    %2419 = vmatpush.msra.mxu0 %v877
    %2420 = vmatpush.msra.mxu0 %v873
    %2421 = vmatpush.msra.mxu0 %v869
    %2422 = vmatmul.f32.gmra.mxu0 %v1656
    %v2423 = vpop.f32.mrf.mxu0
    %v2424 = vadd.f32 %v2404, %v2423
    %2425 = vdwg.mxu0
    %2426 = vmatpush.msra.mxu0 %v993
    %2427 = vmatpush.msra.mxu0 %v989
    %2428 = vmatpush.msra.mxu0 %v985
    %2429 = vmatpush.msra.mxu0 %v981
    %2430 = vmatpush.msra.mxu0 %v977
    %2431 = vmatpush.msra.mxu0 %v973
    %2432 = vmatpush.msra.mxu0 %v969
    %2433 = vmatpush.msra.mxu0 %v965
    %2434 = vmatpush.msra.mxu0 %v961
    %2435 = vmatpush.msra.mxu0 %v957
    %2436 = vmatpush.msra.mxu0 %v953
    %2437 = vmatpush.msra.mxu0 %v949
    %2438 = vmatpush.msra.mxu0 %v945
    %2439 = vmatpush.msra.mxu0 %v941
    %2440 = vmatpush.msra.mxu0 %v937
    %2441 = vmatpush.msra.mxu0 %v933
    %2442 = vmatmul.f32.gmra.mxu0 %v1657
    %v2443 = vpop.f32.mrf.mxu0
    %v2444 = vadd.f32 %v2424, %v2443
    %2445 = vdwg.mxu0
    %2446 = vmatpush.msra.mxu0 %v1057
    %2447 = vmatpush.msra.mxu0 %v1053
    %2448 = vmatpush.msra.mxu0 %v1049
    %2449 = vmatpush.msra.mxu0 %v1045
    %2450 = vmatpush.msra.mxu0 %v1041
    %2451 = vmatpush.msra.mxu0 %v1037
    %2452 = vmatpush.msra.mxu0 %v1033
    %2453 = vmatpush.msra.mxu0 %v1029
    %2454 = vmatpush.msra.mxu0 %v1025
    %2455 = vmatpush.msra.mxu0 %v1021
    %2456 = vmatpush.msra.mxu0 %v1017
    %2457 = vmatpush.msra.mxu0 %v1013
    %2458 = vmatpush.msra.mxu0 %v1009
    %2459 = vmatpush.msra.mxu0 %v1005
    %2460 = vmatpush.msra.mxu0 %v1001
    %2461 = vmatpush.msra.mxu0 %v997
    %2462 = vmatmul.f32.gmra.mxu0 %v1658
    %v2463 = vpop.f32.mrf.mxu0
    %v2464 = vadd.f32 %v2444, %v2463
    %2465 = vdwg.mxu0
    %2466 = vmatpush.msra.mxu0 %v1121
    %2467 = vmatpush.msra.mxu0 %v1117
    %2468 = vmatpush.msra.mxu0 %v1113
    %2469 = vmatpush.msra.mxu0 %v1109
    %2470 = vmatpush.msra.mxu0 %v1105
    %2471 = vmatpush.msra.mxu0 %v1101
    %2472 = vmatpush.msra.mxu0 %v1097
    %2473 = vmatpush.msra.mxu0 %v1093
    %2474 = vmatpush.msra.mxu0 %v1089
    %2475 = vmatpush.msra.mxu0 %v1085
    %2476 = vmatpush.msra.mxu0 %v1081
    %2477 = vmatpush.msra.mxu0 %v1077
    %2478 = vmatpush.msra.mxu0 %v1073
    %2479 = vmatpush.msra.mxu0 %v1069
    %2480 = vmatpush.msra.mxu0 %v1065
    %2481 = vmatpush.msra.mxu0 %v1061
    %2482 = vmatmul.f32.gmra.mxu0 %v1659
    %v2483 = vpop.f32.mrf.mxu0
    %v2484 = vadd.f32 %v2464, %v2483
    %2485 = vdwg.mxu0
    %2486 = vmatpush.msra.mxu0 %v1185
    %2487 = vmatpush.msra.mxu0 %v1181
    %2488 = vmatpush.msra.mxu0 %v1177
    %2489 = vmatpush.msra.mxu0 %v1173
    %2490 = vmatpush.msra.mxu0 %v1169
    %2491 = vmatpush.msra.mxu0 %v1165
    %2492 = vmatpush.msra.mxu0 %v1161
    %2493 = vmatpush.msra.mxu0 %v1157
    %2494 = vmatpush.msra.mxu0 %v1153
    %2495 = vmatpush.msra.mxu0 %v1149
    %2496 = vmatpush.msra.mxu0 %v1145
    %2497 = vmatpush.msra.mxu0 %v1141
    %2498 = vmatpush.msra.mxu0 %v1137
    %2499 = vmatpush.msra.mxu0 %v1133
    %2500 = vmatpush.msra.mxu0 %v1129
    %2501 = vmatpush.msra.mxu0 %v1125
    %2502 = vmatmul.f32.gmra.mxu0 %v1662
    %v2503 = vpop.f32.mrf.mxu0
    %v2504 = vadd.f32 %v2484, %v2503
    %2505 = vdwg.mxu0
    %2506 = vmatpush.msra.mxu0 %v1249
    %2507 = vmatpush.msra.mxu0 %v1245
    %2508 = vmatpush.msra.mxu0 %v1241
    %2509 = vmatpush.msra.mxu0 %v1237
    %2510 = vmatpush.msra.mxu0 %v1233
    %2511 = vmatpush.msra.mxu0 %v1229
    %2512 = vmatpush.msra.mxu0 %v1225
    %2513 = vmatpush.msra.mxu0 %v1221
    %2514 = vmatpush.msra.mxu0 %v1217
    %2515 = vmatpush.msra.mxu0 %v1213
    %2516 = vmatpush.msra.mxu0 %v1209
    %2517 = vmatpush.msra.mxu0 %v1205
    %2518 = vmatpush.msra.mxu0 %v1201
    %2519 = vmatpush.msra.mxu0 %v1197
    %2520 = vmatpush.msra.mxu0 %v1193
    %2521 = vmatpush.msra.mxu0 %v1189
    %2522 = vmatmul.f32.gmra.mxu0 %v1663
    %v2523 = vpop.f32.mrf.mxu0
    %v2524 = vadd.f32 %v2504, %v2523
    %2525 = vdwg.mxu0
    %2526 = vmatpush.msra.mxu0 %v1313
    %2527 = vmatpush.msra.mxu0 %v1309
    %2528 = vmatpush.msra.mxu0 %v1305
    %2529 = vmatpush.msra.mxu0 %v1301
    %2530 = vmatpush.msra.mxu0 %v1297
    %2531 = vmatpush.msra.mxu0 %v1293
    %2532 = vmatpush.msra.mxu0 %v1289
    %2533 = vmatpush.msra.mxu0 %v1285
    %2534 = vmatpush.msra.mxu0 %v1281
    %2535 = vmatpush.msra.mxu0 %v1277
    %2536 = vmatpush.msra.mxu0 %v1273
    %2537 = vmatpush.msra.mxu0 %v1269
    %2538 = vmatpush.msra.mxu0 %v1265
    %2539 = vmatpush.msra.mxu0 %v1261
    %2540 = vmatpush.msra.mxu0 %v1257
    %2541 = vmatpush.msra.mxu0 %v1253
    %2542 = vmatmul.f32.gmra.mxu0 %v1664
    %v2543 = vpop.f32.mrf.mxu0
    %v2544 = vadd.f32 %v2524, %v2543
    %2545 = vdwg.mxu0
    %2546 = vmatpush.msra.mxu0 %v1377
    %2547 = vmatpush.msra.mxu0 %v1373
    %2548 = vmatpush.msra.mxu0 %v1369
    %2549 = vmatpush.msra.mxu0 %v1365
    %2550 = vmatpush.msra.mxu0 %v1361
    %2551 = vmatpush.msra.mxu0 %v1357
    %2552 = vmatpush.msra.mxu0 %v1353
    %2553 = vmatpush.msra.mxu0 %v1349
    %2554 = vmatpush.msra.mxu0 %v1345
    %2555 = vmatpush.msra.mxu0 %v1341
    %2556 = vmatpush.msra.mxu0 %v1337
    %2557 = vmatpush.msra.mxu0 %v1333
    %2558 = vmatpush.msra.mxu0 %v1329
    %2559 = vmatpush.msra.mxu0 %v1325
    %2560 = vmatpush.msra.mxu0 %v1321
    %2561 = vmatpush.msra.mxu0 %v1317
    %2562 = vmatmul.f32.gmra.mxu0 %v1665
    %v2563 = vpop.f32.mrf.mxu0
    %v2564 = vadd.f32 %v2544, %v2563
    %2565 = vdwg.mxu0
    %2566 = vmatpush.msra.mxu0 %v1441
    %2567 = vmatpush.msra.mxu0 %v1437
    %2568 = vmatpush.msra.mxu0 %v1433
    %2569 = vmatpush.msra.mxu0 %v1429
    %2570 = vmatpush.msra.mxu0 %v1425
    %2571 = vmatpush.msra.mxu0 %v1421
    %2572 = vmatpush.msra.mxu0 %v1417
    %2573 = vmatpush.msra.mxu0 %v1413
    %2574 = vmatpush.msra.mxu0 %v1409
    %2575 = vmatpush.msra.mxu0 %v1405
    %2576 = vmatpush.msra.mxu0 %v1401
    %2577 = vmatpush.msra.mxu0 %v1397
    %2578 = vmatpush.msra.mxu0 %v1393
    %2579 = vmatpush.msra.mxu0 %v1389
    %2580 = vmatpush.msra.mxu0 %v1385
    %2581 = vmatpush.msra.mxu0 %v1381
    %2582 = vmatmul.f32.gmra.mxu0 %v1666
    %v2583 = vpop.f32.mrf.mxu0
    %v2584 = vadd.f32 %v2564, %v2583
    %2585 = vdwg.mxu0
    %2586 = vmatpush.msra.mxu0 %v1505
    %2587 = vmatpush.msra.mxu0 %v1501
    %2588 = vmatpush.msra.mxu0 %v1497
    %2589 = vmatpush.msra.mxu0 %v1493
    %2590 = vmatpush.msra.mxu0 %v1489
    %2591 = vmatpush.msra.mxu0 %v1485
    %2592 = vmatpush.msra.mxu0 %v1481
    %2593 = vmatpush.msra.mxu0 %v1477
    %2594 = vmatpush.msra.mxu0 %v1473
    %2595 = vmatpush.msra.mxu0 %v1469
    %2596 = vmatpush.msra.mxu0 %v1465
    %2597 = vmatpush.msra.mxu0 %v1461
    %2598 = vmatpush.msra.mxu0 %v1457
    %2599 = vmatpush.msra.mxu0 %v1453
    %2600 = vmatpush.msra.mxu0 %v1449
    %2601 = vmatpush.msra.mxu0 %v1445
    %2602 = vmatmul.f32.gmra.mxu0 %v1667
    %v2603 = vpop.f32.mrf.mxu0
    %v2604 = vadd.f32 %v2584, %v2603
    %2605 = vdwg.mxu0
    %2606 = vmatpush.msra.mxu0 %v1569
    %2607 = vmatpush.msra.mxu0 %v1565
    %2608 = vmatpush.msra.mxu0 %v1561
    %2609 = vmatpush.msra.mxu0 %v1557
    %2610 = vmatpush.msra.mxu0 %v1553
    %2611 = vmatpush.msra.mxu0 %v1549
    %2612 = vmatpush.msra.mxu0 %v1545
    %2613 = vmatpush.msra.mxu0 %v1541
    %2614 = vmatpush.msra.mxu0 %v1537
    %2615 = vmatpush.msra.mxu0 %v1533
    %2616 = vmatpush.msra.mxu0 %v1529
    %2617 = vmatpush.msra.mxu0 %v1525
    %2618 = vmatpush.msra.mxu0 %v1521
    %2619 = vmatpush.msra.mxu0 %v1517
    %2620 = vmatpush.msra.mxu0 %v1513
    %2621 = vmatpush.msra.mxu0 %v1509
    %2622 = vmatmul.f32.gmra.mxu0 %v1668
    %v2623 = vpop.f32.mrf.mxu0
    %v2624 = vadd.f32 %v2604, %v2623
    %2625 = vdwg.mxu0
    %2626 = vmatpush.msra.mxu0 %v1633
    %2627 = vmatpush.msra.mxu0 %v1629
    %2628 = vmatpush.msra.mxu0 %v1625
    %2629 = vmatpush.msra.mxu0 %v1621
    %2630 = vmatpush.msra.mxu0 %v1617
    %2631 = vmatpush.msra.mxu0 %v1613
    %2632 = vmatpush.msra.mxu0 %v1609
    %2633 = vmatpush.msra.mxu0 %v1605
    %2634 = vmatpush.msra.mxu0 %v1601
    %2635 = vmatpush.msra.mxu0 %v1597
    %2636 = vmatpush.msra.mxu0 %v1593
    %2637 = vmatpush.msra.mxu0 %v1589
    %2638 = vmatpush.msra.mxu0 %v1585
    %2639 = vmatpush.msra.mxu0 %v1581
    %2640 = vmatpush.msra.mxu0 %v1577
    %2641 = vmatpush.msra.mxu0 %v1573
    %2642 = vmatmul.f32.gmra.mxu0 %v1669
    %v2643 = vpop.f32.mrf.mxu0
    %v2644 = vadd.f32 %v2624, %v2643
    %2645 = vdwg.mxu0
    %2646 = vmatpush.msra.mxu0 %v674
    %2647 = vmatpush.msra.mxu0 %v670
    %2648 = vmatpush.msra.mxu0 %v666
    %2649 = vmatpush.msra.mxu0 %v662
    %2650 = vmatpush.msra.mxu0 %v658
    %2651 = vmatpush.msra.mxu0 %v654
    %2652 = vmatpush.msra.mxu0 %v650
    %2653 = vmatpush.msra.mxu0 %v646
    %2654 = vmatpush.msra.mxu0 %v642
    %2655 = vmatpush.msra.mxu0 %v638
    %2656 = vmatpush.msra.mxu0 %v634
    %2657 = vmatpush.msra.mxu0 %v630
    %2658 = vmatpush.msra.mxu0 %v626
    %2659 = vmatpush.msra.mxu0 %v622
    %2660 = vmatpush.msra.mxu0 %v618
    %2661 = vmatpush.msra.mxu0 %v614
    %2662 = vmatmul.f32.gmra.mxu0 %v1652
    %v2663 = vpop.f32.mrf.mxu0
    %v2664 = vadd.f32 %v1640, %v2663
    %2665 = vdwg.mxu0
    %2666 = vmatpush.msra.mxu0 %v738
    %2667 = vmatpush.msra.mxu0 %v734
    %2668 = vmatpush.msra.mxu0 %v730
    %2669 = vmatpush.msra.mxu0 %v726
    %2670 = vmatpush.msra.mxu0 %v722
    %2671 = vmatpush.msra.mxu0 %v718
    %2672 = vmatpush.msra.mxu0 %v714
    %2673 = vmatpush.msra.mxu0 %v710
    %2674 = vmatpush.msra.mxu0 %v706
    %2675 = vmatpush.msra.mxu0 %v702
    %2676 = vmatpush.msra.mxu0 %v698
    %2677 = vmatpush.msra.mxu0 %v694
    %2678 = vmatpush.msra.mxu0 %v690
    %2679 = vmatpush.msra.mxu0 %v686
    %2680 = vmatpush.msra.mxu0 %v682
    %2681 = vmatpush.msra.mxu0 %v678
    %2682 = vmatmul.f32.gmra.mxu0 %v1653
    %v2683 = vpop.f32.mrf.mxu0
    %v2684 = vadd.f32 %v2664, %v2683
    %2685 = vdwg.mxu0
    %2686 = vmatpush.msra.mxu0 %v802
    %2687 = vmatpush.msra.mxu0 %v798
    %2688 = vmatpush.msra.mxu0 %v794
    %2689 = vmatpush.msra.mxu0 %v790
    %2690 = vmatpush.msra.mxu0 %v786
    %2691 = vmatpush.msra.mxu0 %v782
    %2692 = vmatpush.msra.mxu0 %v778
    %2693 = vmatpush.msra.mxu0 %v774
    %2694 = vmatpush.msra.mxu0 %v770
    %2695 = vmatpush.msra.mxu0 %v766
    %2696 = vmatpush.msra.mxu0 %v762
    %2697 = vmatpush.msra.mxu0 %v758
    %2698 = vmatpush.msra.mxu0 %v754
    %2699 = vmatpush.msra.mxu0 %v750
    %2700 = vmatpush.msra.mxu0 %v746
    %2701 = vmatpush.msra.mxu0 %v742
    %2702 = vmatmul.f32.gmra.mxu0 %v1654
    %v2703 = vpop.f32.mrf.mxu0
    %v2704 = vadd.f32 %v2684, %v2703
    %2705 = vdwg.mxu0
    %2706 = vmatpush.msra.mxu0 %v866
    %2707 = vmatpush.msra.mxu0 %v862
    %2708 = vmatpush.msra.mxu0 %v858
    %2709 = vmatpush.msra.mxu0 %v854
    %2710 = vmatpush.msra.mxu0 %v850
    %2711 = vmatpush.msra.mxu0 %v846
    %2712 = vmatpush.msra.mxu0 %v842
    %2713 = vmatpush.msra.mxu0 %v838
    %2714 = vmatpush.msra.mxu0 %v834
    %2715 = vmatpush.msra.mxu0 %v830
    %2716 = vmatpush.msra.mxu0 %v826
    %2717 = vmatpush.msra.mxu0 %v822
    %2718 = vmatpush.msra.mxu0 %v818
    %2719 = vmatpush.msra.mxu0 %v814
    %2720 = vmatpush.msra.mxu0 %v810
    %2721 = vmatpush.msra.mxu0 %v806
    %2722 = vmatmul.f32.gmra.mxu0 %v1655
    %v2723 = vpop.f32.mrf.mxu0
    %v2724 = vadd.f32 %v2704, %v2723
    %2725 = vdwg.mxu0
    %2726 = vmatpush.msra.mxu0 %v930
    %2727 = vmatpush.msra.mxu0 %v926
    %2728 = vmatpush.msra.mxu0 %v922
    %2729 = vmatpush.msra.mxu0 %v918
    %2730 = vmatpush.msra.mxu0 %v914
    %2731 = vmatpush.msra.mxu0 %v910
    %2732 = vmatpush.msra.mxu0 %v906
    %2733 = vmatpush.msra.mxu0 %v902
    %2734 = vmatpush.msra.mxu0 %v898
    %2735 = vmatpush.msra.mxu0 %v894
    %2736 = vmatpush.msra.mxu0 %v890
    %2737 = vmatpush.msra.mxu0 %v886
    %2738 = vmatpush.msra.mxu0 %v882
    %2739 = vmatpush.msra.mxu0 %v878
    %2740 = vmatpush.msra.mxu0 %v874
    %2741 = vmatpush.msra.mxu0 %v870
    %2742 = vmatmul.f32.gmra.mxu0 %v1656
    %v2743 = vpop.f32.mrf.mxu0
    %v2744 = vadd.f32 %v2724, %v2743
    %2745 = vdwg.mxu0
    %2746 = vmatpush.msra.mxu0 %v994
    %2747 = vmatpush.msra.mxu0 %v990
    %2748 = vmatpush.msra.mxu0 %v986
    %2749 = vmatpush.msra.mxu0 %v982
    %2750 = vmatpush.msra.mxu0 %v978
    %2751 = vmatpush.msra.mxu0 %v974
    %2752 = vmatpush.msra.mxu0 %v970
    %2753 = vmatpush.msra.mxu0 %v966
    %2754 = vmatpush.msra.mxu0 %v962
    %2755 = vmatpush.msra.mxu0 %v958
    %2756 = vmatpush.msra.mxu0 %v954
    %2757 = vmatpush.msra.mxu0 %v950
    %2758 = vmatpush.msra.mxu0 %v946
    %2759 = vmatpush.msra.mxu0 %v942
    %2760 = vmatpush.msra.mxu0 %v938
    %2761 = vmatpush.msra.mxu0 %v934
    %2762 = vmatmul.f32.gmra.mxu0 %v1657
    %v2763 = vpop.f32.mrf.mxu0
    %v2764 = vadd.f32 %v2744, %v2763
    %2765 = vdwg.mxu0
    %2766 = vmatpush.msra.mxu0 %v1058
    %2767 = vmatpush.msra.mxu0 %v1054
    %2768 = vmatpush.msra.mxu0 %v1050
    %2769 = vmatpush.msra.mxu0 %v1046
    %2770 = vmatpush.msra.mxu0 %v1042
    %2771 = vmatpush.msra.mxu0 %v1038
    %2772 = vmatpush.msra.mxu0 %v1034
    %2773 = vmatpush.msra.mxu0 %v1030
    %2774 = vmatpush.msra.mxu0 %v1026
    %2775 = vmatpush.msra.mxu0 %v1022
    %2776 = vmatpush.msra.mxu0 %v1018
    %2777 = vmatpush.msra.mxu0 %v1014
    %2778 = vmatpush.msra.mxu0 %v1010
    %2779 = vmatpush.msra.mxu0 %v1006
    %2780 = vmatpush.msra.mxu0 %v1002
    %2781 = vmatpush.msra.mxu0 %v998
    %2782 = vmatmul.f32.gmra.mxu0 %v1658
    %v2783 = vpop.f32.mrf.mxu0
    %v2784 = vadd.f32 %v2764, %v2783
    %2785 = vdwg.mxu0
    %2786 = vmatpush.msra.mxu0 %v1122
    %2787 = vmatpush.msra.mxu0 %v1118
    %2788 = vmatpush.msra.mxu0 %v1114
    %2789 = vmatpush.msra.mxu0 %v1110
    %2790 = vmatpush.msra.mxu0 %v1106
    %2791 = vmatpush.msra.mxu0 %v1102
    %2792 = vmatpush.msra.mxu0 %v1098
    %2793 = vmatpush.msra.mxu0 %v1094
    %2794 = vmatpush.msra.mxu0 %v1090
    %2795 = vmatpush.msra.mxu0 %v1086
    %2796 = vmatpush.msra.mxu0 %v1082
    %2797 = vmatpush.msra.mxu0 %v1078
    %2798 = vmatpush.msra.mxu0 %v1074
    %2799 = vmatpush.msra.mxu0 %v1070
    %2800 = vmatpush.msra.mxu0 %v1066
    %2801 = vmatpush.msra.mxu0 %v1062
    %2802 = vmatmul.f32.gmra.mxu0 %v1659
    %v2803 = vpop.f32.mrf.mxu0
    %v2804 = vadd.f32 %v2784, %v2803
    %2805 = vdwg.mxu0
    %2806 = vmatpush.msra.mxu0 %v1186
    %2807 = vmatpush.msra.mxu0 %v1182
    %2808 = vmatpush.msra.mxu0 %v1178
    %2809 = vmatpush.msra.mxu0 %v1174
    %2810 = vmatpush.msra.mxu0 %v1170
    %2811 = vmatpush.msra.mxu0 %v1166
    %2812 = vmatpush.msra.mxu0 %v1162
    %2813 = vmatpush.msra.mxu0 %v1158
    %2814 = vmatpush.msra.mxu0 %v1154
    %2815 = vmatpush.msra.mxu0 %v1150
    %2816 = vmatpush.msra.mxu0 %v1146
    %2817 = vmatpush.msra.mxu0 %v1142
    %2818 = vmatpush.msra.mxu0 %v1138
    %2819 = vmatpush.msra.mxu0 %v1134
    %2820 = vmatpush.msra.mxu0 %v1130
    %2821 = vmatpush.msra.mxu0 %v1126
    %2822 = vmatmul.f32.gmra.mxu0 %v1662
    %v2823 = vpop.f32.mrf.mxu0
    %v2824 = vadd.f32 %v2804, %v2823
    %2825 = vdwg.mxu0
    %2826 = vmatpush.msra.mxu0 %v1250
    %2827 = vmatpush.msra.mxu0 %v1246
    %2828 = vmatpush.msra.mxu0 %v1242
    %2829 = vmatpush.msra.mxu0 %v1238
    %2830 = vmatpush.msra.mxu0 %v1234
    %2831 = vmatpush.msra.mxu0 %v1230
    %2832 = vmatpush.msra.mxu0 %v1226
    %2833 = vmatpush.msra.mxu0 %v1222
    %2834 = vmatpush.msra.mxu0 %v1218
    %2835 = vmatpush.msra.mxu0 %v1214
    %2836 = vmatpush.msra.mxu0 %v1210
    %2837 = vmatpush.msra.mxu0 %v1206
    %2838 = vmatpush.msra.mxu0 %v1202
    %2839 = vmatpush.msra.mxu0 %v1198
    %2840 = vmatpush.msra.mxu0 %v1194
    %2841 = vmatpush.msra.mxu0 %v1190
    %2842 = vmatmul.f32.gmra.mxu0 %v1663
    %v2843 = vpop.f32.mrf.mxu0
    %v2844 = vadd.f32 %v2824, %v2843
    %2845 = vdwg.mxu0
    %2846 = vmatpush.msra.mxu0 %v1314
    %2847 = vmatpush.msra.mxu0 %v1310
    %2848 = vmatpush.msra.mxu0 %v1306
    %2849 = vmatpush.msra.mxu0 %v1302
    %2850 = vmatpush.msra.mxu0 %v1298
    %2851 = vmatpush.msra.mxu0 %v1294
    %2852 = vmatpush.msra.mxu0 %v1290
    %2853 = vmatpush.msra.mxu0 %v1286
    %2854 = vmatpush.msra.mxu0 %v1282
    %2855 = vmatpush.msra.mxu0 %v1278
    %2856 = vmatpush.msra.mxu0 %v1274
    %2857 = vmatpush.msra.mxu0 %v1270
    %2858 = vmatpush.msra.mxu0 %v1266
    %2859 = vmatpush.msra.mxu0 %v1262
    %2860 = vmatpush.msra.mxu0 %v1258
    %2861 = vmatpush.msra.mxu0 %v1254
    %2862 = vmatmul.f32.gmra.mxu0 %v1664
    %v2863 = vpop.f32.mrf.mxu0
    %v2864 = vadd.f32 %v2844, %v2863
    %2865 = vdwg.mxu0
    %2866 = vmatpush.msra.mxu0 %v1378
    %2867 = vmatpush.msra.mxu0 %v1374
    %2868 = vmatpush.msra.mxu0 %v1370
    %2869 = vmatpush.msra.mxu0 %v1366
    %2870 = vmatpush.msra.mxu0 %v1362
    %2871 = vmatpush.msra.mxu0 %v1358
    %2872 = vmatpush.msra.mxu0 %v1354
    %2873 = vmatpush.msra.mxu0 %v1350
    %2874 = vmatpush.msra.mxu0 %v1346
    %2875 = vmatpush.msra.mxu0 %v1342
    %2876 = vmatpush.msra.mxu0 %v1338
    %2877 = vmatpush.msra.mxu0 %v1334
    %2878 = vmatpush.msra.mxu0 %v1330
    %2879 = vmatpush.msra.mxu0 %v1326
    %2880 = vmatpush.msra.mxu0 %v1322
    %2881 = vmatpush.msra.mxu0 %v1318
    %2882 = vmatmul.f32.gmra.mxu0 %v1665
    %v2883 = vpop.f32.mrf.mxu0
    %v2884 = vadd.f32 %v2864, %v2883
    %2885 = vdwg.mxu0
    %2886 = vmatpush.msra.mxu0 %v1442
    %2887 = vmatpush.msra.mxu0 %v1438
    %2888 = vmatpush.msra.mxu0 %v1434
    %2889 = vmatpush.msra.mxu0 %v1430
    %2890 = vmatpush.msra.mxu0 %v1426
    %2891 = vmatpush.msra.mxu0 %v1422
    %2892 = vmatpush.msra.mxu0 %v1418
    %2893 = vmatpush.msra.mxu0 %v1414
    %2894 = vmatpush.msra.mxu0 %v1410
    %2895 = vmatpush.msra.mxu0 %v1406
    %2896 = vmatpush.msra.mxu0 %v1402
    %2897 = vmatpush.msra.mxu0 %v1398
    %2898 = vmatpush.msra.mxu0 %v1394
    %2899 = vmatpush.msra.mxu0 %v1390
    %2900 = vmatpush.msra.mxu0 %v1386
    %2901 = vmatpush.msra.mxu0 %v1382
    %2902 = vmatmul.f32.gmra.mxu0 %v1666
    %v2903 = vpop.f32.mrf.mxu0
    %v2904 = vadd.f32 %v2884, %v2903
    %2905 = vdwg.mxu0
    %2906 = vmatpush.msra.mxu0 %v1506
    %2907 = vmatpush.msra.mxu0 %v1502
    %2908 = vmatpush.msra.mxu0 %v1498
    %2909 = vmatpush.msra.mxu0 %v1494
    %2910 = vmatpush.msra.mxu0 %v1490
    %2911 = vmatpush.msra.mxu0 %v1486
    %2912 = vmatpush.msra.mxu0 %v1482
    %2913 = vmatpush.msra.mxu0 %v1478
    %2914 = vmatpush.msra.mxu0 %v1474
    %2915 = vmatpush.msra.mxu0 %v1470
    %2916 = vmatpush.msra.mxu0 %v1466
    %2917 = vmatpush.msra.mxu0 %v1462
    %2918 = vmatpush.msra.mxu0 %v1458
    %2919 = vmatpush.msra.mxu0 %v1454
    %2920 = vmatpush.msra.mxu0 %v1450
    %2921 = vmatpush.msra.mxu0 %v1446
    %2922 = vmatmul.f32.gmra.mxu0 %v1667
    %v2923 = vpop.f32.mrf.mxu0
    %v2924 = vadd.f32 %v2904, %v2923
    %2925 = vdwg.mxu0
    %2926 = vmatpush.msra.mxu0 %v1570
    %2927 = vmatpush.msra.mxu0 %v1566
    %2928 = vmatpush.msra.mxu0 %v1562
    %2929 = vmatpush.msra.mxu0 %v1558
    %2930 = vmatpush.msra.mxu0 %v1554
    %2931 = vmatpush.msra.mxu0 %v1550
    %2932 = vmatpush.msra.mxu0 %v1546
    %2933 = vmatpush.msra.mxu0 %v1542
    %2934 = vmatpush.msra.mxu0 %v1538
    %2935 = vmatpush.msra.mxu0 %v1534
    %2936 = vmatpush.msra.mxu0 %v1530
    %2937 = vmatpush.msra.mxu0 %v1526
    %2938 = vmatpush.msra.mxu0 %v1522
    %2939 = vmatpush.msra.mxu0 %v1518
    %2940 = vmatpush.msra.mxu0 %v1514
    %2941 = vmatpush.msra.mxu0 %v1510
    %2942 = vmatmul.f32.gmra.mxu0 %v1668
    %v2943 = vpop.f32.mrf.mxu0
    %v2944 = vadd.f32 %v2924, %v2943
    %2945 = vdwg.mxu0
    %2946 = vmatpush.msra.mxu0 %v1634
    %2947 = vmatpush.msra.mxu0 %v1630
    %2948 = vmatpush.msra.mxu0 %v1626
    %2949 = vmatpush.msra.mxu0 %v1622
    %2950 = vmatpush.msra.mxu0 %v1618
    %2951 = vmatpush.msra.mxu0 %v1614
    %2952 = vmatpush.msra.mxu0 %v1610
    %2953 = vmatpush.msra.mxu0 %v1606
    %2954 = vmatpush.msra.mxu0 %v1602
    %2955 = vmatpush.msra.mxu0 %v1598
    %2956 = vmatpush.msra.mxu0 %v1594
    %2957 = vmatpush.msra.mxu0 %v1590
    %2958 = vmatpush.msra.mxu0 %v1586
    %2959 = vmatpush.msra.mxu0 %v1582
    %2960 = vmatpush.msra.mxu0 %v1578
    %2961 = vmatpush.msra.mxu0 %v1574
    %2962 = vmatmul.f32.gmra.mxu0 %v1669
    %v2963 = vpop.f32.mrf.mxu0
    %v2964 = vadd.f32 %v2944, %v2963
    %2965 = vdwg.mxu0
    %v2966 = vmax.f32 %v2004, 0.0
    %v2967 = vmax.f32 %v2324, 0.0
    %v2968 = vmax.f32 %v2644, 0.0
    %v2969 = vmax.f32 %v2964, 0.0
    %v2970 = vld [vmem:[%s5] sm:$0xff]
    %v2971 = vld [vmem:[%s5 + $0x8] sm:$0xff]
    %v2972 = vld [vmem:[%s5 + $0x10] sm:$0xff]
    %v2973 = vld [vmem:[%s5 + $0x18] sm:$0xff]
    %v2974 = vld [vmem:[%s5 + $0x20] sm:$0xff]
    %v2975 = vld [vmem:[%s5 + $0x28] sm:$0xff]
    %v2976 = vld [vmem:[%s5 + $0x30] sm:$0xff]
    %v2977 = vld [vmem:[%s5 + $0x38] sm:$0xff]
    %v2978 = vld [vmem:[%s5 + $0x40] sm:$0xff]
    %v2979 = vld [vmem:[%s5 + $0x48] sm:$0xff]
    %v2980 = vld [vmem:[%s5 + $0x50] sm:$0xff]
    %v2981 = vld [vmem:[%s5 + $0x58] sm:$0xff]
    %v2982 = vld [vmem:[%s5 + $0x60] sm:$0xff]
    %v2983 = vld [vmem:[%s5 + $0x68] sm:$0xff]
    %v2984 = vld [vmem:[%s5 + $0x70] sm:$0xff]
    %v2985 = vld [vmem:[%s5 + $0x78] sm:$0xff]
    %v2986 = vld [vmem:[%s5 + $0x80] sm:$0xff]
    %v2987 = vld [vmem:[%s5 + $0x88] sm:$0xff]
    %v2988 = vld [vmem:[%s5 + $0x90] sm:$0xff]
    %v2989 = vld [vmem:[%s5 + $0x98] sm:$0xff]
    %v2990 = vld [vmem:[%s5 + $0xa0] sm:$0xff]
    %v2991 = vld [vmem:[%s5 + $0xa8] sm:$0xff]
    %v2992 = vld [vmem:[%s5 + $0xb0] sm:$0xff]
    %v2993 = vld [vmem:[%s5 + $0xb8] sm:$0xff]
    %v2994 = vld [vmem:[%s5 + $0xc0] sm:$0xff]
    %v2995 = vld [vmem:[%s5 + $0xc8] sm:$0xff]
    %v2996 = vld [vmem:[%s5 + $0xd0] sm:$0xff]
    %v2997 = vld [vmem:[%s5 + $0xd8] sm:$0xff]
    %v2998 = vld [vmem:[%s5 + $0xe0] sm:$0xff]
    %v2999 = vld [vmem:[%s5 + $0xe8] sm:$0xff]
    %v3000 = vld [vmem:[%s5 + $0xf0] sm:$0xff]
    %v3001 = vld [vmem:[%s5 + $0xf8] sm:$0xff]
    %v3002 = vld [vmem:[%s5 + $0x100] sm:$0xff]
    %v3003 = vld [vmem:[%s5 + $0x108] sm:$0xff]
    %v3004 = vld [vmem:[%s5 + $0x110] sm:$0xff]
    %v3005 = vld [vmem:[%s5 + $0x118] sm:$0xff]
    %v3006 = vld [vmem:[%s5 + $0x120] sm:$0xff]
    %v3007 = vld [vmem:[%s5 + $0x128] sm:$0xff]
    %v3008 = vld [vmem:[%s5 + $0x130] sm:$0xff]
    %v3009 = vld [vmem:[%s5 + $0x138] sm:$0xff]
    %v3010 = vld [vmem:[%s5 + $0x140] sm:$0xff]
    %v3011 = vld [vmem:[%s5 + $0x148] sm:$0xff]
    %v3012 = vld [vmem:[%s5 + $0x150] sm:$0xff]
    %v3013 = vld [vmem:[%s5 + $0x158] sm:$0xff]
    %v3014 = vld [vmem:[%s5 + $0x160] sm:$0xff]
    %v3015 = vld [vmem:[%s5 + $0x168] sm:$0xff]
    %v3016 = vld [vmem:[%s5 + $0x170] sm:$0xff]
    %v3017 = vld [vmem:[%s5 + $0x178] sm:$0xff]
    %v3018 = vld [vmem:[%s5 + $0x180] sm:$0xff]
    %v3019 = vld [vmem:[%s5 + $0x188] sm:$0xff]
    %v3020 = vld [vmem:[%s5 + $0x190] sm:$0xff]
    %v3021 = vld [vmem:[%s5 + $0x198] sm:$0xff]
    %v3022 = vld [vmem:[%s5 + $0x1a0] sm:$0xff]
    %v3023 = vld [vmem:[%s5 + $0x1a8] sm:$0xff]
    %v3024 = vld [vmem:[%s5 + $0x1b0] sm:$0xff]
    %v3025 = vld [vmem:[%s5 + $0x1b8] sm:$0xff]
    %v3026 = vld [vmem:[%s5 + $0x1c0] sm:$0xff]
    %v3027 = vld [vmem:[%s5 + $0x1c8] sm:$0xff]
    %v3028 = vld [vmem:[%s5 + $0x1d0] sm:$0xff]
    %v3029 = vld [vmem:[%s5 + $0x1d8] sm:$0xff]
    %v3030 = vld [vmem:[%s5 + $0x1e0] sm:$0xff]
    %v3031 = vld [vmem:[%s5 + $0x1e8] sm:$0xff]
    %v3032 = vld [vmem:[%s5 + $0x1f0] sm:$0xff]
    %v3033 = vld [vmem:[%s5 + $0x1f8] sm:$0xff]
    %v3034 = vld [vmem:[%s6] sm:$0x1]
    %v3036 = vperm.slane %v3034, 0
    %3038 = vmatpush.msra.mxu0 %v2985
    %3039 = vmatpush.msra.mxu0 %v2984
    %3040 = vmatpush.msra.mxu0 %v2983
    %3041 = vmatpush.msra.mxu0 %v2982
    %3042 = vmatpush.msra.mxu0 %v2981
    %3043 = vmatpush.msra.mxu0 %v2980
    %3044 = vmatpush.msra.mxu0 %v2979
    %3045 = vmatpush.msra.mxu0 %v2978
    %3046 = vmatpush.msra.mxu0 %v2977
    %3047 = vmatpush.msra.mxu0 %v2976
    %3048 = vmatpush.msra.mxu0 %v2975
    %3049 = vmatpush.msra.mxu0 %v2974
    %3050 = vmatpush.msra.mxu0 %v2973
    %3051 = vmatpush.msra.mxu0 %v2972
    %3052 = vmatpush.msra.mxu0 %v2971
    %3053 = vmatpush.msra.mxu0 %v2970
    %3054 = vmatmul.f32.gmra.mxu0 %v2966
    %v3055 = vpop.f32.mrf.mxu0
    %v3056 = vadd.f32 %v3036, %v3055
    %3057 = vdwg.mxu0
    %3058 = vmatpush.msra.mxu0 %v3001
    %3059 = vmatpush.msra.mxu0 %v3000
    %3060 = vmatpush.msra.mxu0 %v2999
    %3061 = vmatpush.msra.mxu0 %v2998
    %3062 = vmatpush.msra.mxu0 %v2997
    %3063 = vmatpush.msra.mxu0 %v2996
    %3064 = vmatpush.msra.mxu0 %v2995
    %3065 = vmatpush.msra.mxu0 %v2994
    %3066 = vmatpush.msra.mxu0 %v2993
    %3067 = vmatpush.msra.mxu0 %v2992
    %3068 = vmatpush.msra.mxu0 %v2991
    %3069 = vmatpush.msra.mxu0 %v2990
    %3070 = vmatpush.msra.mxu0 %v2989
    %3071 = vmatpush.msra.mxu0 %v2988
    %3072 = vmatpush.msra.mxu0 %v2987
    %3073 = vmatpush.msra.mxu0 %v2986
    %3074 = vmatmul.f32.gmra.mxu0 %v2967
    %v3075 = vpop.f32.mrf.mxu0
    %v3076 = vadd.f32 %v3056, %v3075
    %3077 = vdwg.mxu0
    %3078 = vmatpush.msra.mxu0 %v3017
    %3079 = vmatpush.msra.mxu0 %v3016
    %3080 = vmatpush.msra.mxu0 %v3015
    %3081 = vmatpush.msra.mxu0 %v3014
    %3082 = vmatpush.msra.mxu0 %v3013
    %3083 = vmatpush.msra.mxu0 %v3012
    %3084 = vmatpush.msra.mxu0 %v3011
    %3085 = vmatpush.msra.mxu0 %v3010
    %3086 = vmatpush.msra.mxu0 %v3009
    %3087 = vmatpush.msra.mxu0 %v3008
    %3088 = vmatpush.msra.mxu0 %v3007
    %3089 = vmatpush.msra.mxu0 %v3006
    %3090 = vmatpush.msra.mxu0 %v3005
    %3091 = vmatpush.msra.mxu0 %v3004
    %3092 = vmatpush.msra.mxu0 %v3003
    %3093 = vmatpush.msra.mxu0 %v3002
    %3094 = vmatmul.f32.gmra.mxu0 %v2968
    %v3095 = vpop.f32.mrf.mxu0
    %v3096 = vadd.f32 %v3076, %v3095
    %3097 = vdwg.mxu0
    %3098 = vmatpush.msra.mxu0 %v3033
    %3099 = vmatpush.msra.mxu0 %v3032
    %3100 = vmatpush.msra.mxu0 %v3031
    %3101 = vmatpush.msra.mxu0 %v3030
    %3102 = vmatpush.msra.mxu0 %v3029
    %3103 = vmatpush.msra.mxu0 %v3028
    %3104 = vmatpush.msra.mxu0 %v3027
    %3105 = vmatpush.msra.mxu0 %v3026
    %3106 = vmatpush.msra.mxu0 %v3025
    %3107 = vmatpush.msra.mxu0 %v3024
    %3108 = vmatpush.msra.mxu0 %v3023
    %3109 = vmatpush.msra.mxu0 %v3022
    %3110 = vmatpush.msra.mxu0 %v3021
    %3111 = vmatpush.msra.mxu0 %v3020
    %3112 = vmatpush.msra.mxu0 %v3019
    %3113 = vmatpush.msra.mxu0 %v3018
    %3114 = vmatmul.f32.gmra.mxu0 %v2969
    %v3115 = vpop.f32.mrf.mxu0
    %v3116 = vadd.f32 %v3096, %v3115
    %3117 = vdwg.mxu0
    %3118 = vst [vmem:[#allocation3] sm:$0x3] %v3116
    // Predicated region
    $region30: #{conv_model_forward.3} parent=1 // pred_check
      _
    $region31: #{conv_model_forward.3} parent=1 // pred_check_branch
      %3120 = sbr.rel (0) target = $region33
    $region32: #{conv_model_forward.3} parent=1 // pred_region
      %3122 = vsyncadd [#allocation4], 0
      %s3124 = sshll.u32 [#allocation3], 4
      %s3125 = int_to_ptr.vmem [resolvable:$true] %s3124
      %s3126 = sshll.u32 %s7, 4
      %s3127 = int_to_ptr.hbm [resolvable:$true] %s3126
      %3129 = dma.vmem_to_hbm [thread:$0]  %s3125, 32, %s3127, [#allocation4]
    $region33: #{conv_model_forward.3} parent=1 // pred_fallthru
      _
    // Predicated region
    $region34: #{conv_model_forward.3} parent=1 // pred_check
      _
    $region35: #{conv_model_forward.3} parent=1 // pred_check_branch
      %3131 = sbr.rel (0) target = $region37
    $region36: #{conv_model_forward.3} parent=1 // pred_region
      %3133 = dma.done [#allocation4], 32
    $region37: #{conv_model_forward.3} parent=1 // pred_fallthru
      _
    %3134 = vsyncpa [#allocation4], 1

</llo_original>
